<compile_context>
chip_gen: v6e
topology: v6e:2x2x1
jax: 0.10.0
libtpu: 0.0.40
codegen_flags: <defaults>
</compile_context>

<pallas_src>
import math
from functools import partial

import jax
import jax.numpy as jnp
from jax import lax
from jax.experimental import pallas as pl
from jax.experimental.pallas import tpu as pltpu


def _sigmoid(x):
    return 1.0 / (1.0 + jnp.exp(-x))


def _dw_to_kkc(w):
    # torch depthwise weight (C, 1, K, K) -> (K*K, C), tap-major, channels-last
    C, _, K, _ = w.shape
    return jnp.transpose(w[:, 0], (1, 2, 0)).reshape(K * K, C)


def _bn_fold(bn, C):
    # eval-mode BatchNorm -> per-channel (scale, shift)
    f32 = jnp.float32
    if bn is None:
        g, b = jnp.ones((C,), f32), jnp.zeros((C,), f32)
        m, v = jnp.zeros((C,), f32), jnp.ones((C,), f32)
    else:
        g, b, m, v = bn
    scale = g / jnp.sqrt(v + 1e-5)
    shift = b - m * scale
    return scale, shift


def _pick_batch_tile(N, C):
    # Pack samples into lanes: target 128 lanes on v5e, 256 on v6e/v7x, while keeping
    # >= 2 grid steps when possible (v7x megacore needs >= 2 parallel steps).
    try:
        kind = jax.devices()[0].device_kind.lower()
        target = 256 if ("v6" in kind or "v7" in kind) else 128
    except Exception:
        target = 128
    B = math.gcd(N, max(1, target // C))
    while B > 1 and N // B < 2:
        B -= 1
        while N % B:
            B -= 1
    return B


# ----------------------------------------------------------------------------- kernel

def _ms_mlp_kernel(x_ref, w3c_ref, pwt_ref, w1t_ref, w2t_ref, sab_ref,
                   a1_ref, b1c_ref, w1m_ref, w3m_ref, w5m_ref,
                   pmat_ref, a2_ref, b2r_ref,
                   o_ref, pad1_ref, pad2_ref, *, H, W, C, HID, B):
    f32 = jnp.float32
    L = B * C

    # ---------------- COCS: depthwise 3x3 (+ folded eval BN) + ReLU -------------------
    # Zero only the halo border (interior fully overwritten every step).
    pad1_ref[0, :, :] = jnp.zeros((W + 2, L), f32)
    pad1_ref[H + 1, :, :] = jnp.zeros((W + 2, L), f32)
    pad1_ref[1:1 + H, 0:1, :] = jnp.zeros((H, 1, L), f32)
    pad1_ref[1:1 + H, W + 1:W + 2, :] = jnp.zeros((H, 1, L), f32)
    pad1_ref[1:1 + H, 1:1 + W, :] = x_ref[...]

    w3 = w3c_ref[...]                                        # (10, L): 9 scaled taps + BN shift
    acc = pad1_ref[0:H, 0:W, :] * w3[0, :]
    for t in range(1, 9):
        dh, dw = divmod(t, 3)
        acc = acc + pad1_ref[dh:dh + H, dw:dw + W, :] * w3[t, :]
    u = jnp.maximum(acc + w3[9, :], 0.0).reshape(H * W, L)

    # ---------------- COCS: 1x1 pointwise conv (block-diag over samples) + residual ---
    x0 = x_ref[...].reshape(H * W, L)
    x1 = jnp.dot(u, pwt_ref[...], preferred_element_type=f32) + x0           # (H*W, L)

    # ---------------- CAB: global avg/max pool + shared 2-layer MLP + sigmoid ---------
    avg = jnp.mean(x1, axis=0, keepdims=True)                # (1, L)
    mx = jnp.max(x1, axis=0, keepdims=True)                  # (1, L)
    q = jnp.concatenate([avg, mx], axis=0)                   # (2, L)
    z = jnp.maximum(jnp.dot(q, w1t_ref[...], preferred_element_type=f32), 0.0)
    o2 = jnp.dot(z, w2t_ref[...], preferred_element_type=f32)                # (2, L)
    cab = _sigmoid(o2[0:1, :] + o2[1:2, :])                  # (1, L)

    # ---------------- SAB on the 1x1 CAB map (only the 7x7 center taps contribute) ----
    # Per-sample (per C-block of lanes) channel mean/max, broadcast back onto the block.
    wa = sab_ref[0:1, 0:1]
    wb = sab_ref[0:1, 1:2]
    lane = lax.broadcasted_iota(jnp.int32, (1, L), 1)
    sab_row = jnp.zeros((1, L), f32)
    for b in range(B):
        blk = cab[:, b * C:(b + 1) * C]
        s = _sigmoid(jnp.mean(blk, keepdims=True) * wa + jnp.max(blk, keepdims=True) * wb)
        sab_row = sab_row + jnp.where((lane >= b * C) & (lane < (b + 1) * C), s, 0.0)
    x2 = x1 + sab_row                                        # (H*W, L)

    # ---------------- fc1 over torch-last dim W (block-diag kron(I_H, W1)) + exact GELU
    h1 = jnp.dot(a1_ref[...], x2, preferred_element_type=f32) + b1c_ref[...]
    h1 = 0.5 * h1 * (1.0 + lax.erf(h1 * (1.0 / math.sqrt(2.0))))             # (H*HID, L)

    # ---------------- MSConv: depthwise k=1,3,5 (+folded eval BN, ReLU6), summed ------
    pad2_ref[0:2, :, :] = jnp.zeros((2, HID + 4, L), f32)
    pad2_ref[H + 2:H + 4, :, :] = jnp.zeros((2, HID + 4, L), f32)
    pad2_ref[2:2 + H, 0:2, :] = jnp.zeros((H, 2, L), f32)
    pad2_ref[2:2 + H, HID + 2:HID + 4, :] = jnp.zeros((H, 2, L), f32)
    pad2_ref[2:2 + H, 2:2 + HID, :] = h1.reshape(H, HID, L)  # single sliced interior store

    w1m = w1m_ref[...]                                       # (2, L): scaled tap + BN shift
    out = h1 + jnp.clip(h1 * w1m[0, :] + w1m[1, :], 0.0, 6.0)

    w3m = w3m_ref[...]                                       # (10, L)
    acc3 = pad2_ref[1:1 + H, 1:1 + HID, :] * w3m[0, :]
    for t in range(1, 9):
        dh, dw = divmod(t, 3)
        acc3 = acc3 + pad2_ref[1 + dh:1 + dh + H, 1 + dw:1 + dw + HID, :] * w3m[t, :]
    out = out + jnp.clip(acc3 + w3m[9, :], 0.0, 6.0).reshape(H * HID, L)

    w5m = w5m_ref[...]                                       # (26, L)
    acc5 = pad2_ref[0:H, 0:HID, :] * w5m[0, :]
    for t in range(1, 25):
        dh, dw = divmod(t, 5)
        acc5 = acc5 + pad2_ref[dh:dh + H, dw:dw + HID, :] * w5m[t, :]
    out = out + jnp.clip(acc5 + w5m[25, :], 0.0, 6.0).reshape(H * HID, L)

    # ---------------- fc2 (kron(I_H, W2)) + in-kernel channel_shuffle (block-diag perm)
    y = jnp.dot(out.T, a2_ref[...], preferred_element_type=f32)              # (L, H*OUT)
    y = jnp.dot(pmat_ref[...], y, preferred_element_type=f32) + b2r_ref[...]
    o_ref[...] = y                                           # lane-dense (L, H*OUT)


# ----------------------------------------------------------------------------- forward

def ms_mlp_forward(x_nchw, p):
    N, C, H, W = x_nchw.shape
    f32 = jnp.float32
    HID = p["fc1_w"].shape[0]
    IN_F = p["fc1_w"].shape[1]
    OUT = p["fc2_w"].shape[0]
    # nn.Linear acts on the torch-last dim (W); MSConv's per-channel weights/BN live on
    # the channel dim, so the module implicitly needs W == in_features and hidden == C.
    assert W == IN_F and HID == C, "requires W == in_features and hidden_features == C"

    B = _pick_batch_tile(N, C)           # samples packed into the lane axis per grid step
    NG = N // B
    L = B * C

    red = C // min(16, C)                # CAB reduced channels (ratio=16, clamped)
    red_pad = max(8, ((red + 7) // 8) * 8)

    # ---- eval-mode BatchNorm folds (scale into taps, shift added before activation) ---
    cocs_s, cocs_sh = _bn_fold(p.get("cocs_bn"), C)
    ms1_s, ms1_sh = _bn_fold(p.get("ms_bn1"), HID)
    ms3_s, ms3_sh = _bn_fold(p.get("ms_bn3"), HID)
    ms5_s, ms5_sh = _bn_fold(p.get("ms_bn5"), HID)
    # TODO(synk): training-mode BatchNorm (batch statistics) not implemented.

    def tile_l(mat):                     # (K, C) -> (K, B*C): same weights for all samples
        return jnp.tile(mat, (1, B))

    w3c = tile_l(jnp.concatenate([_dw_to_kkc(p["cocs_dw_w"]) * cocs_s[None, :],
                                  cocs_sh[None, :]], axis=0))                # (10, L)
    w1m = tile_l(jnp.stack([p["ms_dw_w1"][:, 0, 0, 0] * ms1_s, ms1_sh], 0))  # (2, L)
    w3m = tile_l(jnp.concatenate([_dw_to_kkc(p["ms_dw_w3"]) * ms3_s[None, :],
                                  ms3_sh[None, :]], axis=0))                 # (10, L)
    w5m = tile_l(jnp.concatenate([_dw_to_kkc(p["ms_dw_w5"]) * ms5_s[None, :],
                                  ms5_sh[None, :]], axis=0))                 # (26, L)

    # ---- channel-mixing weights -> block-diagonal kron(I_B, W) slabs ----
    eye_b = jnp.eye(B, dtype=f32)
    pwt = jnp.kron(eye_b, p["cocs_pw_w"].T)                                   # (L, L)
    w1t = jnp.kron(eye_b, jnp.zeros((C, red_pad), f32).at[:, :red].set(p["cab_fc1_w"].T))
    w2t = jnp.kron(eye_b, jnp.zeros((red_pad, C), f32).at[:red, :].set(p["cab_fc2_w"].T))
    sab_sc = jnp.stack([p["sab_w"][0, 0, 3, 3], p["sab_w"][0, 1, 3, 3]]).reshape(1, 2)

    # ---- fc1 / fc2 as kron(I_H, W) slabs acting on the (H*W / H*HID) row axis ----
    eye_h = jnp.eye(H, dtype=f32)
    a1 = jnp.kron(eye_h, p["fc1_w"])                                          # (H*HID, H*W)
    b1c = jnp.tile(p["fc1_b"], H).reshape(H * HID, 1)
    a2 = jnp.kron(eye_h, p["fc2_w"].T)                                        # (H*HID, H*OUT)
    b2r = jnp.tile(p["fc2_b"], H).reshape(1, H * OUT)

    # ---- channel_shuffle as a block-diagonal row permutation applied in-kernel ----
    # (fc2 is channel-independent, so shuffle-then-fc2 == fc2-then-permute-channels)
    g = math.gcd(HID, OUT)
    cpg = C // g
    perm = jnp.asarray([(c % g) * cpg + (c // g) for c in range(C)], dtype=jnp.int32)
    pmat = jnp.kron(eye_b, jnp.eye(C, dtype=f32)[perm])                       # (L, L)

    # ---- pack B samples into the lane axis: (N,C,H,W) -> (N//B, H, W, B*C) ----
    x_in = jnp.transpose(x_nchw.reshape(NG, B, C, H, W), (0, 3, 4, 1, 2)).reshape(NG, H, W, L)

    def wspec(shape):
        return pl.BlockSpec(shape, lambda n, _s=len(shape): (0,) * _s)

    kern = partial(_ms_mlp_kernel, H=H, W=W, C=C, HID=HID, B=B)
    y = pl.pallas_call(
        kern,
        out_shape=jax.ShapeDtypeStruct((NG, L, H * OUT), f32),
        grid=(NG,),
        in_specs=[
            pl.BlockSpec((None, H, W, L), lambda n: (n, 0, 0, 0)),
            wspec((10, L)), wspec((L, L)),
            wspec((L, B * red_pad)), wspec((B * red_pad, L)), wspec((1, 2)),
            wspec((H * HID, H * W)), wspec((H * HID, 1)),
            wspec((2, L)), wspec((10, L)), wspec((26, L)),
            wspec((L, L)), wspec((H * HID, H * OUT)), wspec((1, H * OUT)),
        ],
        out_specs=pl.BlockSpec((None, L, H * OUT), lambda n: (n, 0, 0)),
        scratch_shapes=[
            pltpu.VMEM((H + 2, W + 2, L), f32),      # COCS 3x3 halo buffer
            pltpu.VMEM((H + 4, HID + 4, L), f32),    # MSConv 3x3/5x5 halo buffer
        ],
        compiler_params=pltpu.CompilerParams(dimension_semantics=("parallel",)),
    )(x_in, w3c, pwt, w1t, w2t, sab_sc, a1, b1c, w1m, w3m, w5m, pmat, a2, b2r)

    # (NG, B*C, H*OUT) -> (N, C, H, OUT): pure reshape (lanes are sample-major, chan-minor)
    return y.reshape(N, C, H, OUT)


# ----------------------------------------------------------------------------- reference

def reference_forward(x, p):
    N, C, H, W = x.shape
    eps = 1e-5

    def dwconv(inp, w):
        return lax.conv_general_dilated(inp, w, (1, 1), "SAME",
                                        feature_group_count=inp.shape[1],
                                        dimension_numbers=("NCHW", "OIHW", "NCHW"))

    def bn(t, bp):
        Cc = t.shape[1]
        if bp is None:
            g, b = jnp.ones((Cc,)), jnp.zeros((Cc,))
            m, v = jnp.zeros((Cc,)), jnp.ones((Cc,))
        else:
            g, b, m, v = bp
        scale = g / jnp.sqrt(v + eps)
        shift = b - m * scale
        return t * scale[None, :, None, None] + shift[None, :, None, None]

    u = jnp.maximum(bn(dwconv(x, p["cocs_dw_w"]), p.get("cocs_bn")), 0.0)
    u = jnp.einsum("oi,nihw->nohw", p["cocs_pw_w"], u)
    x1 = u + x
    avg = jnp.mean(x1, axis=(2, 3))
    mx = jnp.max(x1, axis=(2, 3))

    def cab_path(q):
        return jnp.maximum(q @ p["cab_fc1_w"].T, 0.0) @ p["cab_fc2_w"].T

    cab = _sigmoid(cab_path(avg) + cab_path(mx))
    s_avg = jnp.mean(cab, axis=1, keepdims=True)
    s_max = jnp.max(cab, axis=1, keepdims=True)
    sab = _sigmoid(s_avg * p["sab_w"][0, 0, 3, 3] + s_max * p["sab_w"][0, 1, 3, 3])
    x2 = x1 + sab[:, :, None, None]

    h1 = x2 @ p["fc1_w"].T + p["fc1_b"]
    h1 = 0.5 * h1 * (1.0 + lax.erf(h1 / jnp.sqrt(2.0)))

    out = h1
    for w, key in ((p["ms_dw_w1"], "ms_bn1"), (p["ms_dw_w3"], "ms_bn3"),
                   (p["ms_dw_w5"], "ms_bn5")):
        out = out + jnp.clip(bn(dwconv(h1, w), p.get(key)), 0.0, 6.0)

    hid = p["fc1_w"].shape[0]
    out_f = p["fc2_w"].shape[0]
    g = math.gcd(hid, out_f)
    cpg = C // g
    out = out.reshape(N, g, cpg, H, hid).transpose(0, 2, 1, 3, 4).reshape(N, C, H, hid)
    return out @ p["fc2_w"].T + p["fc2_b"]


# ----------------------------------------------------------------------------- main

if __name__ == "__main__":
    IN_F = 16          # in_features (CAB ratio -> reduced_channels = 1)
    HID = 16           # hidden_features (PyTorch default: == in_features)
    OUT = 24           # out_features -> channel_shuffle groups = gcd(16, 24) = 8
    N, C, H, W = 16, IN_F, 8, IN_F   # W must equal in_features for the nn.Linear path

    key = jax.random.PRNGKey(0)
    ks = jax.random.split(key, 18)
    std = 0.02

    def bn_init(k, Cc):
        k1, k2, k3, k4 = jax.random.split(k, 4)
        return (1.0 + 0.1 * jax.random.normal(k1, (Cc,), jnp.float32),   # gamma
                0.1 * jax.random.normal(k2, (Cc,), jnp.float32),          # beta
                0.1 * jax.random.normal(k3, (Cc,), jnp.float32),          # running_mean
                0.5 + jax.random.uniform(k4, (Cc,), jnp.float32))         # running_var

    params = dict(
        cocs_dw_w=jax.random.normal(ks[0], (C, 1, 3, 3), jnp.float32) * std,   # dw 3x3
        cocs_pw_w=jax.random.normal(ks[1], (C, C), jnp.float32) * std,         # 1x1 (Co,Ci)
        cab_fc1_w=jax.random.normal(ks[2], (1, C), jnp.float32) * std,         # (reduced, C)
        cab_fc2_w=jax.random.normal(ks[3], (C, 1), jnp.float32) * std,         # (C, reduced)
        sab_w=jax.random.normal(ks[4], (1, 2, 7, 7), jnp.float32) * std,
        fc1_w=jax.random.normal(ks[5], (HID, IN_F), jnp.float32) * std,
        fc1_b=jax.random.normal(ks[6], (HID,), jnp.float32) * std,
        ms_dw_w1=jax.random.normal(ks[7], (HID, 1, 1, 1), jnp.float32) * std,
        ms_dw_w3=jax.random.normal(ks[8], (HID, 1, 3, 3), jnp.float32) * std,
        ms_dw_w5=jax.random.normal(ks[9], (HID, 1, 5, 5), jnp.float32) * std,
        fc2_w=jax.random.normal(ks[10], (OUT, HID), jnp.float32) * std,
        fc2_b=jax.random.normal(ks[11], (OUT,), jnp.float32) * std,
        cocs_bn=bn_init(ks[12], C),     # eval-mode BatchNorm statistics (folded in-kernel)
        ms_bn1=bn_init(ks[13], HID),
        ms_bn3=bn_init(ks[14], HID),
        ms_bn5=bn_init(ks[15], HID),
    )
    x = jax.random.normal(ks[16], (N, C, H, W), jnp.float32)

    fwd = jax.jit(ms_mlp_forward)
    y = jax.block_until_ready(fwd(x, params))
    assert y.shape == (N, C, H, OUT), y.shape

    y_ref = reference_forward(x, params)
    err = float(jnp.max(jnp.abs(y - y_ref)))
    assert jnp.all(jnp.isfinite(y)), "non-finite output"
    assert err < 5e-4, f"mismatch vs pure-JAX reference: {err}"
    print("KERNEL_OK")
</pallas_src>

<mosaic_0001>
module attributes {stable_mosaic.version = 11 : i64} {
  func.func @_ms_mlp_kernel(%arg0: i32, %arg1: memref<1x8x16x128xf32, #tpu.memory_space<vmem>>, %arg2: memref<10x128xf32, #tpu.memory_space<vmem>>, %arg3: memref<128x128xf32, #tpu.memory_space<vmem>>, %arg4: memref<128x64xf32, #tpu.memory_space<vmem>>, %arg5: memref<64x128xf32, #tpu.memory_space<vmem>>, %arg6: memref<1x2xf32, #tpu.memory_space<vmem>>, %arg7: memref<128x128xf32, #tpu.memory_space<vmem>>, %arg8: memref<128x1xf32, #tpu.memory_space<vmem>>, %arg9: memref<2x128xf32, #tpu.memory_space<vmem>>, %arg10: memref<10x128xf32, #tpu.memory_space<vmem>>, %arg11: memref<26x128xf32, #tpu.memory_space<vmem>>, %arg12: memref<128x128xf32, #tpu.memory_space<vmem>>, %arg13: memref<128x192xf32, #tpu.memory_space<vmem>>, %arg14: memref<1x192xf32, #tpu.memory_space<vmem>>, %arg15: memref<1x128x192xf32, #tpu.memory_space<vmem>>, %arg16: memref<10x18x128xf32, #tpu.memory_space<vmem>>, %arg17: memref<12x20x128xf32, #tpu.memory_space<vmem>>) attributes {dimension_semantics = [#tpu.dimension_semantics<parallel>], iteration_bounds = array<i64: 2>, scalar_prefetch = 0 : i64, scratch_operands = 2 : i64, tpu.core_type = #tpu.core_type<tc>, window_params = [{transform_indices = @transform_0, window_bounds = array<i64: 1, 8, 16, 128>}, {pipeline_mode = #tpu.pipeline_mode<synchronous>, transform_indices = @transform_1, window_bounds = array<i64: 10, 128>}, {pipeline_mode = #tpu.pipeline_mode<synchronous>, transform_indices = @transform_2, window_bounds = array<i64: 128, 128>}, {pipeline_mode = #tpu.pipeline_mode<synchronous>, transform_indices = @transform_3, window_bounds = array<i64: 128, 64>}, {pipeline_mode = #tpu.pipeline_mode<synchronous>, transform_indices = @transform_4, window_bounds = array<i64: 64, 128>}, {pipeline_mode = #tpu.pipeline_mode<synchronous>, transform_indices = @transform_5, window_bounds = array<i64: 1, 2>}, {pipeline_mode = #tpu.pipeline_mode<synchronous>, transform_indices = @transform_6, window_bounds = array<i64: 128, 128>}, {pipeline_mode = #tpu.pipeline_mode<synchronous>, transform_indices = @transform_7, window_bounds = array<i64: 128, 1>}, {pipeline_mode = #tpu.pipeline_mode<synchronous>, transform_indices = @transform_8, window_bounds = array<i64: 2, 128>}, {pipeline_mode = #tpu.pipeline_mode<synchronous>, transform_indices = @transform_9, window_bounds = array<i64: 10, 128>}, {pipeline_mode = #tpu.pipeline_mode<synchronous>, transform_indices = @transform_10, window_bounds = array<i64: 26, 128>}, {pipeline_mode = #tpu.pipeline_mode<synchronous>, transform_indices = @transform_11, window_bounds = array<i64: 128, 128>}, {pipeline_mode = #tpu.pipeline_mode<synchronous>, transform_indices = @transform_12, window_bounds = array<i64: 128, 192>}, {pipeline_mode = #tpu.pipeline_mode<synchronous>, transform_indices = @transform_13, window_bounds = array<i64: 1, 192>}, {transform_indices = @transform_14, window_bounds = array<i64: 1, 128, 192>}]} {
    %cst = arith.constant 0.000000e+00 : f32
    %0 = vector.broadcast %cst : f32 to vector<18x128xf32>
    %c0 = arith.constant 0 : index
    %c0_0 = arith.constant 0 : index
    %c0_1 = arith.constant 0 : index
    %1 = vector.load %arg16[%c0, %c0_0, %c0_1] : memref<10x18x128xf32, #tpu.memory_space<vmem>>, vector<1x18x128xf32>
    %2 = vector.shape_cast %1 : vector<1x18x128xf32> to vector<18x128xf32>
    %3 = vector.shape_cast %0 : vector<18x128xf32> to vector<1x18x128xf32>
    tpu.vector_store %arg16[%c0, %c0_0, %c0_1], %3 {strides = array<i32>} : memref<10x18x128xf32, #tpu.memory_space<vmem>>, vector<1x18x128xf32>,
    %cst_2 = arith.constant 0.000000e+00 : f32
    %4 = vector.broadcast %cst_2 : f32 to vector<18x128xf32>
    %c9 = arith.constant 9 : index
    %c0_3 = arith.constant 0 : index
    %c0_4 = arith.constant 0 : index
    %5 = vector.load %arg16[%c9, %c0_3, %c0_4] : memref<10x18x128xf32, #tpu.memory_space<vmem>>, vector<1x18x128xf32>
    %6 = vector.shape_cast %5 : vector<1x18x128xf32> to vector<18x128xf32>
    %7 = vector.shape_cast %4 : vector<18x128xf32> to vector<1x18x128xf32>
    tpu.vector_store %arg16[%c9, %c0_3, %c0_4], %7 {strides = array<i32>} : memref<10x18x128xf32, #tpu.memory_space<vmem>>, vector<1x18x128xf32>,
    %cst_5 = arith.constant 0.000000e+00 : f32
    %8 = vector.broadcast %cst_5 : f32 to vector<8x1x128xf32>
    %c1 = arith.constant 1 : index
    %c0_6 = arith.constant 0 : index
    %c0_7 = arith.constant 0 : index
    %9 = vector.load %arg16[%c1, %c0_6, %c0_7] : memref<10x18x128xf32, #tpu.memory_space<vmem>>, vector<8x1x128xf32>
    tpu.vector_store %arg16[%c1, %c0_6, %c0_7], %8 {strides = array<i32>} : memref<10x18x128xf32, #tpu.memory_space<vmem>>, vector<8x1x128xf32>,
    %cst_8 = arith.constant 0.000000e+00 : f32
    %10 = vector.broadcast %cst_8 : f32 to vector<8x1x128xf32>
    %c1_9 = arith.constant 1 : index
    %c17 = arith.constant 17 : index
    %c0_10 = arith.constant 0 : index
    %11 = vector.load %arg16[%c1_9, %c17, %c0_10] : memref<10x18x128xf32, #tpu.memory_space<vmem>>, vector<8x1x128xf32>
    tpu.vector_store %arg16[%c1_9, %c17, %c0_10], %10 {strides = array<i32>} : memref<10x18x128xf32, #tpu.memory_space<vmem>>, vector<8x1x128xf32>,
    %c0_11 = arith.constant 0 : index
    %c0_12 = arith.constant 0 : index
    %c0_13 = arith.constant 0 : index
    %c0_14 = arith.constant 0 : index
    %12 = vector.load %arg1[%c0_11, %c0_12, %c0_13, %c0_14] : memref<1x8x16x128xf32, #tpu.memory_space<vmem>>, vector<1x8x16x128xf32>
    %13 = vector.shape_cast %12 : vector<1x8x16x128xf32> to vector<8x16x128xf32>
    %c1_15 = arith.constant 1 : index
    %c1_16 = arith.constant 1 : index
    %c0_17 = arith.constant 0 : index
    %14 = vector.load %arg16[%c1_15, %c1_16, %c0_17] : memref<10x18x128xf32, #tpu.memory_space<vmem>>, vector<8x16x128xf32>
    tpu.vector_store %arg16[%c1_15, %c1_16, %c0_17], %13 {strides = array<i32>} : memref<10x18x128xf32, #tpu.memory_space<vmem>>, vector<8x16x128xf32>,
    %c0_18 = arith.constant 0 : index
    %c0_19 = arith.constant 0 : index
    %15 = vector.load %arg2[%c0_18, %c0_19] : memref<10x128xf32, #tpu.memory_space<vmem>>, vector<10x128xf32>
    %c0_20 = arith.constant 0 : index
    %c0_21 = arith.constant 0 : index
    %c0_22 = arith.constant 0 : index
    %16 = vector.load %arg16[%c0_20, %c0_21, %c0_22] : memref<10x18x128xf32, #tpu.memory_space<vmem>>, vector<8x16x128xf32>
    %17 = vector.extract_strided_slice %15 {offsets = [0, 0], sizes = [1, 128], strides = [1, 1]} : vector<10x128xf32> to vector<1x128xf32>
    %18 = vector.shape_cast %17 : vector<1x128xf32> to vector<128xf32>
    %19 = vector.shape_cast %18 : vector<128xf32> to vector<1x1x128xf32>
    %20 = vector.broadcast %19 : vector<1x1x128xf32> to vector<8x16x128xf32>
    %21 = arith.mulf %16, %20 : vector<8x16x128xf32>
    %c0_23 = arith.constant 0 : index
    %c1_24 = arith.constant 1 : index
    %c0_25 = arith.constant 0 : index
    %22 = vector.load %arg16[%c0_23, %c1_24, %c0_25] : memref<10x18x128xf32, #tpu.memory_space<vmem>>, vector<8x16x128xf32>
    %23 = vector.extract_strided_slice %15 {offsets = [1, 0], sizes = [1, 128], strides = [1, 1]} : vector<10x128xf32> to vector<1x128xf32>
    %24 = vector.shape_cast %23 : vector<1x128xf32> to vector<128xf32>
    %25 = vector.shape_cast %24 : vector<128xf32> to vector<1x1x128xf32>
    %26 = vector.broadcast %25 : vector<1x1x128xf32> to vector<8x16x128xf32>
    %27 = arith.mulf %22, %26 : vector<8x16x128xf32>
    %28 = arith.addf %21, %27 : vector<8x16x128xf32>
    %c0_26 = arith.constant 0 : index
    %c2 = arith.constant 2 : index
    %c0_27 = arith.constant 0 : index
    %29 = vector.load %arg16[%c0_26, %c2, %c0_27] : memref<10x18x128xf32, #tpu.memory_space<vmem>>, vector<8x16x128xf32>
    %30 = vector.extract_strided_slice %15 {offsets = [2, 0], sizes = [1, 128], strides = [1, 1]} : vector<10x128xf32> to vector<1x128xf32>
    %31 = vector.shape_cast %30 : vector<1x128xf32> to vector<128xf32>
    %32 = vector.shape_cast %31 : vector<128xf32> to vector<1x1x128xf32>
    %33 = vector.broadcast %32 : vector<1x1x128xf32> to vector<8x16x128xf32>
    %34 = arith.mulf %29, %33 : vector<8x16x128xf32>
    %35 = arith.addf %28, %34 : vector<8x16x128xf32>
    %c1_28 = arith.constant 1 : index
    %c0_29 = arith.constant 0 : index
    %c0_30 = arith.constant 0 : index
    %36 = vector.load %arg16[%c1_28, %c0_29, %c0_30] : memref<10x18x128xf32, #tpu.memory_space<vmem>>, vector<8x16x128xf32>
    %37 = vector.extract_strided_slice %15 {offsets = [3, 0], sizes = [1, 128], strides = [1, 1]} : vector<10x128xf32> to vector<1x128xf32>
    %38 = vector.shape_cast %37 : vector<1x128xf32> to vector<128xf32>
    %39 = vector.shape_cast %38 : vector<128xf32> to vector<1x1x128xf32>
    %40 = vector.broadcast %39 : vector<1x1x128xf32> to vector<8x16x128xf32>
    %41 = arith.mulf %36, %40 : vector<8x16x128xf32>
    %42 = arith.addf %35, %41 : vector<8x16x128xf32>
    %c1_31 = arith.constant 1 : index
    %c1_32 = arith.constant 1 : index
    %c0_33 = arith.constant 0 : index
    %43 = vector.load %arg16[%c1_31, %c1_32, %c0_33] : memref<10x18x128xf32, #tpu.memory_space<vmem>>, vector<8x16x128xf32>
    %44 = vector.extract_strided_slice %15 {offsets = [4, 0], sizes = [1, 128], strides = [1, 1]} : vector<10x128xf32> to vector<1x128xf32>
    %45 = vector.shape_cast %44 : vector<1x128xf32> to vector<128xf32>
    %46 = vector.shape_cast %45 : vector<128xf32> to vector<1x1x128xf32>
    %47 = vector.broadcast %46 : vector<1x1x128xf32> to vector<8x16x128xf32>
    %48 = arith.mulf %43, %47 : vector<8x16x128xf32>
    %49 = arith.addf %42, %48 : vector<8x16x128xf32>
    %c1_34 = arith.constant 1 : index
    %c2_35 = arith.constant 2 : index
    %c0_36 = arith.constant 0 : index
    %50 = vector.load %arg16[%c1_34, %c2_35, %c0_36] : memref<10x18x128xf32, #tpu.memory_space<vmem>>, vector<8x16x128xf32>
    %51 = vector.extract_strided_slice %15 {offsets = [5, 0], sizes = [1, 128], strides = [1, 1]} : vector<10x128xf32> to vector<1x128xf32>
    %52 = vector.shape_cast %51 : vector<1x128xf32> to vector<128xf32>
    %53 = vector.shape_cast %52 : vector<128xf32> to vector<1x1x128xf32>
    %54 = vector.broadcast %53 : vector<1x1x128xf32> to vector<8x16x128xf32>
    %55 = arith.mulf %50, %54 : vector<8x16x128xf32>
    %56 = arith.addf %49, %55 : vector<8x16x128xf32>
    %c2_37 = arith.constant 2 : index
    %c0_38 = arith.constant 0 : index
    %c0_39 = arith.constant 0 : index
    %57 = vector.load %arg16[%c2_37, %c0_38, %c0_39] : memref<10x18x128xf32, #tpu.memory_space<vmem>>, vector<8x16x128xf32>
    %58 = vector.extract_strided_slice %15 {offsets = [6, 0], sizes = [1, 128], strides = [1, 1]} : vector<10x128xf32> to vector<1x128xf32>
    %59 = vector.shape_cast %58 : vector<1x128xf32> to vector<128xf32>
    %60 = vector.shape_cast %59 : vector<128xf32> to vector<1x1x128xf32>
    %61 = vector.broadcast %60 : vector<1x1x128xf32> to vector<8x16x128xf32>
    %62 = arith.mulf %57, %61 : vector<8x16x128xf32>
    %63 = arith.addf %56, %62 : vector<8x16x128xf32>
    %c2_40 = arith.constant 2 : index
    %c1_41 = arith.constant 1 : index
    %c0_42 = arith.constant 0 : index
    %64 = vector.load %arg16[%c2_40, %c1_41, %c0_42] : memref<10x18x128xf32, #tpu.memory_space<vmem>>, vector<8x16x128xf32>
    %65 = vector.extract_strided_slice %15 {offsets = [7, 0], sizes = [1, 128], strides = [1, 1]} : vector<10x128xf32> to vector<1x128xf32>
    %66 = vector.shape_cast %65 : vector<1x128xf32> to vector<128xf32>
    %67 = vector.shape_cast %66 : vector<128xf32> to vector<1x1x128xf32>
    %68 = vector.broadcast %67 : vector<1x1x128xf32> to vector<8x16x128xf32>
    %69 = arith.mulf %64, %68 : vector<8x16x128xf32>
    %70 = arith.addf %63, %69 : vector<8x16x128xf32>
    %c2_43 = arith.constant 2 : index
    %c2_44 = arith.constant 2 : index
    %c0_45 = arith.constant 0 : index
    %71 = vector.load %arg16[%c2_43, %c2_44, %c0_45] : memref<10x18x128xf32, #tpu.memory_space<vmem>>, vector<8x16x128xf32>
    %72 = vector.extract_strided_slice %15 {offsets = [8, 0], sizes = [1, 128], strides = [1, 1]} : vector<10x128xf32> to vector<1x128xf32>
    %73 = vector.shape_cast %72 : vector<1x128xf32> to vector<128xf32>
    %74 = vector.shape_cast %73 : vector<128xf32> to vector<1x1x128xf32>
    %75 = vector.broadcast %74 : vector<1x1x128xf32> to vector<8x16x128xf32>
    %76 = arith.mulf %71, %75 : vector<8x16x128xf32>
    %77 = arith.addf %70, %76 : vector<8x16x128xf32>
    %78 = vector.extract_strided_slice %15 {offsets = [9, 0], sizes = [1, 128], strides = [1, 1]} : vector<10x128xf32> to vector<1x128xf32>
    %79 = vector.shape_cast %78 : vector<1x128xf32> to vector<128xf32>
    %80 = vector.shape_cast %79 : vector<128xf32> to vector<1x1x128xf32>
    %81 = vector.broadcast %80 : vector<1x1x128xf32> to vector<8x16x128xf32>
    %82 = arith.addf %77, %81 : vector<8x16x128xf32>
    %cst_46 = arith.constant 0.000000e+00 : f32
    %83 = vector.broadcast %cst_46 : f32 to vector<8x16x128xf32>
    %84 = arith.maximumf %82, %83 : vector<8x16x128xf32>
    %85 = vector.shape_cast %84 : vector<8x16x128xf32> to vector<128x128xf32>
    %c0_47 = arith.constant 0 : index
    %c0_48 = arith.constant 0 : index
    %c0_49 = arith.constant 0 : index
    %c0_50 = arith.constant 0 : index
    %86 = vector.load %arg1[%c0_47, %c0_48, %c0_49, %c0_50] : memref<1x8x16x128xf32, #tpu.memory_space<vmem>>, vector<1x8x16x128xf32>
    %87 = vector.shape_cast %86 : vector<1x8x16x128xf32> to vector<8x16x128xf32>
    %88 = vector.shape_cast %87 : vector<8x16x128xf32> to vector<128x128xf32>
    %c0_51 = arith.constant 0 : index
    %c0_52 = arith.constant 0 : index
    %89 = vector.load %arg3[%c0_51, %c0_52] : memref<128x128xf32, #tpu.memory_space<vmem>>, vector<128x128xf32>
    %cst_53 = arith.constant dense<0.000000e+00> : vector<128x128xf32>
    %90 = tpu.matmul %85, %89, %cst_53 {dimension_numbers = #tpu.dot_dimension_numbers<[1], [0], [0], [1], [0, 0, 1, 1], [], []>} : vector<128x128xf32>, vector<128x128xf32>, vector<128x128xf32> -> vector<128x128xf32>
    %91 = arith.addf %90, %88 : vector<128x128xf32>
    %cst_54 = arith.constant dense<0.000000e+00> : vector<128xf32>
    %92 = vector.multi_reduction <add>, %91, %cst_54 [0] : vector<128x128xf32> to vector<128xf32>
    %93 = vector.shape_cast %92 : vector<128xf32> to vector<1x128xf32>
    %cst_55 = arith.constant 1.280000e+02 : f32
    %94 = vector.broadcast %cst_55 : f32 to vector<1x128xf32>
    %95 = arith.divf %93, %94 : vector<1x128xf32>
    %cst_56 = arith.constant dense<0xFF800000> : vector<128xf32>
    %96 = vector.multi_reduction <maximumf>, %91, %cst_56 [0] : vector<128x128xf32> to vector<128xf32>
    %97 = vector.shape_cast %96 : vector<128xf32> to vector<1x128xf32>
    %98 = tpu.concatenate %95, %97 in 0 : vector<1x128xf32>, vector<1x128xf32> -> vector<2x128xf32>
    %c0_57 = arith.constant 0 : index
    %c0_58 = arith.constant 0 : index
    %99 = vector.load %arg4[%c0_57, %c0_58] : memref<128x64xf32, #tpu.memory_space<vmem>>, vector<128x64xf32>
    %cst_59 = arith.constant dense<0.000000e+00> : vector<2x64xf32>
    %100 = tpu.matmul %98, %99, %cst_59 {dimension_numbers = #tpu.dot_dimension_numbers<[1], [0], [0], [1], [0, 0, 1, 1], [], []>} : vector<2x128xf32>, vector<128x64xf32>, vector<2x64xf32> -> vector<2x64xf32>
    %cst_60 = arith.constant 0.000000e+00 : f32
    %101 = vector.broadcast %cst_60 : f32 to vector<2x64xf32>
    %102 = arith.maximumf %100, %101 : vector<2x64xf32>
    %c0_61 = arith.constant 0 : index
    %c0_62 = arith.constant 0 : index
    %103 = vector.load %arg5[%c0_61, %c0_62] : memref<64x128xf32, #tpu.memory_space<vmem>>, vector<64x128xf32>
    %cst_63 = arith.constant dense<0.000000e+00> : vector<2x128xf32>
    %104 = tpu.matmul %102, %103, %cst_63 {dimension_numbers = #tpu.dot_dimension_numbers<[1], [0], [0], [1], [0, 0, 1, 1], [], []>} : vector<2x64xf32>, vector<64x128xf32>, vector<2x128xf32> -> vector<2x128xf32>
    %105 = vector.extract_strided_slice %104 {offsets = [0, 0], sizes = [1, 128], strides = [1, 1]} : vector<2x128xf32> to vector<1x128xf32>
    %106 = vector.extract_strided_slice %104 {offsets = [1, 0], sizes = [1, 128], strides = [1, 1]} : vector<2x128xf32> to vector<1x128xf32>
    %107 = arith.addf %105, %106 : vector<1x128xf32>
    %cst_64 = arith.constant 0.000000e+00 : f32
    %108 = vector.broadcast %cst_64 : f32 to vector<1x128xf32>
    %109 = arith.subf %108, %107 : vector<1x128xf32>
    %110 = math.exp %109 : vector<1x128xf32>
    %cst_65 = arith.constant 1.000000e+00 : f32
    %111 = vector.broadcast %cst_65 : f32 to vector<1x128xf32>
    %112 = arith.addf %111, %110 : vector<1x128xf32>
    %cst_66 = arith.constant 1.000000e+00 : f32
    %113 = vector.broadcast %cst_66 : f32 to vector<1x128xf32>
    %114 = arith.divf %113, %112 : vector<1x128xf32>
    %c0_67 = arith.constant 0 : index
    %c0_68 = arith.constant 0 : index
    %115 = vector.load %arg6[%c0_67, %c0_68] : memref<1x2xf32, #tpu.memory_space<vmem>>, vector<1x1xf32>
    %c0_69 = arith.constant 0 : index
    %c1_70 = arith.constant 1 : index
    %116 = vector.load %arg6[%c0_69, %c1_70] : memref<1x2xf32, #tpu.memory_space<vmem>>, vector<1x1xf32>
    %117 = tpu.iota {dimensions = array<i32: 1>} : vector<1x128xi32>
    %cst_71 = arith.constant 0.000000e+00 : f32
    %118 = vector.broadcast %cst_71 : f32 to vector<1x128xf32>
    %119 = vector.extract_strided_slice %114 {offsets = [0, 0], sizes = [1, 16], strides = [1, 1]} : vector<1x128xf32> to vector<1x16xf32>
    %120 = vector.shape_cast %119 : vector<1x16xf32> to vector<1x1x16xf32>
    %cst_72 = arith.constant dense<0.000000e+00> : vector<1xf32>
    %121 = vector.multi_reduction <add>, %120, %cst_72 [1, 2] : vector<1x1x16xf32> to vector<1xf32>
    %122 = vector.shape_cast %121 : vector<1xf32> to vector<1x1x1xf32>
    %123 = vector.extract %122[0, 0, 0] : f32 from vector<1x1x1xf32>
    %124 = vector.broadcast %123 : f32 to vector<1x1xf32>
    %cst_73 = arith.constant 1.600000e+01 : f32
    %125 = vector.broadcast %cst_73 : f32 to vector<1x1xf32>
    %126 = arith.divf %124, %125 : vector<1x1xf32>
    %127 = arith.mulf %126, %115 : vector<1x1xf32>
    %128 = vector.shape_cast %119 : vector<1x16xf32> to vector<1x1x16xf32>
    %cst_74 = arith.constant dense<0xFF800000> : vector<1xf32>
    %129 = vector.multi_reduction <maximumf>, %128, %cst_74 [1, 2] : vector<1x1x16xf32> to vector<1xf32>
    %130 = vector.shape_cast %129 : vector<1xf32> to vector<1x1x1xf32>
    %131 = vector.extract %130[0, 0, 0] : f32 from vector<1x1x1xf32>
    %132 = vector.broadcast %131 : f32 to vector<1x1xf32>
    %133 = arith.mulf %132, %116 : vector<1x1xf32>
    %134 = arith.addf %127, %133 : vector<1x1xf32>
    %cst_75 = arith.constant 0.000000e+00 : f32
    %135 = vector.broadcast %cst_75 : f32 to vector<1x1xf32>
    %136 = arith.subf %135, %134 : vector<1x1xf32>
    %137 = math.exp %136 : vector<1x1xf32>
    %cst_76 = arith.constant 1.000000e+00 : f32
    %138 = vector.broadcast %cst_76 : f32 to vector<1x1xf32>
    %139 = arith.addf %138, %137 : vector<1x1xf32>
    %cst_77 = arith.constant 1.000000e+00 : f32
    %140 = vector.broadcast %cst_77 : f32 to vector<1x1xf32>
    %141 = arith.divf %140, %139 : vector<1x1xf32>
    %c0_i32 = arith.constant 0 : i32
    %142 = vector.broadcast %c0_i32 : i32 to vector<1x128xi32>
    %143 = arith.cmpi sge, %117, %142 : vector<1x128xi32>
    %c16_i32 = arith.constant 16 : i32
    %144 = vector.broadcast %c16_i32 : i32 to vector<1x128xi32>
    %145 = arith.cmpi slt, %117, %144 : vector<1x128xi32>
    %146 = arith.andi %143, %145 : vector<1x128xi1>
    %cst_78 = arith.constant 0.000000e+00 : f32
    %147 = vector.shape_cast %141 : vector<1x1xf32> to vector<1x1xf32>
    %148 = vector.broadcast %147 : vector<1x1xf32> to vector<1x128xf32>
    %149 = vector.broadcast %cst_78 : f32 to vector<1x128xf32>
    %150 = arith.select %146, %148, %149 : vector<1x128xi1>, vector<1x128xf32>
    %151 = arith.addf %118, %150 : vector<1x128xf32>
    %152 = vector.extract_strided_slice %114 {offsets = [0, 16], sizes = [1, 16], strides = [1, 1]} : vector<1x128xf32> to vector<1x16xf32>
    %153 = vector.shape_cast %152 : vector<1x16xf32> to vector<1x1x16xf32>
    %cst_79 = arith.constant dense<0.000000e+00> : vector<1xf32>
    %154 = vector.multi_reduction <add>, %153, %cst_79 [1, 2] : vector<1x1x16xf32> to vector<1xf32>
    %155 = vector.shape_cast %154 : vector<1xf32> to vector<1x1x1xf32>
    %156 = vector.extract %155[0, 0, 0] : f32 from vector<1x1x1xf32>
    %157 = vector.broadcast %156 : f32 to vector<1x1xf32>
    %cst_80 = arith.constant 1.600000e+01 : f32
    %158 = vector.broadcast %cst_80 : f32 to vector<1x1xf32>
    %159 = arith.divf %157, %158 : vector<1x1xf32>
    %160 = arith.mulf %159, %115 : vector<1x1xf32>
    %161 = vector.shape_cast %152 : vector<1x16xf32> to vector<1x1x16xf32>
    %cst_81 = arith.constant dense<0xFF800000> : vector<1xf32>
    %162 = vector.multi_reduction <maximumf>, %161, %cst_81 [1, 2] : vector<1x1x16xf32> to vector<1xf32>
    %163 = vector.shape_cast %162 : vector<1xf32> to vector<1x1x1xf32>
    %164 = vector.extract %163[0, 0, 0] : f32 from vector<1x1x1xf32>
    %165 = vector.broadcast %164 : f32 to vector<1x1xf32>
    %166 = arith.mulf %165, %116 : vector<1x1xf32>
    %167 = arith.addf %160, %166 : vector<1x1xf32>
    %cst_82 = arith.constant 0.000000e+00 : f32
    %168 = vector.broadcast %cst_82 : f32 to vector<1x1xf32>
    %169 = arith.subf %168, %167 : vector<1x1xf32>
    %170 = math.exp %169 : vector<1x1xf32>
    %cst_83 = arith.constant 1.000000e+00 : f32
    %171 = vector.broadcast %cst_83 : f32 to vector<1x1xf32>
    %172 = arith.addf %171, %170 : vector<1x1xf32>
    %cst_84 = arith.constant 1.000000e+00 : f32
    %173 = vector.broadcast %cst_84 : f32 to vector<1x1xf32>
    %174 = arith.divf %173, %172 : vector<1x1xf32>
    %c16_i32_85 = arith.constant 16 : i32
    %175 = vector.broadcast %c16_i32_85 : i32 to vector<1x128xi32>
    %176 = arith.cmpi sge, %117, %175 : vector<1x128xi32>
    %c32_i32 = arith.constant 32 : i32
    %177 = vector.broadcast %c32_i32 : i32 to vector<1x128xi32>
    %178 = arith.cmpi slt, %117, %177 : vector<1x128xi32>
    %179 = arith.andi %176, %178 : vector<1x128xi1>
    %cst_86 = arith.constant 0.000000e+00 : f32
    %180 = vector.shape_cast %174 : vector<1x1xf32> to vector<1x1xf32>
    %181 = vector.broadcast %180 : vector<1x1xf32> to vector<1x128xf32>
    %182 = vector.broadcast %cst_86 : f32 to vector<1x128xf32>
    %183 = arith.select %179, %181, %182 : vector<1x128xi1>, vector<1x128xf32>
    %184 = arith.addf %151, %183 : vector<1x128xf32>
    %185 = vector.extract_strided_slice %114 {offsets = [0, 32], sizes = [1, 16], strides = [1, 1]} : vector<1x128xf32> to vector<1x16xf32>
    %186 = vector.shape_cast %185 : vector<1x16xf32> to vector<1x1x16xf32>
    %cst_87 = arith.constant dense<0.000000e+00> : vector<1xf32>
    %187 = vector.multi_reduction <add>, %186, %cst_87 [1, 2] : vector<1x1x16xf32> to vector<1xf32>
    %188 = vector.shape_cast %187 : vector<1xf32> to vector<1x1x1xf32>
    %189 = vector.extract %188[0, 0, 0] : f32 from vector<1x1x1xf32>
    %190 = vector.broadcast %189 : f32 to vector<1x1xf32>
    %cst_88 = arith.constant 1.600000e+01 : f32
    %191 = vector.broadcast %cst_88 : f32 to vector<1x1xf32>
    %192 = arith.divf %190, %191 : vector<1x1xf32>
    %193 = arith.mulf %192, %115 : vector<1x1xf32>
    %194 = vector.shape_cast %185 : vector<1x16xf32> to vector<1x1x16xf32>
    %cst_89 = arith.constant dense<0xFF800000> : vector<1xf32>
    %195 = vector.multi_reduction <maximumf>, %194, %cst_89 [1, 2] : vector<1x1x16xf32> to vector<1xf32>
    %196 = vector.shape_cast %195 : vector<1xf32> to vector<1x1x1xf32>
    %197 = vector.extract %196[0, 0, 0] : f32 from vector<1x1x1xf32>
    %198 = vector.broadcast %197 : f32 to vector<1x1xf32>
    %199 = arith.mulf %198, %116 : vector<1x1xf32>
    %200 = arith.addf %193, %199 : vector<1x1xf32>
    %cst_90 = arith.constant 0.000000e+00 : f32
    %201 = vector.broadcast %cst_90 : f32 to vector<1x1xf32>
    %202 = arith.subf %201, %200 : vector<1x1xf32>
    %203 = math.exp %202 : vector<1x1xf32>
    %cst_91 = arith.constant 1.000000e+00 : f32
    %204 = vector.broadcast %cst_91 : f32 to vector<1x1xf32>
    %205 = arith.addf %204, %203 : vector<1x1xf32>
    %cst_92 = arith.constant 1.000000e+00 : f32
    %206 = vector.broadcast %cst_92 : f32 to vector<1x1xf32>
    %207 = arith.divf %206, %205 : vector<1x1xf32>
    %c32_i32_93 = arith.constant 32 : i32
    %208 = vector.broadcast %c32_i32_93 : i32 to vector<1x128xi32>
    %209 = arith.cmpi sge, %117, %208 : vector<1x128xi32>
    %c48_i32 = arith.constant 48 : i32
    %210 = vector.broadcast %c48_i32 : i32 to vector<1x128xi32>
    %211 = arith.cmpi slt, %117, %210 : vector<1x128xi32>
    %212 = arith.andi %209, %211 : vector<1x128xi1>
    %cst_94 = arith.constant 0.000000e+00 : f32
    %213 = vector.shape_cast %207 : vector<1x1xf32> to vector<1x1xf32>
    %214 = vector.broadcast %213 : vector<1x1xf32> to vector<1x128xf32>
    %215 = vector.broadcast %cst_94 : f32 to vector<1x128xf32>
    %216 = arith.select %212, %214, %215 : vector<1x128xi1>, vector<1x128xf32>
    %217 = arith.addf %184, %216 : vector<1x128xf32>
    %218 = vector.extract_strided_slice %114 {offsets = [0, 48], sizes = [1, 16], strides = [1, 1]} : vector<1x128xf32> to vector<1x16xf32>
    %219 = vector.shape_cast %218 : vector<1x16xf32> to vector<1x1x16xf32>
    %cst_95 = arith.constant dense<0.000000e+00> : vector<1xf32>
    %220 = vector.multi_reduction <add>, %219, %cst_95 [1, 2] : vector<1x1x16xf32> to vector<1xf32>
    %221 = vector.shape_cast %220 : vector<1xf32> to vector<1x1x1xf32>
    %222 = vector.extract %221[0, 0, 0] : f32 from vector<1x1x1xf32>
    %223 = vector.broadcast %222 : f32 to vector<1x1xf32>
    %cst_96 = arith.constant 1.600000e+01 : f32
    %224 = vector.broadcast %cst_96 : f32 to vector<1x1xf32>
    %225 = arith.divf %223, %224 : vector<1x1xf32>
    %226 = arith.mulf %225, %115 : vector<1x1xf32>
    %227 = vector.shape_cast %218 : vector<1x16xf32> to vector<1x1x16xf32>
    %cst_97 = arith.constant dense<0xFF800000> : vector<1xf32>
    %228 = vector.multi_reduction <maximumf>, %227, %cst_97 [1, 2] : vector<1x1x16xf32> to vector<1xf32>
    %229 = vector.shape_cast %228 : vector<1xf32> to vector<1x1x1xf32>
    %230 = vector.extract %229[0, 0, 0] : f32 from vector<1x1x1xf32>
    %231 = vector.broadcast %230 : f32 to vector<1x1xf32>
    %232 = arith.mulf %231, %116 : vector<1x1xf32>
    %233 = arith.addf %226, %232 : vector<1x1xf32>
    %cst_98 = arith.constant 0.000000e+00 : f32
    %234 = vector.broadcast %cst_98 : f32 to vector<1x1xf32>
    %235 = arith.subf %234, %233 : vector<1x1xf32>
    %236 = math.exp %235 : vector<1x1xf32>
    %cst_99 = arith.constant 1.000000e+00 : f32
    %237 = vector.broadcast %cst_99 : f32 to vector<1x1xf32>
    %238 = arith.addf %237, %236 : vector<1x1xf32>
    %cst_100 = arith.constant 1.000000e+00 : f32
    %239 = vector.broadcast %cst_100 : f32 to vector<1x1xf32>
    %240 = arith.divf %239, %238 : vector<1x1xf32>
    %c48_i32_101 = arith.constant 48 : i32
    %241 = vector.broadcast %c48_i32_101 : i32 to vector<1x128xi32>
    %242 = arith.cmpi sge, %117, %241 : vector<1x128xi32>
    %c64_i32 = arith.constant 64 : i32
    %243 = vector.broadcast %c64_i32 : i32 to vector<1x128xi32>
    %244 = arith.cmpi slt, %117, %243 : vector<1x128xi32>
    %245 = arith.andi %242, %244 : vector<1x128xi1>
    %cst_102 = arith.constant 0.000000e+00 : f32
    %246 = vector.shape_cast %240 : vector<1x1xf32> to vector<1x1xf32>
    %247 = vector.broadcast %246 : vector<1x1xf32> to vector<1x128xf32>
    %248 = vector.broadcast %cst_102 : f32 to vector<1x128xf32>
    %249 = arith.select %245, %247, %248 : vector<1x128xi1>, vector<1x128xf32>
    %250 = arith.addf %217, %249 : vector<1x128xf32>
    %251 = vector.extract_strided_slice %114 {offsets = [0, 64], sizes = [1, 16], strides = [1, 1]} : vector<1x128xf32> to vector<1x16xf32>
    %252 = vector.shape_cast %251 : vector<1x16xf32> to vector<1x1x16xf32>
    %cst_103 = arith.constant dense<0.000000e+00> : vector<1xf32>
    %253 = vector.multi_reduction <add>, %252, %cst_103 [1, 2] : vector<1x1x16xf32> to vector<1xf32>
    %254 = vector.shape_cast %253 : vector<1xf32> to vector<1x1x1xf32>
    %255 = vector.extract %254[0, 0, 0] : f32 from vector<1x1x1xf32>
    %256 = vector.broadcast %255 : f32 to vector<1x1xf32>
    %cst_104 = arith.constant 1.600000e+01 : f32
    %257 = vector.broadcast %cst_104 : f32 to vector<1x1xf32>
    %258 = arith.divf %256, %257 : vector<1x1xf32>
    %259 = arith.mulf %258, %115 : vector<1x1xf32>
    %260 = vector.shape_cast %251 : vector<1x16xf32> to vector<1x1x16xf32>
    %cst_105 = arith.constant dense<0xFF800000> : vector<1xf32>
    %261 = vector.multi_reduction <maximumf>, %260, %cst_105 [1, 2] : vector<1x1x16xf32> to vector<1xf32>
    %262 = vector.shape_cast %261 : vector<1xf32> to vector<1x1x1xf32>
    %263 = vector.extract %262[0, 0, 0] : f32 from vector<1x1x1xf32>
    %264 = vector.broadcast %263 : f32 to vector<1x1xf32>
    %265 = arith.mulf %264, %116 : vector<1x1xf32>
    %266 = arith.addf %259, %265 : vector<1x1xf32>
    %cst_106 = arith.constant 0.000000e+00 : f32
    %267 = vector.broadcast %cst_106 : f32 to vector<1x1xf32>
    %268 = arith.subf %267, %266 : vector<1x1xf32>
    %269 = math.exp %268 : vector<1x1xf32>
    %cst_107 = arith.constant 1.000000e+00 : f32
    %270 = vector.broadcast %cst_107 : f32 to vector<1x1xf32>
    %271 = arith.addf %270, %269 : vector<1x1xf32>
    %cst_108 = arith.constant 1.000000e+00 : f32
    %272 = vector.broadcast %cst_108 : f32 to vector<1x1xf32>
    %273 = arith.divf %272, %271 : vector<1x1xf32>
    %c64_i32_109 = arith.constant 64 : i32
    %274 = vector.broadcast %c64_i32_109 : i32 to vector<1x128xi32>
    %275 = arith.cmpi sge, %117, %274 : vector<1x128xi32>
    %c80_i32 = arith.constant 80 : i32
    %276 = vector.broadcast %c80_i32 : i32 to vector<1x128xi32>
    %277 = arith.cmpi slt, %117, %276 : vector<1x128xi32>
    %278 = arith.andi %275, %277 : vector<1x128xi1>
    %cst_110 = arith.constant 0.000000e+00 : f32
    %279 = vector.shape_cast %273 : vector<1x1xf32> to vector<1x1xf32>
    %280 = vector.broadcast %279 : vector<1x1xf32> to vector<1x128xf32>
    %281 = vector.broadcast %cst_110 : f32 to vector<1x128xf32>
    %282 = arith.select %278, %280, %281 : vector<1x128xi1>, vector<1x128xf32>
    %283 = arith.addf %250, %282 : vector<1x128xf32>
    %284 = vector.extract_strided_slice %114 {offsets = [0, 80], sizes = [1, 16], strides = [1, 1]} : vector<1x128xf32> to vector<1x16xf32>
    %285 = vector.shape_cast %284 : vector<1x16xf32> to vector<1x1x16xf32>
    %cst_111 = arith.constant dense<0.000000e+00> : vector<1xf32>
    %286 = vector.multi_reduction <add>, %285, %cst_111 [1, 2] : vector<1x1x16xf32> to vector<1xf32>
    %287 = vector.shape_cast %286 : vector<1xf32> to vector<1x1x1xf32>
    %288 = vector.extract %287[0, 0, 0] : f32 from vector<1x1x1xf32>
    %289 = vector.broadcast %288 : f32 to vector<1x1xf32>
    %cst_112 = arith.constant 1.600000e+01 : f32
    %290 = vector.broadcast %cst_112 : f32 to vector<1x1xf32>
    %291 = arith.divf %289, %290 : vector<1x1xf32>
    %292 = arith.mulf %291, %115 : vector<1x1xf32>
    %293 = vector.shape_cast %284 : vector<1x16xf32> to vector<1x1x16xf32>
    %cst_113 = arith.constant dense<0xFF800000> : vector<1xf32>
    %294 = vector.multi_reduction <maximumf>, %293, %cst_113 [1, 2] : vector<1x1x16xf32> to vector<1xf32>
    %295 = vector.shape_cast %294 : vector<1xf32> to vector<1x1x1xf32>
    %296 = vector.extract %295[0, 0, 0] : f32 from vector<1x1x1xf32>
    %297 = vector.broadcast %296 : f32 to vector<1x1xf32>
    %298 = arith.mulf %297, %116 : vector<1x1xf32>
    %299 = arith.addf %292, %298 : vector<1x1xf32>
    %cst_114 = arith.constant 0.000000e+00 : f32
    %300 = vector.broadcast %cst_114 : f32 to vector<1x1xf32>
    %301 = arith.subf %300, %299 : vector<1x1xf32>
    %302 = math.exp %301 : vector<1x1xf32>
    %cst_115 = arith.constant 1.000000e+00 : f32
    %303 = vector.broadcast %cst_115 : f32 to vector<1x1xf32>
    %304 = arith.addf %303, %302 : vector<1x1xf32>
    %cst_116 = arith.constant 1.000000e+00 : f32
    %305 = vector.broadcast %cst_116 : f32 to vector<1x1xf32>
    %306 = arith.divf %305, %304 : vector<1x1xf32>
    %c80_i32_117 = arith.constant 80 : i32
    %307 = vector.broadcast %c80_i32_117 : i32 to vector<1x128xi32>
    %308 = arith.cmpi sge, %117, %307 : vector<1x128xi32>
    %c96_i32 = arith.constant 96 : i32
    %309 = vector.broadcast %c96_i32 : i32 to vector<1x128xi32>
    %310 = arith.cmpi slt, %117, %309 : vector<1x128xi32>
    %311 = arith.andi %308, %310 : vector<1x128xi1>
    %cst_118 = arith.constant 0.000000e+00 : f32
    %312 = vector.shape_cast %306 : vector<1x1xf32> to vector<1x1xf32>
    %313 = vector.broadcast %312 : vector<1x1xf32> to vector<1x128xf32>
    %314 = vector.broadcast %cst_118 : f32 to vector<1x128xf32>
    %315 = arith.select %311, %313, %314 : vector<1x128xi1>, vector<1x128xf32>
    %316 = arith.addf %283, %315 : vector<1x128xf32>
    %317 = vector.extract_strided_slice %114 {offsets = [0, 96], sizes = [1, 16], strides = [1, 1]} : vector<1x128xf32> to vector<1x16xf32>
    %318 = vector.shape_cast %317 : vector<1x16xf32> to vector<1x1x16xf32>
    %cst_119 = arith.constant dense<0.000000e+00> : vector<1xf32>
    %319 = vector.multi_reduction <add>, %318, %cst_119 [1, 2] : vector<1x1x16xf32> to vector<1xf32>
    %320 = vector.shape_cast %319 : vector<1xf32> to vector<1x1x1xf32>
    %321 = vector.extract %320[0, 0, 0] : f32 from vector<1x1x1xf32>
    %322 = vector.broadcast %321 : f32 to vector<1x1xf32>
    %cst_120 = arith.constant 1.600000e+01 : f32
    %323 = vector.broadcast %cst_120 : f32 to vector<1x1xf32>
    %324 = arith.divf %322, %323 : vector<1x1xf32>
    %325 = arith.mulf %324, %115 : vector<1x1xf32>
    %326 = vector.shape_cast %317 : vector<1x16xf32> to vector<1x1x16xf32>
    %cst_121 = arith.constant dense<0xFF800000> : vector<1xf32>
    %327 = vector.multi_reduction <maximumf>, %326, %cst_121 [1, 2] : vector<1x1x16xf32> to vector<1xf32>
    %328 = vector.shape_cast %327 : vector<1xf32> to vector<1x1x1xf32>
    %329 = vector.extract %328[0, 0, 0] : f32 from vector<1x1x1xf32>
    %330 = vector.broadcast %329 : f32 to vector<1x1xf32>
    %331 = arith.mulf %330, %116 : vector<1x1xf32>
    %332 = arith.addf %325, %331 : vector<1x1xf32>
    %cst_122 = arith.constant 0.000000e+00 : f32
    %333 = vector.broadcast %cst_122 : f32 to vector<1x1xf32>
    %334 = arith.subf %333, %332 : vector<1x1xf32>
    %335 = math.exp %334 : vector<1x1xf32>
    %cst_123 = arith.constant 1.000000e+00 : f32
    %336 = vector.broadcast %cst_123 : f32 to vector<1x1xf32>
    %337 = arith.addf %336, %335 : vector<1x1xf32>
    %cst_124 = arith.constant 1.000000e+00 : f32
    %338 = vector.broadcast %cst_124 : f32 to vector<1x1xf32>
    %339 = arith.divf %338, %337 : vector<1x1xf32>
    %c96_i32_125 = arith.constant 96 : i32
    %340 = vector.broadcast %c96_i32_125 : i32 to vector<1x128xi32>
    %341 = arith.cmpi sge, %117, %340 : vector<1x128xi32>
    %c112_i32 = arith.constant 112 : i32
    %342 = vector.broadcast %c112_i32 : i32 to vector<1x128xi32>
    %343 = arith.cmpi slt, %117, %342 : vector<1x128xi32>
    %344 = arith.andi %341, %343 : vector<1x128xi1>
    %cst_126 = arith.constant 0.000000e+00 : f32
    %345 = vector.shape_cast %339 : vector<1x1xf32> to vector<1x1xf32>
    %346 = vector.broadcast %345 : vector<1x1xf32> to vector<1x128xf32>
    %347 = vector.broadcast %cst_126 : f32 to vector<1x128xf32>
    %348 = arith.select %344, %346, %347 : vector<1x128xi1>, vector<1x128xf32>
    %349 = arith.addf %316, %348 : vector<1x128xf32>
    %350 = vector.extract_strided_slice %114 {offsets = [0, 112], sizes = [1, 16], strides = [1, 1]} : vector<1x128xf32> to vector<1x16xf32>
    %351 = vector.shape_cast %350 : vector<1x16xf32> to vector<1x1x16xf32>
    %cst_127 = arith.constant dense<0.000000e+00> : vector<1xf32>
    %352 = vector.multi_reduction <add>, %351, %cst_127 [1, 2] : vector<1x1x16xf32> to vector<1xf32>
    %353 = vector.shape_cast %352 : vector<1xf32> to vector<1x1x1xf32>
    %354 = vector.extract %353[0, 0, 0] : f32 from vector<1x1x1xf32>
    %355 = vector.broadcast %354 : f32 to vector<1x1xf32>
    %cst_128 = arith.constant 1.600000e+01 : f32
    %356 = vector.broadcast %cst_128 : f32 to vector<1x1xf32>
    %357 = arith.divf %355, %356 : vector<1x1xf32>
    %358 = arith.mulf %357, %115 : vector<1x1xf32>
    %359 = vector.shape_cast %350 : vector<1x16xf32> to vector<1x1x16xf32>
    %cst_129 = arith.constant dense<0xFF800000> : vector<1xf32>
    %360 = vector.multi_reduction <maximumf>, %359, %cst_129 [1, 2] : vector<1x1x16xf32> to vector<1xf32>
    %361 = vector.shape_cast %360 : vector<1xf32> to vector<1x1x1xf32>
    %362 = vector.extract %361[0, 0, 0] : f32 from vector<1x1x1xf32>
    %363 = vector.broadcast %362 : f32 to vector<1x1xf32>
    %364 = arith.mulf %363, %116 : vector<1x1xf32>
    %365 = arith.addf %358, %364 : vector<1x1xf32>
    %cst_130 = arith.constant 0.000000e+00 : f32
    %366 = vector.broadcast %cst_130 : f32 to vector<1x1xf32>
    %367 = arith.subf %366, %365 : vector<1x1xf32>
    %368 = math.exp %367 : vector<1x1xf32>
    %cst_131 = arith.constant 1.000000e+00 : f32
    %369 = vector.broadcast %cst_131 : f32 to vector<1x1xf32>
    %370 = arith.addf %369, %368 : vector<1x1xf32>
    %cst_132 = arith.constant 1.000000e+00 : f32
    %371 = vector.broadcast %cst_132 : f32 to vector<1x1xf32>
    %372 = arith.divf %371, %370 : vector<1x1xf32>
    %c112_i32_133 = arith.constant 112 : i32
    %373 = vector.broadcast %c112_i32_133 : i32 to vector<1x128xi32>
    %374 = arith.cmpi sge, %117, %373 : vector<1x128xi32>
    %c128_i32 = arith.constant 128 : i32
    %375 = vector.broadcast %c128_i32 : i32 to vector<1x128xi32>
    %376 = arith.cmpi slt, %117, %375 : vector<1x128xi32>
    %377 = arith.andi %374, %376 : vector<1x128xi1>
    %cst_134 = arith.constant 0.000000e+00 : f32
    %378 = vector.shape_cast %372 : vector<1x1xf32> to vector<1x1xf32>
    %379 = vector.broadcast %378 : vector<1x1xf32> to vector<1x128xf32>
    %380 = vector.broadcast %cst_134 : f32 to vector<1x128xf32>
    %381 = arith.select %377, %379, %380 : vector<1x128xi1>, vector<1x128xf32>
    %382 = arith.addf %349, %381 : vector<1x128xf32>
    %383 = vector.broadcast %382 : vector<1x128xf32> to vector<128x128xf32>
    %384 = arith.addf %91, %383 : vector<128x128xf32>
    %c0_135 = arith.constant 0 : index
    %c0_136 = arith.constant 0 : index
    %385 = vector.load %arg7[%c0_135, %c0_136] : memref<128x128xf32, #tpu.memory_space<vmem>>, vector<128x128xf32>
    %cst_137 = arith.constant dense<0.000000e+00> : vector<128x128xf32>
    %386 = tpu.matmul %385, %384, %cst_137 {dimension_numbers = #tpu.dot_dimension_numbers<[1], [0], [0], [1], [0, 0, 1, 1], [], []>} : vector<128x128xf32>, vector<128x128xf32>, vector<128x128xf32> -> vector<128x128xf32>
    %c0_138 = arith.constant 0 : index
    %c0_139 = arith.constant 0 : index
    %387 = vector.load %arg8[%c0_138, %c0_139] : memref<128x1xf32, #tpu.memory_space<vmem>>, vector<128x1xf32>
    %388 = vector.broadcast %387 : vector<128x1xf32> to vector<128x128xf32>
    %389 = arith.addf %386, %388 : vector<128x128xf32>
    %cst_140 = arith.constant 5.000000e-01 : f32
    %390 = vector.broadcast %cst_140 : f32 to vector<128x128xf32>
    %391 = arith.mulf %390, %389 : vector<128x128xf32>
    %cst_141 = arith.constant 0.707106769 : f32
    %392 = vector.broadcast %cst_141 : f32 to vector<128x128xf32>
    %393 = arith.mulf %389, %392 : vector<128x128xf32>
    %394 = math.erf %393 : vector<128x128xf32>
    %cst_142 = arith.constant 1.000000e+00 : f32
    %395 = vector.broadcast %cst_142 : f32 to vector<128x128xf32>
    %396 = arith.addf %395, %394 : vector<128x128xf32>
    %397 = arith.mulf %391, %396 : vector<128x128xf32>
    %cst_143 = arith.constant 0.000000e+00 : f32
    %398 = vector.broadcast %cst_143 : f32 to vector<2x20x128xf32>
    %c0_144 = arith.constant 0 : index
    %c0_145 = arith.constant 0 : index
    %c0_146 = arith.constant 0 : index
    %399 = vector.load %arg17[%c0_144, %c0_145, %c0_146] : memref<12x20x128xf32, #tpu.memory_space<vmem>>, vector<2x20x128xf32>
    tpu.vector_store %arg17[%c0_144, %c0_145, %c0_146], %398 {strides = array<i32>} : memref<12x20x128xf32, #tpu.memory_space<vmem>>, vector<2x20x128xf32>,
    %cst_147 = arith.constant 0.000000e+00 : f32
    %400 = vector.broadcast %cst_147 : f32 to vector<2x20x128xf32>
    %c10 = arith.constant 10 : index
    %c0_148 = arith.constant 0 : index
    %c0_149 = arith.constant 0 : index
    %401 = vector.load %arg17[%c10, %c0_148, %c0_149] : memref<12x20x128xf32, #tpu.memory_space<vmem>>, vector<2x20x128xf32>
    tpu.vector_store %arg17[%c10, %c0_148, %c0_149], %400 {strides = array<i32>} : memref<12x20x128xf32, #tpu.memory_space<vmem>>, vector<2x20x128xf32>,
    %cst_150 = arith.constant 0.000000e+00 : f32
    %402 = vector.broadcast %cst_150 : f32 to vector<8x2x128xf32>
    %c2_151 = arith.constant 2 : index
    %c0_152 = arith.constant 0 : index
    %c0_153 = arith.constant 0 : index
    %403 = vector.load %arg17[%c2_151, %c0_152, %c0_153] : memref<12x20x128xf32, #tpu.memory_space<vmem>>, vector<8x2x128xf32>
    tpu.vector_store %arg17[%c2_151, %c0_152, %c0_153], %402 {strides = array<i32>} : memref<12x20x128xf32, #tpu.memory_space<vmem>>, vector<8x2x128xf32>,
    %cst_154 = arith.constant 0.000000e+00 : f32
    %404 = vector.broadcast %cst_154 : f32 to vector<8x2x128xf32>
    %c2_155 = arith.constant 2 : index
    %c18 = arith.constant 18 : index
    %c0_156 = arith.constant 0 : index
    %405 = vector.load %arg17[%c2_155, %c18, %c0_156] : memref<12x20x128xf32, #tpu.memory_space<vmem>>, vector<8x2x128xf32>
    tpu.vector_store %arg17[%c2_155, %c18, %c0_156], %404 {strides = array<i32>} : memref<12x20x128xf32, #tpu.memory_space<vmem>>, vector<8x2x128xf32>,
    %406 = vector.shape_cast %397 : vector<128x128xf32> to vector<8x16x128xf32>
    %c2_157 = arith.constant 2 : index
    %c2_158 = arith.constant 2 : index
    %c0_159 = arith.constant 0 : index
    %407 = vector.load %arg17[%c2_157, %c2_158, %c0_159] : memref<12x20x128xf32, #tpu.memory_space<vmem>>, vector<8x16x128xf32>
    tpu.vector_store %arg17[%c2_157, %c2_158, %c0_159], %406 {strides = array<i32>} : memref<12x20x128xf32, #tpu.memory_space<vmem>>, vector<8x16x128xf32>,
    %c0_160 = arith.constant 0 : index
    %c0_161 = arith.constant 0 : index
    %408 = vector.load %arg9[%c0_160, %c0_161] : memref<2x128xf32, #tpu.memory_space<vmem>>, vector<2x128xf32>
    %409 = vector.extract_strided_slice %408 {offsets = [0, 0], sizes = [1, 128], strides = [1, 1]} : vector<2x128xf32> to vector<1x128xf32>
    %410 = vector.shape_cast %409 : vector<1x128xf32> to vector<128xf32>
    %411 = vector.shape_cast %410 : vector<128xf32> to vector<1x128xf32>
    %412 = vector.broadcast %411 : vector<1x128xf32> to vector<128x128xf32>
    %413 = arith.mulf %397, %412 : vector<128x128xf32>
    %414 = vector.extract_strided_slice %408 {offsets = [1, 0], sizes = [1, 128], strides = [1, 1]} : vector<2x128xf32> to vector<1x128xf32>
    %415 = vector.shape_cast %414 : vector<1x128xf32> to vector<128xf32>
    %416 = vector.shape_cast %415 : vector<128xf32> to vector<1x128xf32>
    %417 = vector.broadcast %416 : vector<1x128xf32> to vector<128x128xf32>
    %418 = arith.addf %413, %417 : vector<128x128xf32>
    %cst_162 = arith.constant 0.000000e+00 : f32
    %cst_163 = arith.constant 6.000000e+00 : f32
    %419 = vector.broadcast %cst_162 : f32 to vector<128x128xf32>
    %420 = arith.maximumf %419, %418 : vector<128x128xf32>
    %421 = vector.broadcast %cst_163 : f32 to vector<128x128xf32>
    %422 = arith.minimumf %421, %420 : vector<128x128xf32>
    %423 = arith.addf %397, %422 : vector<128x128xf32>
    %c0_164 = arith.constant 0 : index
    %c0_165 = arith.constant 0 : index
    %424 = vector.load %arg10[%c0_164, %c0_165] : memref<10x128xf32, #tpu.memory_space<vmem>>, vector<10x128xf32>
    %c1_166 = arith.constant 1 : index
    %c1_167 = arith.constant 1 : index
    %c0_168 = arith.constant 0 : index
    %425 = vector.load %arg17[%c1_166, %c1_167, %c0_168] : memref<12x20x128xf32, #tpu.memory_space<vmem>>, vector<8x16x128xf32>
    %426 = vector.extract_strided_slice %424 {offsets = [0, 0], sizes = [1, 128], strides = [1, 1]} : vector<10x128xf32> to vector<1x128xf32>
    %427 = vector.shape_cast %426 : vector<1x128xf32> to vector<128xf32>
    %428 = vector.shape_cast %427 : vector<128xf32> to vector<1x1x128xf32>
    %429 = vector.broadcast %428 : vector<1x1x128xf32> to vector<8x16x128xf32>
    %430 = arith.mulf %425, %429 : vector<8x16x128xf32>
    %c1_169 = arith.constant 1 : index
    %c2_170 = arith.constant 2 : index
    %c0_171 = arith.constant 0 : index
    %431 = vector.load %arg17[%c1_169, %c2_170, %c0_171] : memref<12x20x128xf32, #tpu.memory_space<vmem>>, vector<8x16x128xf32>
    %432 = vector.extract_strided_slice %424 {offsets = [1, 0], sizes = [1, 128], strides = [1, 1]} : vector<10x128xf32> to vector<1x128xf32>
    %433 = vector.shape_cast %432 : vector<1x128xf32> to vector<128xf32>
    %434 = vector.shape_cast %433 : vector<128xf32> to vector<1x1x128xf32>
    %435 = vector.broadcast %434 : vector<1x1x128xf32> to vector<8x16x128xf32>
    %436 = arith.mulf %431, %435 : vector<8x16x128xf32>
    %437 = arith.addf %430, %436 : vector<8x16x128xf32>
    %c1_172 = arith.constant 1 : index
    %c3 = arith.constant 3 : index
    %c0_173 = arith.constant 0 : index
    %438 = vector.load %arg17[%c1_172, %c3, %c0_173] : memref<12x20x128xf32, #tpu.memory_space<vmem>>, vector<8x16x128xf32>
    %439 = vector.extract_strided_slice %424 {offsets = [2, 0], sizes = [1, 128], strides = [1, 1]} : vector<10x128xf32> to vector<1x128xf32>
    %440 = vector.shape_cast %439 : vector<1x128xf32> to vector<128xf32>
    %441 = vector.shape_cast %440 : vector<128xf32> to vector<1x1x128xf32>
    %442 = vector.broadcast %441 : vector<1x1x128xf32> to vector<8x16x128xf32>
    %443 = arith.mulf %438, %442 : vector<8x16x128xf32>
    %444 = arith.addf %437, %443 : vector<8x16x128xf32>
    %c2_174 = arith.constant 2 : index
    %c1_175 = arith.constant 1 : index
    %c0_176 = arith.constant 0 : index
    %445 = vector.load %arg17[%c2_174, %c1_175, %c0_176] : memref<12x20x128xf32, #tpu.memory_space<vmem>>, vector<8x16x128xf32>
    %446 = vector.extract_strided_slice %424 {offsets = [3, 0], sizes = [1, 128], strides = [1, 1]} : vector<10x128xf32> to vector<1x128xf32>
    %447 = vector.shape_cast %446 : vector<1x128xf32> to vector<128xf32>
    %448 = vector.shape_cast %447 : vector<128xf32> to vector<1x1x128xf32>
    %449 = vector.broadcast %448 : vector<1x1x128xf32> to vector<8x16x128xf32>
    %450 = arith.mulf %445, %449 : vector<8x16x128xf32>
    %451 = arith.addf %444, %450 : vector<8x16x128xf32>
    %c2_177 = arith.constant 2 : index
    %c2_178 = arith.constant 2 : index
    %c0_179 = arith.constant 0 : index
    %452 = vector.load %arg17[%c2_177, %c2_178, %c0_179] : memref<12x20x128xf32, #tpu.memory_space<vmem>>, vector<8x16x128xf32>
    %453 = vector.extract_strided_slice %424 {offsets = [4, 0], sizes = [1, 128], strides = [1, 1]} : vector<10x128xf32> to vector<1x128xf32>
    %454 = vector.shape_cast %453 : vector<1x128xf32> to vector<128xf32>
    %455 = vector.shape_cast %454 : vector<128xf32> to vector<1x1x128xf32>
    %456 = vector.broadcast %455 : vector<1x1x128xf32> to vector<8x16x128xf32>
    %457 = arith.mulf %452, %456 : vector<8x16x128xf32>
    %458 = arith.addf %451, %457 : vector<8x16x128xf32>
    %c2_180 = arith.constant 2 : index
    %c3_181 = arith.constant 3 : index
    %c0_182 = arith.constant 0 : index
    %459 = vector.load %arg17[%c2_180, %c3_181, %c0_182] : memref<12x20x128xf32, #tpu.memory_space<vmem>>, vector<8x16x128xf32>
    %460 = vector.extract_strided_slice %424 {offsets = [5, 0], sizes = [1, 128], strides = [1, 1]} : vector<10x128xf32> to vector<1x128xf32>
    %461 = vector.shape_cast %460 : vector<1x128xf32> to vector<128xf32>
    %462 = vector.shape_cast %461 : vector<128xf32> to vector<1x1x128xf32>
    %463 = vector.broadcast %462 : vector<1x1x128xf32> to vector<8x16x128xf32>
    %464 = arith.mulf %459, %463 : vector<8x16x128xf32>
    %465 = arith.addf %458, %464 : vector<8x16x128xf32>
    %c3_183 = arith.constant 3 : index
    %c1_184 = arith.constant 1 : index
    %c0_185 = arith.constant 0 : index
    %466 = vector.load %arg17[%c3_183, %c1_184, %c0_185] : memref<12x20x128xf32, #tpu.memory_space<vmem>>, vector<8x16x128xf32>
    %467 = vector.extract_strided_slice %424 {offsets = [6, 0], sizes = [1, 128], strides = [1, 1]} : vector<10x128xf32> to vector<1x128xf32>
    %468 = vector.shape_cast %467 : vector<1x128xf32> to vector<128xf32>
    %469 = vector.shape_cast %468 : vector<128xf32> to vector<1x1x128xf32>
    %470 = vector.broadcast %469 : vector<1x1x128xf32> to vector<8x16x128xf32>
    %471 = arith.mulf %466, %470 : vector<8x16x128xf32>
    %472 = arith.addf %465, %471 : vector<8x16x128xf32>
    %c3_186 = arith.constant 3 : index
    %c2_187 = arith.constant 2 : index
    %c0_188 = arith.constant 0 : index
    %473 = vector.load %arg17[%c3_186, %c2_187, %c0_188] : memref<12x20x128xf32, #tpu.memory_space<vmem>>, vector<8x16x128xf32>
    %474 = vector.extract_strided_slice %424 {offsets = [7, 0], sizes = [1, 128], strides = [1, 1]} : vector<10x128xf32> to vector<1x128xf32>
    %475 = vector.shape_cast %474 : vector<1x128xf32> to vector<128xf32>
    %476 = vector.shape_cast %475 : vector<128xf32> to vector<1x1x128xf32>
    %477 = vector.broadcast %476 : vector<1x1x128xf32> to vector<8x16x128xf32>
    %478 = arith.mulf %473, %477 : vector<8x16x128xf32>
    %479 = arith.addf %472, %478 : vector<8x16x128xf32>
    %c3_189 = arith.constant 3 : index
    %c3_190 = arith.constant 3 : index
    %c0_191 = arith.constant 0 : index
    %480 = vector.load %arg17[%c3_189, %c3_190, %c0_191] : memref<12x20x128xf32, #tpu.memory_space<vmem>>, vector<8x16x128xf32>
    %481 = vector.extract_strided_slice %424 {offsets = [8, 0], sizes = [1, 128], strides = [1, 1]} : vector<10x128xf32> to vector<1x128xf32>
    %482 = vector.shape_cast %481 : vector<1x128xf32> to vector<128xf32>
    %483 = vector.shape_cast %482 : vector<128xf32> to vector<1x1x128xf32>
    %484 = vector.broadcast %483 : vector<1x1x128xf32> to vector<8x16x128xf32>
    %485 = arith.mulf %480, %484 : vector<8x16x128xf32>
    %486 = arith.addf %479, %485 : vector<8x16x128xf32>
    %487 = vector.extract_strided_slice %424 {offsets = [9, 0], sizes = [1, 128], strides = [1, 1]} : vector<10x128xf32> to vector<1x128xf32>
    %488 = vector.shape_cast %487 : vector<1x128xf32> to vector<128xf32>
    %489 = vector.shape_cast %488 : vector<128xf32> to vector<1x1x128xf32>
    %490 = vector.broadcast %489 : vector<1x1x128xf32> to vector<8x16x128xf32>
    %491 = arith.addf %486, %490 : vector<8x16x128xf32>
    %cst_192 = arith.constant 0.000000e+00 : f32
    %cst_193 = arith.constant 6.000000e+00 : f32
    %492 = vector.broadcast %cst_192 : f32 to vector<8x16x128xf32>
    %493 = arith.maximumf %492, %491 : vector<8x16x128xf32>
    %494 = vector.broadcast %cst_193 : f32 to vector<8x16x128xf32>
    %495 = arith.minimumf %494, %493 : vector<8x16x128xf32>
    %496 = vector.shape_cast %495 : vector<8x16x128xf32> to vector<128x128xf32>
    %497 = arith.addf %423, %496 : vector<128x128xf32>
    %c0_194 = arith.constant 0 : index
    %c0_195 = arith.constant 0 : index
    %498 = vector.load %arg11[%c0_194, %c0_195] : memref<26x128xf32, #tpu.memory_space<vmem>>, vector<26x128xf32>
    %c0_196 = arith.constant 0 : index
    %c0_197 = arith.constant 0 : index
    %c0_198 = arith.constant 0 : index
    %499 = vector.load %arg17[%c0_196, %c0_197, %c0_198] : memref<12x20x128xf32, #tpu.memory_space<vmem>>, vector<8x16x128xf32>
    %500 = vector.extract_strided_slice %498 {offsets = [0, 0], sizes = [1, 128], strides = [1, 1]} : vector<26x128xf32> to vector<1x128xf32>
    %501 = vector.shape_cast %500 : vector<1x128xf32> to vector<128xf32>
    %502 = vector.shape_cast %501 : vector<128xf32> to vector<1x1x128xf32>
    %503 = vector.broadcast %502 : vector<1x1x128xf32> to vector<8x16x128xf32>
    %504 = arith.mulf %499, %503 : vector<8x16x128xf32>
    %c0_199 = arith.constant 0 : index
    %c1_200 = arith.constant 1 : index
    %c0_201 = arith.constant 0 : index
    %505 = vector.load %arg17[%c0_199, %c1_200, %c0_201] : memref<12x20x128xf32, #tpu.memory_space<vmem>>, vector<8x16x128xf32>
    %506 = vector.extract_strided_slice %498 {offsets = [1, 0], sizes = [1, 128], strides = [1, 1]} : vector<26x128xf32> to vector<1x128xf32>
    %507 = vector.shape_cast %506 : vector<1x128xf32> to vector<128xf32>
    %508 = vector.shape_cast %507 : vector<128xf32> to vector<1x1x128xf32>
    %509 = vector.broadcast %508 : vector<1x1x128xf32> to vector<8x16x128xf32>
    %510 = arith.mulf %505, %509 : vector<8x16x128xf32>
    %511 = arith.addf %504, %510 : vector<8x16x128xf32>
    %c0_202 = arith.constant 0 : index
    %c2_203 = arith.constant 2 : index
    %c0_204 = arith.constant 0 : index
    %512 = vector.load %arg17[%c0_202, %c2_203, %c0_204] : memref<12x20x128xf32, #tpu.memory_space<vmem>>, vector<8x16x128xf32>
    %513 = vector.extract_strided_slice %498 {offsets = [2, 0], sizes = [1, 128], strides = [1, 1]} : vector<26x128xf32> to vector<1x128xf32>
    %514 = vector.shape_cast %513 : vector<1x128xf32> to vector<128xf32>
    %515 = vector.shape_cast %514 : vector<128xf32> to vector<1x1x128xf32>
    %516 = vector.broadcast %515 : vector<1x1x128xf32> to vector<8x16x128xf32>
    %517 = arith.mulf %512, %516 : vector<8x16x128xf32>
    %518 = arith.addf %511, %517 : vector<8x16x128xf32>
    %c0_205 = arith.constant 0 : index
    %c3_206 = arith.constant 3 : index
    %c0_207 = arith.constant 0 : index
    %519 = vector.load %arg17[%c0_205, %c3_206, %c0_207] : memref<12x20x128xf32, #tpu.memory_space<vmem>>, vector<8x16x128xf32>
    %520 = vector.extract_strided_slice %498 {offsets = [3, 0], sizes = [1, 128], strides = [1, 1]} : vector<26x128xf32> to vector<1x128xf32>
    %521 = vector.shape_cast %520 : vector<1x128xf32> to vector<128xf32>
    %522 = vector.shape_cast %521 : vector<128xf32> to vector<1x1x128xf32>
    %523 = vector.broadcast %522 : vector<1x1x128xf32> to vector<8x16x128xf32>
    %524 = arith.mulf %519, %523 : vector<8x16x128xf32>
    %525 = arith.addf %518, %524 : vector<8x16x128xf32>
    %c0_208 = arith.constant 0 : index
    %c4 = arith.constant 4 : index
    %c0_209 = arith.constant 0 : index
    %526 = vector.load %arg17[%c0_208, %c4, %c0_209] : memref<12x20x128xf32, #tpu.memory_space<vmem>>, vector<8x16x128xf32>
    %527 = vector.extract_strided_slice %498 {offsets = [4, 0], sizes = [1, 128], strides = [1, 1]} : vector<26x128xf32> to vector<1x128xf32>
    %528 = vector.shape_cast %527 : vector<1x128xf32> to vector<128xf32>
    %529 = vector.shape_cast %528 : vector<128xf32> to vector<1x1x128xf32>
    %530 = vector.broadcast %529 : vector<1x1x128xf32> to vector<8x16x128xf32>
    %531 = arith.mulf %526, %530 : vector<8x16x128xf32>
    %532 = arith.addf %525, %531 : vector<8x16x128xf32>
    %c1_210 = arith.constant 1 : index
    %c0_211 = arith.constant 0 : index
    %c0_212 = arith.constant 0 : index
    %533 = vector.load %arg17[%c1_210, %c0_211, %c0_212] : memref<12x20x128xf32, #tpu.memory_space<vmem>>, vector<8x16x128xf32>
    %534 = vector.extract_strided_slice %498 {offsets = [5, 0], sizes = [1, 128], strides = [1, 1]} : vector<26x128xf32> to vector<1x128xf32>
    %535 = vector.shape_cast %534 : vector<1x128xf32> to vector<128xf32>
    %536 = vector.shape_cast %535 : vector<128xf32> to vector<1x1x128xf32>
    %537 = vector.broadcast %536 : vector<1x1x128xf32> to vector<8x16x128xf32>
    %538 = arith.mulf %533, %537 : vector<8x16x128xf32>
    %539 = arith.addf %532, %538 : vector<8x16x128xf32>
    %c1_213 = arith.constant 1 : index
    %c1_214 = arith.constant 1 : index
    %c0_215 = arith.constant 0 : index
    %540 = vector.load %arg17[%c1_213, %c1_214, %c0_215] : memref<12x20x128xf32, #tpu.memory_space<vmem>>, vector<8x16x128xf32>
    %541 = vector.extract_strided_slice %498 {offsets = [6, 0], sizes = [1, 128], strides = [1, 1]} : vector<26x128xf32> to vector<1x128xf32>
    %542 = vector.shape_cast %541 : vector<1x128xf32> to vector<128xf32>
    %543 = vector.shape_cast %542 : vector<128xf32> to vector<1x1x128xf32>
    %544 = vector.broadcast %543 : vector<1x1x128xf32> to vector<8x16x128xf32>
    %545 = arith.mulf %540, %544 : vector<8x16x128xf32>
    %546 = arith.addf %539, %545 : vector<8x16x128xf32>
    %c1_216 = arith.constant 1 : index
    %c2_217 = arith.constant 2 : index
    %c0_218 = arith.constant 0 : index
    %547 = vector.load %arg17[%c1_216, %c2_217, %c0_218] : memref<12x20x128xf32, #tpu.memory_space<vmem>>, vector<8x16x128xf32>
    %548 = vector.extract_strided_slice %498 {offsets = [7, 0], sizes = [1, 128], strides = [1, 1]} : vector<26x128xf32> to vector<1x128xf32>
    %549 = vector.shape_cast %548 : vector<1x128xf32> to vector<128xf32>
    %550 = vector.shape_cast %549 : vector<128xf32> to vector<1x1x128xf32>
    %551 = vector.broadcast %550 : vector<1x1x128xf32> to vector<8x16x128xf32>
    %552 = arith.mulf %547, %551 : vector<8x16x128xf32>
    %553 = arith.addf %546, %552 : vector<8x16x128xf32>
    %c1_219 = arith.constant 1 : index
    %c3_220 = arith.constant 3 : index
    %c0_221 = arith.constant 0 : index
    %554 = vector.load %arg17[%c1_219, %c3_220, %c0_221] : memref<12x20x128xf32, #tpu.memory_space<vmem>>, vector<8x16x128xf32>
    %555 = vector.extract_strided_slice %498 {offsets = [8, 0], sizes = [1, 128], strides = [1, 1]} : vector<26x128xf32> to vector<1x128xf32>
    %556 = vector.shape_cast %555 : vector<1x128xf32> to vector<128xf32>
    %557 = vector.shape_cast %556 : vector<128xf32> to vector<1x1x128xf32>
    %558 = vector.broadcast %557 : vector<1x1x128xf32> to vector<8x16x128xf32>
    %559 = arith.mulf %554, %558 : vector<8x16x128xf32>
    %560 = arith.addf %553, %559 : vector<8x16x128xf32>
    %c1_222 = arith.constant 1 : index
    %c4_223 = arith.constant 4 : index
    %c0_224 = arith.constant 0 : index
    %561 = vector.load %arg17[%c1_222, %c4_223, %c0_224] : memref<12x20x128xf32, #tpu.memory_space<vmem>>, vector<8x16x128xf32>
    %562 = vector.extract_strided_slice %498 {offsets = [9, 0], sizes = [1, 128], strides = [1, 1]} : vector<26x128xf32> to vector<1x128xf32>
    %563 = vector.shape_cast %562 : vector<1x128xf32> to vector<128xf32>
    %564 = vector.shape_cast %563 : vector<128xf32> to vector<1x1x128xf32>
    %565 = vector.broadcast %564 : vector<1x1x128xf32> to vector<8x16x128xf32>
    %566 = arith.mulf %561, %565 : vector<8x16x128xf32>
    %567 = arith.addf %560, %566 : vector<8x16x128xf32>
    %c2_225 = arith.constant 2 : index
    %c0_226 = arith.constant 0 : index
    %c0_227 = arith.constant 0 : index
    %568 = vector.load %arg17[%c2_225, %c0_226, %c0_227] : memref<12x20x128xf32, #tpu.memory_space<vmem>>, vector<8x16x128xf32>
    %569 = vector.extract_strided_slice %498 {offsets = [10, 0], sizes = [1, 128], strides = [1, 1]} : vector<26x128xf32> to vector<1x128xf32>
    %570 = vector.shape_cast %569 : vector<1x128xf32> to vector<128xf32>
    %571 = vector.shape_cast %570 : vector<128xf32> to vector<1x1x128xf32>
    %572 = vector.broadcast %571 : vector<1x1x128xf32> to vector<8x16x128xf32>
    %573 = arith.mulf %568, %572 : vector<8x16x128xf32>
    %574 = arith.addf %567, %573 : vector<8x16x128xf32>
    %c2_228 = arith.constant 2 : index
    %c1_229 = arith.constant 1 : index
    %c0_230 = arith.constant 0 : index
    %575 = vector.load %arg17[%c2_228, %c1_229, %c0_230] : memref<12x20x128xf32, #tpu.memory_space<vmem>>, vector<8x16x128xf32>
    %576 = vector.extract_strided_slice %498 {offsets = [11, 0], sizes = [1, 128], strides = [1, 1]} : vector<26x128xf32> to vector<1x128xf32>
    %577 = vector.shape_cast %576 : vector<1x128xf32> to vector<128xf32>
    %578 = vector.shape_cast %577 : vector<128xf32> to vector<1x1x128xf32>
    %579 = vector.broadcast %578 : vector<1x1x128xf32> to vector<8x16x128xf32>
    %580 = arith.mulf %575, %579 : vector<8x16x128xf32>
    %581 = arith.addf %574, %580 : vector<8x16x128xf32>
    %c2_231 = arith.constant 2 : index
    %c2_232 = arith.constant 2 : index
    %c0_233 = arith.constant 0 : index
    %582 = vector.load %arg17[%c2_231, %c2_232, %c0_233] : memref<12x20x128xf32, #tpu.memory_space<vmem>>, vector<8x16x128xf32>
    %583 = vector.extract_strided_slice %498 {offsets = [12, 0], sizes = [1, 128], strides = [1, 1]} : vector<26x128xf32> to vector<1x128xf32>
    %584 = vector.shape_cast %583 : vector<1x128xf32> to vector<128xf32>
    %585 = vector.shape_cast %584 : vector<128xf32> to vector<1x1x128xf32>
    %586 = vector.broadcast %585 : vector<1x1x128xf32> to vector<8x16x128xf32>
    %587 = arith.mulf %582, %586 : vector<8x16x128xf32>
    %588 = arith.addf %581, %587 : vector<8x16x128xf32>
    %c2_234 = arith.constant 2 : index
    %c3_235 = arith.constant 3 : index
    %c0_236 = arith.constant 0 : index
    %589 = vector.load %arg17[%c2_234, %c3_235, %c0_236] : memref<12x20x128xf32, #tpu.memory_space<vmem>>, vector<8x16x128xf32>
    %590 = vector.extract_strided_slice %498 {offsets = [13, 0], sizes = [1, 128], strides = [1, 1]} : vector<26x128xf32> to vector<1x128xf32>
    %591 = vector.shape_cast %590 : vector<1x128xf32> to vector<128xf32>
    %592 = vector.shape_cast %591 : vector<128xf32> to vector<1x1x128xf32>
    %593 = vector.broadcast %592 : vector<1x1x128xf32> to vector<8x16x128xf32>
    %594 = arith.mulf %589, %593 : vector<8x16x128xf32>
    %595 = arith.addf %588, %594 : vector<8x16x128xf32>
    %c2_237 = arith.constant 2 : index
    %c4_238 = arith.constant 4 : index
    %c0_239 = arith.constant 0 : index
    %596 = vector.load %arg17[%c2_237, %c4_238, %c0_239] : memref<12x20x128xf32, #tpu.memory_space<vmem>>, vector<8x16x128xf32>
    %597 = vector.extract_strided_slice %498 {offsets = [14, 0], sizes = [1, 128], strides = [1, 1]} : vector<26x128xf32> to vector<1x128xf32>
    %598 = vector.shape_cast %597 : vector<1x128xf32> to vector<128xf32>
    %599 = vector.shape_cast %598 : vector<128xf32> to vector<1x1x128xf32>
    %600 = vector.broadcast %599 : vector<1x1x128xf32> to vector<8x16x128xf32>
    %601 = arith.mulf %596, %600 : vector<8x16x128xf32>
    %602 = arith.addf %595, %601 : vector<8x16x128xf32>
    %c3_240 = arith.constant 3 : index
    %c0_241 = arith.constant 0 : index
    %c0_242 = arith.constant 0 : index
    %603 = vector.load %arg17[%c3_240, %c0_241, %c0_242] : memref<12x20x128xf32, #tpu.memory_space<vmem>>, vector<8x16x128xf32>
    %604 = vector.extract_strided_slice %498 {offsets = [15, 0], sizes = [1, 128], strides = [1, 1]} : vector<26x128xf32> to vector<1x128xf32>
    %605 = vector.shape_cast %604 : vector<1x128xf32> to vector<128xf32>
    %606 = vector.shape_cast %605 : vector<128xf32> to vector<1x1x128xf32>
    %607 = vector.broadcast %606 : vector<1x1x128xf32> to vector<8x16x128xf32>
    %608 = arith.mulf %603, %607 : vector<8x16x128xf32>
    %609 = arith.addf %602, %608 : vector<8x16x128xf32>
    %c3_243 = arith.constant 3 : index
    %c1_244 = arith.constant 1 : index
    %c0_245 = arith.constant 0 : index
    %610 = vector.load %arg17[%c3_243, %c1_244, %c0_245] : memref<12x20x128xf32, #tpu.memory_space<vmem>>, vector<8x16x128xf32>
    %611 = vector.extract_strided_slice %498 {offsets = [16, 0], sizes = [1, 128], strides = [1, 1]} : vector<26x128xf32> to vector<1x128xf32>
    %612 = vector.shape_cast %611 : vector<1x128xf32> to vector<128xf32>
    %613 = vector.shape_cast %612 : vector<128xf32> to vector<1x1x128xf32>
    %614 = vector.broadcast %613 : vector<1x1x128xf32> to vector<8x16x128xf32>
    %615 = arith.mulf %610, %614 : vector<8x16x128xf32>
    %616 = arith.addf %609, %615 : vector<8x16x128xf32>
    %c3_246 = arith.constant 3 : index
    %c2_247 = arith.constant 2 : index
    %c0_248 = arith.constant 0 : index
    %617 = vector.load %arg17[%c3_246, %c2_247, %c0_248] : memref<12x20x128xf32, #tpu.memory_space<vmem>>, vector<8x16x128xf32>
    %618 = vector.extract_strided_slice %498 {offsets = [17, 0], sizes = [1, 128], strides = [1, 1]} : vector<26x128xf32> to vector<1x128xf32>
    %619 = vector.shape_cast %618 : vector<1x128xf32> to vector<128xf32>
    %620 = vector.shape_cast %619 : vector<128xf32> to vector<1x1x128xf32>
    %621 = vector.broadcast %620 : vector<1x1x128xf32> to vector<8x16x128xf32>
    %622 = arith.mulf %617, %621 : vector<8x16x128xf32>
    %623 = arith.addf %616, %622 : vector<8x16x128xf32>
    %c3_249 = arith.constant 3 : index
    %c3_250 = arith.constant 3 : index
    %c0_251 = arith.constant 0 : index
    %624 = vector.load %arg17[%c3_249, %c3_250, %c0_251] : memref<12x20x128xf32, #tpu.memory_space<vmem>>, vector<8x16x128xf32>
    %625 = vector.extract_strided_slice %498 {offsets = [18, 0], sizes = [1, 128], strides = [1, 1]} : vector<26x128xf32> to vector<1x128xf32>
    %626 = vector.shape_cast %625 : vector<1x128xf32> to vector<128xf32>
    %627 = vector.shape_cast %626 : vector<128xf32> to vector<1x1x128xf32>
    %628 = vector.broadcast %627 : vector<1x1x128xf32> to vector<8x16x128xf32>
    %629 = arith.mulf %624, %628 : vector<8x16x128xf32>
    %630 = arith.addf %623, %629 : vector<8x16x128xf32>
    %c3_252 = arith.constant 3 : index
    %c4_253 = arith.constant 4 : index
    %c0_254 = arith.constant 0 : index
    %631 = vector.load %arg17[%c3_252, %c4_253, %c0_254] : memref<12x20x128xf32, #tpu.memory_space<vmem>>, vector<8x16x128xf32>
    %632 = vector.extract_strided_slice %498 {offsets = [19, 0], sizes = [1, 128], strides = [1, 1]} : vector<26x128xf32> to vector<1x128xf32>
    %633 = vector.shape_cast %632 : vector<1x128xf32> to vector<128xf32>
    %634 = vector.shape_cast %633 : vector<128xf32> to vector<1x1x128xf32>
    %635 = vector.broadcast %634 : vector<1x1x128xf32> to vector<8x16x128xf32>
    %636 = arith.mulf %631, %635 : vector<8x16x128xf32>
    %637 = arith.addf %630, %636 : vector<8x16x128xf32>
    %c4_255 = arith.constant 4 : index
    %c0_256 = arith.constant 0 : index
    %c0_257 = arith.constant 0 : index
    %638 = vector.load %arg17[%c4_255, %c0_256, %c0_257] : memref<12x20x128xf32, #tpu.memory_space<vmem>>, vector<8x16x128xf32>
    %639 = vector.extract_strided_slice %498 {offsets = [20, 0], sizes = [1, 128], strides = [1, 1]} : vector<26x128xf32> to vector<1x128xf32>
    %640 = vector.shape_cast %639 : vector<1x128xf32> to vector<128xf32>
    %641 = vector.shape_cast %640 : vector<128xf32> to vector<1x1x128xf32>
    %642 = vector.broadcast %641 : vector<1x1x128xf32> to vector<8x16x128xf32>
    %643 = arith.mulf %638, %642 : vector<8x16x128xf32>
    %644 = arith.addf %637, %643 : vector<8x16x128xf32>
    %c4_258 = arith.constant 4 : index
    %c1_259 = arith.constant 1 : index
    %c0_260 = arith.constant 0 : index
    %645 = vector.load %arg17[%c4_258, %c1_259, %c0_260] : memref<12x20x128xf32, #tpu.memory_space<vmem>>, vector<8x16x128xf32>
    %646 = vector.extract_strided_slice %498 {offsets = [21, 0], sizes = [1, 128], strides = [1, 1]} : vector<26x128xf32> to vector<1x128xf32>
    %647 = vector.shape_cast %646 : vector<1x128xf32> to vector<128xf32>
    %648 = vector.shape_cast %647 : vector<128xf32> to vector<1x1x128xf32>
    %649 = vector.broadcast %648 : vector<1x1x128xf32> to vector<8x16x128xf32>
    %650 = arith.mulf %645, %649 : vector<8x16x128xf32>
    %651 = arith.addf %644, %650 : vector<8x16x128xf32>
    %c4_261 = arith.constant 4 : index
    %c2_262 = arith.constant 2 : index
    %c0_263 = arith.constant 0 : index
    %652 = vector.load %arg17[%c4_261, %c2_262, %c0_263] : memref<12x20x128xf32, #tpu.memory_space<vmem>>, vector<8x16x128xf32>
    %653 = vector.extract_strided_slice %498 {offsets = [22, 0], sizes = [1, 128], strides = [1, 1]} : vector<26x128xf32> to vector<1x128xf32>
    %654 = vector.shape_cast %653 : vector<1x128xf32> to vector<128xf32>
    %655 = vector.shape_cast %654 : vector<128xf32> to vector<1x1x128xf32>
    %656 = vector.broadcast %655 : vector<1x1x128xf32> to vector<8x16x128xf32>
    %657 = arith.mulf %652, %656 : vector<8x16x128xf32>
    %658 = arith.addf %651, %657 : vector<8x16x128xf32>
    %c4_264 = arith.constant 4 : index
    %c3_265 = arith.constant 3 : index
    %c0_266 = arith.constant 0 : index
    %659 = vector.load %arg17[%c4_264, %c3_265, %c0_266] : memref<12x20x128xf32, #tpu.memory_space<vmem>>, vector<8x16x128xf32>
    %660 = vector.extract_strided_slice %498 {offsets = [23, 0], sizes = [1, 128], strides = [1, 1]} : vector<26x128xf32> to vector<1x128xf32>
    %661 = vector.shape_cast %660 : vector<1x128xf32> to vector<128xf32>
    %662 = vector.shape_cast %661 : vector<128xf32> to vector<1x1x128xf32>
    %663 = vector.broadcast %662 : vector<1x1x128xf32> to vector<8x16x128xf32>
    %664 = arith.mulf %659, %663 : vector<8x16x128xf32>
    %665 = arith.addf %658, %664 : vector<8x16x128xf32>
    %c4_267 = arith.constant 4 : index
    %c4_268 = arith.constant 4 : index
    %c0_269 = arith.constant 0 : index
    %666 = vector.load %arg17[%c4_267, %c4_268, %c0_269] : memref<12x20x128xf32, #tpu.memory_space<vmem>>, vector<8x16x128xf32>
    %667 = vector.extract_strided_slice %498 {offsets = [24, 0], sizes = [1, 128], strides = [1, 1]} : vector<26x128xf32> to vector<1x128xf32>
    %668 = vector.shape_cast %667 : vector<1x128xf32> to vector<128xf32>
    %669 = vector.shape_cast %668 : vector<128xf32> to vector<1x1x128xf32>
    %670 = vector.broadcast %669 : vector<1x1x128xf32> to vector<8x16x128xf32>
    %671 = arith.mulf %666, %670 : vector<8x16x128xf32>
    %672 = arith.addf %665, %671 : vector<8x16x128xf32>
    %673 = vector.extract_strided_slice %498 {offsets = [25, 0], sizes = [1, 128], strides = [1, 1]} : vector<26x128xf32> to vector<1x128xf32>
    %674 = vector.shape_cast %673 : vector<1x128xf32> to vector<128xf32>
    %675 = vector.shape_cast %674 : vector<128xf32> to vector<1x1x128xf32>
    %676 = vector.broadcast %675 : vector<1x1x128xf32> to vector<8x16x128xf32>
    %677 = arith.addf %672, %676 : vector<8x16x128xf32>
    %cst_270 = arith.constant 0.000000e+00 : f32
    %cst_271 = arith.constant 6.000000e+00 : f32
    %678 = vector.broadcast %cst_270 : f32 to vector<8x16x128xf32>
    %679 = arith.maximumf %678, %677 : vector<8x16x128xf32>
    %680 = vector.broadcast %cst_271 : f32 to vector<8x16x128xf32>
    %681 = arith.minimumf %680, %679 : vector<8x16x128xf32>
    %682 = vector.shape_cast %681 : vector<8x16x128xf32> to vector<128x128xf32>
    %683 = arith.addf %497, %682 : vector<128x128xf32>
    %684 = tpu.transpose %683, [1, 0] : vector<128x128xf32> -> vector<128x128xf32>
    %c0_272 = arith.constant 0 : index
    %c0_273 = arith.constant 0 : index
    %685 = vector.load %arg13[%c0_272, %c0_273] : memref<128x192xf32, #tpu.memory_space<vmem>>, vector<128x192xf32>
    %cst_274 = arith.constant dense<0.000000e+00> : vector<128x192xf32>
    %686 = tpu.matmul %684, %685, %cst_274 {dimension_numbers = #tpu.dot_dimension_numbers<[1], [0], [0], [1], [0, 0, 1, 1], [], []>} : vector<128x128xf32>, vector<128x192xf32>, vector<128x192xf32> -> vector<128x192xf32>
    %c0_275 = arith.constant 0 : index
    %c0_276 = arith.constant 0 : index
    %687 = vector.load %arg12[%c0_275, %c0_276] : memref<128x128xf32, #tpu.memory_space<vmem>>, vector<128x128xf32>
    %cst_277 = arith.constant dense<0.000000e+00> : vector<128x192xf32>
    %688 = tpu.matmul %687, %686, %cst_277 {dimension_numbers = #tpu.dot_dimension_numbers<[1], [0], [0], [1], [0, 0, 1, 1], [], []>} : vector<128x128xf32>, vector<128x192xf32>, vector<128x192xf32> -> vector<128x192xf32>
    %c0_278 = arith.constant 0 : index
    %c0_279 = arith.constant 0 : index
    %689 = vector.load %arg14[%c0_278, %c0_279] : memref<1x192xf32, #tpu.memory_space<vmem>>, vector<1x192xf32>
    %690 = vector.broadcast %689 : vector<1x192xf32> to vector<128x192xf32>
    %691 = arith.addf %688, %690 : vector<128x192xf32>
    %c0_280 = arith.constant 0 : index
    %c0_281 = arith.constant 0 : index
    %c0_282 = arith.constant 0 : index
    %692 = vector.load %arg15[%c0_280, %c0_281, %c0_282] : memref<1x128x192xf32, #tpu.memory_space<vmem>>, vector<1x128x192xf32>
    %693 = vector.shape_cast %692 : vector<1x128x192xf32> to vector<128x192xf32>
    %694 = vector.shape_cast %691 : vector<128x192xf32> to vector<1x128x192xf32>
    tpu.vector_store %arg15[%c0_280, %c0_281, %c0_282], %694 {strides = array<i32>} : memref<1x128x192xf32, #tpu.memory_space<vmem>>, vector<1x128x192xf32>,
    return
  }
  func.func @transform_0(%arg0: i32) -> (i32, i32, i32, i32) {
    %c0_i32 = arith.constant 0 : i32
    %c0_i32_0 = arith.constant 0 : i32
    %c0_i32_1 = arith.constant 0 : i32
    %c0_i32_2 = arith.constant 0 : i32
    return %arg0, %c0_i32, %c0_i32_0, %c0_i32_1 : i32, i32, i32, i32
  }
  func.func @transform_1(%arg0: i32) -> (i32, i32) {
    %c0_i32 = arith.constant 0 : i32
    %c0_i32_0 = arith.constant 0 : i32
    %c0_i32_1 = arith.constant 0 : i32
    return %c0_i32, %c0_i32_0 : i32, i32
  }
  func.func @transform_2(%arg0: i32) -> (i32, i32) {
    %c0_i32 = arith.constant 0 : i32
    %c0_i32_0 = arith.constant 0 : i32
    %c0_i32_1 = arith.constant 0 : i32
    return %c0_i32, %c0_i32_0 : i32, i32
  }
  func.func @transform_3(%arg0: i32) -> (i32, i32) {
    %c0_i32 = arith.constant 0 : i32
    %c0_i32_0 = arith.constant 0 : i32
    %c0_i32_1 = arith.constant 0 : i32
    return %c0_i32, %c0_i32_0 : i32, i32
  }
  func.func @transform_4(%arg0: i32) -> (i32, i32) {
    %c0_i32 = arith.constant 0 : i32
    %c0_i32_0 = arith.constant 0 : i32
    %c0_i32_1 = arith.constant 0 : i32
    return %c0_i32, %c0_i32_0 : i32, i32
  }
  func.func @transform_5(%arg0: i32) -> (i32, i32) {
    %c0_i32 = arith.constant 0 : i32
    %c0_i32_0 = arith.constant 0 : i32
    %c0_i32_1 = arith.constant 0 : i32
    return %c0_i32, %c0_i32_0 : i32, i32
  }
  func.func @transform_6(%arg0: i32) -> (i32, i32) {
    %c0_i32 = arith.constant 0 : i32
    %c0_i32_0 = arith.constant 0 : i32
    %c0_i32_1 = arith.constant 0 : i32
    return %c0_i32, %c0_i32_0 : i32, i32
  }
  func.func @transform_7(%arg0: i32) -> (i32, i32) {
    %c0_i32 = arith.constant 0 : i32
    %c0_i32_0 = arith.constant 0 : i32
    %c0_i32_1 = arith.constant 0 : i32
    return %c0_i32, %c0_i32_0 : i32, i32
  }
  func.func @transform_8(%arg0: i32) -> (i32, i32) {
    %c0_i32 = arith.constant 0 : i32
    %c0_i32_0 = arith.constant 0 : i32
    %c0_i32_1 = arith.constant 0 : i32
    return %c0_i32, %c0_i32_0 : i32, i32
  }
  func.func @transform_9(%arg0: i32) -> (i32, i32) {
    %c0_i32 = arith.constant 0 : i32
    %c0_i32_0 = arith.constant 0 : i32
    %c0_i32_1 = arith.constant 0 : i32
    return %c0_i32, %c0_i32_0 : i32, i32
  }
  func.func @transform_10(%arg0: i32) -> (i32, i32) {
    %c0_i32 = arith.constant 0 : i32
    %c0_i32_0 = arith.constant 0 : i32
    %c0_i32_1 = arith.constant 0 : i32
    return %c0_i32, %c0_i32_0 : i32, i32
  }
  func.func @transform_11(%arg0: i32) -> (i32, i32) {
    %c0_i32 = arith.constant 0 : i32
    %c0_i32_0 = arith.constant 0 : i32
    %c0_i32_1 = arith.constant 0 : i32
    return %c0_i32, %c0_i32_0 : i32, i32
  }
  func.func @transform_12(%arg0: i32) -> (i32, i32) {
    %c0_i32 = arith.constant 0 : i32
    %c0_i32_0 = arith.constant 0 : i32
    %c0_i32_1 = arith.constant 0 : i32
    return %c0_i32, %c0_i32_0 : i32, i32
  }
  func.func @transform_13(%arg0: i32) -> (i32, i32) {
    %c0_i32 = arith.constant 0 : i32
    %c0_i32_0 = arith.constant 0 : i32
    %c0_i32_1 = arith.constant 0 : i32
    return %c0_i32, %c0_i32_0 : i32, i32
  }
  func.func @transform_14(%arg0: i32) -> (i32, i32, i32) {
    %c0_i32 = arith.constant 0 : i32
    %c0_i32_0 = arith.constant 0 : i32
    %c0_i32_1 = arith.constant 0 : i32
    return %arg0, %c0_i32, %c0_i32_0 : i32, i32, i32
  }
}

</mosaic_0001>

<llo_original>
// kernel: tile.49
$region0: #{tile.49}
  %s0 = inlined_call_operand.vmem [shape: f32[26,8,16], index: 0, kind: input, shape index: {}]
  %s1 = inlined_call_operand.vmem [shape: f32[26,128], index: 1, kind: output, shape index: {}]
  %v2 = vld [vmem:[%s0] ss:$8 sm:$0xf]
  %v3 = vld [vmem:[%s0] ss:$8 sm:$0xf0]
  %vm4 = vcmask 1047556
  %v5 = vsel %vm4, %v3, %v2
  %vm6 = vcmask 130048
  %7 = vst.msk [vmem:[%s1] sm:$0xff] %vm6, %v5
  %s8 = scalar_lea.vmem %s0, 64
  %v9 = vld [vmem:[%s8] ss:$8 sm:$0xf]
  %s10 = scalar_lea.vmem %s0, 64
  %v11 = vld [vmem:[%s10] ss:$8 sm:$0xf0]
  %vm12 = vcmask 1047556
  %v13 = vsel %vm12, %v11, %v9
  %vm14 = vcmask 130048
  %s15 = scalar_lea.vmem %s1, 8
  %16 = vst.msk [vmem:[%s15] sm:$0xff] %vm14, %v13
  %s17 = scalar_lea.vmem %s0, 128
  %v18 = vld [vmem:[%s17] ss:$8 sm:$0xf]
  %s19 = scalar_lea.vmem %s0, 128
  %v20 = vld [vmem:[%s19] ss:$8 sm:$0xf0]
  %vm21 = vcmask 1047556
  %v22 = vsel %vm21, %v20, %v18
  %vm23 = vcmask 130048
  %s24 = scalar_lea.vmem %s1, 16
  %25 = vst.msk [vmem:[%s24] sm:$0xff] %vm23, %v22
  %s26 = scalar_lea.vmem %s0, 192
  %s27 = smov 3
  %v28 = vld [vmem:[%s26] ss:$8 sm:%s27]
  %vm29 = vcmask 130048
  %s30 = scalar_lea.vmem %s1, 24
  %31 = vst.msk [vmem:[%s30] sm:$0x3] %vm29, %v28
  %s32 = scalar_lea.vmem %s0, 7
  %v33 = vld [vmem:[%s32] ss:$8 sm:$0xf]
  %s34 = scalar_lea.vmem %s0, 7
  %v35 = vld [vmem:[%s34] ss:$8 sm:$0xf0]
  %vm36 = vcmask 1047556
  %v37 = vsel %vm36, %v35, %v33
  %38 = vrot.lane.b32.xlu0 %v37, 112
  %v39 = vpop.permute.xlu0 %38
  %vm40 = vcmask 1048448
  %41 = vst.msk [vmem:[%s1] sm:$0xff] %vm40, %v39
  %s42 = scalar_lea.vmem %s0, 71
  %v43 = vld [vmem:[%s42] ss:$8 sm:$0xf]
  %s44 = scalar_lea.vmem %s0, 71
  %v45 = vld [vmem:[%s44] ss:$8 sm:$0xf0]
  %vm46 = vcmask 1047556
  %v47 = vsel %vm46, %v45, %v43
  %48 = vrot.lane.b32.xlu0 %v47, 112
  %v49 = vpop.permute.xlu0 %48
  %vm50 = vcmask 1048448
  %s51 = scalar_lea.vmem %s1, 8
  %52 = vst.msk [vmem:[%s51] sm:$0xff] %vm50, %v49
  %s53 = scalar_lea.vmem %s0, 135
  %v54 = vld [vmem:[%s53] ss:$8 sm:$0xf]
  %s55 = scalar_lea.vmem %s0, 135
  %v56 = vld [vmem:[%s55] ss:$8 sm:$0xf0]
  %vm57 = vcmask 1047556
  %v58 = vsel %vm57, %v56, %v54
  %59 = vrot.lane.b32.xlu0 %v58, 112
  %v60 = vpop.permute.xlu0 %59
  %vm61 = vcmask 1048448
  %s62 = scalar_lea.vmem %s1, 16
  %63 = vst.msk [vmem:[%s62] sm:$0xff] %vm61, %v60
  %s64 = scalar_lea.vmem %s0, 199
  %s65 = smov 3
  %v66 = vld [vmem:[%s64] ss:$8 sm:%s65]
  %67 = vrot.lane.b32.xlu0 %v66, 112
  %v68 = vpop.permute.xlu0 %67
  %vm69 = vcmask 1048448
  %s70 = scalar_lea.vmem %s1, 24
  %71 = vst.msk [vmem:[%s70] sm:$0x3] %vm69, %v68
  %s72 = scalar_lea.vmem %s0, 6
  %v73 = vld [vmem:[%s72] ss:$8 sm:$0xf]
  %s74 = scalar_lea.vmem %s0, 6
  %v75 = vld [vmem:[%s74] ss:$8 sm:$0xf0]
  %vm76 = vcmask 1047556
  %v77 = vsel %vm76, %v75, %v73
  %78 = vrot.lane.b32.xlu0 %v77, 96
  %v79 = vpop.permute.xlu0 %78
  %vm80 = vcmask 917248
  %81 = vst.msk [vmem:[%s1] sm:$0xff] %vm80, %v79
  %s82 = scalar_lea.vmem %s0, 70
  %v83 = vld [vmem:[%s82] ss:$8 sm:$0xf]
  %s84 = scalar_lea.vmem %s0, 70
  %v85 = vld [vmem:[%s84] ss:$8 sm:$0xf0]
  %vm86 = vcmask 1047556
  %v87 = vsel %vm86, %v85, %v83
  %88 = vrot.lane.b32.xlu0 %v87, 96
  %v89 = vpop.permute.xlu0 %88
  %vm90 = vcmask 917248
  %s91 = scalar_lea.vmem %s1, 8
  %92 = vst.msk [vmem:[%s91] sm:$0xff] %vm90, %v89
  %s93 = scalar_lea.vmem %s0, 134
  %v94 = vld [vmem:[%s93] ss:$8 sm:$0xf]
  %s95 = scalar_lea.vmem %s0, 134
  %v96 = vld [vmem:[%s95] ss:$8 sm:$0xf0]
  %vm97 = vcmask 1047556
  %v98 = vsel %vm97, %v96, %v94
  %99 = vrot.lane.b32.xlu0 %v98, 96
  %v100 = vpop.permute.xlu0 %99
  %vm101 = vcmask 917248
  %s102 = scalar_lea.vmem %s1, 16
  %103 = vst.msk [vmem:[%s102] sm:$0xff] %vm101, %v100
  %s104 = scalar_lea.vmem %s0, 198
  %s105 = smov 3
  %v106 = vld [vmem:[%s104] ss:$8 sm:%s105]
  %107 = vrot.lane.b32.xlu0 %v106, 96
  %v108 = vpop.permute.xlu0 %107
  %vm109 = vcmask 917248
  %s110 = scalar_lea.vmem %s1, 24
  %111 = vst.msk [vmem:[%s110] sm:$0x3] %vm109, %v108
  %s112 = scalar_lea.vmem %s0, 5
  %v113 = vld [vmem:[%s112] ss:$8 sm:$0xf]
  %s114 = scalar_lea.vmem %s0, 5
  %v115 = vld [vmem:[%s114] ss:$8 sm:$0xf0]
  %vm116 = vcmask 1047556
  %v117 = vsel %vm116, %v115, %v113
  %118 = vrot.lane.b32.xlu0 %v117, 80
  %v119 = vpop.permute.xlu0 %118
  %vm120 = vcmask 786048
  %121 = vst.msk [vmem:[%s1] sm:$0xff] %vm120, %v119
  %s122 = scalar_lea.vmem %s0, 69
  %v123 = vld [vmem:[%s122] ss:$8 sm:$0xf]
  %s124 = scalar_lea.vmem %s0, 69
  %v125 = vld [vmem:[%s124] ss:$8 sm:$0xf0]
  %vm126 = vcmask 1047556
  %v127 = vsel %vm126, %v125, %v123
  %128 = vrot.lane.b32.xlu0 %v127, 80
  %v129 = vpop.permute.xlu0 %128
  %vm130 = vcmask 786048
  %s131 = scalar_lea.vmem %s1, 8
  %132 = vst.msk [vmem:[%s131] sm:$0xff] %vm130, %v129
  %s133 = scalar_lea.vmem %s0, 133
  %v134 = vld [vmem:[%s133] ss:$8 sm:$0xf]
  %s135 = scalar_lea.vmem %s0, 133
  %v136 = vld [vmem:[%s135] ss:$8 sm:$0xf0]
  %vm137 = vcmask 1047556
  %v138 = vsel %vm137, %v136, %v134
  %139 = vrot.lane.b32.xlu0 %v138, 80
  %v140 = vpop.permute.xlu0 %139
  %vm141 = vcmask 786048
  %s142 = scalar_lea.vmem %s1, 16
  %143 = vst.msk [vmem:[%s142] sm:$0xff] %vm141, %v140
  %s144 = scalar_lea.vmem %s0, 197
  %s145 = smov 3
  %v146 = vld [vmem:[%s144] ss:$8 sm:%s145]
  %147 = vrot.lane.b32.xlu0 %v146, 80
  %v148 = vpop.permute.xlu0 %147
  %vm149 = vcmask 786048
  %s150 = scalar_lea.vmem %s1, 24
  %151 = vst.msk [vmem:[%s150] sm:$0x3] %vm149, %v148
  %s152 = scalar_lea.vmem %s0, 4
  %v153 = vld [vmem:[%s152] ss:$8 sm:$0xf]
  %s154 = scalar_lea.vmem %s0, 4
  %v155 = vld [vmem:[%s154] ss:$8 sm:$0xf0]
  %vm156 = vcmask 1047556
  %v157 = vsel %vm156, %v155, %v153
  %158 = vrot.lane.b32.xlu0 %v157, 64
  %v159 = vpop.permute.xlu0 %158
  %vm160 = vcmask 654848
  %161 = vst.msk [vmem:[%s1] sm:$0xff] %vm160, %v159
  %s162 = scalar_lea.vmem %s0, 68
  %v163 = vld [vmem:[%s162] ss:$8 sm:$0xf]
  %s164 = scalar_lea.vmem %s0, 68
  %v165 = vld [vmem:[%s164] ss:$8 sm:$0xf0]
  %vm166 = vcmask 1047556
  %v167 = vsel %vm166, %v165, %v163
  %168 = vrot.lane.b32.xlu0 %v167, 64
  %v169 = vpop.permute.xlu0 %168
  %vm170 = vcmask 654848
  %s171 = scalar_lea.vmem %s1, 8
  %172 = vst.msk [vmem:[%s171] sm:$0xff] %vm170, %v169
  %s173 = scalar_lea.vmem %s0, 132
  %v174 = vld [vmem:[%s173] ss:$8 sm:$0xf]
  %s175 = scalar_lea.vmem %s0, 132
  %v176 = vld [vmem:[%s175] ss:$8 sm:$0xf0]
  %vm177 = vcmask 1047556
  %v178 = vsel %vm177, %v176, %v174
  %179 = vrot.lane.b32.xlu0 %v178, 64
  %v180 = vpop.permute.xlu0 %179
  %vm181 = vcmask 654848
  %s182 = scalar_lea.vmem %s1, 16
  %183 = vst.msk [vmem:[%s182] sm:$0xff] %vm181, %v180
  %s184 = scalar_lea.vmem %s0, 196
  %s185 = smov 3
  %v186 = vld [vmem:[%s184] ss:$8 sm:%s185]
  %187 = vrot.lane.b32.xlu0 %v186, 64
  %v188 = vpop.permute.xlu0 %187
  %vm189 = vcmask 654848
  %s190 = scalar_lea.vmem %s1, 24
  %191 = vst.msk [vmem:[%s190] sm:$0x3] %vm189, %v188
  %s192 = scalar_lea.vmem %s0, 3
  %v193 = vld [vmem:[%s192] ss:$8 sm:$0xf]
  %s194 = scalar_lea.vmem %s0, 3
  %v195 = vld [vmem:[%s194] ss:$8 sm:$0xf0]
  %vm196 = vcmask 1047556
  %v197 = vsel %vm196, %v195, %v193
  %198 = vrot.lane.b32.xlu0 %v197, 48
  %v199 = vpop.permute.xlu0 %198
  %vm200 = vcmask 523648
  %201 = vst.msk [vmem:[%s1] sm:$0xff] %vm200, %v199
  %s202 = scalar_lea.vmem %s0, 67
  %v203 = vld [vmem:[%s202] ss:$8 sm:$0xf]
  %s204 = scalar_lea.vmem %s0, 67
  %v205 = vld [vmem:[%s204] ss:$8 sm:$0xf0]
  %vm206 = vcmask 1047556
  %v207 = vsel %vm206, %v205, %v203
  %208 = vrot.lane.b32.xlu0 %v207, 48
  %v209 = vpop.permute.xlu0 %208
  %vm210 = vcmask 523648
  %s211 = scalar_lea.vmem %s1, 8
  %212 = vst.msk [vmem:[%s211] sm:$0xff] %vm210, %v209
  %s213 = scalar_lea.vmem %s0, 131
  %v214 = vld [vmem:[%s213] ss:$8 sm:$0xf]
  %s215 = scalar_lea.vmem %s0, 131
  %v216 = vld [vmem:[%s215] ss:$8 sm:$0xf0]
  %vm217 = vcmask 1047556
  %v218 = vsel %vm217, %v216, %v214
  %219 = vrot.lane.b32.xlu0 %v218, 48
  %v220 = vpop.permute.xlu0 %219
  %vm221 = vcmask 523648
  %s222 = scalar_lea.vmem %s1, 16
  %223 = vst.msk [vmem:[%s222] sm:$0xff] %vm221, %v220
  %s224 = scalar_lea.vmem %s0, 195
  %s225 = smov 3
  %v226 = vld [vmem:[%s224] ss:$8 sm:%s225]
  %227 = vrot.lane.b32.xlu0 %v226, 48
  %v228 = vpop.permute.xlu0 %227
  %vm229 = vcmask 523648
  %s230 = scalar_lea.vmem %s1, 24
  %231 = vst.msk [vmem:[%s230] sm:$0x3] %vm229, %v228
  %s232 = scalar_lea.vmem %s0, 2
  %v233 = vld [vmem:[%s232] ss:$8 sm:$0xf]
  %s234 = scalar_lea.vmem %s0, 2
  %v235 = vld [vmem:[%s234] ss:$8 sm:$0xf0]
  %vm236 = vcmask 1047556
  %v237 = vsel %vm236, %v235, %v233
  %238 = vrot.lane.b32.xlu0 %v237, 32
  %v239 = vpop.permute.xlu0 %238
  %vm240 = vcmask 392448
  %241 = vst.msk [vmem:[%s1] sm:$0xff] %vm240, %v239
  %s242 = scalar_lea.vmem %s0, 66
  %v243 = vld [vmem:[%s242] ss:$8 sm:$0xf]
  %s244 = scalar_lea.vmem %s0, 66
  %v245 = vld [vmem:[%s244] ss:$8 sm:$0xf0]
  %vm246 = vcmask 1047556
  %v247 = vsel %vm246, %v245, %v243
  %248 = vrot.lane.b32.xlu0 %v247, 32
  %v249 = vpop.permute.xlu0 %248
  %vm250 = vcmask 392448
  %s251 = scalar_lea.vmem %s1, 8
  %252 = vst.msk [vmem:[%s251] sm:$0xff] %vm250, %v249
  %s253 = scalar_lea.vmem %s0, 130
  %v254 = vld [vmem:[%s253] ss:$8 sm:$0xf]
  %s255 = scalar_lea.vmem %s0, 130
  %v256 = vld [vmem:[%s255] ss:$8 sm:$0xf0]
  %vm257 = vcmask 1047556
  %v258 = vsel %vm257, %v256, %v254
  %259 = vrot.lane.b32.xlu0 %v258, 32
  %v260 = vpop.permute.xlu0 %259
  %vm261 = vcmask 392448
  %s262 = scalar_lea.vmem %s1, 16
  %263 = vst.msk [vmem:[%s262] sm:$0xff] %vm261, %v260
  %s264 = scalar_lea.vmem %s0, 194
  %s265 = smov 3
  %v266 = vld [vmem:[%s264] ss:$8 sm:%s265]
  %267 = vrot.lane.b32.xlu0 %v266, 32
  %v268 = vpop.permute.xlu0 %267
  %vm269 = vcmask 392448
  %s270 = scalar_lea.vmem %s1, 24
  %271 = vst.msk [vmem:[%s270] sm:$0x3] %vm269, %v268
  %s272 = scalar_lea.vmem %s0, 1
  %v273 = vld [vmem:[%s272] ss:$8 sm:$0xf]
  %s274 = scalar_lea.vmem %s0, 1
  %v275 = vld [vmem:[%s274] ss:$8 sm:$0xf0]
  %vm276 = vcmask 1047556
  %v277 = vsel %vm276, %v275, %v273
  %278 = vrot.lane.b32.xlu0 %v277, 16
  %v279 = vpop.permute.xlu0 %278
  %vm280 = vcmask 261248
  %281 = vst.msk [vmem:[%s1] sm:$0xff] %vm280, %v279
  %s282 = scalar_lea.vmem %s0, 65
  %v283 = vld [vmem:[%s282] ss:$8 sm:$0xf]
  %s284 = scalar_lea.vmem %s0, 65
  %v285 = vld [vmem:[%s284] ss:$8 sm:$0xf0]
  %vm286 = vcmask 1047556
  %v287 = vsel %vm286, %v285, %v283
  %288 = vrot.lane.b32.xlu0 %v287, 16
  %v289 = vpop.permute.xlu0 %288
  %vm290 = vcmask 261248
  %s291 = scalar_lea.vmem %s1, 8
  %292 = vst.msk [vmem:[%s291] sm:$0xff] %vm290, %v289
  %s293 = scalar_lea.vmem %s0, 129
  %v294 = vld [vmem:[%s293] ss:$8 sm:$0xf]
  %s295 = scalar_lea.vmem %s0, 129
  %v296 = vld [vmem:[%s295] ss:$8 sm:$0xf0]
  %vm297 = vcmask 1047556
  %v298 = vsel %vm297, %v296, %v294
  %299 = vrot.lane.b32.xlu0 %v298, 16
  %v300 = vpop.permute.xlu0 %299
  %vm301 = vcmask 261248
  %s302 = scalar_lea.vmem %s1, 16
  %303 = vst.msk [vmem:[%s302] sm:$0xff] %vm301, %v300
  %s304 = scalar_lea.vmem %s0, 193
  %s305 = smov 3
  %v306 = vld [vmem:[%s304] ss:$8 sm:%s305]
  %307 = vrot.lane.b32.xlu0 %v306, 16
  %v308 = vpop.permute.xlu0 %307
  %vm309 = vcmask 261248
  %s310 = scalar_lea.vmem %s1, 24
  %311 = vst.msk [vmem:[%s310] sm:$0x3] %vm309, %v308

// kernel: tile.34
$region0: #{tile.34}
  %s0 = inlined_call_operand.vmem [shape: f32[10,8,16], index: 0, kind: input, shape index: {}]
  %s1 = inlined_call_operand.vmem [shape: f32[10,128], index: 1, kind: output, shape index: {}]
  %v2 = vld [vmem:[%s0] ss:$8 sm:$0xf]
  %v3 = vld [vmem:[%s0] ss:$8 sm:$0xf0]
  %vm4 = vcmask 1047556
  %v5 = vsel %vm4, %v3, %v2
  %vm6 = vcmask 130048
  %7 = vst.msk [vmem:[%s1] sm:$0xff] %vm6, %v5
  %s8 = scalar_lea.vmem %s0, 64
  %s9 = smov 3
  %v10 = vld [vmem:[%s8] ss:$8 sm:%s9]
  %vm11 = vcmask 130048
  %s12 = scalar_lea.vmem %s1, 8
  %13 = vst.msk [vmem:[%s12] sm:$0x3] %vm11, %v10
  %s14 = scalar_lea.vmem %s0, 7
  %v15 = vld [vmem:[%s14] ss:$8 sm:$0xf]
  %s16 = scalar_lea.vmem %s0, 7
  %v17 = vld [vmem:[%s16] ss:$8 sm:$0xf0]
  %vm18 = vcmask 1047556
  %v19 = vsel %vm18, %v17, %v15
  %20 = vrot.lane.b32.xlu0 %v19, 112
  %v21 = vpop.permute.xlu0 %20
  %vm22 = vcmask 1048448
  %23 = vst.msk [vmem:[%s1] sm:$0xff] %vm22, %v21
  %s24 = scalar_lea.vmem %s0, 71
  %s25 = smov 3
  %v26 = vld [vmem:[%s24] ss:$8 sm:%s25]
  %27 = vrot.lane.b32.xlu0 %v26, 112
  %v28 = vpop.permute.xlu0 %27
  %vm29 = vcmask 1048448
  %s30 = scalar_lea.vmem %s1, 8
  %31 = vst.msk [vmem:[%s30] sm:$0x3] %vm29, %v28
  %s32 = scalar_lea.vmem %s0, 6
  %v33 = vld [vmem:[%s32] ss:$8 sm:$0xf]
  %s34 = scalar_lea.vmem %s0, 6
  %v35 = vld [vmem:[%s34] ss:$8 sm:$0xf0]
  %vm36 = vcmask 1047556
  %v37 = vsel %vm36, %v35, %v33
  %38 = vrot.lane.b32.xlu0 %v37, 96
  %v39 = vpop.permute.xlu0 %38
  %vm40 = vcmask 917248
  %41 = vst.msk [vmem:[%s1] sm:$0xff] %vm40, %v39
  %s42 = scalar_lea.vmem %s0, 70
  %s43 = smov 3
  %v44 = vld [vmem:[%s42] ss:$8 sm:%s43]
  %45 = vrot.lane.b32.xlu0 %v44, 96
  %v46 = vpop.permute.xlu0 %45
  %vm47 = vcmask 917248
  %s48 = scalar_lea.vmem %s1, 8
  %49 = vst.msk [vmem:[%s48] sm:$0x3] %vm47, %v46
  %s50 = scalar_lea.vmem %s0, 5
  %v51 = vld [vmem:[%s50] ss:$8 sm:$0xf]
  %s52 = scalar_lea.vmem %s0, 5
  %v53 = vld [vmem:[%s52] ss:$8 sm:$0xf0]
  %vm54 = vcmask 1047556
  %v55 = vsel %vm54, %v53, %v51
  %56 = vrot.lane.b32.xlu0 %v55, 80
  %v57 = vpop.permute.xlu0 %56
  %vm58 = vcmask 786048
  %59 = vst.msk [vmem:[%s1] sm:$0xff] %vm58, %v57
  %s60 = scalar_lea.vmem %s0, 69
  %s61 = smov 3
  %v62 = vld [vmem:[%s60] ss:$8 sm:%s61]
  %63 = vrot.lane.b32.xlu0 %v62, 80
  %v64 = vpop.permute.xlu0 %63
  %vm65 = vcmask 786048
  %s66 = scalar_lea.vmem %s1, 8
  %67 = vst.msk [vmem:[%s66] sm:$0x3] %vm65, %v64
  %s68 = scalar_lea.vmem %s0, 4
  %v69 = vld [vmem:[%s68] ss:$8 sm:$0xf]
  %s70 = scalar_lea.vmem %s0, 4
  %v71 = vld [vmem:[%s70] ss:$8 sm:$0xf0]
  %vm72 = vcmask 1047556
  %v73 = vsel %vm72, %v71, %v69
  %74 = vrot.lane.b32.xlu0 %v73, 64
  %v75 = vpop.permute.xlu0 %74
  %vm76 = vcmask 654848
  %77 = vst.msk [vmem:[%s1] sm:$0xff] %vm76, %v75
  %s78 = scalar_lea.vmem %s0, 68
  %s79 = smov 3
  %v80 = vld [vmem:[%s78] ss:$8 sm:%s79]
  %81 = vrot.lane.b32.xlu0 %v80, 64
  %v82 = vpop.permute.xlu0 %81
  %vm83 = vcmask 654848
  %s84 = scalar_lea.vmem %s1, 8
  %85 = vst.msk [vmem:[%s84] sm:$0x3] %vm83, %v82
  %s86 = scalar_lea.vmem %s0, 3
  %v87 = vld [vmem:[%s86] ss:$8 sm:$0xf]
  %s88 = scalar_lea.vmem %s0, 3
  %v89 = vld [vmem:[%s88] ss:$8 sm:$0xf0]
  %vm90 = vcmask 1047556
  %v91 = vsel %vm90, %v89, %v87
  %92 = vrot.lane.b32.xlu0 %v91, 48
  %v93 = vpop.permute.xlu0 %92
  %vm94 = vcmask 523648
  %95 = vst.msk [vmem:[%s1] sm:$0xff] %vm94, %v93
  %s96 = scalar_lea.vmem %s0, 67
  %s97 = smov 3
  %v98 = vld [vmem:[%s96] ss:$8 sm:%s97]
  %99 = vrot.lane.b32.xlu0 %v98, 48
  %v100 = vpop.permute.xlu0 %99
  %vm101 = vcmask 523648
  %s102 = scalar_lea.vmem %s1, 8
  %103 = vst.msk [vmem:[%s102] sm:$0x3] %vm101, %v100
  %s104 = scalar_lea.vmem %s0, 2
  %v105 = vld [vmem:[%s104] ss:$8 sm:$0xf]
  %s106 = scalar_lea.vmem %s0, 2
  %v107 = vld [vmem:[%s106] ss:$8 sm:$0xf0]
  %vm108 = vcmask 1047556
  %v109 = vsel %vm108, %v107, %v105
  %110 = vrot.lane.b32.xlu0 %v109, 32
  %v111 = vpop.permute.xlu0 %110
  %vm112 = vcmask 392448
  %113 = vst.msk [vmem:[%s1] sm:$0xff] %vm112, %v111
  %s114 = scalar_lea.vmem %s0, 66
  %s115 = smov 3
  %v116 = vld [vmem:[%s114] ss:$8 sm:%s115]
  %117 = vrot.lane.b32.xlu0 %v116, 32
  %v118 = vpop.permute.xlu0 %117
  %vm119 = vcmask 392448
  %s120 = scalar_lea.vmem %s1, 8
  %121 = vst.msk [vmem:[%s120] sm:$0x3] %vm119, %v118
  %s122 = scalar_lea.vmem %s0, 1
  %v123 = vld [vmem:[%s122] ss:$8 sm:$0xf]
  %s124 = scalar_lea.vmem %s0, 1
  %v125 = vld [vmem:[%s124] ss:$8 sm:$0xf0]
  %vm126 = vcmask 1047556
  %v127 = vsel %vm126, %v125, %v123
  %128 = vrot.lane.b32.xlu0 %v127, 16
  %v129 = vpop.permute.xlu0 %128
  %vm130 = vcmask 261248
  %131 = vst.msk [vmem:[%s1] sm:$0xff] %vm130, %v129
  %s132 = scalar_lea.vmem %s0, 65
  %s133 = smov 3
  %v134 = vld [vmem:[%s132] ss:$8 sm:%s133]
  %135 = vrot.lane.b32.xlu0 %v134, 16
  %v136 = vpop.permute.xlu0 %135
  %vm137 = vcmask 261248
  %s138 = scalar_lea.vmem %s1, 8
  %139 = vst.msk [vmem:[%s138] sm:$0x3] %vm137, %v136

// kernel: tile.39
$region0: #{tile.39}
  %s0 = inlined_call_operand.vmem [shape: f32[2,8,16], index: 0, kind: input, shape index: {}]
  %s1 = inlined_call_operand.vmem [shape: f32[2,128], index: 1, kind: output, shape index: {}]
  $region1: #{tile.39} parent=0
    #allocation0 [shape = 'u8[4096]{0}', space=vmem, size = 0x1000, scoped, tag = 'scoped mem for output reshape']
    %s2 = smov 3
    %v3 = vld [vmem:[%s0] ss:$8 sm:%s2]
    %vm4 = vcmask 130048
    %5 = vst.msk [vmem:[#allocation0] sm:$0x3] %vm4, %v3
    %s6 = scalar_lea.vmem %s0, 7
    %s7 = smov 3
    %v8 = vld [vmem:[%s6] ss:$8 sm:%s7]
    %9 = vrot.lane.b32.xlu0 %v8, 112
    %v10 = vpop.permute.xlu0 %9
    %vm11 = vcmask 1048448
    %12 = vst.msk [vmem:[#allocation0] sm:$0x3] %vm11, %v10
    %s13 = scalar_lea.vmem %s0, 6
    %s14 = smov 3
    %v15 = vld [vmem:[%s13] ss:$8 sm:%s14]
    %16 = vrot.lane.b32.xlu0 %v15, 96
    %v17 = vpop.permute.xlu0 %16
    %vm18 = vcmask 917248
    %19 = vst.msk [vmem:[#allocation0] sm:$0x3] %vm18, %v17
    %s20 = scalar_lea.vmem %s0, 5
    %s21 = smov 3
    %v22 = vld [vmem:[%s20] ss:$8 sm:%s21]
    %23 = vrot.lane.b32.xlu0 %v22, 80
    %v24 = vpop.permute.xlu0 %23
    %vm25 = vcmask 786048
    %26 = vst.msk [vmem:[#allocation0] sm:$0x3] %vm25, %v24
    %s27 = scalar_lea.vmem %s0, 4
    %s28 = smov 3
    %v29 = vld [vmem:[%s27] ss:$8 sm:%s28]
    %30 = vrot.lane.b32.xlu0 %v29, 64
    %v31 = vpop.permute.xlu0 %30
    %vm32 = vcmask 654848
    %33 = vst.msk [vmem:[#allocation0] sm:$0x3] %vm32, %v31
    %s34 = scalar_lea.vmem %s0, 3
    %s35 = smov 3
    %v36 = vld [vmem:[%s34] ss:$8 sm:%s35]
    %37 = vrot.lane.b32.xlu0 %v36, 48
    %v38 = vpop.permute.xlu0 %37
    %vm39 = vcmask 523648
    %40 = vst.msk [vmem:[#allocation0] sm:$0x3] %vm39, %v38
    %s41 = scalar_lea.vmem %s0, 2
    %s42 = smov 3
    %v43 = vld [vmem:[%s41] ss:$8 sm:%s42]
    %44 = vrot.lane.b32.xlu0 %v43, 32
    %v45 = vpop.permute.xlu0 %44
    %vm46 = vcmask 392448
    %47 = vst.msk [vmem:[#allocation0] sm:$0x3] %vm46, %v45
    %s48 = scalar_lea.vmem %s0, 1
    %s49 = smov 3
    %v50 = vld [vmem:[%s48] ss:$8 sm:%s49]
    %51 = vrot.lane.b32.xlu0 %v50, 16
    %v52 = vpop.permute.xlu0 %51
    %vm53 = vcmask 261248
    %54 = vst.msk [vmem:[#allocation0] sm:$0x3] %vm53, %v52
    %s56 = sshll.u32 1, 2
    %s57 = ssub.s32 %s56, 1
    %v59 = vld [vmem:[#allocation0] sm:%s57]
    %s60 = sshll.u32 1, 2
    %s61 = ssub.s32 %s60, 1
    %62 = vst [vmem:[%s1] sm:%s61] %v59

// kernel: tile.53
$region0: #{tile.53}
  #allocation0 [shape = 's32[1]{0}', space=sflag, size = 0x4, scoped, tag = 'scoped memory for tile.53']
  %s0 = inlined_call_operand.vmem [shape: f32[16], index: 0, kind: input, shape index: {}]
  %s1 = inlined_call_operand.vmem [shape: f32[8,16], index: 1, kind: output, shape index: {}]
  // Predicated region
  $region2: #{tile.53} parent=0 // pred_check
    _
  $region3: #{tile.53} parent=0 // pred_check_branch
    %3 = sbr.rel (0) target = $region5
  $region4: #{tile.53} parent=0 // pred_region
    _
  $region5: #{tile.53} parent=0 // pred_fallthru
    _
  %v4 = vld [vmem:[%s0] ss:$0 sm:$0xff]
  %5 = vst [vmem:[%s1] sm:$0xff] %v4

// kernel: tile.0
$region0: #{tile.0}
  %s0 = inlined_call_operand.vmem [shape: f32[8,16], index: 0, kind: input, shape index: {}]
  %s1 = inlined_call_operand.vmem [shape: f32[128,1], index: 1, kind: output, shape index: {}]
  %v2 = vld [vmem:[%s0] sm:$0xff]
  %vm3 = vcmask 7168
  %4 = vst.msk [vmem:[%s1] ss:$16 sm:$0x3] %vm3, %v2
  %5 = vst.msk [vmem:[%s1] ss:$16 sm:$0xc] %vm3, %v2
  %6 = vst.msk [vmem:[%s1] ss:$16 sm:$0x30] %vm3, %v2
  %7 = vst.msk [vmem:[%s1] ss:$16 sm:$0xc0] %vm3, %v2
  %v8 = vld [vmem:[%s0] sm:$0xff]
  %9 = vrot.lane.b32.xlu0 %v8, 127
  %v10 = vpop.permute.xlu0 %9
  %vm11 = vcmask 7168
  %s12 = scalar_lea.vmem %s1, 1
  %13 = vst.msk [vmem:[%s12] ss:$16 sm:$0x3] %vm11, %v10
  %s14 = scalar_lea.vmem %s1, 1
  %15 = vst.msk [vmem:[%s14] ss:$16 sm:$0xc] %vm11, %v10
  %s16 = scalar_lea.vmem %s1, 1
  %17 = vst.msk [vmem:[%s16] ss:$16 sm:$0x30] %vm11, %v10
  %s18 = scalar_lea.vmem %s1, 1
  %19 = vst.msk [vmem:[%s18] ss:$16 sm:$0xc0] %vm11, %v10
  %v20 = vld [vmem:[%s0] sm:$0xff]
  %21 = vrot.lane.b32.xlu0 %v20, 126
  %v22 = vpop.permute.xlu0 %21
  %vm23 = vcmask 7168
  %s24 = scalar_lea.vmem %s1, 2
  %25 = vst.msk [vmem:[%s24] ss:$16 sm:$0x3] %vm23, %v22
  %s26 = scalar_lea.vmem %s1, 2
  %27 = vst.msk [vmem:[%s26] ss:$16 sm:$0xc] %vm23, %v22
  %s28 = scalar_lea.vmem %s1, 2
  %29 = vst.msk [vmem:[%s28] ss:$16 sm:$0x30] %vm23, %v22
  %s30 = scalar_lea.vmem %s1, 2
  %31 = vst.msk [vmem:[%s30] ss:$16 sm:$0xc0] %vm23, %v22
  %v32 = vld [vmem:[%s0] sm:$0xff]
  %33 = vrot.lane.b32.xlu0 %v32, 125
  %v34 = vpop.permute.xlu0 %33
  %vm35 = vcmask 7168
  %s36 = scalar_lea.vmem %s1, 3
  %37 = vst.msk [vmem:[%s36] ss:$16 sm:$0x3] %vm35, %v34
  %s38 = scalar_lea.vmem %s1, 3
  %39 = vst.msk [vmem:[%s38] ss:$16 sm:$0xc] %vm35, %v34
  %s40 = scalar_lea.vmem %s1, 3
  %41 = vst.msk [vmem:[%s40] ss:$16 sm:$0x30] %vm35, %v34
  %s42 = scalar_lea.vmem %s1, 3
  %43 = vst.msk [vmem:[%s42] ss:$16 sm:$0xc0] %vm35, %v34
  %v44 = vld [vmem:[%s0] sm:$0xff]
  %45 = vrot.lane.b32.xlu0 %v44, 124
  %v46 = vpop.permute.xlu0 %45
  %vm47 = vcmask 7168
  %s48 = scalar_lea.vmem %s1, 4
  %49 = vst.msk [vmem:[%s48] ss:$16 sm:$0x3] %vm47, %v46
  %s50 = scalar_lea.vmem %s1, 4
  %51 = vst.msk [vmem:[%s50] ss:$16 sm:$0xc] %vm47, %v46
  %s52 = scalar_lea.vmem %s1, 4
  %53 = vst.msk [vmem:[%s52] ss:$16 sm:$0x30] %vm47, %v46
  %s54 = scalar_lea.vmem %s1, 4
  %55 = vst.msk [vmem:[%s54] ss:$16 sm:$0xc0] %vm47, %v46
  %v56 = vld [vmem:[%s0] sm:$0xff]
  %57 = vrot.lane.b32.xlu0 %v56, 123
  %v58 = vpop.permute.xlu0 %57
  %vm59 = vcmask 7168
  %s60 = scalar_lea.vmem %s1, 5
  %61 = vst.msk [vmem:[%s60] ss:$16 sm:$0x3] %vm59, %v58
  %s62 = scalar_lea.vmem %s1, 5
  %63 = vst.msk [vmem:[%s62] ss:$16 sm:$0xc] %vm59, %v58
  %s64 = scalar_lea.vmem %s1, 5
  %65 = vst.msk [vmem:[%s64] ss:$16 sm:$0x30] %vm59, %v58
  %s66 = scalar_lea.vmem %s1, 5
  %67 = vst.msk [vmem:[%s66] ss:$16 sm:$0xc0] %vm59, %v58
  %v68 = vld [vmem:[%s0] sm:$0xff]
  %69 = vrot.lane.b32.xlu0 %v68, 122
  %v70 = vpop.permute.xlu0 %69
  %vm71 = vcmask 7168
  %s72 = scalar_lea.vmem %s1, 6
  %73 = vst.msk [vmem:[%s72] ss:$16 sm:$0x3] %vm71, %v70
  %s74 = scalar_lea.vmem %s1, 6
  %75 = vst.msk [vmem:[%s74] ss:$16 sm:$0xc] %vm71, %v70
  %s76 = scalar_lea.vmem %s1, 6
  %77 = vst.msk [vmem:[%s76] ss:$16 sm:$0x30] %vm71, %v70
  %s78 = scalar_lea.vmem %s1, 6
  %79 = vst.msk [vmem:[%s78] ss:$16 sm:$0xc0] %vm71, %v70
  %v80 = vld [vmem:[%s0] sm:$0xff]
  %81 = vrot.lane.b32.xlu0 %v80, 121
  %v82 = vpop.permute.xlu0 %81
  %vm83 = vcmask 7168
  %s84 = scalar_lea.vmem %s1, 7
  %85 = vst.msk [vmem:[%s84] ss:$16 sm:$0x3] %vm83, %v82
  %s86 = scalar_lea.vmem %s1, 7
  %87 = vst.msk [vmem:[%s86] ss:$16 sm:$0xc] %vm83, %v82
  %s88 = scalar_lea.vmem %s1, 7
  %89 = vst.msk [vmem:[%s88] ss:$16 sm:$0x30] %vm83, %v82
  %s90 = scalar_lea.vmem %s1, 7
  %91 = vst.msk [vmem:[%s90] ss:$16 sm:$0xc0] %vm83, %v82
  %v92 = vld [vmem:[%s0] sm:$0xff]
  %93 = vrot.lane.b32.xlu0 %v92, 120
  %v94 = vpop.permute.xlu0 %93
  %vm95 = vcmask 7168
  %s96 = scalar_lea.vmem %s1, 8
  %97 = vst.msk [vmem:[%s96] ss:$16 sm:$0x3] %vm95, %v94
  %s98 = scalar_lea.vmem %s1, 8
  %99 = vst.msk [vmem:[%s98] ss:$16 sm:$0xc] %vm95, %v94
  %s100 = scalar_lea.vmem %s1, 8
  %101 = vst.msk [vmem:[%s100] ss:$16 sm:$0x30] %vm95, %v94
  %s102 = scalar_lea.vmem %s1, 8
  %103 = vst.msk [vmem:[%s102] ss:$16 sm:$0xc0] %vm95, %v94
  %v104 = vld [vmem:[%s0] sm:$0xff]
  %105 = vrot.lane.b32.xlu0 %v104, 119
  %v106 = vpop.permute.xlu0 %105
  %vm107 = vcmask 7168
  %s108 = scalar_lea.vmem %s1, 9
  %109 = vst.msk [vmem:[%s108] ss:$16 sm:$0x3] %vm107, %v106
  %s110 = scalar_lea.vmem %s1, 9
  %111 = vst.msk [vmem:[%s110] ss:$16 sm:$0xc] %vm107, %v106
  %s112 = scalar_lea.vmem %s1, 9
  %113 = vst.msk [vmem:[%s112] ss:$16 sm:$0x30] %vm107, %v106
  %s114 = scalar_lea.vmem %s1, 9
  %115 = vst.msk [vmem:[%s114] ss:$16 sm:$0xc0] %vm107, %v106
  %v116 = vld [vmem:[%s0] sm:$0xff]
  %117 = vrot.lane.b32.xlu0 %v116, 118
  %v118 = vpop.permute.xlu0 %117
  %vm119 = vcmask 7168
  %s120 = scalar_lea.vmem %s1, 10
  %121 = vst.msk [vmem:[%s120] ss:$16 sm:$0x3] %vm119, %v118
  %s122 = scalar_lea.vmem %s1, 10
  %123 = vst.msk [vmem:[%s122] ss:$16 sm:$0xc] %vm119, %v118
  %s124 = scalar_lea.vmem %s1, 10
  %125 = vst.msk [vmem:[%s124] ss:$16 sm:$0x30] %vm119, %v118
  %s126 = scalar_lea.vmem %s1, 10
  %127 = vst.msk [vmem:[%s126] ss:$16 sm:$0xc0] %vm119, %v118
  %v128 = vld [vmem:[%s0] sm:$0xff]
  %129 = vrot.lane.b32.xlu0 %v128, 117
  %v130 = vpop.permute.xlu0 %129
  %vm131 = vcmask 7168
  %s132 = scalar_lea.vmem %s1, 11
  %133 = vst.msk [vmem:[%s132] ss:$16 sm:$0x3] %vm131, %v130
  %s134 = scalar_lea.vmem %s1, 11
  %135 = vst.msk [vmem:[%s134] ss:$16 sm:$0xc] %vm131, %v130
  %s136 = scalar_lea.vmem %s1, 11
  %137 = vst.msk [vmem:[%s136] ss:$16 sm:$0x30] %vm131, %v130
  %s138 = scalar_lea.vmem %s1, 11
  %139 = vst.msk [vmem:[%s138] ss:$16 sm:$0xc0] %vm131, %v130
  %v140 = vld [vmem:[%s0] sm:$0xff]
  %141 = vrot.lane.b32.xlu0 %v140, 116
  %v142 = vpop.permute.xlu0 %141
  %vm143 = vcmask 7168
  %s144 = scalar_lea.vmem %s1, 12
  %145 = vst.msk [vmem:[%s144] ss:$16 sm:$0x3] %vm143, %v142
  %s146 = scalar_lea.vmem %s1, 12
  %147 = vst.msk [vmem:[%s146] ss:$16 sm:$0xc] %vm143, %v142
  %s148 = scalar_lea.vmem %s1, 12
  %149 = vst.msk [vmem:[%s148] ss:$16 sm:$0x30] %vm143, %v142
  %s150 = scalar_lea.vmem %s1, 12
  %151 = vst.msk [vmem:[%s150] ss:$16 sm:$0xc0] %vm143, %v142
  %v152 = vld [vmem:[%s0] sm:$0xff]
  %153 = vrot.lane.b32.xlu0 %v152, 115
  %v154 = vpop.permute.xlu0 %153
  %vm155 = vcmask 7168
  %s156 = scalar_lea.vmem %s1, 13
  %157 = vst.msk [vmem:[%s156] ss:$16 sm:$0x3] %vm155, %v154
  %s158 = scalar_lea.vmem %s1, 13
  %159 = vst.msk [vmem:[%s158] ss:$16 sm:$0xc] %vm155, %v154
  %s160 = scalar_lea.vmem %s1, 13
  %161 = vst.msk [vmem:[%s160] ss:$16 sm:$0x30] %vm155, %v154
  %s162 = scalar_lea.vmem %s1, 13
  %163 = vst.msk [vmem:[%s162] ss:$16 sm:$0xc0] %vm155, %v154
  %v164 = vld [vmem:[%s0] sm:$0xff]
  %165 = vrot.lane.b32.xlu0 %v164, 114
  %v166 = vpop.permute.xlu0 %165
  %vm167 = vcmask 7168
  %s168 = scalar_lea.vmem %s1, 14
  %169 = vst.msk [vmem:[%s168] ss:$16 sm:$0x3] %vm167, %v166
  %s170 = scalar_lea.vmem %s1, 14
  %171 = vst.msk [vmem:[%s170] ss:$16 sm:$0xc] %vm167, %v166
  %s172 = scalar_lea.vmem %s1, 14
  %173 = vst.msk [vmem:[%s172] ss:$16 sm:$0x30] %vm167, %v166
  %s174 = scalar_lea.vmem %s1, 14
  %175 = vst.msk [vmem:[%s174] ss:$16 sm:$0xc0] %vm167, %v166
  %v176 = vld [vmem:[%s0] sm:$0xff]
  %177 = vrot.lane.b32.xlu0 %v176, 113
  %v178 = vpop.permute.xlu0 %177
  %vm179 = vcmask 7168
  %s180 = scalar_lea.vmem %s1, 15
  %181 = vst.msk [vmem:[%s180] ss:$16 sm:$0x3] %vm179, %v178
  %s182 = scalar_lea.vmem %s1, 15
  %183 = vst.msk [vmem:[%s182] ss:$16 sm:$0xc] %vm179, %v178
  %s184 = scalar_lea.vmem %s1, 15
  %185 = vst.msk [vmem:[%s184] ss:$16 sm:$0x30] %vm179, %v178
  %s186 = scalar_lea.vmem %s1, 15
  %187 = vst.msk [vmem:[%s186] ss:$16 sm:$0xc0] %vm179, %v178

// kernel: tile.58
$region0: #{tile.58}
  #allocation0 [shape = 's32[1]{0}', space=sflag, size = 0x4, scoped, tag = 'scoped memory for tile.58']
  %s0 = inlined_call_operand.vmem [shape: f32[24], index: 0, kind: input, shape index: {}]
  %s1 = inlined_call_operand.vmem [shape: f32[8,24], index: 1, kind: output, shape index: {}]
  // Predicated region
  $region2: #{tile.58} parent=0 // pred_check
    _
  $region3: #{tile.58} parent=0 // pred_check_branch
    %3 = sbr.rel (0) target = $region5
  $region4: #{tile.58} parent=0 // pred_region
    _
  $region5: #{tile.58} parent=0 // pred_fallthru
    _
  %v4 = vld [vmem:[%s0] ss:$0 sm:$0xff]
  %5 = vst [vmem:[%s1] sm:$0xff] %v4

// kernel: tile.59
$region0: #{tile.59}
  %s0 = inlined_call_operand.vmem [shape: f32[8,24], index: 0, kind: input, shape index: {}]
  %s1 = inlined_call_operand.vmem [shape: f32[1,192], index: 1, kind: output, shape index: {}]
  $region1: #{tile.59} parent=0
    #allocation0 [shape = 'u8[8192]{0}', space=vmem, size = 0x2000, scoped, tag = 'scoped mem for output reshape']
    %v2 = vld [vmem:[%s0] sm:$0x1]
    %vm3 = vcmask 195584
    %4 = vst.msk [vmem:[#allocation0] sm:$0x1] %vm3, %v2
    %s5 = scalar_lea.vmem %s0, 5
    %v6 = vld [vmem:[%s5] sm:$0x1]
    %s7 = scalar_lea.vmem %s0, 5
    %v8 = vld [vmem:[%s7] sm:$0x1]
    %vm9 = vcmask 64512
    %v10 = vsel %vm9, %v8, %v6
    %11 = vrot.lane.b32.xlu0 %v10, 120
    %v12 = vpop.permute.xlu0 %11
    %vm13 = vcmask 130048
    %s14 = scalar_lea.vmem [#allocation0], 8
    %15 = vst.msk [vmem:[%s14] sm:$0x1] %vm13, %v12
    %vm16 = vcmask 1048512
    %17 = vst.msk [vmem:[#allocation0] sm:$0x1] %vm16, %v12
    %s18 = scalar_lea.vmem %s0, 4
    %v19 = vld [vmem:[%s18] sm:$0x1]
    %20 = vrot.lane.b32.xlu0 %v19, 96
    %v21 = vpop.permute.xlu0 %20
    %vm22 = vcmask 982784
    %23 = vst.msk [vmem:[#allocation0] sm:$0x1] %vm22, %v21
    %s24 = scalar_lea.vmem %s0, 3
    %v25 = vld [vmem:[%s24] sm:$0x1]
    %26 = vrot.lane.b32.xlu0 %v25, 72
    %v27 = vpop.permute.xlu0 %26
    %vm28 = vcmask 785984
    %29 = vst.msk [vmem:[#allocation0] sm:$0x1] %vm28, %v27
    %s30 = scalar_lea.vmem %s0, 2
    %v31 = vld [vmem:[%s30] sm:$0x1]
    %32 = vrot.lane.b32.xlu0 %v31, 48
    %v33 = vpop.permute.xlu0 %32
    %vm34 = vcmask 589184
    %35 = vst.msk [vmem:[#allocation0] sm:$0x1] %vm34, %v33
    %s36 = scalar_lea.vmem %s0, 7
    %v37 = vld [vmem:[%s36] sm:$0x1]
    %38 = vrot.lane.b32.xlu0 %v37, 40
    %v39 = vpop.permute.xlu0 %38
    %vm40 = vcmask 523584
    %s41 = scalar_lea.vmem [#allocation0], 8
    %42 = vst.msk [vmem:[%s41] sm:$0x1] %vm40, %v39
    %s43 = scalar_lea.vmem %s0, 1
    %v44 = vld [vmem:[%s43] sm:$0x1]
    %45 = vrot.lane.b32.xlu0 %v44, 24
    %v46 = vpop.permute.xlu0 %45
    %vm47 = vcmask 392384
    %48 = vst.msk [vmem:[#allocation0] sm:$0x1] %vm47, %v46
    %s49 = scalar_lea.vmem %s0, 6
    %v50 = vld [vmem:[%s49] sm:$0x1]
    %51 = vrot.lane.b32.xlu0 %v50, 16
    %v52 = vpop.permute.xlu0 %51
    %vm53 = vcmask 326784
    %s54 = scalar_lea.vmem [#allocation0], 8
    %55 = vst.msk [vmem:[%s54] sm:$0x1] %vm53, %v52
    %s57 = sshll.u32 1, 1
    %s58 = ssub.s32 %s57, 1
    %v60 = vld [vmem:[#allocation0] sm:%s58]
    %s61 = sshll.u32 1, 1
    %s62 = ssub.s32 %s61, 1
    %63 = vst [vmem:[%s1] sm:%s62] %v60
    %s64 = scalar_lea.vmem [#allocation0], 8
    %v65 = vld [vmem:[%s64] sm:%s58]
    %s66 = sshll.u32 1, 1
    %s67 = ssub.s32 %s66, 1
    %s68 = scalar_lea.vmem %s1, 1
    %69 = vst [vmem:[%s68] sm:%s67] %v65

// kernel: ms_mlp_forward.1
$region0: #{ms_mlp_forward.1}
  #allocation0 [shape = 'u32[]', space=smem, size = 0x4, offset = 0x4, fixed_abs, tag = 'smem constant byte address 0x4 - core index']
  #allocation1 [shape = 'u32[144,128]{1,0:T(1,128)}', space=vmem, size = 0x12000, scoped, tag = 'internal scratch']
  #allocation2 [shape = 'f32[10,18,128]{2,1,0:T(8,128)}', space=vmem, size = 0x1e000, scoped, tag = 'scratch operand']
  #allocation3 [shape = 'f32[12,20,128]{2,1,0:T(8,128)}', space=vmem, size = 0x24000, scoped, tag = 'scratch operand']
  %s0 = inlined_call_operand.vmem [shape: f32[2,8,16,128], index: 0, kind: input, shape index: {}]
  %s1 = inlined_call_operand.vmem [shape: f32[10,128], index: 1, kind: input, shape index: {}]
  %s2 = inlined_call_operand.vmem [shape: f32[128,128], index: 2, kind: input, shape index: {}]
  %s3 = inlined_call_operand.vmem [shape: f32[128,64], index: 3, kind: input, shape index: {}]
  %s4 = inlined_call_operand.vmem [shape: f32[64,128], index: 4, kind: input, shape index: {}]
  %s5 = inlined_call_operand.vmem [shape: f32[1,2], index: 5, kind: input, shape index: {}]
  %s6 = inlined_call_operand.vmem [shape: f32[128,128], index: 6, kind: input, shape index: {}]
  %s7 = inlined_call_operand.vmem [shape: f32[128,1], index: 7, kind: input, shape index: {}]
  %s8 = inlined_call_operand.vmem [shape: f32[2,128], index: 8, kind: input, shape index: {}]
  %s9 = inlined_call_operand.vmem [shape: f32[10,128], index: 9, kind: input, shape index: {}]
  %s10 = inlined_call_operand.vmem [shape: f32[26,128], index: 10, kind: input, shape index: {}]
  %s11 = inlined_call_operand.vmem [shape: f32[128,128], index: 11, kind: input, shape index: {}]
  %s12 = inlined_call_operand.vmem [shape: f32[128,192], index: 12, kind: input, shape index: {}]
  %s13 = inlined_call_operand.vmem [shape: f32[1,192], index: 13, kind: input, shape index: {}]
  %s14 = inlined_call_operand.vmem [shape: f32[2,128,192], index: 14, kind: output, shape index: {}]
  %s15 = sld [smem:[#allocation0]]
  $region89: #{ms_mlp_forward.1} parent=0
    _
  %s17 = ssub.s32 1, %s15
  %s18 = scalar_select 0, %s17, %s15
  loop: start=0, step=1, limit=4
  $region2: #{ms_mlp_forward.1} parent=0 // loop_pre_header
    _
  $region3: #{ms_mlp_forward.1} parent=0 // loop_header
    %s20 = sphi 0, %s24
    %p21 = scmp.ge.s32.totalorder %s20, 4
    %s30 = sphi 0, %s32
    %s33 = sphi 0, %s30
    %s34 = sphi 0, %s33
    %s50 = sphi 0, %s34
    %s54 = sphi 0, %s54
    %s56 = sphi 0, %s54
    %s57 = sphi 0, %s56
    %s71 = sphi 0, %s57
    %s75 = sphi 0, %s75
    %s77 = sphi 0, %s75
    %s78 = sphi 0, %s77
    %s92 = sphi 0, %s78
    %s96 = sphi 0, %s96
    %s98 = sphi 0, %s96
    %s99 = sphi 0, %s98
    %s113 = sphi 0, %s99
    %s117 = sphi 0, %s117
    %s119 = sphi 0, %s117
    %s120 = sphi 0, %s119
    %s134 = sphi 0, %s120
    %s138 = sphi 0, %s138
    %s140 = sphi 0, %s138
    %s141 = sphi 0, %s140
    %s155 = sphi 0, %s141
    %s159 = sphi 0, %s159
    %s161 = sphi 0, %s159
    %s162 = sphi 0, %s161
    %s176 = sphi 0, %s162
    %s180 = sphi 0, %s180
    %s182 = sphi 0, %s180
    %s183 = sphi 0, %s182
    %s197 = sphi 0, %s183
    %s201 = sphi 0, %s201
    %s203 = sphi 0, %s201
    %s204 = sphi 0, %s203
    %s218 = sphi 0, %s204
    %s222 = sphi 0, %s222
    %s224 = sphi 0, %s222
    %s225 = sphi 0, %s224
    %s239 = sphi 0, %s225
    %s243 = sphi 0, %s243
    %s245 = sphi 0, %s243
    %s246 = sphi 0, %s245
    %s260 = sphi 0, %s246
    %s264 = sphi 0, %s264
    %s266 = sphi 0, %s264
    %s267 = sphi 0, %s266
    %s281 = sphi 0, %s267
    %s285 = sphi 0, %s285
    %s287 = sphi 0, %s285
    %s288 = sphi 0, %s287
    %s302 = sphi 0, %s288
    %s306 = sphi 0, %s306
    %s308 = sphi 0, %s306
    %s309 = sphi 0, %s308
    %s323 = sphi 0, %s309
    %s329 = sphi 0, %s331
    %s332 = sphi 0, %s329
    %s333 = sphi 0, %s332
    %s349 = sphi 0, %s333
  $region4: #{ms_mlp_forward.1} parent=0 // loop_header_branch
    %23 = sbr.rel (%p21) target = $region8
  $region5: #{ms_mlp_forward.1} parent=0 // loop_body
    %s25 = ssub.s32 %s20, 1
    %s26 = ssub.s32 %s20, 2
    %s27 = sadd.s32 %s20, 1
    %s28 = ssub.s32 %s20, %s27
    %p29 = scmp.eq.s32.totalorder %s28, 0
    %s31 = sadd.s32 %s30, 1
    %s32 = scalar_select %p29, %s30, %s31
    %p35 = pneg %p29
    %p36 = scmp.eq.s32.totalorder %s20, 1
    %p37 = por %p35, %p36
    %p38 = scmp.ne.s32.totalorder %s30, %s33
    %p39 = scmp.eq.s32.totalorder %s20, 0
    %p40 = por %p38, %p39
    %p41 = scmp.ne.s32.totalorder %s30, %s33
    %p42 = scmp.eq.s32.totalorder %s25, 1
    %p43 = por %p41, %p42
    %p44 = scmp.ne.s32.totalorder %s33, %s34
    %p45 = scmp.eq.s32.totalorder %s25, 0
    %p46 = por %p44, %p45
    %p47 = scmp.ne.s32.totalorder %s33, %s34
    %p48 = scmp.eq.s32.totalorder %s26, 1
    %p49 = por %p47, %p48
    %p51 = scmp.ne.s32.totalorder %s34, %s50
    %p52 = scmp.eq.s32.totalorder %s26, 0
    %p53 = por %p51, %p52
    %s55 = sadd.s32 %s54, 1
    %p58 = scmp.eq.s32.totalorder %s20, 1
    %p59 = scmp.ne.s32.totalorder %s54, %s56
    %p60 = scmp.eq.s32.totalorder %s20, 0
    %p61 = por %p59, %p60
    %p62 = scmp.ne.s32.totalorder %s54, %s56
    %p63 = scmp.eq.s32.totalorder %s25, 1
    %p64 = por %p62, %p63
    %p65 = scmp.ne.s32.totalorder %s56, %s57
    %p66 = scmp.eq.s32.totalorder %s25, 0
    %p67 = por %p65, %p66
    %p68 = scmp.ne.s32.totalorder %s56, %s57
    %p69 = scmp.eq.s32.totalorder %s26, 1
    %p70 = por %p68, %p69
    %p72 = scmp.ne.s32.totalorder %s57, %s71
    %p73 = scmp.eq.s32.totalorder %s26, 0
    %p74 = por %p72, %p73
    %s76 = sadd.s32 %s75, 1
    %p79 = scmp.eq.s32.totalorder %s20, 1
    %p80 = scmp.ne.s32.totalorder %s75, %s77
    %p81 = scmp.eq.s32.totalorder %s20, 0
    %p82 = por %p80, %p81
    %p83 = scmp.ne.s32.totalorder %s75, %s77
    %p84 = scmp.eq.s32.totalorder %s25, 1
    %p85 = por %p83, %p84
    %p86 = scmp.ne.s32.totalorder %s77, %s78
    %p87 = scmp.eq.s32.totalorder %s25, 0
    %p88 = por %p86, %p87
    %p89 = scmp.ne.s32.totalorder %s77, %s78
    %p90 = scmp.eq.s32.totalorder %s26, 1
    %p91 = por %p89, %p90
    %p93 = scmp.ne.s32.totalorder %s78, %s92
    %p94 = scmp.eq.s32.totalorder %s26, 0
    %p95 = por %p93, %p94
    %s97 = sadd.s32 %s96, 1
    %p100 = scmp.eq.s32.totalorder %s20, 1
    %p101 = scmp.ne.s32.totalorder %s96, %s98
    %p102 = scmp.eq.s32.totalorder %s20, 0
    %p103 = por %p101, %p102
    %p104 = scmp.ne.s32.totalorder %s96, %s98
    %p105 = scmp.eq.s32.totalorder %s25, 1
    %p106 = por %p104, %p105
    %p107 = scmp.ne.s32.totalorder %s98, %s99
    %p108 = scmp.eq.s32.totalorder %s25, 0
    %p109 = por %p107, %p108
    %p110 = scmp.ne.s32.totalorder %s98, %s99
    %p111 = scmp.eq.s32.totalorder %s26, 1
    %p112 = por %p110, %p111
    %p114 = scmp.ne.s32.totalorder %s99, %s113
    %p115 = scmp.eq.s32.totalorder %s26, 0
    %p116 = por %p114, %p115
    %s118 = sadd.s32 %s117, 1
    %p121 = scmp.eq.s32.totalorder %s20, 1
    %p122 = scmp.ne.s32.totalorder %s117, %s119
    %p123 = scmp.eq.s32.totalorder %s20, 0
    %p124 = por %p122, %p123
    %p125 = scmp.ne.s32.totalorder %s117, %s119
    %p126 = scmp.eq.s32.totalorder %s25, 1
    %p127 = por %p125, %p126
    %p128 = scmp.ne.s32.totalorder %s119, %s120
    %p129 = scmp.eq.s32.totalorder %s25, 0
    %p130 = por %p128, %p129
    %p131 = scmp.ne.s32.totalorder %s119, %s120
    %p132 = scmp.eq.s32.totalorder %s26, 1
    %p133 = por %p131, %p132
    %p135 = scmp.ne.s32.totalorder %s120, %s134
    %p136 = scmp.eq.s32.totalorder %s26, 0
    %p137 = por %p135, %p136
    %s139 = sadd.s32 %s138, 1
    %p142 = scmp.eq.s32.totalorder %s20, 1
    %p143 = scmp.ne.s32.totalorder %s138, %s140
    %p144 = scmp.eq.s32.totalorder %s20, 0
    %p145 = por %p143, %p144
    %p146 = scmp.ne.s32.totalorder %s138, %s140
    %p147 = scmp.eq.s32.totalorder %s25, 1
    %p148 = por %p146, %p147
    %p149 = scmp.ne.s32.totalorder %s140, %s141
    %p150 = scmp.eq.s32.totalorder %s25, 0
    %p151 = por %p149, %p150
    %p152 = scmp.ne.s32.totalorder %s140, %s141
    %p153 = scmp.eq.s32.totalorder %s26, 1
    %p154 = por %p152, %p153
    %p156 = scmp.ne.s32.totalorder %s141, %s155
    %p157 = scmp.eq.s32.totalorder %s26, 0
    %p158 = por %p156, %p157
    %s160 = sadd.s32 %s159, 1
    %p163 = scmp.eq.s32.totalorder %s20, 1
    %p164 = scmp.ne.s32.totalorder %s159, %s161
    %p165 = scmp.eq.s32.totalorder %s20, 0
    %p166 = por %p164, %p165
    %p167 = scmp.ne.s32.totalorder %s159, %s161
    %p168 = scmp.eq.s32.totalorder %s25, 1
    %p169 = por %p167, %p168
    %p170 = scmp.ne.s32.totalorder %s161, %s162
    %p171 = scmp.eq.s32.totalorder %s25, 0
    %p172 = por %p170, %p171
    %p173 = scmp.ne.s32.totalorder %s161, %s162
    %p174 = scmp.eq.s32.totalorder %s26, 1
    %p175 = por %p173, %p174
    %p177 = scmp.ne.s32.totalorder %s162, %s176
    %p178 = scmp.eq.s32.totalorder %s26, 0
    %p179 = por %p177, %p178
    %s181 = sadd.s32 %s180, 1
    %p184 = scmp.eq.s32.totalorder %s20, 1
    %p185 = scmp.ne.s32.totalorder %s180, %s182
    %p186 = scmp.eq.s32.totalorder %s20, 0
    %p187 = por %p185, %p186
    %p188 = scmp.ne.s32.totalorder %s180, %s182
    %p189 = scmp.eq.s32.totalorder %s25, 1
    %p190 = por %p188, %p189
    %p191 = scmp.ne.s32.totalorder %s182, %s183
    %p192 = scmp.eq.s32.totalorder %s25, 0
    %p193 = por %p191, %p192
    %p194 = scmp.ne.s32.totalorder %s182, %s183
    %p195 = scmp.eq.s32.totalorder %s26, 1
    %p196 = por %p194, %p195
    %p198 = scmp.ne.s32.totalorder %s183, %s197
    %p199 = scmp.eq.s32.totalorder %s26, 0
    %p200 = por %p198, %p199
    %s202 = sadd.s32 %s201, 1
    %p205 = scmp.eq.s32.totalorder %s20, 1
    %p206 = scmp.ne.s32.totalorder %s201, %s203
    %p207 = scmp.eq.s32.totalorder %s20, 0
    %p208 = por %p206, %p207
    %p209 = scmp.ne.s32.totalorder %s201, %s203
    %p210 = scmp.eq.s32.totalorder %s25, 1
    %p211 = por %p209, %p210
    %p212 = scmp.ne.s32.totalorder %s203, %s204
    %p213 = scmp.eq.s32.totalorder %s25, 0
    %p214 = por %p212, %p213
    %p215 = scmp.ne.s32.totalorder %s203, %s204
    %p216 = scmp.eq.s32.totalorder %s26, 1
    %p217 = por %p215, %p216
    %p219 = scmp.ne.s32.totalorder %s204, %s218
    %p220 = scmp.eq.s32.totalorder %s26, 0
    %p221 = por %p219, %p220
    %s223 = sadd.s32 %s222, 1
    %p226 = scmp.eq.s32.totalorder %s20, 1
    %p227 = scmp.ne.s32.totalorder %s222, %s224
    %p228 = scmp.eq.s32.totalorder %s20, 0
    %p229 = por %p227, %p228
    %p230 = scmp.ne.s32.totalorder %s222, %s224
    %p231 = scmp.eq.s32.totalorder %s25, 1
    %p232 = por %p230, %p231
    %p233 = scmp.ne.s32.totalorder %s224, %s225
    %p234 = scmp.eq.s32.totalorder %s25, 0
    %p235 = por %p233, %p234
    %p236 = scmp.ne.s32.totalorder %s224, %s225
    %p237 = scmp.eq.s32.totalorder %s26, 1
    %p238 = por %p236, %p237
    %p240 = scmp.ne.s32.totalorder %s225, %s239
    %p241 = scmp.eq.s32.totalorder %s26, 0
    %p242 = por %p240, %p241
    %s244 = sadd.s32 %s243, 1
    %p247 = scmp.eq.s32.totalorder %s20, 1
    %p248 = scmp.ne.s32.totalorder %s243, %s245
    %p249 = scmp.eq.s32.totalorder %s20, 0
    %p250 = por %p248, %p249
    %p251 = scmp.ne.s32.totalorder %s243, %s245
    %p252 = scmp.eq.s32.totalorder %s25, 1
    %p253 = por %p251, %p252
    %p254 = scmp.ne.s32.totalorder %s245, %s246
    %p255 = scmp.eq.s32.totalorder %s25, 0
    %p256 = por %p254, %p255
    %p257 = scmp.ne.s32.totalorder %s245, %s246
    %p258 = scmp.eq.s32.totalorder %s26, 1
    %p259 = por %p257, %p258
    %p261 = scmp.ne.s32.totalorder %s246, %s260
    %p262 = scmp.eq.s32.totalorder %s26, 0
    %p263 = por %p261, %p262
    %s265 = sadd.s32 %s264, 1
    %p268 = scmp.eq.s32.totalorder %s20, 1
    %p269 = scmp.ne.s32.totalorder %s264, %s266
    %p270 = scmp.eq.s32.totalorder %s20, 0
    %p271 = por %p269, %p270
    %p272 = scmp.ne.s32.totalorder %s264, %s266
    %p273 = scmp.eq.s32.totalorder %s25, 1
    %p274 = por %p272, %p273
    %p275 = scmp.ne.s32.totalorder %s266, %s267
    %p276 = scmp.eq.s32.totalorder %s25, 0
    %p277 = por %p275, %p276
    %p278 = scmp.ne.s32.totalorder %s266, %s267
    %p279 = scmp.eq.s32.totalorder %s26, 1
    %p280 = por %p278, %p279
    %p282 = scmp.ne.s32.totalorder %s267, %s281
    %p283 = scmp.eq.s32.totalorder %s26, 0
    %p284 = por %p282, %p283
    %s286 = sadd.s32 %s285, 1
    %p289 = scmp.eq.s32.totalorder %s20, 1
    %p290 = scmp.ne.s32.totalorder %s285, %s287
    %p291 = scmp.eq.s32.totalorder %s20, 0
    %p292 = por %p290, %p291
    %p293 = scmp.ne.s32.totalorder %s285, %s287
    %p294 = scmp.eq.s32.totalorder %s25, 1
    %p295 = por %p293, %p294
    %p296 = scmp.ne.s32.totalorder %s287, %s288
    %p297 = scmp.eq.s32.totalorder %s25, 0
    %p298 = por %p296, %p297
    %p299 = scmp.ne.s32.totalorder %s287, %s288
    %p300 = scmp.eq.s32.totalorder %s26, 1
    %p301 = por %p299, %p300
    %p303 = scmp.ne.s32.totalorder %s288, %s302
    %p304 = scmp.eq.s32.totalorder %s26, 0
    %p305 = por %p303, %p304
    %s307 = sadd.s32 %s306, 1
    %p310 = scmp.eq.s32.totalorder %s20, 1
    %p311 = scmp.ne.s32.totalorder %s306, %s308
    %p312 = scmp.eq.s32.totalorder %s20, 0
    %p313 = por %p311, %p312
    %p314 = scmp.ne.s32.totalorder %s306, %s308
    %p315 = scmp.eq.s32.totalorder %s25, 1
    %p316 = por %p314, %p315
    %p317 = scmp.ne.s32.totalorder %s308, %s309
    %p318 = scmp.eq.s32.totalorder %s25, 0
    %p319 = por %p317, %p318
    %p320 = scmp.ne.s32.totalorder %s308, %s309
    %p321 = scmp.eq.s32.totalorder %s26, 1
    %p322 = por %p320, %p321
    %p324 = scmp.ne.s32.totalorder %s309, %s323
    %p325 = scmp.eq.s32.totalorder %s26, 0
    %p326 = por %p324, %p325
    %s327 = ssub.s32 %s20, %s27
    %p328 = scmp.eq.s32.totalorder %s327, 0
    %s330 = sadd.s32 %s329, 1
    %s331 = scalar_select %p328, %s329, %s330
    %p334 = pneg %p328
    %p335 = scmp.eq.s32.totalorder %s20, 1
    %p336 = por %p334, %p335
    %p337 = scmp.ne.s32.totalorder %s329, %s332
    %p338 = scmp.eq.s32.totalorder %s20, 0
    %p339 = por %p337, %p338
    %p340 = scmp.ne.s32.totalorder %s329, %s332
    %p341 = scmp.eq.s32.totalorder %s25, 1
    %p342 = por %p340, %p341
    %p343 = scmp.ne.s32.totalorder %s332, %s333
    %p344 = scmp.eq.s32.totalorder %s25, 0
    %p345 = por %p343, %p344
    %p346 = scmp.ne.s32.totalorder %s332, %s333
    %p347 = scmp.eq.s32.totalorder %s26, 1
    %p348 = por %p346, %p347
    %p350 = scmp.ne.s32.totalorder %s333, %s349
    %p351 = scmp.eq.s32.totalorder %s26, 0
    %p352 = por %p350, %p351
    %p353 = scmp.le.s32.totalorder 1, %s20
    %p354 = scmp.lt.s32.totalorder %s20, 3
    %p355 = pnand %p353, %p354
    %p356 = pneg %p355
    // Predicated region
    $region9: #{ms_mlp_forward.1} parent=5 // pred_check
      _
    $region10: #{ms_mlp_forward.1} parent=5 // pred_check_branch
      %358 = sbr.rel (%p355) target = $region12
    $region11: #{ms_mlp_forward.1} parent=5 // pred_region
      %s359 = ssub.s32 %s20, 1
      // Predicated region
      $region13: #{ms_mlp_forward.1} parent=11 // pred_check
        %p360 = pneg %p67
      $region14: #{ms_mlp_forward.1} parent=11 // pred_check_branch
        %362 = sbr.rel (%p360) target = $region16
      $region15: #{ms_mlp_forward.1} parent=11 // pred_region
        _
      $region16: #{ms_mlp_forward.1} parent=11 // pred_fallthru
        _
      // Predicated region
      $region17: #{ms_mlp_forward.1} parent=11 // pred_check
        %p363 = pneg %p88
      $region18: #{ms_mlp_forward.1} parent=11 // pred_check_branch
        %365 = sbr.rel (%p363) target = $region20
      $region19: #{ms_mlp_forward.1} parent=11 // pred_region
        _
      $region20: #{ms_mlp_forward.1} parent=11 // pred_fallthru
        _
      // Predicated region
      $region21: #{ms_mlp_forward.1} parent=11 // pred_check
        %p366 = pneg %p109
      $region22: #{ms_mlp_forward.1} parent=11 // pred_check_branch
        %368 = sbr.rel (%p366) target = $region24
      $region23: #{ms_mlp_forward.1} parent=11 // pred_region
        _
      $region24: #{ms_mlp_forward.1} parent=11 // pred_fallthru
        _
      // Predicated region
      $region25: #{ms_mlp_forward.1} parent=11 // pred_check
        %p369 = pneg %p130
      $region26: #{ms_mlp_forward.1} parent=11 // pred_check_branch
        %371 = sbr.rel (%p369) target = $region28
      $region27: #{ms_mlp_forward.1} parent=11 // pred_region
        _
      $region28: #{ms_mlp_forward.1} parent=11 // pred_fallthru
        _
      // Predicated region
      $region29: #{ms_mlp_forward.1} parent=11 // pred_check
        %p372 = pneg %p151
      $region30: #{ms_mlp_forward.1} parent=11 // pred_check_branch
        %374 = sbr.rel (%p372) target = $region32
      $region31: #{ms_mlp_forward.1} parent=11 // pred_region
        _
      $region32: #{ms_mlp_forward.1} parent=11 // pred_fallthru
        _
      // Predicated region
      $region33: #{ms_mlp_forward.1} parent=11 // pred_check
        %p375 = pneg %p172
      $region34: #{ms_mlp_forward.1} parent=11 // pred_check_branch
        %377 = sbr.rel (%p375) target = $region36
      $region35: #{ms_mlp_forward.1} parent=11 // pred_region
        _
      $region36: #{ms_mlp_forward.1} parent=11 // pred_fallthru
        _
      // Predicated region
      $region37: #{ms_mlp_forward.1} parent=11 // pred_check
        %p378 = pneg %p193
      $region38: #{ms_mlp_forward.1} parent=11 // pred_check_branch
        %380 = sbr.rel (%p378) target = $region40
      $region39: #{ms_mlp_forward.1} parent=11 // pred_region
        _
      $region40: #{ms_mlp_forward.1} parent=11 // pred_fallthru
        _
      // Predicated region
      $region41: #{ms_mlp_forward.1} parent=11 // pred_check
        %p381 = pneg %p214
      $region42: #{ms_mlp_forward.1} parent=11 // pred_check_branch
        %383 = sbr.rel (%p381) target = $region44
      $region43: #{ms_mlp_forward.1} parent=11 // pred_region
        _
      $region44: #{ms_mlp_forward.1} parent=11 // pred_fallthru
        _
      // Predicated region
      $region45: #{ms_mlp_forward.1} parent=11 // pred_check
        %p384 = pneg %p235
      $region46: #{ms_mlp_forward.1} parent=11 // pred_check_branch
        %386 = sbr.rel (%p384) target = $region48
      $region47: #{ms_mlp_forward.1} parent=11 // pred_region
        _
      $region48: #{ms_mlp_forward.1} parent=11 // pred_fallthru
        _
      // Predicated region
      $region49: #{ms_mlp_forward.1} parent=11 // pred_check
        %p387 = pneg %p256
      $region50: #{ms_mlp_forward.1} parent=11 // pred_check_branch
        %389 = sbr.rel (%p387) target = $region52
      $region51: #{ms_mlp_forward.1} parent=11 // pred_region
        _
      $region52: #{ms_mlp_forward.1} parent=11 // pred_fallthru
        _
      // Predicated region
      $region53: #{ms_mlp_forward.1} parent=11 // pred_check
        %p390 = pneg %p277
      $region54: #{ms_mlp_forward.1} parent=11 // pred_check_branch
        %392 = sbr.rel (%p390) target = $region56
      $region55: #{ms_mlp_forward.1} parent=11 // pred_region
        _
      $region56: #{ms_mlp_forward.1} parent=11 // pred_fallthru
        _
      // Predicated region
      $region57: #{ms_mlp_forward.1} parent=11 // pred_check
        %p393 = pneg %p298
      $region58: #{ms_mlp_forward.1} parent=11 // pred_check_branch
        %395 = sbr.rel (%p393) target = $region60
      $region59: #{ms_mlp_forward.1} parent=11 // pred_region
        _
      $region60: #{ms_mlp_forward.1} parent=11 // pred_fallthru
        _
      // Predicated region
      $region61: #{ms_mlp_forward.1} parent=11 // pred_check
        %p396 = pneg %p319
      $region62: #{ms_mlp_forward.1} parent=11 // pred_check_branch
        %398 = sbr.rel (%p396) target = $region64
      $region63: #{ms_mlp_forward.1} parent=11 // pred_region
        _
      $region64: #{ms_mlp_forward.1} parent=11 // pred_fallthru
        _
    $region12: #{ms_mlp_forward.1} parent=5 // pred_fallthru
      _
    %p399 = scmp.lt.s32.totalorder %s20, 2
    // Predicated region
    $region65: #{ms_mlp_forward.1} parent=5 // pred_check
      %p400 = pneg %p399
    $region66: #{ms_mlp_forward.1} parent=5 // pred_check_branch
      %402 = sbr.rel (%p400) target = $region68
    $region67: #{ms_mlp_forward.1} parent=5 // pred_region
      // Predicated region
      $region69: #{ms_mlp_forward.1} parent=67 // pred_check
        %p403 = pneg %p40
      $region70: #{ms_mlp_forward.1} parent=67 // pred_check_branch
        %405 = sbr.rel (%p403) target = $region72
      $region71: #{ms_mlp_forward.1} parent=67 // pred_region
        %p406 = scmp.lt.s32.totalorder %s20, 1
        %s407 = scalar_select %p406, %s20, 1
        %s408 = smul.addr %s407, 16
        %s409 = smul.addr %s408, 8
        %s410 = scalar_lea.vmem %s0, %s409
      $region72: #{ms_mlp_forward.1} parent=67 // pred_fallthru
        _
    $region68: #{ms_mlp_forward.1} parent=5 // pred_fallthru
      _
    %p411 = scmp.le.s32.totalorder 1, %s20
    %p412 = scmp.lt.s32.totalorder %s20, 3
    %p413 = pnand %p411, %p412
    %p414 = pneg %p413
    // Predicated region
    $region73: #{ms_mlp_forward.1} parent=5 // pred_check
      _
    $region74: #{ms_mlp_forward.1} parent=5 // pred_check_branch
      %416 = sbr.rel (%p413) target = $region76
    $region75: #{ms_mlp_forward.1} parent=5 // pred_region
      %s417 = ssub.s32 %s20, 1
      %p418 = scmp.lt.s32.totalorder %s25, 1
      %s419 = scalar_select %p418, %s25, 1
      %s420 = smul.addr %s419, 16
      %s421 = smul.addr %s420, 8
      %s422 = scalar_lea.vmem %s0, %s421
      %p423 = pneg %p46
      %p424 = pneg %p43
      %p425 = pneg %p67
      %p426 = pneg %p64
      %p427 = pneg %p88
      %p428 = pneg %p85
      %p429 = pneg %p109
      %p430 = pneg %p106
      %p431 = pneg %p130
      %p432 = pneg %p127
      %p433 = pneg %p151
      %p434 = pneg %p148
      %p435 = pneg %p172
      %p436 = pneg %p169
      %p437 = pneg %p193
      %p438 = pneg %p190
      %p439 = pneg %p214
      %p440 = pneg %p211
      %p441 = pneg %p235
      %p442 = pneg %p232
      %p443 = pneg %p256
      %p444 = pneg %p253
      %p445 = pneg %p277
      %p446 = pneg %p274
      %p447 = pneg %p298
      %p448 = pneg %p295
      %p449 = pneg %p319
      %p450 = pneg %p316
      %p451 = pneg %p345
      %p452 = pneg %p342
      %p453 = scmp.lt.s32.totalorder %s25, 1
      %s454 = scalar_select %p453, %s25, 1
      %s455 = smul.addr %s454, 32
      %s456 = smul.addr %s455, 8
      %s457 = scalar_lea.vmem %s14, %s456
      %p458 = scmp.lt.s32.totalorder %s25, 1
      %s459 = scalar_select %p458, %s25, 1
      %s460 = smul.addr %s459, 16
      %s461 = smul.addr %s460, 8
      %s462 = scalar_lea.vmem %s0, %s461
      %p463 = scmp.lt.s32.totalorder %s25, 1
      %s464 = scalar_select %p463, %s25, 1
      %s465 = smul.addr %s464, 32
      %s466 = smul.addr %s465, 8
      %s467 = scalar_lea.vmem %s14, %s466
      %468 = vst [vmem:[#allocation2] sm:$0xff] 0.0
      %469 = vst [vmem:[#allocation2 + $0x8] sm:$0xff] 0.0
      %470 = vst [vmem:[#allocation2 + $0x10] sm:$0x3] 0.0
      %s471 = scalar_lea.vmem [#allocation2], 216
      %472 = vst [vmem:[%s471] sm:$0xff] 0.0
      %473 = vst [vmem:[%s471 + $0x8] sm:$0xff] 0.0
      %474 = vst [vmem:[%s471 + $0x10] sm:$0x3] 0.0
      %s475 = scalar_lea.vmem [#allocation2], 24
      %476 = vst [vmem:[%s475] sm:$0x1] 0.0
      %477 = vst [vmem:[%s475 + $0x18] sm:$0x1] 0.0
      %478 = vst [vmem:[%s475 + $0x30] sm:$0x1] 0.0
      %479 = vst [vmem:[%s475 + $0x48] sm:$0x1] 0.0
      %480 = vst [vmem:[%s475 + $0x60] sm:$0x1] 0.0
      %481 = vst [vmem:[%s475 + $0x78] sm:$0x1] 0.0
      %482 = vst [vmem:[%s475 + $0x90] sm:$0x1] 0.0
      %483 = vst [vmem:[%s475 + $0xa8] sm:$0x1] 0.0
      %484 = vst [vmem:[%s475 + $0x11] sm:$0x1] 0.0
      %485 = vst [vmem:[%s475 + $0x29] sm:$0x1] 0.0
      %486 = vst [vmem:[%s475 + $0x41] sm:$0x1] 0.0
      %487 = vst [vmem:[%s475 + $0x59] sm:$0x1] 0.0
      %488 = vst [vmem:[%s475 + $0x71] sm:$0x1] 0.0
      %489 = vst [vmem:[%s475 + $0x89] sm:$0x1] 0.0
      %490 = vst [vmem:[%s475 + $0xa1] sm:$0x1] 0.0
      %491 = vst [vmem:[%s475 + $0xb9] sm:$0x1] 0.0
      %v492 = vld [vmem:[%s462] sm:$0xff]
      %v493 = vld [vmem:[%s462 + $0x8] sm:$0xff]
      %v494 = vld [vmem:[%s462 + $0x10] sm:$0xff]
      %v495 = vld [vmem:[%s462 + $0x18] sm:$0xff]
      %v496 = vld [vmem:[%s462 + $0x20] sm:$0xff]
      %v497 = vld [vmem:[%s462 + $0x28] sm:$0xff]
      %v498 = vld [vmem:[%s462 + $0x30] sm:$0xff]
      %v499 = vld [vmem:[%s462 + $0x38] sm:$0xff]
      %v500 = vld [vmem:[%s462 + $0x40] sm:$0xff]
      %v501 = vld [vmem:[%s462 + $0x48] sm:$0xff]
      %v502 = vld [vmem:[%s462 + $0x50] sm:$0xff]
      %v503 = vld [vmem:[%s462 + $0x58] sm:$0xff]
      %v504 = vld [vmem:[%s462 + $0x60] sm:$0xff]
      %v505 = vld [vmem:[%s462 + $0x68] sm:$0xff]
      %v506 = vld [vmem:[%s462 + $0x70] sm:$0xff]
      %v507 = vld [vmem:[%s462 + $0x78] sm:$0xff]
      %508 = vst [vmem:[%s475 + $0x1] sm:$0xff] %v492
      %509 = vst [vmem:[%s475 + $0x9] sm:$0xff] %v493
      %510 = vst [vmem:[%s475 + $0x19] sm:$0xff] %v494
      %511 = vst [vmem:[%s475 + $0x21] sm:$0xff] %v495
      %512 = vst [vmem:[%s475 + $0x31] sm:$0xff] %v496
      %513 = vst [vmem:[%s475 + $0x39] sm:$0xff] %v497
      %514 = vst [vmem:[%s475 + $0x49] sm:$0xff] %v498
      %515 = vst [vmem:[%s475 + $0x51] sm:$0xff] %v499
      %516 = vst [vmem:[%s475 + $0x61] sm:$0xff] %v500
      %517 = vst [vmem:[%s475 + $0x69] sm:$0xff] %v501
      %518 = vst [vmem:[%s475 + $0x79] sm:$0xff] %v502
      %519 = vst [vmem:[%s475 + $0x81] sm:$0xff] %v503
      %520 = vst [vmem:[%s475 + $0x91] sm:$0xff] %v504
      %521 = vst [vmem:[%s475 + $0x99] sm:$0xff] %v505
      %522 = vst [vmem:[%s475 + $0xa9] sm:$0xff] %v506
      %523 = vst [vmem:[%s475 + $0xb1] sm:$0xff] %v507
      %v524 = vld [vmem:[%s1] sm:$0xff]
      %v525 = vld [vmem:[%s1 + $0x8] sm:$0x3]
      %v526 = vld [vmem:[#allocation2] sm:$0xff]
      %v527 = vld [vmem:[#allocation2 + $0x8] sm:$0xff]
      %v528 = vld [vmem:[#allocation2 + $0x18] sm:$0xff]
      %v529 = vld [vmem:[#allocation2 + $0x20] sm:$0xff]
      %v530 = vld [vmem:[#allocation2 + $0x30] sm:$0xff]
      %v531 = vld [vmem:[#allocation2 + $0x38] sm:$0xff]
      %v532 = vld [vmem:[#allocation2 + $0x48] sm:$0xff]
      %v533 = vld [vmem:[#allocation2 + $0x50] sm:$0xff]
      %v534 = vld [vmem:[#allocation2 + $0x60] sm:$0xff]
      %v535 = vld [vmem:[#allocation2 + $0x68] sm:$0xff]
      %v536 = vld [vmem:[#allocation2 + $0x78] sm:$0xff]
      %v537 = vld [vmem:[#allocation2 + $0x80] sm:$0xff]
      %v538 = vld [vmem:[#allocation2 + $0x90] sm:$0xff]
      %v539 = vld [vmem:[#allocation2 + $0x98] sm:$0xff]
      %v540 = vld [vmem:[#allocation2 + $0xa8] sm:$0xff]
      %v541 = vld [vmem:[#allocation2 + $0xb0] sm:$0xff]
      %v542 = vlaneseq
      %v543 = vshrl.u32 %v542, 7
      %v544 = vsub.s32 0, %v543
      %v545 = vrot.slane %v524, %v544
      %v546 = vmul.f32 %v526, %v545
      %v547 = vmul.f32 %v527, %v545
      %v548 = vmul.f32 %v528, %v545
      %v549 = vmul.f32 %v529, %v545
      %v550 = vmul.f32 %v530, %v545
      %v551 = vmul.f32 %v531, %v545
      %v552 = vmul.f32 %v532, %v545
      %v553 = vmul.f32 %v533, %v545
      %v554 = vmul.f32 %v534, %v545
      %v555 = vmul.f32 %v535, %v545
      %v556 = vmul.f32 %v536, %v545
      %v557 = vmul.f32 %v537, %v545
      %v558 = vmul.f32 %v538, %v545
      %v559 = vmul.f32 %v539, %v545
      %v560 = vmul.f32 %v540, %v545
      %v561 = vmul.f32 %v541, %v545
      %v562 = vld [vmem:[#allocation2 + $0x1] sm:$0xff]
      %v563 = vld [vmem:[#allocation2 + $0x9] sm:$0xff]
      %v564 = vld [vmem:[#allocation2 + $0x19] sm:$0xff]
      %v565 = vld [vmem:[#allocation2 + $0x21] sm:$0xff]
      %v566 = vld [vmem:[#allocation2 + $0x31] sm:$0xff]
      %v567 = vld [vmem:[#allocation2 + $0x39] sm:$0xff]
      %v568 = vld [vmem:[#allocation2 + $0x49] sm:$0xff]
      %v569 = vld [vmem:[#allocation2 + $0x51] sm:$0xff]
      %v570 = vld [vmem:[#allocation2 + $0x61] sm:$0xff]
      %v571 = vld [vmem:[#allocation2 + $0x69] sm:$0xff]
      %v572 = vld [vmem:[#allocation2 + $0x79] sm:$0xff]
      %v573 = vld [vmem:[#allocation2 + $0x81] sm:$0xff]
      %v574 = vld [vmem:[#allocation2 + $0x91] sm:$0xff]
      %v575 = vld [vmem:[#allocation2 + $0x99] sm:$0xff]
      %v576 = vld [vmem:[#allocation2 + $0xa9] sm:$0xff]
      %v577 = vld [vmem:[#allocation2 + $0xb1] sm:$0xff]
      %v578 = vlaneseq
      %v579 = vshrl.u32 %v578, 7
      %v580 = vsub.s32 1, %v579
      %v581 = vrot.slane %v524, %v580
      %v582 = vmul.f32 %v562, %v581
      %v583 = vmul.f32 %v563, %v581
      %v584 = vmul.f32 %v564, %v581
      %v585 = vmul.f32 %v565, %v581
      %v586 = vmul.f32 %v566, %v581
      %v587 = vmul.f32 %v567, %v581
      %v588 = vmul.f32 %v568, %v581
      %v589 = vmul.f32 %v569, %v581
      %v590 = vmul.f32 %v570, %v581
      %v591 = vmul.f32 %v571, %v581
      %v592 = vmul.f32 %v572, %v581
      %v593 = vmul.f32 %v573, %v581
      %v594 = vmul.f32 %v574, %v581
      %v595 = vmul.f32 %v575, %v581
      %v596 = vmul.f32 %v576, %v581
      %v597 = vmul.f32 %v577, %v581
      %v598 = vadd.f32 %v546, %v582
      %v599 = vadd.f32 %v547, %v583
      %v600 = vadd.f32 %v548, %v584
      %v601 = vadd.f32 %v549, %v585
      %v602 = vadd.f32 %v550, %v586
      %v603 = vadd.f32 %v551, %v587
      %v604 = vadd.f32 %v552, %v588
      %v605 = vadd.f32 %v553, %v589
      %v606 = vadd.f32 %v554, %v590
      %v607 = vadd.f32 %v555, %v591
      %v608 = vadd.f32 %v556, %v592
      %v609 = vadd.f32 %v557, %v593
      %v610 = vadd.f32 %v558, %v594
      %v611 = vadd.f32 %v559, %v595
      %v612 = vadd.f32 %v560, %v596
      %v613 = vadd.f32 %v561, %v597
      %v614 = vld [vmem:[#allocation2 + $0x2] sm:$0xff]
      %v615 = vld [vmem:[#allocation2 + $0xa] sm:$0xff]
      %v616 = vld [vmem:[#allocation2 + $0x1a] sm:$0xff]
      %v617 = vld [vmem:[#allocation2 + $0x22] sm:$0xff]
      %v618 = vld [vmem:[#allocation2 + $0x32] sm:$0xff]
      %v619 = vld [vmem:[#allocation2 + $0x3a] sm:$0xff]
      %v620 = vld [vmem:[#allocation2 + $0x4a] sm:$0xff]
      %v621 = vld [vmem:[#allocation2 + $0x52] sm:$0xff]
      %v622 = vld [vmem:[#allocation2 + $0x62] sm:$0xff]
      %v623 = vld [vmem:[#allocation2 + $0x6a] sm:$0xff]
      %v624 = vld [vmem:[#allocation2 + $0x7a] sm:$0xff]
      %v625 = vld [vmem:[#allocation2 + $0x82] sm:$0xff]
      %v626 = vld [vmem:[#allocation2 + $0x92] sm:$0xff]
      %v627 = vld [vmem:[#allocation2 + $0x9a] sm:$0xff]
      %v628 = vld [vmem:[#allocation2 + $0xaa] sm:$0xff]
      %v629 = vld [vmem:[#allocation2 + $0xb2] sm:$0xff]
      %v630 = vlaneseq
      %v631 = vshrl.u32 %v630, 7
      %v632 = vsub.s32 2, %v631
      %v633 = vrot.slane %v524, %v632
      %v634 = vmul.f32 %v614, %v633
      %v635 = vmul.f32 %v615, %v633
      %v636 = vmul.f32 %v616, %v633
      %v637 = vmul.f32 %v617, %v633
      %v638 = vmul.f32 %v618, %v633
      %v639 = vmul.f32 %v619, %v633
      %v640 = vmul.f32 %v620, %v633
      %v641 = vmul.f32 %v621, %v633
      %v642 = vmul.f32 %v622, %v633
      %v643 = vmul.f32 %v623, %v633
      %v644 = vmul.f32 %v624, %v633
      %v645 = vmul.f32 %v625, %v633
      %v646 = vmul.f32 %v626, %v633
      %v647 = vmul.f32 %v627, %v633
      %v648 = vmul.f32 %v628, %v633
      %v649 = vmul.f32 %v629, %v633
      %v650 = vadd.f32 %v598, %v634
      %v651 = vadd.f32 %v599, %v635
      %v652 = vadd.f32 %v600, %v636
      %v653 = vadd.f32 %v601, %v637
      %v654 = vadd.f32 %v602, %v638
      %v655 = vadd.f32 %v603, %v639
      %v656 = vadd.f32 %v604, %v640
      %v657 = vadd.f32 %v605, %v641
      %v658 = vadd.f32 %v606, %v642
      %v659 = vadd.f32 %v607, %v643
      %v660 = vadd.f32 %v608, %v644
      %v661 = vadd.f32 %v609, %v645
      %v662 = vadd.f32 %v610, %v646
      %v663 = vadd.f32 %v611, %v647
      %v664 = vadd.f32 %v612, %v648
      %v665 = vadd.f32 %v613, %v649
      %v666 = vld [vmem:[%s475] sm:$0xff]
      %v667 = vld [vmem:[%s475 + $0x8] sm:$0xff]
      %v668 = vld [vmem:[%s475 + $0x18] sm:$0xff]
      %v669 = vld [vmem:[%s475 + $0x20] sm:$0xff]
      %v670 = vld [vmem:[%s475 + $0x30] sm:$0xff]
      %v671 = vld [vmem:[%s475 + $0x38] sm:$0xff]
      %v672 = vld [vmem:[%s475 + $0x48] sm:$0xff]
      %v673 = vld [vmem:[%s475 + $0x50] sm:$0xff]
      %v674 = vld [vmem:[%s475 + $0x60] sm:$0xff]
      %v675 = vld [vmem:[%s475 + $0x68] sm:$0xff]
      %v676 = vld [vmem:[%s475 + $0x78] sm:$0xff]
      %v677 = vld [vmem:[%s475 + $0x80] sm:$0xff]
      %v678 = vld [vmem:[%s475 + $0x90] sm:$0xff]
      %v679 = vld [vmem:[%s475 + $0x98] sm:$0xff]
      %v680 = vld [vmem:[%s475 + $0xa8] sm:$0xff]
      %v681 = vld [vmem:[%s475 + $0xb0] sm:$0xff]
      %v682 = vlaneseq
      %v683 = vshrl.u32 %v682, 7
      %v684 = vsub.s32 3, %v683
      %v685 = vrot.slane %v524, %v684
      %v686 = vmul.f32 %v666, %v685
      %v687 = vmul.f32 %v667, %v685
      %v688 = vmul.f32 %v668, %v685
      %v689 = vmul.f32 %v669, %v685
      %v690 = vmul.f32 %v670, %v685
      %v691 = vmul.f32 %v671, %v685
      %v692 = vmul.f32 %v672, %v685
      %v693 = vmul.f32 %v673, %v685
      %v694 = vmul.f32 %v674, %v685
      %v695 = vmul.f32 %v675, %v685
      %v696 = vmul.f32 %v676, %v685
      %v697 = vmul.f32 %v677, %v685
      %v698 = vmul.f32 %v678, %v685
      %v699 = vmul.f32 %v679, %v685
      %v700 = vmul.f32 %v680, %v685
      %v701 = vmul.f32 %v681, %v685
      %v702 = vadd.f32 %v650, %v686
      %v703 = vadd.f32 %v651, %v687
      %v704 = vadd.f32 %v652, %v688
      %v705 = vadd.f32 %v653, %v689
      %v706 = vadd.f32 %v654, %v690
      %v707 = vadd.f32 %v655, %v691
      %v708 = vadd.f32 %v656, %v692
      %v709 = vadd.f32 %v657, %v693
      %v710 = vadd.f32 %v658, %v694
      %v711 = vadd.f32 %v659, %v695
      %v712 = vadd.f32 %v660, %v696
      %v713 = vadd.f32 %v661, %v697
      %v714 = vadd.f32 %v662, %v698
      %v715 = vadd.f32 %v663, %v699
      %v716 = vadd.f32 %v664, %v700
      %v717 = vadd.f32 %v665, %v701
      %v718 = vld [vmem:[%s475 + $0x1] sm:$0xff]
      %v719 = vld [vmem:[%s475 + $0x9] sm:$0xff]
      %v720 = vld [vmem:[%s475 + $0x19] sm:$0xff]
      %v721 = vld [vmem:[%s475 + $0x21] sm:$0xff]
      %v722 = vld [vmem:[%s475 + $0x31] sm:$0xff]
      %v723 = vld [vmem:[%s475 + $0x39] sm:$0xff]
      %v724 = vld [vmem:[%s475 + $0x49] sm:$0xff]
      %v725 = vld [vmem:[%s475 + $0x51] sm:$0xff]
      %v726 = vld [vmem:[%s475 + $0x61] sm:$0xff]
      %v727 = vld [vmem:[%s475 + $0x69] sm:$0xff]
      %v728 = vld [vmem:[%s475 + $0x79] sm:$0xff]
      %v729 = vld [vmem:[%s475 + $0x81] sm:$0xff]
      %v730 = vld [vmem:[%s475 + $0x91] sm:$0xff]
      %v731 = vld [vmem:[%s475 + $0x99] sm:$0xff]
      %v732 = vld [vmem:[%s475 + $0xa9] sm:$0xff]
      %v733 = vld [vmem:[%s475 + $0xb1] sm:$0xff]
      %v734 = vlaneseq
      %v735 = vshrl.u32 %v734, 7
      %v736 = vsub.s32 4, %v735
      %v737 = vrot.slane %v524, %v736
      %v738 = vmul.f32 %v718, %v737
      %v739 = vmul.f32 %v719, %v737
      %v740 = vmul.f32 %v720, %v737
      %v741 = vmul.f32 %v721, %v737
      %v742 = vmul.f32 %v722, %v737
      %v743 = vmul.f32 %v723, %v737
      %v744 = vmul.f32 %v724, %v737
      %v745 = vmul.f32 %v725, %v737
      %v746 = vmul.f32 %v726, %v737
      %v747 = vmul.f32 %v727, %v737
      %v748 = vmul.f32 %v728, %v737
      %v749 = vmul.f32 %v729, %v737
      %v750 = vmul.f32 %v730, %v737
      %v751 = vmul.f32 %v731, %v737
      %v752 = vmul.f32 %v732, %v737
      %v753 = vmul.f32 %v733, %v737
      %v754 = vadd.f32 %v702, %v738
      %v755 = vadd.f32 %v703, %v739
      %v756 = vadd.f32 %v704, %v740
      %v757 = vadd.f32 %v705, %v741
      %v758 = vadd.f32 %v706, %v742
      %v759 = vadd.f32 %v707, %v743
      %v760 = vadd.f32 %v708, %v744
      %v761 = vadd.f32 %v709, %v745
      %v762 = vadd.f32 %v710, %v746
      %v763 = vadd.f32 %v711, %v747
      %v764 = vadd.f32 %v712, %v748
      %v765 = vadd.f32 %v713, %v749
      %v766 = vadd.f32 %v714, %v750
      %v767 = vadd.f32 %v715, %v751
      %v768 = vadd.f32 %v716, %v752
      %v769 = vadd.f32 %v717, %v753
      %v770 = vld [vmem:[%s475 + $0x2] sm:$0xff]
      %v771 = vld [vmem:[%s475 + $0xa] sm:$0xff]
      %v772 = vld [vmem:[%s475 + $0x1a] sm:$0xff]
      %v773 = vld [vmem:[%s475 + $0x22] sm:$0xff]
      %v774 = vld [vmem:[%s475 + $0x32] sm:$0xff]
      %v775 = vld [vmem:[%s475 + $0x3a] sm:$0xff]
      %v776 = vld [vmem:[%s475 + $0x4a] sm:$0xff]
      %v777 = vld [vmem:[%s475 + $0x52] sm:$0xff]
      %v778 = vld [vmem:[%s475 + $0x62] sm:$0xff]
      %v779 = vld [vmem:[%s475 + $0x6a] sm:$0xff]
      %v780 = vld [vmem:[%s475 + $0x7a] sm:$0xff]
      %v781 = vld [vmem:[%s475 + $0x82] sm:$0xff]
      %v782 = vld [vmem:[%s475 + $0x92] sm:$0xff]
      %v783 = vld [vmem:[%s475 + $0x9a] sm:$0xff]
      %v784 = vld [vmem:[%s475 + $0xaa] sm:$0xff]
      %v785 = vld [vmem:[%s475 + $0xb2] sm:$0xff]
      %v786 = vlaneseq
      %v787 = vshrl.u32 %v786, 7
      %v788 = vsub.s32 5, %v787
      %v789 = vrot.slane %v524, %v788
      %v790 = vmul.f32 %v770, %v789
      %v791 = vmul.f32 %v771, %v789
      %v792 = vmul.f32 %v772, %v789
      %v793 = vmul.f32 %v773, %v789
      %v794 = vmul.f32 %v774, %v789
      %v795 = vmul.f32 %v775, %v789
      %v796 = vmul.f32 %v776, %v789
      %v797 = vmul.f32 %v777, %v789
      %v798 = vmul.f32 %v778, %v789
      %v799 = vmul.f32 %v779, %v789
      %v800 = vmul.f32 %v780, %v789
      %v801 = vmul.f32 %v781, %v789
      %v802 = vmul.f32 %v782, %v789
      %v803 = vmul.f32 %v783, %v789
      %v804 = vmul.f32 %v784, %v789
      %v805 = vmul.f32 %v785, %v789
      %v806 = vadd.f32 %v754, %v790
      %v807 = vadd.f32 %v755, %v791
      %v808 = vadd.f32 %v756, %v792
      %v809 = vadd.f32 %v757, %v793
      %v810 = vadd.f32 %v758, %v794
      %v811 = vadd.f32 %v759, %v795
      %v812 = vadd.f32 %v760, %v796
      %v813 = vadd.f32 %v761, %v797
      %v814 = vadd.f32 %v762, %v798
      %v815 = vadd.f32 %v763, %v799
      %v816 = vadd.f32 %v764, %v800
      %v817 = vadd.f32 %v765, %v801
      %v818 = vadd.f32 %v766, %v802
      %v819 = vadd.f32 %v767, %v803
      %v820 = vadd.f32 %v768, %v804
      %v821 = vadd.f32 %v769, %v805
      %s822 = scalar_lea.vmem [#allocation2], 48
      %v823 = vld [vmem:[%s822] sm:$0xff]
      %v824 = vld [vmem:[%s822 + $0x8] sm:$0xff]
      %v825 = vld [vmem:[%s822 + $0x18] sm:$0xff]
      %v826 = vld [vmem:[%s822 + $0x20] sm:$0xff]
      %v827 = vld [vmem:[%s822 + $0x30] sm:$0xff]
      %v828 = vld [vmem:[%s822 + $0x38] sm:$0xff]
      %v829 = vld [vmem:[%s822 + $0x48] sm:$0xff]
      %v830 = vld [vmem:[%s822 + $0x50] sm:$0xff]
      %v831 = vld [vmem:[%s822 + $0x60] sm:$0xff]
      %v832 = vld [vmem:[%s822 + $0x68] sm:$0xff]
      %v833 = vld [vmem:[%s822 + $0x78] sm:$0xff]
      %v834 = vld [vmem:[%s822 + $0x80] sm:$0xff]
      %v835 = vld [vmem:[%s822 + $0x90] sm:$0xff]
      %v836 = vld [vmem:[%s822 + $0x98] sm:$0xff]
      %v837 = vld [vmem:[%s822 + $0xa8] sm:$0xff]
      %v838 = vld [vmem:[%s822 + $0xb0] sm:$0xff]
      %v839 = vlaneseq
      %v840 = vshrl.u32 %v839, 7
      %v841 = vsub.s32 6, %v840
      %v842 = vrot.slane %v524, %v841
      %v843 = vmul.f32 %v823, %v842
      %v844 = vmul.f32 %v824, %v842
      %v845 = vmul.f32 %v825, %v842
      %v846 = vmul.f32 %v826, %v842
      %v847 = vmul.f32 %v827, %v842
      %v848 = vmul.f32 %v828, %v842
      %v849 = vmul.f32 %v829, %v842
      %v850 = vmul.f32 %v830, %v842
      %v851 = vmul.f32 %v831, %v842
      %v852 = vmul.f32 %v832, %v842
      %v853 = vmul.f32 %v833, %v842
      %v854 = vmul.f32 %v834, %v842
      %v855 = vmul.f32 %v835, %v842
      %v856 = vmul.f32 %v836, %v842
      %v857 = vmul.f32 %v837, %v842
      %v858 = vmul.f32 %v838, %v842
      %v859 = vadd.f32 %v806, %v843
      %v860 = vadd.f32 %v807, %v844
      %v861 = vadd.f32 %v808, %v845
      %v862 = vadd.f32 %v809, %v846
      %v863 = vadd.f32 %v810, %v847
      %v864 = vadd.f32 %v811, %v848
      %v865 = vadd.f32 %v812, %v849
      %v866 = vadd.f32 %v813, %v850
      %v867 = vadd.f32 %v814, %v851
      %v868 = vadd.f32 %v815, %v852
      %v869 = vadd.f32 %v816, %v853
      %v870 = vadd.f32 %v817, %v854
      %v871 = vadd.f32 %v818, %v855
      %v872 = vadd.f32 %v819, %v856
      %v873 = vadd.f32 %v820, %v857
      %v874 = vadd.f32 %v821, %v858
      %v875 = vld [vmem:[%s822 + $0x1] sm:$0xff]
      %v876 = vld [vmem:[%s822 + $0x9] sm:$0xff]
      %v877 = vld [vmem:[%s822 + $0x19] sm:$0xff]
      %v878 = vld [vmem:[%s822 + $0x21] sm:$0xff]
      %v879 = vld [vmem:[%s822 + $0x31] sm:$0xff]
      %v880 = vld [vmem:[%s822 + $0x39] sm:$0xff]
      %v881 = vld [vmem:[%s822 + $0x49] sm:$0xff]
      %v882 = vld [vmem:[%s822 + $0x51] sm:$0xff]
      %v883 = vld [vmem:[%s822 + $0x61] sm:$0xff]
      %v884 = vld [vmem:[%s822 + $0x69] sm:$0xff]
      %v885 = vld [vmem:[%s822 + $0x79] sm:$0xff]
      %v886 = vld [vmem:[%s822 + $0x81] sm:$0xff]
      %v887 = vld [vmem:[%s822 + $0x91] sm:$0xff]
      %v888 = vld [vmem:[%s822 + $0x99] sm:$0xff]
      %v889 = vld [vmem:[%s822 + $0xa9] sm:$0xff]
      %v890 = vld [vmem:[%s822 + $0xb1] sm:$0xff]
      %v891 = vlaneseq
      %v892 = vshrl.u32 %v891, 7
      %v893 = vsub.s32 7, %v892
      %v894 = vrot.slane %v524, %v893
      %v895 = vmul.f32 %v875, %v894
      %v896 = vmul.f32 %v876, %v894
      %v897 = vmul.f32 %v877, %v894
      %v898 = vmul.f32 %v878, %v894
      %v899 = vmul.f32 %v879, %v894
      %v900 = vmul.f32 %v880, %v894
      %v901 = vmul.f32 %v881, %v894
      %v902 = vmul.f32 %v882, %v894
      %v903 = vmul.f32 %v883, %v894
      %v904 = vmul.f32 %v884, %v894
      %v905 = vmul.f32 %v885, %v894
      %v906 = vmul.f32 %v886, %v894
      %v907 = vmul.f32 %v887, %v894
      %v908 = vmul.f32 %v888, %v894
      %v909 = vmul.f32 %v889, %v894
      %v910 = vmul.f32 %v890, %v894
      %v911 = vadd.f32 %v859, %v895
      %v912 = vadd.f32 %v860, %v896
      %v913 = vadd.f32 %v861, %v897
      %v914 = vadd.f32 %v862, %v898
      %v915 = vadd.f32 %v863, %v899
      %v916 = vadd.f32 %v864, %v900
      %v917 = vadd.f32 %v865, %v901
      %v918 = vadd.f32 %v866, %v902
      %v919 = vadd.f32 %v867, %v903
      %v920 = vadd.f32 %v868, %v904
      %v921 = vadd.f32 %v869, %v905
      %v922 = vadd.f32 %v870, %v906
      %v923 = vadd.f32 %v871, %v907
      %v924 = vadd.f32 %v872, %v908
      %v925 = vadd.f32 %v873, %v909
      %v926 = vadd.f32 %v874, %v910
      %v927 = vld [vmem:[%s822 + $0x2] sm:$0xff]
      %v928 = vld [vmem:[%s822 + $0xa] sm:$0xff]
      %v929 = vld [vmem:[%s822 + $0x1a] sm:$0xff]
      %v930 = vld [vmem:[%s822 + $0x22] sm:$0xff]
      %v931 = vld [vmem:[%s822 + $0x32] sm:$0xff]
      %v932 = vld [vmem:[%s822 + $0x3a] sm:$0xff]
      %v933 = vld [vmem:[%s822 + $0x4a] sm:$0xff]
      %v934 = vld [vmem:[%s822 + $0x52] sm:$0xff]
      %v935 = vld [vmem:[%s822 + $0x62] sm:$0xff]
      %v936 = vld [vmem:[%s822 + $0x6a] sm:$0xff]
      %v937 = vld [vmem:[%s822 + $0x7a] sm:$0xff]
      %v938 = vld [vmem:[%s822 + $0x82] sm:$0xff]
      %v939 = vld [vmem:[%s822 + $0x92] sm:$0xff]
      %v940 = vld [vmem:[%s822 + $0x9a] sm:$0xff]
      %v941 = vld [vmem:[%s822 + $0xaa] sm:$0xff]
      %v942 = vld [vmem:[%s822 + $0xb2] sm:$0xff]
      %v943 = vlaneseq
      %v944 = vshrl.u32 %v943, 7
      %v945 = vsub.s32 0, %v944
      %v946 = vrot.slane %v525, %v945
      %v947 = vmul.f32 %v927, %v946
      %v948 = vmul.f32 %v928, %v946
      %v949 = vmul.f32 %v929, %v946
      %v950 = vmul.f32 %v930, %v946
      %v951 = vmul.f32 %v931, %v946
      %v952 = vmul.f32 %v932, %v946
      %v953 = vmul.f32 %v933, %v946
      %v954 = vmul.f32 %v934, %v946
      %v955 = vmul.f32 %v935, %v946
      %v956 = vmul.f32 %v936, %v946
      %v957 = vmul.f32 %v937, %v946
      %v958 = vmul.f32 %v938, %v946
      %v959 = vmul.f32 %v939, %v946
      %v960 = vmul.f32 %v940, %v946
      %v961 = vmul.f32 %v941, %v946
      %v962 = vmul.f32 %v942, %v946
      %v963 = vadd.f32 %v911, %v947
      %v964 = vadd.f32 %v912, %v948
      %v965 = vadd.f32 %v913, %v949
      %v966 = vadd.f32 %v914, %v950
      %v967 = vadd.f32 %v915, %v951
      %v968 = vadd.f32 %v916, %v952
      %v969 = vadd.f32 %v917, %v953
      %v970 = vadd.f32 %v918, %v954
      %v971 = vadd.f32 %v919, %v955
      %v972 = vadd.f32 %v920, %v956
      %v973 = vadd.f32 %v921, %v957
      %v974 = vadd.f32 %v922, %v958
      %v975 = vadd.f32 %v923, %v959
      %v976 = vadd.f32 %v924, %v960
      %v977 = vadd.f32 %v925, %v961
      %v978 = vadd.f32 %v926, %v962
      %v979 = vlaneseq
      %v980 = vshrl.u32 %v979, 7
      %v981 = vsub.s32 1, %v980
      %v982 = vrot.slane %v525, %v981
      %v983 = vadd.f32 %v963, %v982
      %v984 = vadd.f32 %v964, %v982
      %v985 = vadd.f32 %v965, %v982
      %v986 = vadd.f32 %v966, %v982
      %v987 = vadd.f32 %v967, %v982
      %v988 = vadd.f32 %v968, %v982
      %v989 = vadd.f32 %v969, %v982
      %v990 = vadd.f32 %v970, %v982
      %v991 = vadd.f32 %v971, %v982
      %v992 = vadd.f32 %v972, %v982
      %v993 = vadd.f32 %v973, %v982
      %v994 = vadd.f32 %v974, %v982
      %v995 = vadd.f32 %v975, %v982
      %v996 = vadd.f32 %v976, %v982
      %v997 = vadd.f32 %v977, %v982
      %v998 = vadd.f32 %v978, %v982
      %v999 = vmax.f32 %v983, 0.0
      %v1000 = vmax.f32 %v984, 0.0
      %v1001 = vmax.f32 %v985, 0.0
      %v1002 = vmax.f32 %v986, 0.0
      %v1003 = vmax.f32 %v987, 0.0
      %v1004 = vmax.f32 %v988, 0.0
      %v1005 = vmax.f32 %v989, 0.0
      %v1006 = vmax.f32 %v990, 0.0
      %v1007 = vmax.f32 %v991, 0.0
      %v1008 = vmax.f32 %v992, 0.0
      %v1009 = vmax.f32 %v993, 0.0
      %v1010 = vmax.f32 %v994, 0.0
      %v1011 = vmax.f32 %v995, 0.0
      %v1012 = vmax.f32 %v996, 0.0
      %v1013 = vmax.f32 %v997, 0.0
      %v1014 = vmax.f32 %v998, 0.0
      %v1015 = vld [vmem:[%s462] sm:$0xff]
      %v1016 = vld [vmem:[%s462 + $0x8] sm:$0xff]
      %v1017 = vld [vmem:[%s462 + $0x10] sm:$0xff]
      %v1018 = vld [vmem:[%s462 + $0x18] sm:$0xff]
      %v1019 = vld [vmem:[%s462 + $0x20] sm:$0xff]
      %v1020 = vld [vmem:[%s462 + $0x28] sm:$0xff]
      %v1021 = vld [vmem:[%s462 + $0x30] sm:$0xff]
      %v1022 = vld [vmem:[%s462 + $0x38] sm:$0xff]
      %v1023 = vld [vmem:[%s462 + $0x40] sm:$0xff]
      %v1024 = vld [vmem:[%s462 + $0x48] sm:$0xff]
      %v1025 = vld [vmem:[%s462 + $0x50] sm:$0xff]
      %v1026 = vld [vmem:[%s462 + $0x58] sm:$0xff]
      %v1027 = vld [vmem:[%s462 + $0x60] sm:$0xff]
      %v1028 = vld [vmem:[%s462 + $0x68] sm:$0xff]
      %v1029 = vld [vmem:[%s462 + $0x70] sm:$0xff]
      %v1030 = vld [vmem:[%s462 + $0x78] sm:$0xff]
      %v1031 = vld [vmem:[%s2] sm:$0xff]
      %v1032 = vld [vmem:[%s2 + $0x8] sm:$0xff]
      %v1033 = vld [vmem:[%s2 + $0x10] sm:$0xff]
      %v1034 = vld [vmem:[%s2 + $0x18] sm:$0xff]
      %v1035 = vld [vmem:[%s2 + $0x20] sm:$0xff]
      %v1036 = vld [vmem:[%s2 + $0x28] sm:$0xff]
      %v1037 = vld [vmem:[%s2 + $0x30] sm:$0xff]
      %v1038 = vld [vmem:[%s2 + $0x38] sm:$0xff]
      %v1039 = vld [vmem:[%s2 + $0x40] sm:$0xff]
      %v1040 = vld [vmem:[%s2 + $0x48] sm:$0xff]
      %v1041 = vld [vmem:[%s2 + $0x50] sm:$0xff]
      %v1042 = vld [vmem:[%s2 + $0x58] sm:$0xff]
      %v1043 = vld [vmem:[%s2 + $0x60] sm:$0xff]
      %v1044 = vld [vmem:[%s2 + $0x68] sm:$0xff]
      %v1045 = vld [vmem:[%s2 + $0x70] sm:$0xff]
      %v1046 = vld [vmem:[%s2 + $0x78] sm:$0xff]
      %1047 = vmatprep.subr.mxu0 0.0
      %1048 = vmatpush1.msra.mxu0 %v1046
      %1049 = vmatprep.subr.mxu0 0.0
      %1050 = vmatpush1.msra.mxu0 %v1045
      %1051 = vmatprep.subr.mxu0 0.0
      %1052 = vmatpush1.msra.mxu0 %v1044
      %1053 = vmatprep.subr.mxu0 0.0
      %1054 = vmatpush1.msra.mxu0 %v1043
      %1055 = vmatprep.subr.mxu0 0.0
      %1056 = vmatpush1.msra.mxu0 %v1042
      %1057 = vmatprep.subr.mxu0 0.0
      %1058 = vmatpush1.msra.mxu0 %v1041
      %1059 = vmatprep.subr.mxu0 0.0
      %1060 = vmatpush1.msra.mxu0 %v1040
      %1061 = vmatprep.subr.mxu0 0.0
      %1062 = vmatpush1.msra.mxu0 %v1039
      %1063 = vmatprep.subr.mxu0 0.0
      %1064 = vmatpush1.msra.mxu0 %v1038
      %1065 = vmatprep.subr.mxu0 0.0
      %1066 = vmatpush1.msra.mxu0 %v1037
      %1067 = vmatprep.subr.mxu0 0.0
      %1068 = vmatpush1.msra.mxu0 %v1036
      %1069 = vmatprep.subr.mxu0 0.0
      %1070 = vmatpush1.msra.mxu0 %v1035
      %1071 = vmatprep.subr.mxu0 0.0
      %1072 = vmatpush1.msra.mxu0 %v1034
      %1073 = vmatprep.subr.mxu0 0.0
      %1074 = vmatpush1.msra.mxu0 %v1033
      %1075 = vmatprep.subr.mxu0 0.0
      %1076 = vmatpush1.msra.mxu0 %v1032
      %1077 = vmatprep.subr.mxu0 0.0
      %1078 = vmatpush1.msra.mxu0 %v1031
      %1079 = vmatprep.subr.mxu0 0.0
      %1080 = vmatpush2.msra.mxu0 0.0
      %1081 = vmatprep.subr.mxu0 0.0
      %1082 = vmatpush2.msra.mxu0 0.0
      %1083 = vmatprep.subr.mxu0 0.0
      %1084 = vmatpush2.msra.mxu0 0.0
      %1085 = vmatprep.subr.mxu0 0.0
      %1086 = vmatpush2.msra.mxu0 0.0
      %1087 = vmatprep.subr.mxu0 0.0
      %1088 = vmatpush2.msra.mxu0 0.0
      %1089 = vmatprep.subr.mxu0 0.0
      %1090 = vmatpush2.msra.mxu0 0.0
      %1091 = vmatprep.subr.mxu0 0.0
      %1092 = vmatpush2.msra.mxu0 0.0
      %1093 = vmatprep.subr.mxu0 0.0
      %1094 = vmatpush2.msra.mxu0 0.0
      %1095 = vmatprep.subr.mxu0 0.0
      %1096 = vmatpush2.msra.mxu0 0.0
      %1097 = vmatprep.subr.mxu0 0.0
      %1098 = vmatpush2.msra.mxu0 0.0
      %1099 = vmatprep.subr.mxu0 0.0
      %1100 = vmatpush2.msra.mxu0 0.0
      %1101 = vmatprep.subr.mxu0 0.0
      %1102 = vmatpush2.msra.mxu0 0.0
      %1103 = vmatprep.subr.mxu0 0.0
      %1104 = vmatpush2.msra.mxu0 0.0
      %1105 = vmatprep.subr.mxu0 0.0
      %1106 = vmatpush2.msra.mxu0 0.0
      %1107 = vmatprep.subr.mxu0 0.0
      %1108 = vmatpush2.msra.mxu0 0.0
      %1109 = vmatprep.subr.mxu0 0.0
      %1110 = vmatpush2.msra.mxu0 0.0
      %1111 = vmatprep.mubr.f32.mxu0 0.0
      %1112 = vmatmul.mubr.f32.gmra.mxu0 %v999
      %v1113 = vpop.f32.mrf.mxu0
      %v1114 = vadd.f32 %v1015, %v1113
      %v1115 = vpop.f32.mrf.mxu0
      %1116 = vmatprep.mubr.f32.mxu0 0.0
      %1117 = vmatmul.mubr.f32.gmra.mxu0 %v1000
      %v1118 = vpop.f32.mrf.mxu0
      %v1119 = vadd.f32 %v1016, %v1118
      %v1120 = vpop.f32.mrf.mxu0
      %1121 = vmatprep.mubr.f32.mxu0 0.0
      %1122 = vmatmul.mubr.f32.gmra.mxu0 %v1001
      %v1123 = vpop.f32.mrf.mxu0
      %v1124 = vadd.f32 %v1017, %v1123
      %v1125 = vpop.f32.mrf.mxu0
      %1126 = vmatprep.mubr.f32.mxu0 0.0
      %1127 = vmatmul.mubr.f32.gmra.mxu0 %v1002
      %v1128 = vpop.f32.mrf.mxu0
      %v1129 = vadd.f32 %v1018, %v1128
      %v1130 = vpop.f32.mrf.mxu0
      %1131 = vmatprep.mubr.f32.mxu0 0.0
      %1132 = vmatmul.mubr.f32.gmra.mxu0 %v1003
      %v1133 = vpop.f32.mrf.mxu0
      %v1134 = vadd.f32 %v1019, %v1133
      %v1135 = vpop.f32.mrf.mxu0
      %1136 = vmatprep.mubr.f32.mxu0 0.0
      %1137 = vmatmul.mubr.f32.gmra.mxu0 %v1004
      %v1138 = vpop.f32.mrf.mxu0
      %v1139 = vadd.f32 %v1020, %v1138
      %v1140 = vpop.f32.mrf.mxu0
      %1141 = vmatprep.mubr.f32.mxu0 0.0
      %1142 = vmatmul.mubr.f32.gmra.mxu0 %v1005
      %v1143 = vpop.f32.mrf.mxu0
      %v1144 = vadd.f32 %v1021, %v1143
      %v1145 = vpop.f32.mrf.mxu0
      %1146 = vmatprep.mubr.f32.mxu0 0.0
      %1147 = vmatmul.mubr.f32.gmra.mxu0 %v1006
      %v1148 = vpop.f32.mrf.mxu0
      %v1149 = vadd.f32 %v1022, %v1148
      %v1150 = vpop.f32.mrf.mxu0
      %1151 = vmatprep.mubr.f32.mxu0 0.0
      %1152 = vmatmul.mubr.f32.gmra.mxu0 %v1007
      %v1153 = vpop.f32.mrf.mxu0
      %v1154 = vadd.f32 %v1023, %v1153
      %v1155 = vpop.f32.mrf.mxu0
      %1156 = vmatprep.mubr.f32.mxu0 0.0
      %1157 = vmatmul.mubr.f32.gmra.mxu0 %v1008
      %v1158 = vpop.f32.mrf.mxu0
      %v1159 = vadd.f32 %v1024, %v1158
      %v1160 = vpop.f32.mrf.mxu0
      %1161 = vmatprep.mubr.f32.mxu0 0.0
      %1162 = vmatmul.mubr.f32.gmra.mxu0 %v1009
      %v1163 = vpop.f32.mrf.mxu0
      %v1164 = vadd.f32 %v1025, %v1163
      %v1165 = vpop.f32.mrf.mxu0
      %1166 = vmatprep.mubr.f32.mxu0 0.0
      %1167 = vmatmul.mubr.f32.gmra.mxu0 %v1010
      %v1168 = vpop.f32.mrf.mxu0
      %v1169 = vadd.f32 %v1026, %v1168
      %v1170 = vpop.f32.mrf.mxu0
      %1171 = vmatprep.mubr.f32.mxu0 0.0
      %1172 = vmatmul.mubr.f32.gmra.mxu0 %v1011
      %v1173 = vpop.f32.mrf.mxu0
      %v1174 = vadd.f32 %v1027, %v1173
      %v1175 = vpop.f32.mrf.mxu0
      %1176 = vmatprep.mubr.f32.mxu0 0.0
      %1177 = vmatmul.mubr.f32.gmra.mxu0 %v1012
      %v1178 = vpop.f32.mrf.mxu0
      %v1179 = vadd.f32 %v1028, %v1178
      %v1180 = vpop.f32.mrf.mxu0
      %1181 = vmatprep.mubr.f32.mxu0 0.0
      %1182 = vmatmul.mubr.f32.gmra.mxu0 %v1013
      %v1183 = vpop.f32.mrf.mxu0
      %v1184 = vadd.f32 %v1029, %v1183
      %v1185 = vpop.f32.mrf.mxu0
      %1186 = vmatprep.mubr.f32.mxu0 0.0
      %1187 = vmatmul.mubr.f32.gmra.mxu0 %v1014
      %v1188 = vpop.f32.mrf.mxu0
      %v1189 = vadd.f32 %v1030, %v1188
      %v1190 = vpop.f32.mrf.mxu0
      %1191 = vdwg.mxu0
      %v1192 = vadd.f32 %v1114, %v1119
      %v1193 = vadd.f32 %v1192, %v1124
      %v1194 = vadd.f32 %v1193, %v1129
      %v1195 = vadd.f32 %v1194, %v1134
      %v1196 = vadd.f32 %v1195, %v1139
      %v1197 = vadd.f32 %v1196, %v1144
      %v1198 = vadd.f32 %v1197, %v1149
      %v1199 = vadd.f32 %v1198, %v1154
      %v1200 = vadd.f32 %v1199, %v1159
      %v1201 = vadd.f32 %v1200, %v1164
      %v1202 = vadd.f32 %v1201, %v1169
      %v1203 = vadd.f32 %v1202, %v1174
      %v1204 = vadd.f32 %v1203, %v1179
      %v1205 = vadd.f32 %v1204, %v1184
      %v1206 = vadd.f32 %v1205, %v1189
      %v1207 = vrot.slane %v1206, 4
      %v1208 = vadd.f32 %v1206, %v1207
      %v1209 = vrot.slane %v1208, 2
      %v1210 = vadd.f32 %v1208, %v1209
      %v1211 = vrot.slane %v1210, 1
      %v1212 = vadd.f32 %v1210, %v1211
      %v1213 = vrcp.pop 128.0
      %v1214 = vmul.f32 %v1212, %v1213
      %v1215 = vmax.f32 %v1114, %v1134
      %v1216 = vmax.f32 %v1119, %v1139
      %v1217 = vmax.f32 %v1124, %v1144
      %v1218 = vmax.f32 %v1129, %v1149
      %v1219 = vmax.f32 %v1215, %v1154
      %v1220 = vmax.f32 %v1216, %v1159
      %v1221 = vmax.f32 %v1217, %v1164
      %v1222 = vmax.f32 %v1218, %v1169
      %v1223 = vmax.f32 %v1219, %v1174
      %v1224 = vmax.f32 %v1220, %v1179
      %v1225 = vmax.f32 %v1221, %v1184
      %v1226 = vmax.f32 %v1222, %v1189
      %v1227 = vmax.f32 %v1223, %v1224
      %v1228 = vmax.f32 %v1225, %v1226
      %v1229 = vmax.f32 %v1227, %v1228
      %v1230 = vrot.slane %v1229, 4
      %v1231 = vmax.f32 %v1229, %v1230
      %v1232 = vrot.slane %v1231, 2
      %v1233 = vmax.f32 %v1231, %v1232
      %v1234 = vrot.slane %v1233, 1
      %v1235 = vmax.f32 %v1233, %v1234
      %vm1236 = vcmask 1040384
      %v1237 = vsel %vm1236, %v1214, %v1235
      %v1238 = vld [vmem:[%s3] sm:$0xff]
      %v1239 = vld [vmem:[%s3 + $0x8] sm:$0xff]
      %v1240 = vld [vmem:[%s3 + $0x10] sm:$0xff]
      %v1241 = vld [vmem:[%s3 + $0x18] sm:$0xff]
      %v1242 = vld [vmem:[%s3 + $0x20] sm:$0xff]
      %v1243 = vld [vmem:[%s3 + $0x28] sm:$0xff]
      %v1244 = vld [vmem:[%s3 + $0x30] sm:$0xff]
      %v1245 = vld [vmem:[%s3 + $0x38] sm:$0xff]
      %v1246 = vld [vmem:[%s3 + $0x40] sm:$0xff]
      %v1247 = vld [vmem:[%s3 + $0x48] sm:$0xff]
      %v1248 = vld [vmem:[%s3 + $0x50] sm:$0xff]
      %v1249 = vld [vmem:[%s3 + $0x58] sm:$0xff]
      %v1250 = vld [vmem:[%s3 + $0x60] sm:$0xff]
      %v1251 = vld [vmem:[%s3 + $0x68] sm:$0xff]
      %v1252 = vld [vmem:[%s3 + $0x70] sm:$0xff]
      %v1253 = vld [vmem:[%s3 + $0x78] sm:$0xff]
      %1254 = vmatprep.subr.mxu0 0.0
      %1255 = vmatpush1.msra.mxu0 %v1253
      %1256 = vmatprep.subr.mxu0 0.0
      %1257 = vmatpush1.msra.mxu0 %v1252
      %1258 = vmatprep.subr.mxu0 0.0
      %1259 = vmatpush1.msra.mxu0 %v1251
      %1260 = vmatprep.subr.mxu0 0.0
      %1261 = vmatpush1.msra.mxu0 %v1250
      %1262 = vmatprep.subr.mxu0 0.0
      %1263 = vmatpush1.msra.mxu0 %v1249
      %1264 = vmatprep.subr.mxu0 0.0
      %1265 = vmatpush1.msra.mxu0 %v1248
      %1266 = vmatprep.subr.mxu0 0.0
      %1267 = vmatpush1.msra.mxu0 %v1247
      %1268 = vmatprep.subr.mxu0 0.0
      %1269 = vmatpush1.msra.mxu0 %v1246
      %1270 = vmatprep.subr.mxu0 0.0
      %1271 = vmatpush1.msra.mxu0 %v1245
      %1272 = vmatprep.subr.mxu0 0.0
      %1273 = vmatpush1.msra.mxu0 %v1244
      %1274 = vmatprep.subr.mxu0 0.0
      %1275 = vmatpush1.msra.mxu0 %v1243
      %1276 = vmatprep.subr.mxu0 0.0
      %1277 = vmatpush1.msra.mxu0 %v1242
      %1278 = vmatprep.subr.mxu0 0.0
      %1279 = vmatpush1.msra.mxu0 %v1241
      %1280 = vmatprep.subr.mxu0 0.0
      %1281 = vmatpush1.msra.mxu0 %v1240
      %1282 = vmatprep.subr.mxu0 0.0
      %1283 = vmatpush1.msra.mxu0 %v1239
      %1284 = vmatprep.subr.mxu0 0.0
      %1285 = vmatpush1.msra.mxu0 %v1238
      %1286 = vmatprep.subr.mxu0 0.0
      %1287 = vmatpush2.msra.mxu0 0.0
      %1288 = vmatprep.subr.mxu0 0.0
      %1289 = vmatpush2.msra.mxu0 0.0
      %1290 = vmatprep.subr.mxu0 0.0
      %1291 = vmatpush2.msra.mxu0 0.0
      %1292 = vmatprep.subr.mxu0 0.0
      %1293 = vmatpush2.msra.mxu0 0.0
      %1294 = vmatprep.subr.mxu0 0.0
      %1295 = vmatpush2.msra.mxu0 0.0
      %1296 = vmatprep.subr.mxu0 0.0
      %1297 = vmatpush2.msra.mxu0 0.0
      %1298 = vmatprep.subr.mxu0 0.0
      %1299 = vmatpush2.msra.mxu0 0.0
      %1300 = vmatprep.subr.mxu0 0.0
      %1301 = vmatpush2.msra.mxu0 0.0
      %1302 = vmatprep.subr.mxu0 0.0
      %1303 = vmatpush2.msra.mxu0 0.0
      %1304 = vmatprep.subr.mxu0 0.0
      %1305 = vmatpush2.msra.mxu0 0.0
      %1306 = vmatprep.subr.mxu0 0.0
      %1307 = vmatpush2.msra.mxu0 0.0
      %1308 = vmatprep.subr.mxu0 0.0
      %1309 = vmatpush2.msra.mxu0 0.0
      %1310 = vmatprep.subr.mxu0 0.0
      %1311 = vmatpush2.msra.mxu0 0.0
      %1312 = vmatprep.subr.mxu0 0.0
      %1313 = vmatpush2.msra.mxu0 0.0
      %1314 = vmatprep.subr.mxu0 0.0
      %1315 = vmatpush2.msra.mxu0 0.0
      %1316 = vmatprep.subr.mxu0 0.0
      %1317 = vmatpush2.msra.mxu0 0.0
      %1318 = vmatprep.mubr.f32.mxu0 0.0
      %1319 = vmatmul.mubr.f32.gmra.mxu0 %v1237
      %v1320 = vpop.f32.mrf.mxu0
      %v1321 = vadd.f32 0.0, %v1320
      %v1322 = vpop.f32.mrf.mxu0
      %1323 = vdwg.mxu0
      %v1324 = vmax.f32 %v1321, 0.0
      %v1325 = vld [vmem:[%s4] sm:$0xff]
      %v1326 = vld [vmem:[%s4 + $0x8] sm:$0xff]
      %v1327 = vld [vmem:[%s4 + $0x10] sm:$0xff]
      %v1328 = vld [vmem:[%s4 + $0x18] sm:$0xff]
      %v1329 = vld [vmem:[%s4 + $0x20] sm:$0xff]
      %v1330 = vld [vmem:[%s4 + $0x28] sm:$0xff]
      %v1331 = vld [vmem:[%s4 + $0x30] sm:$0xff]
      %v1332 = vld [vmem:[%s4 + $0x38] sm:$0xff]
      %vm1333 = vcmask 523264
      %v1335 = vsel %vm1333, %v1324, 0
      %1337 = vmatprep.subr.mxu0 0.0
      %1338 = vmatpush1.msra.mxu0 0.0
      %1339 = vmatprep.subr.mxu0 0.0
      %1340 = vmatpush1.msra.mxu0 0.0
      %1341 = vmatprep.subr.mxu0 0.0
      %1342 = vmatpush1.msra.mxu0 0.0
      %1343 = vmatprep.subr.mxu0 0.0
      %1344 = vmatpush1.msra.mxu0 0.0
      %1345 = vmatprep.subr.mxu0 0.0
      %1346 = vmatpush1.msra.mxu0 0.0
      %1347 = vmatprep.subr.mxu0 0.0
      %1348 = vmatpush1.msra.mxu0 0.0
      %1349 = vmatprep.subr.mxu0 0.0
      %1350 = vmatpush1.msra.mxu0 0.0
      %1351 = vmatprep.subr.mxu0 0.0
      %1352 = vmatpush1.msra.mxu0 0.0
      %1353 = vmatprep.subr.mxu0 0.0
      %1354 = vmatpush1.msra.mxu0 %v1332
      %1355 = vmatprep.subr.mxu0 0.0
      %1356 = vmatpush1.msra.mxu0 %v1331
      %1357 = vmatprep.subr.mxu0 0.0
      %1358 = vmatpush1.msra.mxu0 %v1330
      %1359 = vmatprep.subr.mxu0 0.0
      %1360 = vmatpush1.msra.mxu0 %v1329
      %1361 = vmatprep.subr.mxu0 0.0
      %1362 = vmatpush1.msra.mxu0 %v1328
      %1363 = vmatprep.subr.mxu0 0.0
      %1364 = vmatpush1.msra.mxu0 %v1327
      %1365 = vmatprep.subr.mxu0 0.0
      %1366 = vmatpush1.msra.mxu0 %v1326
      %1367 = vmatprep.subr.mxu0 0.0
      %1368 = vmatpush1.msra.mxu0 %v1325
      %1369 = vmatprep.subr.mxu0 0.0
      %1370 = vmatpush2.msra.mxu0 0.0
      %1371 = vmatprep.subr.mxu0 0.0
      %1372 = vmatpush2.msra.mxu0 0.0
      %1373 = vmatprep.subr.mxu0 0.0
      %1374 = vmatpush2.msra.mxu0 0.0
      %1375 = vmatprep.subr.mxu0 0.0
      %1376 = vmatpush2.msra.mxu0 0.0
      %1377 = vmatprep.subr.mxu0 0.0
      %1378 = vmatpush2.msra.mxu0 0.0
      %1379 = vmatprep.subr.mxu0 0.0
      %1380 = vmatpush2.msra.mxu0 0.0
      %1381 = vmatprep.subr.mxu0 0.0
      %1382 = vmatpush2.msra.mxu0 0.0
      %1383 = vmatprep.subr.mxu0 0.0
      %1384 = vmatpush2.msra.mxu0 0.0
      %1385 = vmatprep.subr.mxu0 0.0
      %1386 = vmatpush2.msra.mxu0 0.0
      %1387 = vmatprep.subr.mxu0 0.0
      %1388 = vmatpush2.msra.mxu0 0.0
      %1389 = vmatprep.subr.mxu0 0.0
      %1390 = vmatpush2.msra.mxu0 0.0
      %1391 = vmatprep.subr.mxu0 0.0
      %1392 = vmatpush2.msra.mxu0 0.0
      %1393 = vmatprep.subr.mxu0 0.0
      %1394 = vmatpush2.msra.mxu0 0.0
      %1395 = vmatprep.subr.mxu0 0.0
      %1396 = vmatpush2.msra.mxu0 0.0
      %1397 = vmatprep.subr.mxu0 0.0
      %1398 = vmatpush2.msra.mxu0 0.0
      %1399 = vmatprep.subr.mxu0 0.0
      %1400 = vmatpush2.msra.mxu0 0.0
      %1401 = vmatprep.mubr.f32.mxu0 0.0
      %1402 = vmatmul.mubr.f32.gmra.mxu0 %v1335
      %v1403 = vpop.f32.mrf.mxu0
      %v1404 = vadd.f32 0.0, %v1403
      %v1405 = vpop.f32.mrf.mxu0
      %1406 = vdwg.mxu0
      %v1408 = vrot.slane %v1404, 1
      %v1410 = vadd.f32 %v1404, %v1408
      %v1411 = vsub.f32 0.0, %v1410
      %v1412 = vmul.f32 %v1411, 1.442695
      %v1413 = vpow.pop %v1412
      %v1414 = vadd.f32 %v1413, 1.0
      %v1415 = vrcp.pop %v1414
      %v1416 = vmul.f32 1.0, %v1415
      %v1417 = vld [vmem:[%s5] sm:$0x1]
      %v1418 = vlaneseq
      %v1419 = vand.u32 %v1418, 127
      %vm1420 = vcmask 122880
      %v1421 = vsel %vm1420, %v1416, 0.0
      %1422 = vadd.xlane.f32.xlu0 %v1421
      %v1423 = vpop.xlane.xlu0 %1422
      %v1424 = vrot.slane %v1423, 4
      %v1425 = vadd.f32 %v1423, %v1424
      %v1426 = vrot.slane %v1425, 2
      %v1427 = vadd.f32 %v1425, %v1426
      %v1428 = vrot.slane %v1427, 1
      %v1429 = vadd.f32 %v1427, %v1428
      %s1430 = vtos %v1429
      %v1431 = vstv %s1430
      %v1432 = vrcp.pop 16.0
      %v1433 = vmul.f32 %v1431, %v1432
      %v1434 = vmul.f32 %v1433, %v1417
      %v1435 = vsel %vm1420, %v1416, -inf
      %1436 = vmax.xlane.f32.xlu0 %v1435
      %v1437 = vpop.xlane.xlu0 %1436
      %v1438 = vrot.slane %v1437, 4
      %v1439 = vmax.f32 %v1437, %v1438
      %v1440 = vrot.slane %v1439, 2
      %v1441 = vmax.f32 %v1439, %v1440
      %v1442 = vrot.slane %v1441, 1
      %v1443 = vmax.f32 %v1441, %v1442
      %s1444 = vtos %v1443
      %v1445 = vstv %s1444
      %v1446 = vmul.f32 %v1445, %v1417
      %1448 = vrot.lane.b32.xlu0 %v1446, 127
      %v1449 = vpop.permute.xlu0 %1448
      %v1451 = vadd.f32 %v1434, %v1449
      %v1452 = vsub.f32 0.0, %v1451
      %v1453 = vmul.f32 %v1452, 1.442695
      %v1454 = vpow.pop %v1453
      %v1455 = vadd.f32 %v1454, 1.0
      %v1456 = vrcp.pop %v1455
      %v1457 = vmul.f32 1.0, %v1456
      %vm1458 = vcmp.ge.s32.totalorder %v1419, 0
      %vm1459 = vcmp.lt.s32.totalorder %v1419, 16
      %vm1460 = vmand %vm1458, %vm1459
      %1462 = vset.pattern.permute.xlu0 0
      %1463 = vperm.xlu0 %1462, %v1457
      %v1464 = vpop.permute.xlu0 %1463
      %v1466 = vlaneseq
      %v1467 = vshrl.u32 %v1466, 7
      %v1468 = vsub.s32 0, %v1467
      %v1469 = vrot.slane %v1464, %v1468
      %v1470 = vsel %vm1460, %v1469, 0.0
      %v1471 = vadd.f32 %v1470, 0.0
      %1473 = vrot.lane.b32.xlu0 %v1416, 112
      %v1474 = vpop.permute.xlu0 %1473
      %v1476 = vsel %vm1420, %v1474, 0.0
      %1477 = vadd.xlane.f32.xlu0 %v1476
      %v1478 = vpop.xlane.xlu0 %1477
      %v1479 = vrot.slane %v1478, 4
      %v1480 = vadd.f32 %v1478, %v1479
      %v1481 = vrot.slane %v1480, 2
      %v1482 = vadd.f32 %v1480, %v1481
      %v1483 = vrot.slane %v1482, 1
      %v1484 = vadd.f32 %v1482, %v1483
      %s1485 = vtos %v1484
      %v1486 = vstv %s1485
      %v1487 = vmul.f32 %v1486, %v1432
      %v1488 = vmul.f32 %v1487, %v1417
      %vm1489 = vcmask 254080
      %v1490 = vsel %vm1489, %v1416, -inf
      %1491 = vmax.xlane.f32.xlu0 %v1490
      %v1492 = vpop.xlane.xlu0 %1491
      %v1493 = vrot.slane %v1492, 4
      %v1494 = vmax.f32 %v1492, %v1493
      %v1495 = vrot.slane %v1494, 2
      %v1496 = vmax.f32 %v1494, %v1495
      %v1497 = vrot.slane %v1496, 1
      %v1498 = vmax.f32 %v1496, %v1497
      %s1499 = vtos %v1498
      %v1500 = vstv %s1499
      %v1501 = vmul.f32 %v1500, %v1417
      %1503 = vrot.lane.b32.xlu0 %v1501, 127
      %v1504 = vpop.permute.xlu0 %1503
      %v1506 = vadd.f32 %v1488, %v1504
      %v1507 = vsub.f32 0.0, %v1506
      %v1508 = vmul.f32 %v1507, 1.442695
      %v1509 = vpow.pop %v1508
      %v1510 = vadd.f32 %v1509, 1.0
      %v1511 = vrcp.pop %v1510
      %v1512 = vmul.f32 1.0, %v1511
      %vm1513 = vcmp.ge.s32.totalorder %v1419, 16
      %vm1514 = vcmp.lt.s32.totalorder %v1419, 32
      %vm1515 = vmand %vm1513, %vm1514
      %1517 = vset.pattern.permute.xlu0 0
      %1518 = vperm.xlu0 %1517, %v1512
      %v1519 = vpop.permute.xlu0 %1518
      %v1521 = vlaneseq
      %v1522 = vshrl.u32 %v1521, 7
      %v1523 = vsub.s32 0, %v1522
      %v1524 = vrot.slane %v1519, %v1523
      %v1525 = vsel %vm1515, %v1524, 0.0
      %v1526 = vadd.f32 %v1471, %v1525
      %1527 = vrot.lane.b32.xlu0 %v1416, 96
      %v1528 = vpop.permute.xlu0 %1527
      %v1530 = vsel %vm1420, %v1528, 0.0
      %1531 = vadd.xlane.f32.xlu0 %v1530
      %v1532 = vpop.xlane.xlu0 %1531
      %v1533 = vrot.slane %v1532, 4
      %v1534 = vadd.f32 %v1532, %v1533
      %v1535 = vrot.slane %v1534, 2
      %v1536 = vadd.f32 %v1534, %v1535
      %v1537 = vrot.slane %v1536, 1
      %v1538 = vadd.f32 %v1536, %v1537
      %s1539 = vtos %v1538
      %v1540 = vstv %s1539
      %v1541 = vmul.f32 %v1540, %v1432
      %v1542 = vmul.f32 %v1541, %v1417
      %vm1543 = vcmask 385280
      %v1544 = vsel %vm1543, %v1416, -inf
      %1545 = vmax.xlane.f32.xlu0 %v1544
      %v1546 = vpop.xlane.xlu0 %1545
      %v1547 = vrot.slane %v1546, 4
      %v1548 = vmax.f32 %v1546, %v1547
      %v1549 = vrot.slane %v1548, 2
      %v1550 = vmax.f32 %v1548, %v1549
      %v1551 = vrot.slane %v1550, 1
      %v1552 = vmax.f32 %v1550, %v1551
      %s1553 = vtos %v1552
      %v1554 = vstv %s1553
      %v1555 = vmul.f32 %v1554, %v1417
      %1557 = vrot.lane.b32.xlu0 %v1555, 127
      %v1558 = vpop.permute.xlu0 %1557
      %v1560 = vadd.f32 %v1542, %v1558
      %v1561 = vsub.f32 0.0, %v1560
      %v1562 = vmul.f32 %v1561, 1.442695
      %v1563 = vpow.pop %v1562
      %v1564 = vadd.f32 %v1563, 1.0
      %v1565 = vrcp.pop %v1564
      %v1566 = vmul.f32 1.0, %v1565
      %vm1567 = vcmp.ge.s32.totalorder %v1419, 32
      %vm1568 = vcmp.lt.s32.totalorder %v1419, 48
      %vm1569 = vmand %vm1567, %vm1568
      %1571 = vset.pattern.permute.xlu0 0
      %1572 = vperm.xlu0 %1571, %v1566
      %v1573 = vpop.permute.xlu0 %1572
      %v1575 = vlaneseq
      %v1576 = vshrl.u32 %v1575, 7
      %v1577 = vsub.s32 0, %v1576
      %v1578 = vrot.slane %v1573, %v1577
      %v1579 = vsel %vm1569, %v1578, 0.0
      %v1580 = vadd.f32 %v1526, %v1579
      %1581 = vrot.lane.b32.xlu0 %v1416, 80
      %v1582 = vpop.permute.xlu0 %1581
      %v1584 = vsel %vm1420, %v1582, 0.0
      %1585 = vadd.xlane.f32.xlu0 %v1584
      %v1586 = vpop.xlane.xlu0 %1585
      %v1587 = vrot.slane %v1586, 4
      %v1588 = vadd.f32 %v1586, %v1587
      %v1589 = vrot.slane %v1588, 2
      %v1590 = vadd.f32 %v1588, %v1589
      %v1591 = vrot.slane %v1590, 1
      %v1592 = vadd.f32 %v1590, %v1591
      %s1593 = vtos %v1592
      %v1594 = vstv %s1593
      %v1595 = vmul.f32 %v1594, %v1432
      %v1596 = vmul.f32 %v1595, %v1417
      %vm1597 = vcmask 516480
      %v1598 = vsel %vm1597, %v1416, -inf
      %1599 = vmax.xlane.f32.xlu0 %v1598
      %v1600 = vpop.xlane.xlu0 %1599
      %v1601 = vrot.slane %v1600, 4
      %v1602 = vmax.f32 %v1600, %v1601
      %v1603 = vrot.slane %v1602, 2
      %v1604 = vmax.f32 %v1602, %v1603
      %v1605 = vrot.slane %v1604, 1
      %v1606 = vmax.f32 %v1604, %v1605
      %s1607 = vtos %v1606
      %v1608 = vstv %s1607
      %v1609 = vmul.f32 %v1608, %v1417
      %1611 = vrot.lane.b32.xlu0 %v1609, 127
      %v1612 = vpop.permute.xlu0 %1611
      %v1614 = vadd.f32 %v1596, %v1612
      %v1615 = vsub.f32 0.0, %v1614
      %v1616 = vmul.f32 %v1615, 1.442695
      %v1617 = vpow.pop %v1616
      %v1618 = vadd.f32 %v1617, 1.0
      %v1619 = vrcp.pop %v1618
      %v1620 = vmul.f32 1.0, %v1619
      %vm1621 = vcmp.ge.s32.totalorder %v1419, 48
      %vm1622 = vcmp.lt.s32.totalorder %v1419, 64
      %vm1623 = vmand %vm1621, %vm1622
      %1625 = vset.pattern.permute.xlu0 0
      %1626 = vperm.xlu0 %1625, %v1620
      %v1627 = vpop.permute.xlu0 %1626
      %v1629 = vlaneseq
      %v1630 = vshrl.u32 %v1629, 7
      %v1631 = vsub.s32 0, %v1630
      %v1632 = vrot.slane %v1627, %v1631
      %v1633 = vsel %vm1623, %v1632, 0.0
      %v1634 = vadd.f32 %v1580, %v1633
      %1635 = vrot.lane.b32.xlu0 %v1416, 64
      %v1636 = vpop.permute.xlu0 %1635
      %v1638 = vsel %vm1420, %v1636, 0.0
      %1639 = vadd.xlane.f32.xlu0 %v1638
      %v1640 = vpop.xlane.xlu0 %1639
      %v1641 = vrot.slane %v1640, 4
      %v1642 = vadd.f32 %v1640, %v1641
      %v1643 = vrot.slane %v1642, 2
      %v1644 = vadd.f32 %v1642, %v1643
      %v1645 = vrot.slane %v1644, 1
      %v1646 = vadd.f32 %v1644, %v1645
      %s1647 = vtos %v1646
      %v1648 = vstv %s1647
      %v1649 = vmul.f32 %v1648, %v1432
      %v1650 = vmul.f32 %v1649, %v1417
      %vm1651 = vcmask 647680
      %v1652 = vsel %vm1651, %v1416, -inf
      %1653 = vmax.xlane.f32.xlu0 %v1652
      %v1654 = vpop.xlane.xlu0 %1653
      %v1655 = vrot.slane %v1654, 4
      %v1656 = vmax.f32 %v1654, %v1655
      %v1657 = vrot.slane %v1656, 2
      %v1658 = vmax.f32 %v1656, %v1657
      %v1659 = vrot.slane %v1658, 1
      %v1660 = vmax.f32 %v1658, %v1659
      %s1661 = vtos %v1660
      %v1662 = vstv %s1661
      %v1663 = vmul.f32 %v1662, %v1417
      %1665 = vrot.lane.b32.xlu0 %v1663, 127
      %v1666 = vpop.permute.xlu0 %1665
      %v1668 = vadd.f32 %v1650, %v1666
      %v1669 = vsub.f32 0.0, %v1668
      %v1670 = vmul.f32 %v1669, 1.442695
      %v1671 = vpow.pop %v1670
      %v1672 = vadd.f32 %v1671, 1.0
      %v1673 = vrcp.pop %v1672
      %v1674 = vmul.f32 1.0, %v1673
      %vm1675 = vcmp.ge.s32.totalorder %v1419, 64
      %vm1676 = vcmp.lt.s32.totalorder %v1419, 80
      %vm1677 = vmand %vm1675, %vm1676
      %1679 = vset.pattern.permute.xlu0 0
      %1680 = vperm.xlu0 %1679, %v1674
      %v1681 = vpop.permute.xlu0 %1680
      %v1683 = vlaneseq
      %v1684 = vshrl.u32 %v1683, 7
      %v1685 = vsub.s32 0, %v1684
      %v1686 = vrot.slane %v1681, %v1685
      %v1687 = vsel %vm1677, %v1686, 0.0
      %v1688 = vadd.f32 %v1634, %v1687
      %1689 = vrot.lane.b32.xlu0 %v1416, 48
      %v1690 = vpop.permute.xlu0 %1689
      %v1692 = vsel %vm1420, %v1690, 0.0
      %1693 = vadd.xlane.f32.xlu0 %v1692
      %v1694 = vpop.xlane.xlu0 %1693
      %v1695 = vrot.slane %v1694, 4
      %v1696 = vadd.f32 %v1694, %v1695
      %v1697 = vrot.slane %v1696, 2
      %v1698 = vadd.f32 %v1696, %v1697
      %v1699 = vrot.slane %v1698, 1
      %v1700 = vadd.f32 %v1698, %v1699
      %s1701 = vtos %v1700
      %v1702 = vstv %s1701
      %v1703 = vmul.f32 %v1702, %v1432
      %v1704 = vmul.f32 %v1703, %v1417
      %vm1705 = vcmask 778880
      %v1706 = vsel %vm1705, %v1416, -inf
      %1707 = vmax.xlane.f32.xlu0 %v1706
      %v1708 = vpop.xlane.xlu0 %1707
      %v1709 = vrot.slane %v1708, 4
      %v1710 = vmax.f32 %v1708, %v1709
      %v1711 = vrot.slane %v1710, 2
      %v1712 = vmax.f32 %v1710, %v1711
      %v1713 = vrot.slane %v1712, 1
      %v1714 = vmax.f32 %v1712, %v1713
      %s1715 = vtos %v1714
      %v1716 = vstv %s1715
      %v1717 = vmul.f32 %v1716, %v1417
      %1719 = vrot.lane.b32.xlu0 %v1717, 127
      %v1720 = vpop.permute.xlu0 %1719
      %v1722 = vadd.f32 %v1704, %v1720
      %v1723 = vsub.f32 0.0, %v1722
      %v1724 = vmul.f32 %v1723, 1.442695
      %v1725 = vpow.pop %v1724
      %v1726 = vadd.f32 %v1725, 1.0
      %v1727 = vrcp.pop %v1726
      %v1728 = vmul.f32 1.0, %v1727
      %vm1729 = vcmp.ge.s32.totalorder %v1419, 80
      %vm1730 = vcmp.lt.s32.totalorder %v1419, 96
      %vm1731 = vmand %vm1729, %vm1730
      %1733 = vset.pattern.permute.xlu0 0
      %1734 = vperm.xlu0 %1733, %v1728
      %v1735 = vpop.permute.xlu0 %1734
      %v1737 = vlaneseq
      %v1738 = vshrl.u32 %v1737, 7
      %v1739 = vsub.s32 0, %v1738
      %v1740 = vrot.slane %v1735, %v1739
      %v1741 = vsel %vm1731, %v1740, 0.0
      %v1742 = vadd.f32 %v1688, %v1741
      %1743 = vrot.lane.b32.xlu0 %v1416, 32
      %v1744 = vpop.permute.xlu0 %1743
      %v1746 = vsel %vm1420, %v1744, 0.0
      %1747 = vadd.xlane.f32.xlu0 %v1746
      %v1748 = vpop.xlane.xlu0 %1747
      %v1749 = vrot.slane %v1748, 4
      %v1750 = vadd.f32 %v1748, %v1749
      %v1751 = vrot.slane %v1750, 2
      %v1752 = vadd.f32 %v1750, %v1751
      %v1753 = vrot.slane %v1752, 1
      %v1754 = vadd.f32 %v1752, %v1753
      %s1755 = vtos %v1754
      %v1756 = vstv %s1755
      %v1757 = vmul.f32 %v1756, %v1432
      %v1758 = vmul.f32 %v1757, %v1417
      %vm1759 = vcmask 910080
      %v1760 = vsel %vm1759, %v1416, -inf
      %1761 = vmax.xlane.f32.xlu0 %v1760
      %v1762 = vpop.xlane.xlu0 %1761
      %v1763 = vrot.slane %v1762, 4
      %v1764 = vmax.f32 %v1762, %v1763
      %v1765 = vrot.slane %v1764, 2
      %v1766 = vmax.f32 %v1764, %v1765
      %v1767 = vrot.slane %v1766, 1
      %v1768 = vmax.f32 %v1766, %v1767
      %s1769 = vtos %v1768
      %v1770 = vstv %s1769
      %v1771 = vmul.f32 %v1770, %v1417
      %1773 = vrot.lane.b32.xlu0 %v1771, 127
      %v1774 = vpop.permute.xlu0 %1773
      %v1776 = vadd.f32 %v1758, %v1774
      %v1777 = vsub.f32 0.0, %v1776
      %v1778 = vmul.f32 %v1777, 1.442695
      %v1779 = vpow.pop %v1778
      %v1780 = vadd.f32 %v1779, 1.0
      %v1781 = vrcp.pop %v1780
      %v1782 = vmul.f32 1.0, %v1781
      %vm1783 = vcmp.ge.s32.totalorder %v1419, 96
      %vm1784 = vcmp.lt.s32.totalorder %v1419, 112
      %vm1785 = vmand %vm1783, %vm1784
      %1787 = vset.pattern.permute.xlu0 0
      %1788 = vperm.xlu0 %1787, %v1782
      %v1789 = vpop.permute.xlu0 %1788
      %v1791 = vlaneseq
      %v1792 = vshrl.u32 %v1791, 7
      %v1793 = vsub.s32 0, %v1792
      %v1794 = vrot.slane %v1789, %v1793
      %v1795 = vsel %vm1785, %v1794, 0.0
      %v1796 = vadd.f32 %v1742, %v1795
      %1797 = vrot.lane.b32.xlu0 %v1416, 16
      %v1798 = vpop.permute.xlu0 %1797
      %v1800 = vsel %vm1420, %v1798, 0.0
      %1801 = vadd.xlane.f32.xlu0 %v1800
      %v1802 = vpop.xlane.xlu0 %1801
      %v1803 = vrot.slane %v1802, 4
      %v1804 = vadd.f32 %v1802, %v1803
      %v1805 = vrot.slane %v1804, 2
      %v1806 = vadd.f32 %v1804, %v1805
      %v1807 = vrot.slane %v1806, 1
      %v1808 = vadd.f32 %v1806, %v1807
      %s1809 = vtos %v1808
      %v1810 = vstv %s1809
      %v1811 = vmul.f32 %v1810, %v1432
      %v1812 = vmul.f32 %v1811, %v1417
      %vm1813 = vcmask 1041280
      %v1814 = vsel %vm1813, %v1416, -inf
      %1815 = vmax.xlane.f32.xlu0 %v1814
      %v1816 = vpop.xlane.xlu0 %1815
      %v1817 = vrot.slane %v1816, 4
      %v1818 = vmax.f32 %v1816, %v1817
      %v1819 = vrot.slane %v1818, 2
      %v1820 = vmax.f32 %v1818, %v1819
      %v1821 = vrot.slane %v1820, 1
      %v1822 = vmax.f32 %v1820, %v1821
      %s1823 = vtos %v1822
      %v1824 = vstv %s1823
      %v1825 = vmul.f32 %v1824, %v1417
      %1827 = vrot.lane.b32.xlu0 %v1825, 127
      %v1828 = vpop.permute.xlu0 %1827
      %v1830 = vadd.f32 %v1812, %v1828
      %v1831 = vsub.f32 0.0, %v1830
      %v1832 = vmul.f32 %v1831, 1.442695
      %v1833 = vpow.pop %v1832
      %v1834 = vadd.f32 %v1833, 1.0
      %v1835 = vrcp.pop %v1834
      %v1836 = vmul.f32 1.0, %v1835
      %vm1837 = vcmp.ge.s32.totalorder %v1419, 112
      %vm1838 = vcmp.lt.s32.totalorder %v1419, 128
      %vm1839 = vmand %vm1837, %vm1838
      %1841 = vset.pattern.permute.xlu0 0
      %1842 = vperm.xlu0 %1841, %v1836
      %v1843 = vpop.permute.xlu0 %1842
      %v1845 = vlaneseq
      %v1846 = vshrl.u32 %v1845, 7
      %v1847 = vsub.s32 0, %v1846
      %v1848 = vrot.slane %v1843, %v1847
      %v1849 = vsel %vm1839, %v1848, 0.0
      %v1850 = vadd.f32 %v1796, %v1849
      %v1851 = vadd.f32 %v1114, %v1850
      %v1852 = vadd.f32 %v1119, %v1850
      %v1853 = vadd.f32 %v1124, %v1850
      %v1854 = vadd.f32 %v1129, %v1850
      %v1855 = vadd.f32 %v1134, %v1850
      %v1856 = vadd.f32 %v1139, %v1850
      %v1857 = vadd.f32 %v1144, %v1850
      %v1858 = vadd.f32 %v1149, %v1850
      %v1859 = vadd.f32 %v1154, %v1850
      %v1860 = vadd.f32 %v1159, %v1850
      %v1861 = vadd.f32 %v1164, %v1850
      %v1862 = vadd.f32 %v1169, %v1850
      %v1863 = vadd.f32 %v1174, %v1850
      %v1864 = vadd.f32 %v1179, %v1850
      %v1865 = vadd.f32 %v1184, %v1850
      %v1866 = vadd.f32 %v1189, %v1850
      %v1867 = vld [vmem:[%s6] sm:$0xff]
      %v1868 = vld [vmem:[%s6 + $0x8] sm:$0xff]
      %v1869 = vld [vmem:[%s6 + $0x10] sm:$0xff]
      %v1870 = vld [vmem:[%s6 + $0x18] sm:$0xff]
      %v1871 = vld [vmem:[%s6 + $0x20] sm:$0xff]
      %v1872 = vld [vmem:[%s6 + $0x28] sm:$0xff]
      %v1873 = vld [vmem:[%s6 + $0x30] sm:$0xff]
      %v1874 = vld [vmem:[%s6 + $0x38] sm:$0xff]
      %v1875 = vld [vmem:[%s6 + $0x40] sm:$0xff]
      %v1876 = vld [vmem:[%s6 + $0x48] sm:$0xff]
      %v1877 = vld [vmem:[%s6 + $0x50] sm:$0xff]
      %v1878 = vld [vmem:[%s6 + $0x58] sm:$0xff]
      %v1879 = vld [vmem:[%s6 + $0x60] sm:$0xff]
      %v1880 = vld [vmem:[%s6 + $0x68] sm:$0xff]
      %v1881 = vld [vmem:[%s6 + $0x70] sm:$0xff]
      %v1882 = vld [vmem:[%s6 + $0x78] sm:$0xff]
      %v1883 = vld [vmem:[%s7] sm:$0xff]
      %v1884 = vld [vmem:[%s7 + $0x8] sm:$0xff]
      %v1885 = vld [vmem:[%s7 + $0x10] sm:$0xff]
      %v1886 = vld [vmem:[%s7 + $0x18] sm:$0xff]
      %v1887 = vld [vmem:[%s7 + $0x20] sm:$0xff]
      %v1888 = vld [vmem:[%s7 + $0x28] sm:$0xff]
      %v1889 = vld [vmem:[%s7 + $0x30] sm:$0xff]
      %v1890 = vld [vmem:[%s7 + $0x38] sm:$0xff]
      %v1891 = vld [vmem:[%s7 + $0x40] sm:$0xff]
      %v1892 = vld [vmem:[%s7 + $0x48] sm:$0xff]
      %v1893 = vld [vmem:[%s7 + $0x50] sm:$0xff]
      %v1894 = vld [vmem:[%s7 + $0x58] sm:$0xff]
      %v1895 = vld [vmem:[%s7 + $0x60] sm:$0xff]
      %v1896 = vld [vmem:[%s7 + $0x68] sm:$0xff]
      %v1897 = vld [vmem:[%s7 + $0x70] sm:$0xff]
      %v1898 = vld [vmem:[%s7 + $0x78] sm:$0xff]
      %1900 = vset.pattern.permute.xlu0 0
      %1901 = vperm.xlu0 %1900, %v1883
      %v1902 = vpop.permute.xlu0 %1901
      %1905 = vset.pattern.permute.xlu0 0
      %1906 = vperm.xlu0 %1905, %v1884
      %v1907 = vpop.permute.xlu0 %1906
      %1910 = vset.pattern.permute.xlu0 0
      %1911 = vperm.xlu0 %1910, %v1885
      %v1912 = vpop.permute.xlu0 %1911
      %1915 = vset.pattern.permute.xlu0 0
      %1916 = vperm.xlu0 %1915, %v1886
      %v1917 = vpop.permute.xlu0 %1916
      %1920 = vset.pattern.permute.xlu0 0
      %1921 = vperm.xlu0 %1920, %v1887
      %v1922 = vpop.permute.xlu0 %1921
      %1925 = vset.pattern.permute.xlu0 0
      %1926 = vperm.xlu0 %1925, %v1888
      %v1927 = vpop.permute.xlu0 %1926
      %1930 = vset.pattern.permute.xlu0 0
      %1931 = vperm.xlu0 %1930, %v1889
      %v1932 = vpop.permute.xlu0 %1931
      %1935 = vset.pattern.permute.xlu0 0
      %1936 = vperm.xlu0 %1935, %v1890
      %v1937 = vpop.permute.xlu0 %1936
      %1940 = vset.pattern.permute.xlu0 0
      %1941 = vperm.xlu0 %1940, %v1891
      %v1942 = vpop.permute.xlu0 %1941
      %1945 = vset.pattern.permute.xlu0 0
      %1946 = vperm.xlu0 %1945, %v1892
      %v1947 = vpop.permute.xlu0 %1946
      %1950 = vset.pattern.permute.xlu0 0
      %1951 = vperm.xlu0 %1950, %v1893
      %v1952 = vpop.permute.xlu0 %1951
      %1955 = vset.pattern.permute.xlu0 0
      %1956 = vperm.xlu0 %1955, %v1894
      %v1957 = vpop.permute.xlu0 %1956
      %1960 = vset.pattern.permute.xlu0 0
      %1961 = vperm.xlu0 %1960, %v1895
      %v1962 = vpop.permute.xlu0 %1961
      %1965 = vset.pattern.permute.xlu0 0
      %1966 = vperm.xlu0 %1965, %v1896
      %v1967 = vpop.permute.xlu0 %1966
      %1970 = vset.pattern.permute.xlu0 0
      %1971 = vperm.xlu0 %1970, %v1897
      %v1972 = vpop.permute.xlu0 %1971
      %1975 = vset.pattern.permute.xlu0 0
      %1976 = vperm.xlu0 %1975, %v1898
      %v1977 = vpop.permute.xlu0 %1976
      %1979 = vmatprep.subr.mxu0 0.0
      %1980 = vmatpush1.msra.mxu0 %v1866
      %1981 = vmatprep.subr.mxu0 0.0
      %1982 = vmatpush1.msra.mxu0 %v1865
      %1983 = vmatprep.subr.mxu0 0.0
      %1984 = vmatpush1.msra.mxu0 %v1864
      %1985 = vmatprep.subr.mxu0 0.0
      %1986 = vmatpush1.msra.mxu0 %v1863
      %1987 = vmatprep.subr.mxu0 0.0
      %1988 = vmatpush1.msra.mxu0 %v1862
      %1989 = vmatprep.subr.mxu0 0.0
      %1990 = vmatpush1.msra.mxu0 %v1861
      %1991 = vmatprep.subr.mxu0 0.0
      %1992 = vmatpush1.msra.mxu0 %v1860
      %1993 = vmatprep.subr.mxu0 0.0
      %1994 = vmatpush1.msra.mxu0 %v1859
      %1995 = vmatprep.subr.mxu0 0.0
      %1996 = vmatpush1.msra.mxu0 %v1858
      %1997 = vmatprep.subr.mxu0 0.0
      %1998 = vmatpush1.msra.mxu0 %v1857
      %1999 = vmatprep.subr.mxu0 0.0
      %2000 = vmatpush1.msra.mxu0 %v1856
      %2001 = vmatprep.subr.mxu0 0.0
      %2002 = vmatpush1.msra.mxu0 %v1855
      %2003 = vmatprep.subr.mxu0 0.0
      %2004 = vmatpush1.msra.mxu0 %v1854
      %2005 = vmatprep.subr.mxu0 0.0
      %2006 = vmatpush1.msra.mxu0 %v1853
      %2007 = vmatprep.subr.mxu0 0.0
      %2008 = vmatpush1.msra.mxu0 %v1852
      %2009 = vmatprep.subr.mxu0 0.0
      %2010 = vmatpush1.msra.mxu0 %v1851
      %2011 = vmatprep.subr.mxu0 0.0
      %2012 = vmatpush2.msra.mxu0 0.0
      %2013 = vmatprep.subr.mxu0 0.0
      %2014 = vmatpush2.msra.mxu0 0.0
      %2015 = vmatprep.subr.mxu0 0.0
      %2016 = vmatpush2.msra.mxu0 0.0
      %2017 = vmatprep.subr.mxu0 0.0
      %2018 = vmatpush2.msra.mxu0 0.0
      %2019 = vmatprep.subr.mxu0 0.0
      %2020 = vmatpush2.msra.mxu0 0.0
      %2021 = vmatprep.subr.mxu0 0.0
      %2022 = vmatpush2.msra.mxu0 0.0
      %2023 = vmatprep.subr.mxu0 0.0
      %2024 = vmatpush2.msra.mxu0 0.0
      %2025 = vmatprep.subr.mxu0 0.0
      %2026 = vmatpush2.msra.mxu0 0.0
      %2027 = vmatprep.subr.mxu0 0.0
      %2028 = vmatpush2.msra.mxu0 0.0
      %2029 = vmatprep.subr.mxu0 0.0
      %2030 = vmatpush2.msra.mxu0 0.0
      %2031 = vmatprep.subr.mxu0 0.0
      %2032 = vmatpush2.msra.mxu0 0.0
      %2033 = vmatprep.subr.mxu0 0.0
      %2034 = vmatpush2.msra.mxu0 0.0
      %2035 = vmatprep.subr.mxu0 0.0
      %2036 = vmatpush2.msra.mxu0 0.0
      %2037 = vmatprep.subr.mxu0 0.0
      %2038 = vmatpush2.msra.mxu0 0.0
      %2039 = vmatprep.subr.mxu0 0.0
      %2040 = vmatpush2.msra.mxu0 0.0
      %2041 = vmatprep.subr.mxu0 0.0
      %2042 = vmatpush2.msra.mxu0 0.0
      %2043 = vmatprep.mubr.f32.mxu0 0.0
      %2044 = vmatmul.mubr.f32.gmra.mxu0 %v1867
      %v2045 = vpop.f32.mrf.mxu0
      %v2046 = vadd.f32 %v1902, %v2045
      %v2047 = vpop.f32.mrf.mxu0
      %2048 = vmatprep.mubr.f32.mxu0 0.0
      %2049 = vmatmul.mubr.f32.gmra.mxu0 %v1868
      %v2050 = vpop.f32.mrf.mxu0
      %v2051 = vadd.f32 %v1907, %v2050
      %v2052 = vpop.f32.mrf.mxu0
      %2053 = vmatprep.mubr.f32.mxu0 0.0
      %2054 = vmatmul.mubr.f32.gmra.mxu0 %v1869
      %v2055 = vpop.f32.mrf.mxu0
      %v2056 = vadd.f32 %v1912, %v2055
      %v2057 = vpop.f32.mrf.mxu0
      %2058 = vmatprep.mubr.f32.mxu0 0.0
      %2059 = vmatmul.mubr.f32.gmra.mxu0 %v1870
      %v2060 = vpop.f32.mrf.mxu0
      %v2061 = vadd.f32 %v1917, %v2060
      %v2062 = vpop.f32.mrf.mxu0
      %2063 = vmatprep.mubr.f32.mxu0 0.0
      %2064 = vmatmul.mubr.f32.gmra.mxu0 %v1871
      %v2065 = vpop.f32.mrf.mxu0
      %v2066 = vadd.f32 %v1922, %v2065
      %v2067 = vpop.f32.mrf.mxu0
      %2068 = vmatprep.mubr.f32.mxu0 0.0
      %2069 = vmatmul.mubr.f32.gmra.mxu0 %v1872
      %v2070 = vpop.f32.mrf.mxu0
      %v2071 = vadd.f32 %v1927, %v2070
      %v2072 = vpop.f32.mrf.mxu0
      %2073 = vmatprep.mubr.f32.mxu0 0.0
      %2074 = vmatmul.mubr.f32.gmra.mxu0 %v1873
      %v2075 = vpop.f32.mrf.mxu0
      %v2076 = vadd.f32 %v1932, %v2075
      %v2077 = vpop.f32.mrf.mxu0
      %2078 = vmatprep.mubr.f32.mxu0 0.0
      %2079 = vmatmul.mubr.f32.gmra.mxu0 %v1874
      %v2080 = vpop.f32.mrf.mxu0
      %v2081 = vadd.f32 %v1937, %v2080
      %v2082 = vpop.f32.mrf.mxu0
      %2083 = vmatprep.mubr.f32.mxu0 0.0
      %2084 = vmatmul.mubr.f32.gmra.mxu0 %v1875
      %v2085 = vpop.f32.mrf.mxu0
      %v2086 = vadd.f32 %v1942, %v2085
      %v2087 = vpop.f32.mrf.mxu0
      %2088 = vmatprep.mubr.f32.mxu0 0.0
      %2089 = vmatmul.mubr.f32.gmra.mxu0 %v1876
      %v2090 = vpop.f32.mrf.mxu0
      %v2091 = vadd.f32 %v1947, %v2090
      %v2092 = vpop.f32.mrf.mxu0
      %2093 = vmatprep.mubr.f32.mxu0 0.0
      %2094 = vmatmul.mubr.f32.gmra.mxu0 %v1877
      %v2095 = vpop.f32.mrf.mxu0
      %v2096 = vadd.f32 %v1952, %v2095
      %v2097 = vpop.f32.mrf.mxu0
      %2098 = vmatprep.mubr.f32.mxu0 0.0
      %2099 = vmatmul.mubr.f32.gmra.mxu0 %v1878
      %v2100 = vpop.f32.mrf.mxu0
      %v2101 = vadd.f32 %v1957, %v2100
      %v2102 = vpop.f32.mrf.mxu0
      %2103 = vmatprep.mubr.f32.mxu0 0.0
      %2104 = vmatmul.mubr.f32.gmra.mxu0 %v1879
      %v2105 = vpop.f32.mrf.mxu0
      %v2106 = vadd.f32 %v1962, %v2105
      %v2107 = vpop.f32.mrf.mxu0
      %2108 = vmatprep.mubr.f32.mxu0 0.0
      %2109 = vmatmul.mubr.f32.gmra.mxu0 %v1880
      %v2110 = vpop.f32.mrf.mxu0
      %v2111 = vadd.f32 %v1967, %v2110
      %v2112 = vpop.f32.mrf.mxu0
      %2113 = vmatprep.mubr.f32.mxu0 0.0
      %2114 = vmatmul.mubr.f32.gmra.mxu0 %v1881
      %v2115 = vpop.f32.mrf.mxu0
      %v2116 = vadd.f32 %v1972, %v2115
      %v2117 = vpop.f32.mrf.mxu0
      %2118 = vmatprep.mubr.f32.mxu0 0.0
      %2119 = vmatmul.mubr.f32.gmra.mxu0 %v1882
      %v2120 = vpop.f32.mrf.mxu0
      %v2121 = vadd.f32 %v1977, %v2120
      %v2122 = vpop.f32.mrf.mxu0
      %2123 = vdwg.mxu0
      %v2124 = vmul.f32 %v2046, 0.5
      %v2125 = vmul.f32 %v2051, 0.5
      %v2126 = vmul.f32 %v2056, 0.5
      %v2127 = vmul.f32 %v2061, 0.5
      %v2128 = vmul.f32 %v2066, 0.5
      %v2129 = vmul.f32 %v2071, 0.5
      %v2130 = vmul.f32 %v2076, 0.5
      %v2131 = vmul.f32 %v2081, 0.5
      %v2132 = vmul.f32 %v2086, 0.5
      %v2133 = vmul.f32 %v2091, 0.5
      %v2134 = vmul.f32 %v2096, 0.5
      %v2135 = vmul.f32 %v2101, 0.5
      %v2136 = vmul.f32 %v2106, 0.5
      %v2137 = vmul.f32 %v2111, 0.5
      %v2138 = vmul.f32 %v2116, 0.5
      %v2139 = vmul.f32 %v2121, 0.5
      %v2140 = vmul.f32 %v2046, 0.70710677
      %v2141 = vmul.f32 %v2051, 0.70710677
      %v2142 = vmul.f32 %v2056, 0.70710677
      %v2143 = vmul.f32 %v2061, 0.70710677
      %v2144 = vmul.f32 %v2066, 0.70710677
      %v2145 = vmul.f32 %v2071, 0.70710677
      %v2146 = vmul.f32 %v2076, 0.70710677
      %v2147 = vmul.f32 %v2081, 0.70710677
      %v2148 = vmul.f32 %v2086, 0.70710677
      %v2149 = vmul.f32 %v2091, 0.70710677
      %v2150 = vmul.f32 %v2096, 0.70710677
      %v2151 = vmul.f32 %v2101, 0.70710677
      %v2152 = vmul.f32 %v2106, 0.70710677
      %v2153 = vmul.f32 %v2111, 0.70710677
      %v2154 = vmul.f32 %v2116, 0.70710677
      %v2155 = vmul.f32 %v2121, 0.70710677
      %v2156 = verf.f32.pop %v2140
      %v2157 = verf.f32.pop %v2141
      %v2158 = verf.f32.pop %v2142
      %v2159 = verf.f32.pop %v2143
      %v2160 = verf.f32.pop %v2144
      %v2161 = verf.f32.pop %v2145
      %v2162 = verf.f32.pop %v2146
      %v2163 = verf.f32.pop %v2147
      %v2164 = verf.f32.pop %v2148
      %v2165 = verf.f32.pop %v2149
      %v2166 = verf.f32.pop %v2150
      %v2167 = verf.f32.pop %v2151
      %v2168 = verf.f32.pop %v2152
      %v2169 = verf.f32.pop %v2153
      %v2170 = verf.f32.pop %v2154
      %v2171 = verf.f32.pop %v2155
      %v2172 = vadd.f32 %v2156, 1.0
      %v2173 = vadd.f32 %v2157, 1.0
      %v2174 = vadd.f32 %v2158, 1.0
      %v2175 = vadd.f32 %v2159, 1.0
      %v2176 = vadd.f32 %v2160, 1.0
      %v2177 = vadd.f32 %v2161, 1.0
      %v2178 = vadd.f32 %v2162, 1.0
      %v2179 = vadd.f32 %v2163, 1.0
      %v2180 = vadd.f32 %v2164, 1.0
      %v2181 = vadd.f32 %v2165, 1.0
      %v2182 = vadd.f32 %v2166, 1.0
      %v2183 = vadd.f32 %v2167, 1.0
      %v2184 = vadd.f32 %v2168, 1.0
      %v2185 = vadd.f32 %v2169, 1.0
      %v2186 = vadd.f32 %v2170, 1.0
      %v2187 = vadd.f32 %v2171, 1.0
      %v2188 = vmul.f32 %v2124, %v2172
      %v2189 = vmul.f32 %v2125, %v2173
      %v2190 = vmul.f32 %v2126, %v2174
      %v2191 = vmul.f32 %v2127, %v2175
      %v2192 = vmul.f32 %v2128, %v2176
      %v2193 = vmul.f32 %v2129, %v2177
      %v2194 = vmul.f32 %v2130, %v2178
      %v2195 = vmul.f32 %v2131, %v2179
      %v2196 = vmul.f32 %v2132, %v2180
      %v2197 = vmul.f32 %v2133, %v2181
      %v2198 = vmul.f32 %v2134, %v2182
      %v2199 = vmul.f32 %v2135, %v2183
      %v2200 = vmul.f32 %v2136, %v2184
      %v2201 = vmul.f32 %v2137, %v2185
      %v2202 = vmul.f32 %v2138, %v2186
      %v2203 = vmul.f32 %v2139, %v2187
      %2204 = vst [vmem:[#allocation3] sm:$0xff] 0.0
      %2205 = vst [vmem:[#allocation3 + $0x8] sm:$0xff] 0.0
      %2206 = vst [vmem:[#allocation3 + $0x10] sm:$0xf] 0.0
      %2207 = vst [vmem:[#allocation3 + $0x18] sm:$0xff] 0.0
      %2208 = vst [vmem:[#allocation3 + $0x20] sm:$0xff] 0.0
      %2209 = vst [vmem:[#allocation3 + $0x28] sm:$0xf] 0.0
      %s2210 = scalar_lea.vmem [#allocation3], 240
      %2211 = vst [vmem:[%s2210] sm:$0xff] 0.0
      %2212 = vst [vmem:[%s2210 + $0x8] sm:$0xff] 0.0
      %2213 = vst [vmem:[%s2210 + $0x10] sm:$0xf] 0.0
      %2214 = vst [vmem:[%s2210 + $0x18] sm:$0xff] 0.0
      %2215 = vst [vmem:[%s2210 + $0x20] sm:$0xff] 0.0
      %2216 = vst [vmem:[%s2210 + $0x28] sm:$0xf] 0.0
      %s2217 = scalar_lea.vmem [#allocation3], 48
      %2218 = vst [vmem:[%s2217] sm:$0x3] 0.0
      %2219 = vst [vmem:[%s2217 + $0x18] sm:$0x3] 0.0
      %2220 = vst [vmem:[%s2217 + $0x30] sm:$0x3] 0.0
      %2221 = vst [vmem:[%s2217 + $0x48] sm:$0x3] 0.0
      %2222 = vst [vmem:[%s2217 + $0x60] sm:$0x3] 0.0
      %2223 = vst [vmem:[%s2217 + $0x78] sm:$0x3] 0.0
      %2224 = vst [vmem:[%s2217 + $0x90] sm:$0x3] 0.0
      %2225 = vst [vmem:[%s2217 + $0xa8] sm:$0x3] 0.0
      %2226 = vst [vmem:[%s2217 + $0x12] sm:$0x3] 0.0
      %2227 = vst [vmem:[%s2217 + $0x2a] sm:$0x3] 0.0
      %2228 = vst [vmem:[%s2217 + $0x42] sm:$0x3] 0.0
      %2229 = vst [vmem:[%s2217 + $0x5a] sm:$0x3] 0.0
      %2230 = vst [vmem:[%s2217 + $0x72] sm:$0x3] 0.0
      %2231 = vst [vmem:[%s2217 + $0x8a] sm:$0x3] 0.0
      %2232 = vst [vmem:[%s2217 + $0xa2] sm:$0x3] 0.0
      %2233 = vst [vmem:[%s2217 + $0xba] sm:$0x3] 0.0
      %2234 = vst [vmem:[%s2217 + $0x2] sm:$0xff] %v2188
      %2235 = vst [vmem:[%s2217 + $0xa] sm:$0xff] %v2189
      %2236 = vst [vmem:[%s2217 + $0x1a] sm:$0xff] %v2190
      %2237 = vst [vmem:[%s2217 + $0x22] sm:$0xff] %v2191
      %2238 = vst [vmem:[%s2217 + $0x32] sm:$0xff] %v2192
      %2239 = vst [vmem:[%s2217 + $0x3a] sm:$0xff] %v2193
      %2240 = vst [vmem:[%s2217 + $0x4a] sm:$0xff] %v2194
      %2241 = vst [vmem:[%s2217 + $0x52] sm:$0xff] %v2195
      %2242 = vst [vmem:[%s2217 + $0x62] sm:$0xff] %v2196
      %2243 = vst [vmem:[%s2217 + $0x6a] sm:$0xff] %v2197
      %2244 = vst [vmem:[%s2217 + $0x7a] sm:$0xff] %v2198
      %2245 = vst [vmem:[%s2217 + $0x82] sm:$0xff] %v2199
      %2246 = vst [vmem:[%s2217 + $0x92] sm:$0xff] %v2200
      %2247 = vst [vmem:[%s2217 + $0x9a] sm:$0xff] %v2201
      %2248 = vst [vmem:[%s2217 + $0xaa] sm:$0xff] %v2202
      %2249 = vst [vmem:[%s2217 + $0xb2] sm:$0xff] %v2203
      %v2250 = vld [vmem:[%s8] sm:$0x3]
      %v2251 = vlaneseq
      %v2252 = vshrl.u32 %v2251, 7
      %v2253 = vsub.s32 0, %v2252
      %v2254 = vrot.slane %v2250, %v2253
      %v2255 = vmul.f32 %v2188, %v2254
      %v2256 = vmul.f32 %v2189, %v2254
      %v2257 = vmul.f32 %v2190, %v2254
      %v2258 = vmul.f32 %v2191, %v2254
      %v2259 = vmul.f32 %v2192, %v2254
      %v2260 = vmul.f32 %v2193, %v2254
      %v2261 = vmul.f32 %v2194, %v2254
      %v2262 = vmul.f32 %v2195, %v2254
      %v2263 = vmul.f32 %v2196, %v2254
      %v2264 = vmul.f32 %v2197, %v2254
      %v2265 = vmul.f32 %v2198, %v2254
      %v2266 = vmul.f32 %v2199, %v2254
      %v2267 = vmul.f32 %v2200, %v2254
      %v2268 = vmul.f32 %v2201, %v2254
      %v2269 = vmul.f32 %v2202, %v2254
      %v2270 = vmul.f32 %v2203, %v2254
      %v2271 = vlaneseq
      %v2272 = vshrl.u32 %v2271, 7
      %v2273 = vsub.s32 1, %v2272
      %v2274 = vrot.slane %v2250, %v2273
      %v2275 = vadd.f32 %v2255, %v2274
      %v2276 = vadd.f32 %v2256, %v2274
      %v2277 = vadd.f32 %v2257, %v2274
      %v2278 = vadd.f32 %v2258, %v2274
      %v2279 = vadd.f32 %v2259, %v2274
      %v2280 = vadd.f32 %v2260, %v2274
      %v2281 = vadd.f32 %v2261, %v2274
      %v2282 = vadd.f32 %v2262, %v2274
      %v2283 = vadd.f32 %v2263, %v2274
      %v2284 = vadd.f32 %v2264, %v2274
      %v2285 = vadd.f32 %v2265, %v2274
      %v2286 = vadd.f32 %v2266, %v2274
      %v2287 = vadd.f32 %v2267, %v2274
      %v2288 = vadd.f32 %v2268, %v2274
      %v2289 = vadd.f32 %v2269, %v2274
      %v2290 = vadd.f32 %v2270, %v2274
      %v2291 = vmax.f32 %v2275, 0.0
      %v2292 = vmax.f32 %v2276, 0.0
      %v2293 = vmax.f32 %v2277, 0.0
      %v2294 = vmax.f32 %v2278, 0.0
      %v2295 = vmax.f32 %v2279, 0.0
      %v2296 = vmax.f32 %v2280, 0.0
      %v2297 = vmax.f32 %v2281, 0.0
      %v2298 = vmax.f32 %v2282, 0.0
      %v2299 = vmax.f32 %v2283, 0.0
      %v2300 = vmax.f32 %v2284, 0.0
      %v2301 = vmax.f32 %v2285, 0.0
      %v2302 = vmax.f32 %v2286, 0.0
      %v2303 = vmax.f32 %v2287, 0.0
      %v2304 = vmax.f32 %v2288, 0.0
      %v2305 = vmax.f32 %v2289, 0.0
      %v2306 = vmax.f32 %v2290, 0.0
      %v2307 = vmin.f32 %v2291, 6.0
      %v2308 = vmin.f32 %v2292, 6.0
      %v2309 = vmin.f32 %v2293, 6.0
      %v2310 = vmin.f32 %v2294, 6.0
      %v2311 = vmin.f32 %v2295, 6.0
      %v2312 = vmin.f32 %v2296, 6.0
      %v2313 = vmin.f32 %v2297, 6.0
      %v2314 = vmin.f32 %v2298, 6.0
      %v2315 = vmin.f32 %v2299, 6.0
      %v2316 = vmin.f32 %v2300, 6.0
      %v2317 = vmin.f32 %v2301, 6.0
      %v2318 = vmin.f32 %v2302, 6.0
      %v2319 = vmin.f32 %v2303, 6.0
      %v2320 = vmin.f32 %v2304, 6.0
      %v2321 = vmin.f32 %v2305, 6.0
      %v2322 = vmin.f32 %v2306, 6.0
      %v2323 = vadd.f32 %v2188, %v2307
      %v2324 = vadd.f32 %v2189, %v2308
      %v2325 = vadd.f32 %v2190, %v2309
      %v2326 = vadd.f32 %v2191, %v2310
      %v2327 = vadd.f32 %v2192, %v2311
      %v2328 = vadd.f32 %v2193, %v2312
      %v2329 = vadd.f32 %v2194, %v2313
      %v2330 = vadd.f32 %v2195, %v2314
      %v2331 = vadd.f32 %v2196, %v2315
      %v2332 = vadd.f32 %v2197, %v2316
      %v2333 = vadd.f32 %v2198, %v2317
      %v2334 = vadd.f32 %v2199, %v2318
      %v2335 = vadd.f32 %v2200, %v2319
      %v2336 = vadd.f32 %v2201, %v2320
      %v2337 = vadd.f32 %v2202, %v2321
      %v2338 = vadd.f32 %v2203, %v2322
      %v2339 = vld [vmem:[%s9] sm:$0xff]
      %v2340 = vld [vmem:[%s9 + $0x8] sm:$0x3]
      %s2341 = scalar_lea.vmem [#allocation3], 24
      %v2342 = vld [vmem:[%s2341 + $0x1] sm:$0xff]
      %v2343 = vld [vmem:[%s2341 + $0x9] sm:$0xff]
      %v2344 = vld [vmem:[%s2341 + $0x19] sm:$0xff]
      %v2345 = vld [vmem:[%s2341 + $0x21] sm:$0xff]
      %v2346 = vld [vmem:[%s2341 + $0x31] sm:$0xff]
      %v2347 = vld [vmem:[%s2341 + $0x39] sm:$0xff]
      %v2348 = vld [vmem:[%s2341 + $0x49] sm:$0xff]
      %v2349 = vld [vmem:[%s2341 + $0x51] sm:$0xff]
      %v2350 = vld [vmem:[%s2341 + $0x61] sm:$0xff]
      %v2351 = vld [vmem:[%s2341 + $0x69] sm:$0xff]
      %v2352 = vld [vmem:[%s2341 + $0x79] sm:$0xff]
      %v2353 = vld [vmem:[%s2341 + $0x81] sm:$0xff]
      %v2354 = vld [vmem:[%s2341 + $0x91] sm:$0xff]
      %v2355 = vld [vmem:[%s2341 + $0x99] sm:$0xff]
      %v2356 = vld [vmem:[%s2341 + $0xa9] sm:$0xff]
      %v2357 = vld [vmem:[%s2341 + $0xb1] sm:$0xff]
      %v2358 = vlaneseq
      %v2359 = vshrl.u32 %v2358, 7
      %v2360 = vsub.s32 0, %v2359
      %v2361 = vrot.slane %v2339, %v2360
      %v2362 = vmul.f32 %v2342, %v2361
      %v2363 = vmul.f32 %v2343, %v2361
      %v2364 = vmul.f32 %v2344, %v2361
      %v2365 = vmul.f32 %v2345, %v2361
      %v2366 = vmul.f32 %v2346, %v2361
      %v2367 = vmul.f32 %v2347, %v2361
      %v2368 = vmul.f32 %v2348, %v2361
      %v2369 = vmul.f32 %v2349, %v2361
      %v2370 = vmul.f32 %v2350, %v2361
      %v2371 = vmul.f32 %v2351, %v2361
      %v2372 = vmul.f32 %v2352, %v2361
      %v2373 = vmul.f32 %v2353, %v2361
      %v2374 = vmul.f32 %v2354, %v2361
      %v2375 = vmul.f32 %v2355, %v2361
      %v2376 = vmul.f32 %v2356, %v2361
      %v2377 = vmul.f32 %v2357, %v2361
      %v2378 = vld [vmem:[%s2341 + $0x2] sm:$0xff]
      %v2379 = vld [vmem:[%s2341 + $0xa] sm:$0xff]
      %v2380 = vld [vmem:[%s2341 + $0x1a] sm:$0xff]
      %v2381 = vld [vmem:[%s2341 + $0x22] sm:$0xff]
      %v2382 = vld [vmem:[%s2341 + $0x32] sm:$0xff]
      %v2383 = vld [vmem:[%s2341 + $0x3a] sm:$0xff]
      %v2384 = vld [vmem:[%s2341 + $0x4a] sm:$0xff]
      %v2385 = vld [vmem:[%s2341 + $0x52] sm:$0xff]
      %v2386 = vld [vmem:[%s2341 + $0x62] sm:$0xff]
      %v2387 = vld [vmem:[%s2341 + $0x6a] sm:$0xff]
      %v2388 = vld [vmem:[%s2341 + $0x7a] sm:$0xff]
      %v2389 = vld [vmem:[%s2341 + $0x82] sm:$0xff]
      %v2390 = vld [vmem:[%s2341 + $0x92] sm:$0xff]
      %v2391 = vld [vmem:[%s2341 + $0x9a] sm:$0xff]
      %v2392 = vld [vmem:[%s2341 + $0xaa] sm:$0xff]
      %v2393 = vld [vmem:[%s2341 + $0xb2] sm:$0xff]
      %v2394 = vlaneseq
      %v2395 = vshrl.u32 %v2394, 7
      %v2396 = vsub.s32 1, %v2395
      %v2397 = vrot.slane %v2339, %v2396
      %v2398 = vmul.f32 %v2378, %v2397
      %v2399 = vmul.f32 %v2379, %v2397
      %v2400 = vmul.f32 %v2380, %v2397
      %v2401 = vmul.f32 %v2381, %v2397
      %v2402 = vmul.f32 %v2382, %v2397
      %v2403 = vmul.f32 %v2383, %v2397
      %v2404 = vmul.f32 %v2384, %v2397
      %v2405 = vmul.f32 %v2385, %v2397
      %v2406 = vmul.f32 %v2386, %v2397
      %v2407 = vmul.f32 %v2387, %v2397
      %v2408 = vmul.f32 %v2388, %v2397
      %v2409 = vmul.f32 %v2389, %v2397
      %v2410 = vmul.f32 %v2390, %v2397
      %v2411 = vmul.f32 %v2391, %v2397
      %v2412 = vmul.f32 %v2392, %v2397
      %v2413 = vmul.f32 %v2393, %v2397
      %v2414 = vadd.f32 %v2362, %v2398
      %v2415 = vadd.f32 %v2363, %v2399
      %v2416 = vadd.f32 %v2364, %v2400
      %v2417 = vadd.f32 %v2365, %v2401
      %v2418 = vadd.f32 %v2366, %v2402
      %v2419 = vadd.f32 %v2367, %v2403
      %v2420 = vadd.f32 %v2368, %v2404
      %v2421 = vadd.f32 %v2369, %v2405
      %v2422 = vadd.f32 %v2370, %v2406
      %v2423 = vadd.f32 %v2371, %v2407
      %v2424 = vadd.f32 %v2372, %v2408
      %v2425 = vadd.f32 %v2373, %v2409
      %v2426 = vadd.f32 %v2374, %v2410
      %v2427 = vadd.f32 %v2375, %v2411
      %v2428 = vadd.f32 %v2376, %v2412
      %v2429 = vadd.f32 %v2377, %v2413
      %v2430 = vld [vmem:[%s2341 + $0x3] sm:$0xff]
      %v2431 = vld [vmem:[%s2341 + $0xb] sm:$0xff]
      %v2432 = vld [vmem:[%s2341 + $0x1b] sm:$0xff]
      %v2433 = vld [vmem:[%s2341 + $0x23] sm:$0xff]
      %v2434 = vld [vmem:[%s2341 + $0x33] sm:$0xff]
      %v2435 = vld [vmem:[%s2341 + $0x3b] sm:$0xff]
      %v2436 = vld [vmem:[%s2341 + $0x4b] sm:$0xff]
      %v2437 = vld [vmem:[%s2341 + $0x53] sm:$0xff]
      %v2438 = vld [vmem:[%s2341 + $0x63] sm:$0xff]
      %v2439 = vld [vmem:[%s2341 + $0x6b] sm:$0xff]
      %v2440 = vld [vmem:[%s2341 + $0x7b] sm:$0xff]
      %v2441 = vld [vmem:[%s2341 + $0x83] sm:$0xff]
      %v2442 = vld [vmem:[%s2341 + $0x93] sm:$0xff]
      %v2443 = vld [vmem:[%s2341 + $0x9b] sm:$0xff]
      %v2444 = vld [vmem:[%s2341 + $0xab] sm:$0xff]
      %v2445 = vld [vmem:[%s2341 + $0xb3] sm:$0xff]
      %v2446 = vlaneseq
      %v2447 = vshrl.u32 %v2446, 7
      %v2448 = vsub.s32 2, %v2447
      %v2449 = vrot.slane %v2339, %v2448
      %v2450 = vmul.f32 %v2430, %v2449
      %v2451 = vmul.f32 %v2431, %v2449
      %v2452 = vmul.f32 %v2432, %v2449
      %v2453 = vmul.f32 %v2433, %v2449
      %v2454 = vmul.f32 %v2434, %v2449
      %v2455 = vmul.f32 %v2435, %v2449
      %v2456 = vmul.f32 %v2436, %v2449
      %v2457 = vmul.f32 %v2437, %v2449
      %v2458 = vmul.f32 %v2438, %v2449
      %v2459 = vmul.f32 %v2439, %v2449
      %v2460 = vmul.f32 %v2440, %v2449
      %v2461 = vmul.f32 %v2441, %v2449
      %v2462 = vmul.f32 %v2442, %v2449
      %v2463 = vmul.f32 %v2443, %v2449
      %v2464 = vmul.f32 %v2444, %v2449
      %v2465 = vmul.f32 %v2445, %v2449
      %v2466 = vadd.f32 %v2414, %v2450
      %v2467 = vadd.f32 %v2415, %v2451
      %v2468 = vadd.f32 %v2416, %v2452
      %v2469 = vadd.f32 %v2417, %v2453
      %v2470 = vadd.f32 %v2418, %v2454
      %v2471 = vadd.f32 %v2419, %v2455
      %v2472 = vadd.f32 %v2420, %v2456
      %v2473 = vadd.f32 %v2421, %v2457
      %v2474 = vadd.f32 %v2422, %v2458
      %v2475 = vadd.f32 %v2423, %v2459
      %v2476 = vadd.f32 %v2424, %v2460
      %v2477 = vadd.f32 %v2425, %v2461
      %v2478 = vadd.f32 %v2426, %v2462
      %v2479 = vadd.f32 %v2427, %v2463
      %v2480 = vadd.f32 %v2428, %v2464
      %v2481 = vadd.f32 %v2429, %v2465
      %v2482 = vld [vmem:[%s2217 + $0x1] sm:$0xff]
      %v2483 = vld [vmem:[%s2217 + $0x9] sm:$0xff]
      %v2484 = vld [vmem:[%s2217 + $0x19] sm:$0xff]
      %v2485 = vld [vmem:[%s2217 + $0x21] sm:$0xff]
      %v2486 = vld [vmem:[%s2217 + $0x31] sm:$0xff]
      %v2487 = vld [vmem:[%s2217 + $0x39] sm:$0xff]
      %v2488 = vld [vmem:[%s2217 + $0x49] sm:$0xff]
      %v2489 = vld [vmem:[%s2217 + $0x51] sm:$0xff]
      %v2490 = vld [vmem:[%s2217 + $0x61] sm:$0xff]
      %v2491 = vld [vmem:[%s2217 + $0x69] sm:$0xff]
      %v2492 = vld [vmem:[%s2217 + $0x79] sm:$0xff]
      %v2493 = vld [vmem:[%s2217 + $0x81] sm:$0xff]
      %v2494 = vld [vmem:[%s2217 + $0x91] sm:$0xff]
      %v2495 = vld [vmem:[%s2217 + $0x99] sm:$0xff]
      %v2496 = vld [vmem:[%s2217 + $0xa9] sm:$0xff]
      %v2497 = vld [vmem:[%s2217 + $0xb1] sm:$0xff]
      %v2498 = vlaneseq
      %v2499 = vshrl.u32 %v2498, 7
      %v2500 = vsub.s32 3, %v2499
      %v2501 = vrot.slane %v2339, %v2500
      %v2502 = vmul.f32 %v2482, %v2501
      %v2503 = vmul.f32 %v2483, %v2501
      %v2504 = vmul.f32 %v2484, %v2501
      %v2505 = vmul.f32 %v2485, %v2501
      %v2506 = vmul.f32 %v2486, %v2501
      %v2507 = vmul.f32 %v2487, %v2501
      %v2508 = vmul.f32 %v2488, %v2501
      %v2509 = vmul.f32 %v2489, %v2501
      %v2510 = vmul.f32 %v2490, %v2501
      %v2511 = vmul.f32 %v2491, %v2501
      %v2512 = vmul.f32 %v2492, %v2501
      %v2513 = vmul.f32 %v2493, %v2501
      %v2514 = vmul.f32 %v2494, %v2501
      %v2515 = vmul.f32 %v2495, %v2501
      %v2516 = vmul.f32 %v2496, %v2501
      %v2517 = vmul.f32 %v2497, %v2501
      %v2518 = vadd.f32 %v2466, %v2502
      %v2519 = vadd.f32 %v2467, %v2503
      %v2520 = vadd.f32 %v2468, %v2504
      %v2521 = vadd.f32 %v2469, %v2505
      %v2522 = vadd.f32 %v2470, %v2506
      %v2523 = vadd.f32 %v2471, %v2507
      %v2524 = vadd.f32 %v2472, %v2508
      %v2525 = vadd.f32 %v2473, %v2509
      %v2526 = vadd.f32 %v2474, %v2510
      %v2527 = vadd.f32 %v2475, %v2511
      %v2528 = vadd.f32 %v2476, %v2512
      %v2529 = vadd.f32 %v2477, %v2513
      %v2530 = vadd.f32 %v2478, %v2514
      %v2531 = vadd.f32 %v2479, %v2515
      %v2532 = vadd.f32 %v2480, %v2516
      %v2533 = vadd.f32 %v2481, %v2517
      %v2534 = vld [vmem:[%s2217 + $0x2] sm:$0xff]
      %v2535 = vld [vmem:[%s2217 + $0xa] sm:$0xff]
      %v2536 = vld [vmem:[%s2217 + $0x1a] sm:$0xff]
      %v2537 = vld [vmem:[%s2217 + $0x22] sm:$0xff]
      %v2538 = vld [vmem:[%s2217 + $0x32] sm:$0xff]
      %v2539 = vld [vmem:[%s2217 + $0x3a] sm:$0xff]
      %v2540 = vld [vmem:[%s2217 + $0x4a] sm:$0xff]
      %v2541 = vld [vmem:[%s2217 + $0x52] sm:$0xff]
      %v2542 = vld [vmem:[%s2217 + $0x62] sm:$0xff]
      %v2543 = vld [vmem:[%s2217 + $0x6a] sm:$0xff]
      %v2544 = vld [vmem:[%s2217 + $0x7a] sm:$0xff]
      %v2545 = vld [vmem:[%s2217 + $0x82] sm:$0xff]
      %v2546 = vld [vmem:[%s2217 + $0x92] sm:$0xff]
      %v2547 = vld [vmem:[%s2217 + $0x9a] sm:$0xff]
      %v2548 = vld [vmem:[%s2217 + $0xaa] sm:$0xff]
      %v2549 = vld [vmem:[%s2217 + $0xb2] sm:$0xff]
      %v2550 = vlaneseq
      %v2551 = vshrl.u32 %v2550, 7
      %v2552 = vsub.s32 4, %v2551
      %v2553 = vrot.slane %v2339, %v2552
      %v2554 = vmul.f32 %v2534, %v2553
      %v2555 = vmul.f32 %v2535, %v2553
      %v2556 = vmul.f32 %v2536, %v2553
      %v2557 = vmul.f32 %v2537, %v2553
      %v2558 = vmul.f32 %v2538, %v2553
      %v2559 = vmul.f32 %v2539, %v2553
      %v2560 = vmul.f32 %v2540, %v2553
      %v2561 = vmul.f32 %v2541, %v2553
      %v2562 = vmul.f32 %v2542, %v2553
      %v2563 = vmul.f32 %v2543, %v2553
      %v2564 = vmul.f32 %v2544, %v2553
      %v2565 = vmul.f32 %v2545, %v2553
      %v2566 = vmul.f32 %v2546, %v2553
      %v2567 = vmul.f32 %v2547, %v2553
      %v2568 = vmul.f32 %v2548, %v2553
      %v2569 = vmul.f32 %v2549, %v2553
      %v2570 = vadd.f32 %v2518, %v2554
      %v2571 = vadd.f32 %v2519, %v2555
      %v2572 = vadd.f32 %v2520, %v2556
      %v2573 = vadd.f32 %v2521, %v2557
      %v2574 = vadd.f32 %v2522, %v2558
      %v2575 = vadd.f32 %v2523, %v2559
      %v2576 = vadd.f32 %v2524, %v2560
      %v2577 = vadd.f32 %v2525, %v2561
      %v2578 = vadd.f32 %v2526, %v2562
      %v2579 = vadd.f32 %v2527, %v2563
      %v2580 = vadd.f32 %v2528, %v2564
      %v2581 = vadd.f32 %v2529, %v2565
      %v2582 = vadd.f32 %v2530, %v2566
      %v2583 = vadd.f32 %v2531, %v2567
      %v2584 = vadd.f32 %v2532, %v2568
      %v2585 = vadd.f32 %v2533, %v2569
      %v2586 = vld [vmem:[%s2217 + $0x3] sm:$0xff]
      %v2587 = vld [vmem:[%s2217 + $0xb] sm:$0xff]
      %v2588 = vld [vmem:[%s2217 + $0x1b] sm:$0xff]
      %v2589 = vld [vmem:[%s2217 + $0x23] sm:$0xff]
      %v2590 = vld [vmem:[%s2217 + $0x33] sm:$0xff]
      %v2591 = vld [vmem:[%s2217 + $0x3b] sm:$0xff]
      %v2592 = vld [vmem:[%s2217 + $0x4b] sm:$0xff]
      %v2593 = vld [vmem:[%s2217 + $0x53] sm:$0xff]
      %v2594 = vld [vmem:[%s2217 + $0x63] sm:$0xff]
      %v2595 = vld [vmem:[%s2217 + $0x6b] sm:$0xff]
      %v2596 = vld [vmem:[%s2217 + $0x7b] sm:$0xff]
      %v2597 = vld [vmem:[%s2217 + $0x83] sm:$0xff]
      %v2598 = vld [vmem:[%s2217 + $0x93] sm:$0xff]
      %v2599 = vld [vmem:[%s2217 + $0x9b] sm:$0xff]
      %v2600 = vld [vmem:[%s2217 + $0xab] sm:$0xff]
      %v2601 = vld [vmem:[%s2217 + $0xb3] sm:$0xff]
      %v2602 = vlaneseq
      %v2603 = vshrl.u32 %v2602, 7
      %v2604 = vsub.s32 5, %v2603
      %v2605 = vrot.slane %v2339, %v2604
      %v2606 = vmul.f32 %v2586, %v2605
      %v2607 = vmul.f32 %v2587, %v2605
      %v2608 = vmul.f32 %v2588, %v2605
      %v2609 = vmul.f32 %v2589, %v2605
      %v2610 = vmul.f32 %v2590, %v2605
      %v2611 = vmul.f32 %v2591, %v2605
      %v2612 = vmul.f32 %v2592, %v2605
      %v2613 = vmul.f32 %v2593, %v2605
      %v2614 = vmul.f32 %v2594, %v2605
      %v2615 = vmul.f32 %v2595, %v2605
      %v2616 = vmul.f32 %v2596, %v2605
      %v2617 = vmul.f32 %v2597, %v2605
      %v2618 = vmul.f32 %v2598, %v2605
      %v2619 = vmul.f32 %v2599, %v2605
      %v2620 = vmul.f32 %v2600, %v2605
      %v2621 = vmul.f32 %v2601, %v2605
      %v2622 = vadd.f32 %v2570, %v2606
      %v2623 = vadd.f32 %v2571, %v2607
      %v2624 = vadd.f32 %v2572, %v2608
      %v2625 = vadd.f32 %v2573, %v2609
      %v2626 = vadd.f32 %v2574, %v2610
      %v2627 = vadd.f32 %v2575, %v2611
      %v2628 = vadd.f32 %v2576, %v2612
      %v2629 = vadd.f32 %v2577, %v2613
      %v2630 = vadd.f32 %v2578, %v2614
      %v2631 = vadd.f32 %v2579, %v2615
      %v2632 = vadd.f32 %v2580, %v2616
      %v2633 = vadd.f32 %v2581, %v2617
      %v2634 = vadd.f32 %v2582, %v2618
      %v2635 = vadd.f32 %v2583, %v2619
      %v2636 = vadd.f32 %v2584, %v2620
      %v2637 = vadd.f32 %v2585, %v2621
      %s2638 = scalar_lea.vmem [#allocation3], 72
      %v2639 = vld [vmem:[%s2638 + $0x1] sm:$0xff]
      %v2640 = vld [vmem:[%s2638 + $0x9] sm:$0xff]
      %v2641 = vld [vmem:[%s2638 + $0x19] sm:$0xff]
      %v2642 = vld [vmem:[%s2638 + $0x21] sm:$0xff]
      %v2643 = vld [vmem:[%s2638 + $0x31] sm:$0xff]
      %v2644 = vld [vmem:[%s2638 + $0x39] sm:$0xff]
      %v2645 = vld [vmem:[%s2638 + $0x49] sm:$0xff]
      %v2646 = vld [vmem:[%s2638 + $0x51] sm:$0xff]
      %v2647 = vld [vmem:[%s2638 + $0x61] sm:$0xff]
      %v2648 = vld [vmem:[%s2638 + $0x69] sm:$0xff]
      %v2649 = vld [vmem:[%s2638 + $0x79] sm:$0xff]
      %v2650 = vld [vmem:[%s2638 + $0x81] sm:$0xff]
      %v2651 = vld [vmem:[%s2638 + $0x91] sm:$0xff]
      %v2652 = vld [vmem:[%s2638 + $0x99] sm:$0xff]
      %v2653 = vld [vmem:[%s2638 + $0xa9] sm:$0xff]
      %v2654 = vld [vmem:[%s2638 + $0xb1] sm:$0xff]
      %v2655 = vlaneseq
      %v2656 = vshrl.u32 %v2655, 7
      %v2657 = vsub.s32 6, %v2656
      %v2658 = vrot.slane %v2339, %v2657
      %v2659 = vmul.f32 %v2639, %v2658
      %v2660 = vmul.f32 %v2640, %v2658
      %v2661 = vmul.f32 %v2641, %v2658
      %v2662 = vmul.f32 %v2642, %v2658
      %v2663 = vmul.f32 %v2643, %v2658
      %v2664 = vmul.f32 %v2644, %v2658
      %v2665 = vmul.f32 %v2645, %v2658
      %v2666 = vmul.f32 %v2646, %v2658
      %v2667 = vmul.f32 %v2647, %v2658
      %v2668 = vmul.f32 %v2648, %v2658
      %v2669 = vmul.f32 %v2649, %v2658
      %v2670 = vmul.f32 %v2650, %v2658
      %v2671 = vmul.f32 %v2651, %v2658
      %v2672 = vmul.f32 %v2652, %v2658
      %v2673 = vmul.f32 %v2653, %v2658
      %v2674 = vmul.f32 %v2654, %v2658
      %v2675 = vadd.f32 %v2622, %v2659
      %v2676 = vadd.f32 %v2623, %v2660
      %v2677 = vadd.f32 %v2624, %v2661
      %v2678 = vadd.f32 %v2625, %v2662
      %v2679 = vadd.f32 %v2626, %v2663
      %v2680 = vadd.f32 %v2627, %v2664
      %v2681 = vadd.f32 %v2628, %v2665
      %v2682 = vadd.f32 %v2629, %v2666
      %v2683 = vadd.f32 %v2630, %v2667
      %v2684 = vadd.f32 %v2631, %v2668
      %v2685 = vadd.f32 %v2632, %v2669
      %v2686 = vadd.f32 %v2633, %v2670
      %v2687 = vadd.f32 %v2634, %v2671
      %v2688 = vadd.f32 %v2635, %v2672
      %v2689 = vadd.f32 %v2636, %v2673
      %v2690 = vadd.f32 %v2637, %v2674
      %v2691 = vld [vmem:[%s2638 + $0x2] sm:$0xff]
      %v2692 = vld [vmem:[%s2638 + $0xa] sm:$0xff]
      %v2693 = vld [vmem:[%s2638 + $0x1a] sm:$0xff]
      %v2694 = vld [vmem:[%s2638 + $0x22] sm:$0xff]
      %v2695 = vld [vmem:[%s2638 + $0x32] sm:$0xff]
      %v2696 = vld [vmem:[%s2638 + $0x3a] sm:$0xff]
      %v2697 = vld [vmem:[%s2638 + $0x4a] sm:$0xff]
      %v2698 = vld [vmem:[%s2638 + $0x52] sm:$0xff]
      %v2699 = vld [vmem:[%s2638 + $0x62] sm:$0xff]
      %v2700 = vld [vmem:[%s2638 + $0x6a] sm:$0xff]
      %v2701 = vld [vmem:[%s2638 + $0x7a] sm:$0xff]
      %v2702 = vld [vmem:[%s2638 + $0x82] sm:$0xff]
      %v2703 = vld [vmem:[%s2638 + $0x92] sm:$0xff]
      %v2704 = vld [vmem:[%s2638 + $0x9a] sm:$0xff]
      %v2705 = vld [vmem:[%s2638 + $0xaa] sm:$0xff]
      %v2706 = vld [vmem:[%s2638 + $0xb2] sm:$0xff]
      %v2707 = vlaneseq
      %v2708 = vshrl.u32 %v2707, 7
      %v2709 = vsub.s32 7, %v2708
      %v2710 = vrot.slane %v2339, %v2709
      %v2711 = vmul.f32 %v2691, %v2710
      %v2712 = vmul.f32 %v2692, %v2710
      %v2713 = vmul.f32 %v2693, %v2710
      %v2714 = vmul.f32 %v2694, %v2710
      %v2715 = vmul.f32 %v2695, %v2710
      %v2716 = vmul.f32 %v2696, %v2710
      %v2717 = vmul.f32 %v2697, %v2710
      %v2718 = vmul.f32 %v2698, %v2710
      %v2719 = vmul.f32 %v2699, %v2710
      %v2720 = vmul.f32 %v2700, %v2710
      %v2721 = vmul.f32 %v2701, %v2710
      %v2722 = vmul.f32 %v2702, %v2710
      %v2723 = vmul.f32 %v2703, %v2710
      %v2724 = vmul.f32 %v2704, %v2710
      %v2725 = vmul.f32 %v2705, %v2710
      %v2726 = vmul.f32 %v2706, %v2710
      %v2727 = vadd.f32 %v2675, %v2711
      %v2728 = vadd.f32 %v2676, %v2712
      %v2729 = vadd.f32 %v2677, %v2713
      %v2730 = vadd.f32 %v2678, %v2714
      %v2731 = vadd.f32 %v2679, %v2715
      %v2732 = vadd.f32 %v2680, %v2716
      %v2733 = vadd.f32 %v2681, %v2717
      %v2734 = vadd.f32 %v2682, %v2718
      %v2735 = vadd.f32 %v2683, %v2719
      %v2736 = vadd.f32 %v2684, %v2720
      %v2737 = vadd.f32 %v2685, %v2721
      %v2738 = vadd.f32 %v2686, %v2722
      %v2739 = vadd.f32 %v2687, %v2723
      %v2740 = vadd.f32 %v2688, %v2724
      %v2741 = vadd.f32 %v2689, %v2725
      %v2742 = vadd.f32 %v2690, %v2726
      %v2743 = vld [vmem:[%s2638 + $0x3] sm:$0xff]
      %v2744 = vld [vmem:[%s2638 + $0xb] sm:$0xff]
      %v2745 = vld [vmem:[%s2638 + $0x1b] sm:$0xff]
      %v2746 = vld [vmem:[%s2638 + $0x23] sm:$0xff]
      %v2747 = vld [vmem:[%s2638 + $0x33] sm:$0xff]
      %v2748 = vld [vmem:[%s2638 + $0x3b] sm:$0xff]
      %v2749 = vld [vmem:[%s2638 + $0x4b] sm:$0xff]
      %v2750 = vld [vmem:[%s2638 + $0x53] sm:$0xff]
      %v2751 = vld [vmem:[%s2638 + $0x63] sm:$0xff]
      %v2752 = vld [vmem:[%s2638 + $0x6b] sm:$0xff]
      %v2753 = vld [vmem:[%s2638 + $0x7b] sm:$0xff]
      %v2754 = vld [vmem:[%s2638 + $0x83] sm:$0xff]
      %v2755 = vld [vmem:[%s2638 + $0x93] sm:$0xff]
      %v2756 = vld [vmem:[%s2638 + $0x9b] sm:$0xff]
      %v2757 = vld [vmem:[%s2638 + $0xab] sm:$0xff]
      %v2758 = vld [vmem:[%s2638 + $0xb3] sm:$0xff]
      %v2759 = vlaneseq
      %v2760 = vshrl.u32 %v2759, 7
      %v2761 = vsub.s32 0, %v2760
      %v2762 = vrot.slane %v2340, %v2761
      %v2763 = vmul.f32 %v2743, %v2762
      %v2764 = vmul.f32 %v2744, %v2762
      %v2765 = vmul.f32 %v2745, %v2762
      %v2766 = vmul.f32 %v2746, %v2762
      %v2767 = vmul.f32 %v2747, %v2762
      %v2768 = vmul.f32 %v2748, %v2762
      %v2769 = vmul.f32 %v2749, %v2762
      %v2770 = vmul.f32 %v2750, %v2762
      %v2771 = vmul.f32 %v2751, %v2762
      %v2772 = vmul.f32 %v2752, %v2762
      %v2773 = vmul.f32 %v2753, %v2762
      %v2774 = vmul.f32 %v2754, %v2762
      %v2775 = vmul.f32 %v2755, %v2762
      %v2776 = vmul.f32 %v2756, %v2762
      %v2777 = vmul.f32 %v2757, %v2762
      %v2778 = vmul.f32 %v2758, %v2762
      %v2779 = vadd.f32 %v2727, %v2763
      %v2780 = vadd.f32 %v2728, %v2764
      %v2781 = vadd.f32 %v2729, %v2765
      %v2782 = vadd.f32 %v2730, %v2766
      %v2783 = vadd.f32 %v2731, %v2767
      %v2784 = vadd.f32 %v2732, %v2768
      %v2785 = vadd.f32 %v2733, %v2769
      %v2786 = vadd.f32 %v2734, %v2770
      %v2787 = vadd.f32 %v2735, %v2771
      %v2788 = vadd.f32 %v2736, %v2772
      %v2789 = vadd.f32 %v2737, %v2773
      %v2790 = vadd.f32 %v2738, %v2774
      %v2791 = vadd.f32 %v2739, %v2775
      %v2792 = vadd.f32 %v2740, %v2776
      %v2793 = vadd.f32 %v2741, %v2777
      %v2794 = vadd.f32 %v2742, %v2778
      %v2795 = vlaneseq
      %v2796 = vshrl.u32 %v2795, 7
      %v2797 = vsub.s32 1, %v2796
      %v2798 = vrot.slane %v2340, %v2797
      %v2799 = vadd.f32 %v2779, %v2798
      %v2800 = vadd.f32 %v2780, %v2798
      %v2801 = vadd.f32 %v2781, %v2798
      %v2802 = vadd.f32 %v2782, %v2798
      %v2803 = vadd.f32 %v2783, %v2798
      %v2804 = vadd.f32 %v2784, %v2798
      %v2805 = vadd.f32 %v2785, %v2798
      %v2806 = vadd.f32 %v2786, %v2798
      %v2807 = vadd.f32 %v2787, %v2798
      %v2808 = vadd.f32 %v2788, %v2798
      %v2809 = vadd.f32 %v2789, %v2798
      %v2810 = vadd.f32 %v2790, %v2798
      %v2811 = vadd.f32 %v2791, %v2798
      %v2812 = vadd.f32 %v2792, %v2798
      %v2813 = vadd.f32 %v2793, %v2798
      %v2814 = vadd.f32 %v2794, %v2798
      %v2815 = vmax.f32 %v2799, 0.0
      %v2816 = vmax.f32 %v2800, 0.0
      %v2817 = vmax.f32 %v2801, 0.0
      %v2818 = vmax.f32 %v2802, 0.0
      %v2819 = vmax.f32 %v2803, 0.0
      %v2820 = vmax.f32 %v2804, 0.0
      %v2821 = vmax.f32 %v2805, 0.0
      %v2822 = vmax.f32 %v2806, 0.0
      %v2823 = vmax.f32 %v2807, 0.0
      %v2824 = vmax.f32 %v2808, 0.0
      %v2825 = vmax.f32 %v2809, 0.0
      %v2826 = vmax.f32 %v2810, 0.0
      %v2827 = vmax.f32 %v2811, 0.0
      %v2828 = vmax.f32 %v2812, 0.0
      %v2829 = vmax.f32 %v2813, 0.0
      %v2830 = vmax.f32 %v2814, 0.0
      %v2831 = vmin.f32 %v2815, 6.0
      %v2832 = vmin.f32 %v2816, 6.0
      %v2833 = vmin.f32 %v2817, 6.0
      %v2834 = vmin.f32 %v2818, 6.0
      %v2835 = vmin.f32 %v2819, 6.0
      %v2836 = vmin.f32 %v2820, 6.0
      %v2837 = vmin.f32 %v2821, 6.0
      %v2838 = vmin.f32 %v2822, 6.0
      %v2839 = vmin.f32 %v2823, 6.0
      %v2840 = vmin.f32 %v2824, 6.0
      %v2841 = vmin.f32 %v2825, 6.0
      %v2842 = vmin.f32 %v2826, 6.0
      %v2843 = vmin.f32 %v2827, 6.0
      %v2844 = vmin.f32 %v2828, 6.0
      %v2845 = vmin.f32 %v2829, 6.0
      %v2846 = vmin.f32 %v2830, 6.0
      %v2847 = vadd.f32 %v2323, %v2831
      %v2848 = vadd.f32 %v2324, %v2832
      %v2849 = vadd.f32 %v2325, %v2833
      %v2850 = vadd.f32 %v2326, %v2834
      %v2851 = vadd.f32 %v2327, %v2835
      %v2852 = vadd.f32 %v2328, %v2836
      %v2853 = vadd.f32 %v2329, %v2837
      %v2854 = vadd.f32 %v2330, %v2838
      %v2855 = vadd.f32 %v2331, %v2839
      %v2856 = vadd.f32 %v2332, %v2840
      %v2857 = vadd.f32 %v2333, %v2841
      %v2858 = vadd.f32 %v2334, %v2842
      %v2859 = vadd.f32 %v2335, %v2843
      %v2860 = vadd.f32 %v2336, %v2844
      %v2861 = vadd.f32 %v2337, %v2845
      %v2862 = vadd.f32 %v2338, %v2846
      %v2863 = vld [vmem:[%s10] sm:$0xff]
      %v2864 = vld [vmem:[%s10 + $0x8] sm:$0xff]
      %v2865 = vld [vmem:[%s10 + $0x10] sm:$0xff]
      %v2866 = vld [vmem:[%s10 + $0x18] sm:$0x3]
      %v2867 = vld [vmem:[#allocation3] sm:$0xff]
      %v2868 = vld [vmem:[#allocation3 + $0x8] sm:$0xff]
      %v2869 = vld [vmem:[#allocation3 + $0x18] sm:$0xff]
      %v2870 = vld [vmem:[#allocation3 + $0x20] sm:$0xff]
      %v2871 = vld [vmem:[#allocation3 + $0x30] sm:$0xff]
      %v2872 = vld [vmem:[#allocation3 + $0x38] sm:$0xff]
      %v2873 = vld [vmem:[#allocation3 + $0x48] sm:$0xff]
      %v2874 = vld [vmem:[#allocation3 + $0x50] sm:$0xff]
      %v2875 = vld [vmem:[#allocation3 + $0x60] sm:$0xff]
      %v2876 = vld [vmem:[#allocation3 + $0x68] sm:$0xff]
      %v2877 = vld [vmem:[#allocation3 + $0x78] sm:$0xff]
      %v2878 = vld [vmem:[#allocation3 + $0x80] sm:$0xff]
      %v2879 = vld [vmem:[#allocation3 + $0x90] sm:$0xff]
      %v2880 = vld [vmem:[#allocation3 + $0x98] sm:$0xff]
      %v2881 = vld [vmem:[#allocation3 + $0xa8] sm:$0xff]
      %v2882 = vld [vmem:[#allocation3 + $0xb0] sm:$0xff]
      %v2883 = vlaneseq
      %v2884 = vshrl.u32 %v2883, 7
      %v2885 = vsub.s32 0, %v2884
      %v2886 = vrot.slane %v2863, %v2885
      %v2887 = vmul.f32 %v2867, %v2886
      %v2888 = vmul.f32 %v2868, %v2886
      %v2889 = vmul.f32 %v2869, %v2886
      %v2890 = vmul.f32 %v2870, %v2886
      %v2891 = vmul.f32 %v2871, %v2886
      %v2892 = vmul.f32 %v2872, %v2886
      %v2893 = vmul.f32 %v2873, %v2886
      %v2894 = vmul.f32 %v2874, %v2886
      %v2895 = vmul.f32 %v2875, %v2886
      %v2896 = vmul.f32 %v2876, %v2886
      %v2897 = vmul.f32 %v2877, %v2886
      %v2898 = vmul.f32 %v2878, %v2886
      %v2899 = vmul.f32 %v2879, %v2886
      %v2900 = vmul.f32 %v2880, %v2886
      %v2901 = vmul.f32 %v2881, %v2886
      %v2902 = vmul.f32 %v2882, %v2886
      %v2903 = vld [vmem:[#allocation3 + $0x1] sm:$0xff]
      %v2904 = vld [vmem:[#allocation3 + $0x9] sm:$0xff]
      %v2905 = vld [vmem:[#allocation3 + $0x19] sm:$0xff]
      %v2906 = vld [vmem:[#allocation3 + $0x21] sm:$0xff]
      %v2907 = vld [vmem:[#allocation3 + $0x31] sm:$0xff]
      %v2908 = vld [vmem:[#allocation3 + $0x39] sm:$0xff]
      %v2909 = vld [vmem:[#allocation3 + $0x49] sm:$0xff]
      %v2910 = vld [vmem:[#allocation3 + $0x51] sm:$0xff]
      %v2911 = vld [vmem:[#allocation3 + $0x61] sm:$0xff]
      %v2912 = vld [vmem:[#allocation3 + $0x69] sm:$0xff]
      %v2913 = vld [vmem:[#allocation3 + $0x79] sm:$0xff]
      %v2914 = vld [vmem:[#allocation3 + $0x81] sm:$0xff]
      %v2915 = vld [vmem:[#allocation3 + $0x91] sm:$0xff]
      %v2916 = vld [vmem:[#allocation3 + $0x99] sm:$0xff]
      %v2917 = vld [vmem:[#allocation3 + $0xa9] sm:$0xff]
      %v2918 = vld [vmem:[#allocation3 + $0xb1] sm:$0xff]
      %v2919 = vlaneseq
      %v2920 = vshrl.u32 %v2919, 7
      %v2921 = vsub.s32 1, %v2920
      %v2922 = vrot.slane %v2863, %v2921
      %v2923 = vmul.f32 %v2903, %v2922
      %v2924 = vmul.f32 %v2904, %v2922
      %v2925 = vmul.f32 %v2905, %v2922
      %v2926 = vmul.f32 %v2906, %v2922
      %v2927 = vmul.f32 %v2907, %v2922
      %v2928 = vmul.f32 %v2908, %v2922
      %v2929 = vmul.f32 %v2909, %v2922
      %v2930 = vmul.f32 %v2910, %v2922
      %v2931 = vmul.f32 %v2911, %v2922
      %v2932 = vmul.f32 %v2912, %v2922
      %v2933 = vmul.f32 %v2913, %v2922
      %v2934 = vmul.f32 %v2914, %v2922
      %v2935 = vmul.f32 %v2915, %v2922
      %v2936 = vmul.f32 %v2916, %v2922
      %v2937 = vmul.f32 %v2917, %v2922
      %v2938 = vmul.f32 %v2918, %v2922
      %v2939 = vadd.f32 %v2887, %v2923
      %v2940 = vadd.f32 %v2888, %v2924
      %v2941 = vadd.f32 %v2889, %v2925
      %v2942 = vadd.f32 %v2890, %v2926
      %v2943 = vadd.f32 %v2891, %v2927
      %v2944 = vadd.f32 %v2892, %v2928
      %v2945 = vadd.f32 %v2893, %v2929
      %v2946 = vadd.f32 %v2894, %v2930
      %v2947 = vadd.f32 %v2895, %v2931
      %v2948 = vadd.f32 %v2896, %v2932
      %v2949 = vadd.f32 %v2897, %v2933
      %v2950 = vadd.f32 %v2898, %v2934
      %v2951 = vadd.f32 %v2899, %v2935
      %v2952 = vadd.f32 %v2900, %v2936
      %v2953 = vadd.f32 %v2901, %v2937
      %v2954 = vadd.f32 %v2902, %v2938
      %v2955 = vld [vmem:[#allocation3 + $0x2] sm:$0xff]
      %v2956 = vld [vmem:[#allocation3 + $0xa] sm:$0xff]
      %v2957 = vld [vmem:[#allocation3 + $0x1a] sm:$0xff]
      %v2958 = vld [vmem:[#allocation3 + $0x22] sm:$0xff]
      %v2959 = vld [vmem:[#allocation3 + $0x32] sm:$0xff]
      %v2960 = vld [vmem:[#allocation3 + $0x3a] sm:$0xff]
      %v2961 = vld [vmem:[#allocation3 + $0x4a] sm:$0xff]
      %v2962 = vld [vmem:[#allocation3 + $0x52] sm:$0xff]
      %v2963 = vld [vmem:[#allocation3 + $0x62] sm:$0xff]
      %v2964 = vld [vmem:[#allocation3 + $0x6a] sm:$0xff]
      %v2965 = vld [vmem:[#allocation3 + $0x7a] sm:$0xff]
      %v2966 = vld [vmem:[#allocation3 + $0x82] sm:$0xff]
      %v2967 = vld [vmem:[#allocation3 + $0x92] sm:$0xff]
      %v2968 = vld [vmem:[#allocation3 + $0x9a] sm:$0xff]
      %v2969 = vld [vmem:[#allocation3 + $0xaa] sm:$0xff]
      %v2970 = vld [vmem:[#allocation3 + $0xb2] sm:$0xff]
      %v2971 = vlaneseq
      %v2972 = vshrl.u32 %v2971, 7
      %v2973 = vsub.s32 2, %v2972
      %v2974 = vrot.slane %v2863, %v2973
      %v2975 = vmul.f32 %v2955, %v2974
      %v2976 = vmul.f32 %v2956, %v2974
      %v2977 = vmul.f32 %v2957, %v2974
      %v2978 = vmul.f32 %v2958, %v2974
      %v2979 = vmul.f32 %v2959, %v2974
      %v2980 = vmul.f32 %v2960, %v2974
      %v2981 = vmul.f32 %v2961, %v2974
      %v2982 = vmul.f32 %v2962, %v2974
      %v2983 = vmul.f32 %v2963, %v2974
      %v2984 = vmul.f32 %v2964, %v2974
      %v2985 = vmul.f32 %v2965, %v2974
      %v2986 = vmul.f32 %v2966, %v2974
      %v2987 = vmul.f32 %v2967, %v2974
      %v2988 = vmul.f32 %v2968, %v2974
      %v2989 = vmul.f32 %v2969, %v2974
      %v2990 = vmul.f32 %v2970, %v2974
      %v2991 = vadd.f32 %v2939, %v2975
      %v2992 = vadd.f32 %v2940, %v2976
      %v2993 = vadd.f32 %v2941, %v2977
      %v2994 = vadd.f32 %v2942, %v2978
      %v2995 = vadd.f32 %v2943, %v2979
      %v2996 = vadd.f32 %v2944, %v2980
      %v2997 = vadd.f32 %v2945, %v2981
      %v2998 = vadd.f32 %v2946, %v2982
      %v2999 = vadd.f32 %v2947, %v2983
      %v3000 = vadd.f32 %v2948, %v2984
      %v3001 = vadd.f32 %v2949, %v2985
      %v3002 = vadd.f32 %v2950, %v2986
      %v3003 = vadd.f32 %v2951, %v2987
      %v3004 = vadd.f32 %v2952, %v2988
      %v3005 = vadd.f32 %v2953, %v2989
      %v3006 = vadd.f32 %v2954, %v2990
      %v3007 = vld [vmem:[#allocation3 + $0x3] sm:$0xff]
      %v3008 = vld [vmem:[#allocation3 + $0xb] sm:$0xff]
      %v3009 = vld [vmem:[#allocation3 + $0x1b] sm:$0xff]
      %v3010 = vld [vmem:[#allocation3 + $0x23] sm:$0xff]
      %v3011 = vld [vmem:[#allocation3 + $0x33] sm:$0xff]
      %v3012 = vld [vmem:[#allocation3 + $0x3b] sm:$0xff]
      %v3013 = vld [vmem:[#allocation3 + $0x4b] sm:$0xff]
      %v3014 = vld [vmem:[#allocation3 + $0x53] sm:$0xff]
      %v3015 = vld [vmem:[#allocation3 + $0x63] sm:$0xff]
      %v3016 = vld [vmem:[#allocation3 + $0x6b] sm:$0xff]
      %v3017 = vld [vmem:[#allocation3 + $0x7b] sm:$0xff]
      %v3018 = vld [vmem:[#allocation3 + $0x83] sm:$0xff]
      %v3019 = vld [vmem:[#allocation3 + $0x93] sm:$0xff]
      %v3020 = vld [vmem:[#allocation3 + $0x9b] sm:$0xff]
      %v3021 = vld [vmem:[#allocation3 + $0xab] sm:$0xff]
      %v3022 = vld [vmem:[#allocation3 + $0xb3] sm:$0xff]
      %v3023 = vlaneseq
      %v3024 = vshrl.u32 %v3023, 7
      %v3025 = vsub.s32 3, %v3024
      %v3026 = vrot.slane %v2863, %v3025
      %v3027 = vmul.f32 %v3007, %v3026
      %v3028 = vmul.f32 %v3008, %v3026
      %v3029 = vmul.f32 %v3009, %v3026
      %v3030 = vmul.f32 %v3010, %v3026
      %v3031 = vmul.f32 %v3011, %v3026
      %v3032 = vmul.f32 %v3012, %v3026
      %v3033 = vmul.f32 %v3013, %v3026
      %v3034 = vmul.f32 %v3014, %v3026
      %v3035 = vmul.f32 %v3015, %v3026
      %v3036 = vmul.f32 %v3016, %v3026
      %v3037 = vmul.f32 %v3017, %v3026
      %v3038 = vmul.f32 %v3018, %v3026
      %v3039 = vmul.f32 %v3019, %v3026
      %v3040 = vmul.f32 %v3020, %v3026
      %v3041 = vmul.f32 %v3021, %v3026
      %v3042 = vmul.f32 %v3022, %v3026
      %v3043 = vadd.f32 %v2991, %v3027
      %v3044 = vadd.f32 %v2992, %v3028
      %v3045 = vadd.f32 %v2993, %v3029
      %v3046 = vadd.f32 %v2994, %v3030
      %v3047 = vadd.f32 %v2995, %v3031
      %v3048 = vadd.f32 %v2996, %v3032
      %v3049 = vadd.f32 %v2997, %v3033
      %v3050 = vadd.f32 %v2998, %v3034
      %v3051 = vadd.f32 %v2999, %v3035
      %v3052 = vadd.f32 %v3000, %v3036
      %v3053 = vadd.f32 %v3001, %v3037
      %v3054 = vadd.f32 %v3002, %v3038
      %v3055 = vadd.f32 %v3003, %v3039
      %v3056 = vadd.f32 %v3004, %v3040
      %v3057 = vadd.f32 %v3005, %v3041
      %v3058 = vadd.f32 %v3006, %v3042
      %v3059 = vld [vmem:[#allocation3 + $0x4] sm:$0xff]
      %v3060 = vld [vmem:[#allocation3 + $0xc] sm:$0xff]
      %v3061 = vld [vmem:[#allocation3 + $0x1c] sm:$0xff]
      %v3062 = vld [vmem:[#allocation3 + $0x24] sm:$0xff]
      %v3063 = vld [vmem:[#allocation3 + $0x34] sm:$0xff]
      %v3064 = vld [vmem:[#allocation3 + $0x3c] sm:$0xff]
      %v3065 = vld [vmem:[#allocation3 + $0x4c] sm:$0xff]
      %v3066 = vld [vmem:[#allocation3 + $0x54] sm:$0xff]
      %v3067 = vld [vmem:[#allocation3 + $0x64] sm:$0xff]
      %v3068 = vld [vmem:[#allocation3 + $0x6c] sm:$0xff]
      %v3069 = vld [vmem:[#allocation3 + $0x7c] sm:$0xff]
      %v3070 = vld [vmem:[#allocation3 + $0x84] sm:$0xff]
      %v3071 = vld [vmem:[#allocation3 + $0x94] sm:$0xff]
      %v3072 = vld [vmem:[#allocation3 + $0x9c] sm:$0xff]
      %v3073 = vld [vmem:[#allocation3 + $0xac] sm:$0xff]
      %v3074 = vld [vmem:[#allocation3 + $0xb4] sm:$0xff]
      %v3075 = vlaneseq
      %v3076 = vshrl.u32 %v3075, 7
      %v3077 = vsub.s32 4, %v3076
      %v3078 = vrot.slane %v2863, %v3077
      %v3079 = vmul.f32 %v3059, %v3078
      %v3080 = vmul.f32 %v3060, %v3078
      %v3081 = vmul.f32 %v3061, %v3078
      %v3082 = vmul.f32 %v3062, %v3078
      %v3083 = vmul.f32 %v3063, %v3078
      %v3084 = vmul.f32 %v3064, %v3078
      %v3085 = vmul.f32 %v3065, %v3078
      %v3086 = vmul.f32 %v3066, %v3078
      %v3087 = vmul.f32 %v3067, %v3078
      %v3088 = vmul.f32 %v3068, %v3078
      %v3089 = vmul.f32 %v3069, %v3078
      %v3090 = vmul.f32 %v3070, %v3078
      %v3091 = vmul.f32 %v3071, %v3078
      %v3092 = vmul.f32 %v3072, %v3078
      %v3093 = vmul.f32 %v3073, %v3078
      %v3094 = vmul.f32 %v3074, %v3078
      %v3095 = vadd.f32 %v3043, %v3079
      %v3096 = vadd.f32 %v3044, %v3080
      %v3097 = vadd.f32 %v3045, %v3081
      %v3098 = vadd.f32 %v3046, %v3082
      %v3099 = vadd.f32 %v3047, %v3083
      %v3100 = vadd.f32 %v3048, %v3084
      %v3101 = vadd.f32 %v3049, %v3085
      %v3102 = vadd.f32 %v3050, %v3086
      %v3103 = vadd.f32 %v3051, %v3087
      %v3104 = vadd.f32 %v3052, %v3088
      %v3105 = vadd.f32 %v3053, %v3089
      %v3106 = vadd.f32 %v3054, %v3090
      %v3107 = vadd.f32 %v3055, %v3091
      %v3108 = vadd.f32 %v3056, %v3092
      %v3109 = vadd.f32 %v3057, %v3093
      %v3110 = vadd.f32 %v3058, %v3094
      %v3111 = vld [vmem:[%s2341] sm:$0xff]
      %v3112 = vld [vmem:[%s2341 + $0x8] sm:$0xff]
      %v3113 = vld [vmem:[%s2341 + $0x18] sm:$0xff]
      %v3114 = vld [vmem:[%s2341 + $0x20] sm:$0xff]
      %v3115 = vld [vmem:[%s2341 + $0x30] sm:$0xff]
      %v3116 = vld [vmem:[%s2341 + $0x38] sm:$0xff]
      %v3117 = vld [vmem:[%s2341 + $0x48] sm:$0xff]
      %v3118 = vld [vmem:[%s2341 + $0x50] sm:$0xff]
      %v3119 = vld [vmem:[%s2341 + $0x60] sm:$0xff]
      %v3120 = vld [vmem:[%s2341 + $0x68] sm:$0xff]
      %v3121 = vld [vmem:[%s2341 + $0x78] sm:$0xff]
      %v3122 = vld [vmem:[%s2341 + $0x80] sm:$0xff]
      %v3123 = vld [vmem:[%s2341 + $0x90] sm:$0xff]
      %v3124 = vld [vmem:[%s2341 + $0x98] sm:$0xff]
      %v3125 = vld [vmem:[%s2341 + $0xa8] sm:$0xff]
      %v3126 = vld [vmem:[%s2341 + $0xb0] sm:$0xff]
      %v3127 = vlaneseq
      %v3128 = vshrl.u32 %v3127, 7
      %v3129 = vsub.s32 5, %v3128
      %v3130 = vrot.slane %v2863, %v3129
      %v3131 = vmul.f32 %v3111, %v3130
      %v3132 = vmul.f32 %v3112, %v3130
      %v3133 = vmul.f32 %v3113, %v3130
      %v3134 = vmul.f32 %v3114, %v3130
      %v3135 = vmul.f32 %v3115, %v3130
      %v3136 = vmul.f32 %v3116, %v3130
      %v3137 = vmul.f32 %v3117, %v3130
      %v3138 = vmul.f32 %v3118, %v3130
      %v3139 = vmul.f32 %v3119, %v3130
      %v3140 = vmul.f32 %v3120, %v3130
      %v3141 = vmul.f32 %v3121, %v3130
      %v3142 = vmul.f32 %v3122, %v3130
      %v3143 = vmul.f32 %v3123, %v3130
      %v3144 = vmul.f32 %v3124, %v3130
      %v3145 = vmul.f32 %v3125, %v3130
      %v3146 = vmul.f32 %v3126, %v3130
      %v3147 = vadd.f32 %v3095, %v3131
      %v3148 = vadd.f32 %v3096, %v3132
      %v3149 = vadd.f32 %v3097, %v3133
      %v3150 = vadd.f32 %v3098, %v3134
      %v3151 = vadd.f32 %v3099, %v3135
      %v3152 = vadd.f32 %v3100, %v3136
      %v3153 = vadd.f32 %v3101, %v3137
      %v3154 = vadd.f32 %v3102, %v3138
      %v3155 = vadd.f32 %v3103, %v3139
      %v3156 = vadd.f32 %v3104, %v3140
      %v3157 = vadd.f32 %v3105, %v3141
      %v3158 = vadd.f32 %v3106, %v3142
      %v3159 = vadd.f32 %v3107, %v3143
      %v3160 = vadd.f32 %v3108, %v3144
      %v3161 = vadd.f32 %v3109, %v3145
      %v3162 = vadd.f32 %v3110, %v3146
      %v3163 = vlaneseq
      %v3164 = vshrl.u32 %v3163, 7
      %v3165 = vsub.s32 6, %v3164
      %v3166 = vrot.slane %v2863, %v3165
      %v3167 = vmul.f32 %v2342, %v3166
      %v3168 = vmul.f32 %v2343, %v3166
      %v3169 = vmul.f32 %v2344, %v3166
      %v3170 = vmul.f32 %v2345, %v3166
      %v3171 = vmul.f32 %v2346, %v3166
      %v3172 = vmul.f32 %v2347, %v3166
      %v3173 = vmul.f32 %v2348, %v3166
      %v3174 = vmul.f32 %v2349, %v3166
      %v3175 = vmul.f32 %v2350, %v3166
      %v3176 = vmul.f32 %v2351, %v3166
      %v3177 = vmul.f32 %v2352, %v3166
      %v3178 = vmul.f32 %v2353, %v3166
      %v3179 = vmul.f32 %v2354, %v3166
      %v3180 = vmul.f32 %v2355, %v3166
      %v3181 = vmul.f32 %v2356, %v3166
      %v3182 = vmul.f32 %v2357, %v3166
      %v3183 = vadd.f32 %v3147, %v3167
      %v3184 = vadd.f32 %v3148, %v3168
      %v3185 = vadd.f32 %v3149, %v3169
      %v3186 = vadd.f32 %v3150, %v3170
      %v3187 = vadd.f32 %v3151, %v3171
      %v3188 = vadd.f32 %v3152, %v3172
      %v3189 = vadd.f32 %v3153, %v3173
      %v3190 = vadd.f32 %v3154, %v3174
      %v3191 = vadd.f32 %v3155, %v3175
      %v3192 = vadd.f32 %v3156, %v3176
      %v3193 = vadd.f32 %v3157, %v3177
      %v3194 = vadd.f32 %v3158, %v3178
      %v3195 = vadd.f32 %v3159, %v3179
      %v3196 = vadd.f32 %v3160, %v3180
      %v3197 = vadd.f32 %v3161, %v3181
      %v3198 = vadd.f32 %v3162, %v3182
      %v3199 = vlaneseq
      %v3200 = vshrl.u32 %v3199, 7
      %v3201 = vsub.s32 7, %v3200
      %v3202 = vrot.slane %v2863, %v3201
      %v3203 = vmul.f32 %v2378, %v3202
      %v3204 = vmul.f32 %v2379, %v3202
      %v3205 = vmul.f32 %v2380, %v3202
      %v3206 = vmul.f32 %v2381, %v3202
      %v3207 = vmul.f32 %v2382, %v3202
      %v3208 = vmul.f32 %v2383, %v3202
      %v3209 = vmul.f32 %v2384, %v3202
      %v3210 = vmul.f32 %v2385, %v3202
      %v3211 = vmul.f32 %v2386, %v3202
      %v3212 = vmul.f32 %v2387, %v3202
      %v3213 = vmul.f32 %v2388, %v3202
      %v3214 = vmul.f32 %v2389, %v3202
      %v3215 = vmul.f32 %v2390, %v3202
      %v3216 = vmul.f32 %v2391, %v3202
      %v3217 = vmul.f32 %v2392, %v3202
      %v3218 = vmul.f32 %v2393, %v3202
      %v3219 = vadd.f32 %v3183, %v3203
      %v3220 = vadd.f32 %v3184, %v3204
      %v3221 = vadd.f32 %v3185, %v3205
      %v3222 = vadd.f32 %v3186, %v3206
      %v3223 = vadd.f32 %v3187, %v3207
      %v3224 = vadd.f32 %v3188, %v3208
      %v3225 = vadd.f32 %v3189, %v3209
      %v3226 = vadd.f32 %v3190, %v3210
      %v3227 = vadd.f32 %v3191, %v3211
      %v3228 = vadd.f32 %v3192, %v3212
      %v3229 = vadd.f32 %v3193, %v3213
      %v3230 = vadd.f32 %v3194, %v3214
      %v3231 = vadd.f32 %v3195, %v3215
      %v3232 = vadd.f32 %v3196, %v3216
      %v3233 = vadd.f32 %v3197, %v3217
      %v3234 = vadd.f32 %v3198, %v3218
      %v3235 = vlaneseq
      %v3236 = vshrl.u32 %v3235, 7
      %v3237 = vsub.s32 0, %v3236
      %v3238 = vrot.slane %v2864, %v3237
      %v3239 = vmul.f32 %v2430, %v3238
      %v3240 = vmul.f32 %v2431, %v3238
      %v3241 = vmul.f32 %v2432, %v3238
      %v3242 = vmul.f32 %v2433, %v3238
      %v3243 = vmul.f32 %v2434, %v3238
      %v3244 = vmul.f32 %v2435, %v3238
      %v3245 = vmul.f32 %v2436, %v3238
      %v3246 = vmul.f32 %v2437, %v3238
      %v3247 = vmul.f32 %v2438, %v3238
      %v3248 = vmul.f32 %v2439, %v3238
      %v3249 = vmul.f32 %v2440, %v3238
      %v3250 = vmul.f32 %v2441, %v3238
      %v3251 = vmul.f32 %v2442, %v3238
      %v3252 = vmul.f32 %v2443, %v3238
      %v3253 = vmul.f32 %v2444, %v3238
      %v3254 = vmul.f32 %v2445, %v3238
      %v3255 = vadd.f32 %v3219, %v3239
      %v3256 = vadd.f32 %v3220, %v3240
      %v3257 = vadd.f32 %v3221, %v3241
      %v3258 = vadd.f32 %v3222, %v3242
      %v3259 = vadd.f32 %v3223, %v3243
      %v3260 = vadd.f32 %v3224, %v3244
      %v3261 = vadd.f32 %v3225, %v3245
      %v3262 = vadd.f32 %v3226, %v3246
      %v3263 = vadd.f32 %v3227, %v3247
      %v3264 = vadd.f32 %v3228, %v3248
      %v3265 = vadd.f32 %v3229, %v3249
      %v3266 = vadd.f32 %v3230, %v3250
      %v3267 = vadd.f32 %v3231, %v3251
      %v3268 = vadd.f32 %v3232, %v3252
      %v3269 = vadd.f32 %v3233, %v3253
      %v3270 = vadd.f32 %v3234, %v3254
      %v3271 = vld [vmem:[%s2341 + $0x4] sm:$0xff]
      %v3272 = vld [vmem:[%s2341 + $0xc] sm:$0xff]
      %v3273 = vld [vmem:[%s2341 + $0x1c] sm:$0xff]
      %v3274 = vld [vmem:[%s2341 + $0x24] sm:$0xff]
      %v3275 = vld [vmem:[%s2341 + $0x34] sm:$0xff]
      %v3276 = vld [vmem:[%s2341 + $0x3c] sm:$0xff]
      %v3277 = vld [vmem:[%s2341 + $0x4c] sm:$0xff]
      %v3278 = vld [vmem:[%s2341 + $0x54] sm:$0xff]
      %v3279 = vld [vmem:[%s2341 + $0x64] sm:$0xff]
      %v3280 = vld [vmem:[%s2341 + $0x6c] sm:$0xff]
      %v3281 = vld [vmem:[%s2341 + $0x7c] sm:$0xff]
      %v3282 = vld [vmem:[%s2341 + $0x84] sm:$0xff]
      %v3283 = vld [vmem:[%s2341 + $0x94] sm:$0xff]
      %v3284 = vld [vmem:[%s2341 + $0x9c] sm:$0xff]
      %v3285 = vld [vmem:[%s2341 + $0xac] sm:$0xff]
      %v3286 = vld [vmem:[%s2341 + $0xb4] sm:$0xff]
      %v3287 = vlaneseq
      %v3288 = vshrl.u32 %v3287, 7
      %v3289 = vsub.s32 1, %v3288
      %v3290 = vrot.slane %v2864, %v3289
      %v3291 = vmul.f32 %v3271, %v3290
      %v3292 = vmul.f32 %v3272, %v3290
      %v3293 = vmul.f32 %v3273, %v3290
      %v3294 = vmul.f32 %v3274, %v3290
      %v3295 = vmul.f32 %v3275, %v3290
      %v3296 = vmul.f32 %v3276, %v3290
      %v3297 = vmul.f32 %v3277, %v3290
      %v3298 = vmul.f32 %v3278, %v3290
      %v3299 = vmul.f32 %v3279, %v3290
      %v3300 = vmul.f32 %v3280, %v3290
      %v3301 = vmul.f32 %v3281, %v3290
      %v3302 = vmul.f32 %v3282, %v3290
      %v3303 = vmul.f32 %v3283, %v3290
      %v3304 = vmul.f32 %v3284, %v3290
      %v3305 = vmul.f32 %v3285, %v3290
      %v3306 = vmul.f32 %v3286, %v3290
      %v3307 = vadd.f32 %v3255, %v3291
      %v3308 = vadd.f32 %v3256, %v3292
      %v3309 = vadd.f32 %v3257, %v3293
      %v3310 = vadd.f32 %v3258, %v3294
      %v3311 = vadd.f32 %v3259, %v3295
      %v3312 = vadd.f32 %v3260, %v3296
      %v3313 = vadd.f32 %v3261, %v3297
      %v3314 = vadd.f32 %v3262, %v3298
      %v3315 = vadd.f32 %v3263, %v3299
      %v3316 = vadd.f32 %v3264, %v3300
      %v3317 = vadd.f32 %v3265, %v3301
      %v3318 = vadd.f32 %v3266, %v3302
      %v3319 = vadd.f32 %v3267, %v3303
      %v3320 = vadd.f32 %v3268, %v3304
      %v3321 = vadd.f32 %v3269, %v3305
      %v3322 = vadd.f32 %v3270, %v3306
      %v3323 = vld [vmem:[%s2217] sm:$0xff]
      %v3324 = vld [vmem:[%s2217 + $0x8] sm:$0xff]
      %v3325 = vld [vmem:[%s2217 + $0x18] sm:$0xff]
      %v3326 = vld [vmem:[%s2217 + $0x20] sm:$0xff]
      %v3327 = vld [vmem:[%s2217 + $0x30] sm:$0xff]
      %v3328 = vld [vmem:[%s2217 + $0x38] sm:$0xff]
      %v3329 = vld [vmem:[%s2217 + $0x48] sm:$0xff]
      %v3330 = vld [vmem:[%s2217 + $0x50] sm:$0xff]
      %v3331 = vld [vmem:[%s2217 + $0x60] sm:$0xff]
      %v3332 = vld [vmem:[%s2217 + $0x68] sm:$0xff]
      %v3333 = vld [vmem:[%s2217 + $0x78] sm:$0xff]
      %v3334 = vld [vmem:[%s2217 + $0x80] sm:$0xff]
      %v3335 = vld [vmem:[%s2217 + $0x90] sm:$0xff]
      %v3336 = vld [vmem:[%s2217 + $0x98] sm:$0xff]
      %v3337 = vld [vmem:[%s2217 + $0xa8] sm:$0xff]
      %v3338 = vld [vmem:[%s2217 + $0xb0] sm:$0xff]
      %v3339 = vlaneseq
      %v3340 = vshrl.u32 %v3339, 7
      %v3341 = vsub.s32 2, %v3340
      %v3342 = vrot.slane %v2864, %v3341
      %v3343 = vmul.f32 %v3323, %v3342
      %v3344 = vmul.f32 %v3324, %v3342
      %v3345 = vmul.f32 %v3325, %v3342
      %v3346 = vmul.f32 %v3326, %v3342
      %v3347 = vmul.f32 %v3327, %v3342
      %v3348 = vmul.f32 %v3328, %v3342
      %v3349 = vmul.f32 %v3329, %v3342
      %v3350 = vmul.f32 %v3330, %v3342
      %v3351 = vmul.f32 %v3331, %v3342
      %v3352 = vmul.f32 %v3332, %v3342
      %v3353 = vmul.f32 %v3333, %v3342
      %v3354 = vmul.f32 %v3334, %v3342
      %v3355 = vmul.f32 %v3335, %v3342
      %v3356 = vmul.f32 %v3336, %v3342
      %v3357 = vmul.f32 %v3337, %v3342
      %v3358 = vmul.f32 %v3338, %v3342
      %v3359 = vadd.f32 %v3307, %v3343
      %v3360 = vadd.f32 %v3308, %v3344
      %v3361 = vadd.f32 %v3309, %v3345
      %v3362 = vadd.f32 %v3310, %v3346
      %v3363 = vadd.f32 %v3311, %v3347
      %v3364 = vadd.f32 %v3312, %v3348
      %v3365 = vadd.f32 %v3313, %v3349
      %v3366 = vadd.f32 %v3314, %v3350
      %v3367 = vadd.f32 %v3315, %v3351
      %v3368 = vadd.f32 %v3316, %v3352
      %v3369 = vadd.f32 %v3317, %v3353
      %v3370 = vadd.f32 %v3318, %v3354
      %v3371 = vadd.f32 %v3319, %v3355
      %v3372 = vadd.f32 %v3320, %v3356
      %v3373 = vadd.f32 %v3321, %v3357
      %v3374 = vadd.f32 %v3322, %v3358
      %v3375 = vlaneseq
      %v3376 = vshrl.u32 %v3375, 7
      %v3377 = vsub.s32 3, %v3376
      %v3378 = vrot.slane %v2864, %v3377
      %v3379 = vmul.f32 %v2482, %v3378
      %v3380 = vmul.f32 %v2483, %v3378
      %v3381 = vmul.f32 %v2484, %v3378
      %v3382 = vmul.f32 %v2485, %v3378
      %v3383 = vmul.f32 %v2486, %v3378
      %v3384 = vmul.f32 %v2487, %v3378
      %v3385 = vmul.f32 %v2488, %v3378
      %v3386 = vmul.f32 %v2489, %v3378
      %v3387 = vmul.f32 %v2490, %v3378
      %v3388 = vmul.f32 %v2491, %v3378
      %v3389 = vmul.f32 %v2492, %v3378
      %v3390 = vmul.f32 %v2493, %v3378
      %v3391 = vmul.f32 %v2494, %v3378
      %v3392 = vmul.f32 %v2495, %v3378
      %v3393 = vmul.f32 %v2496, %v3378
      %v3394 = vmul.f32 %v2497, %v3378
      %v3395 = vadd.f32 %v3359, %v3379
      %v3396 = vadd.f32 %v3360, %v3380
      %v3397 = vadd.f32 %v3361, %v3381
      %v3398 = vadd.f32 %v3362, %v3382
      %v3399 = vadd.f32 %v3363, %v3383
      %v3400 = vadd.f32 %v3364, %v3384
      %v3401 = vadd.f32 %v3365, %v3385
      %v3402 = vadd.f32 %v3366, %v3386
      %v3403 = vadd.f32 %v3367, %v3387
      %v3404 = vadd.f32 %v3368, %v3388
      %v3405 = vadd.f32 %v3369, %v3389
      %v3406 = vadd.f32 %v3370, %v3390
      %v3407 = vadd.f32 %v3371, %v3391
      %v3408 = vadd.f32 %v3372, %v3392
      %v3409 = vadd.f32 %v3373, %v3393
      %v3410 = vadd.f32 %v3374, %v3394
      %v3411 = vlaneseq
      %v3412 = vshrl.u32 %v3411, 7
      %v3413 = vsub.s32 4, %v3412
      %v3414 = vrot.slane %v2864, %v3413
      %v3415 = vmul.f32 %v2534, %v3414
      %v3416 = vmul.f32 %v2535, %v3414
      %v3417 = vmul.f32 %v2536, %v3414
      %v3418 = vmul.f32 %v2537, %v3414
      %v3419 = vmul.f32 %v2538, %v3414
      %v3420 = vmul.f32 %v2539, %v3414
      %v3421 = vmul.f32 %v2540, %v3414
      %v3422 = vmul.f32 %v2541, %v3414
      %v3423 = vmul.f32 %v2542, %v3414
      %v3424 = vmul.f32 %v2543, %v3414
      %v3425 = vmul.f32 %v2544, %v3414
      %v3426 = vmul.f32 %v2545, %v3414
      %v3427 = vmul.f32 %v2546, %v3414
      %v3428 = vmul.f32 %v2547, %v3414
      %v3429 = vmul.f32 %v2548, %v3414
      %v3430 = vmul.f32 %v2549, %v3414
      %v3431 = vadd.f32 %v3395, %v3415
      %v3432 = vadd.f32 %v3396, %v3416
      %v3433 = vadd.f32 %v3397, %v3417
      %v3434 = vadd.f32 %v3398, %v3418
      %v3435 = vadd.f32 %v3399, %v3419
      %v3436 = vadd.f32 %v3400, %v3420
      %v3437 = vadd.f32 %v3401, %v3421
      %v3438 = vadd.f32 %v3402, %v3422
      %v3439 = vadd.f32 %v3403, %v3423
      %v3440 = vadd.f32 %v3404, %v3424
      %v3441 = vadd.f32 %v3405, %v3425
      %v3442 = vadd.f32 %v3406, %v3426
      %v3443 = vadd.f32 %v3407, %v3427
      %v3444 = vadd.f32 %v3408, %v3428
      %v3445 = vadd.f32 %v3409, %v3429
      %v3446 = vadd.f32 %v3410, %v3430
      %v3447 = vlaneseq
      %v3448 = vshrl.u32 %v3447, 7
      %v3449 = vsub.s32 5, %v3448
      %v3450 = vrot.slane %v2864, %v3449
      %v3451 = vmul.f32 %v2586, %v3450
      %v3452 = vmul.f32 %v2587, %v3450
      %v3453 = vmul.f32 %v2588, %v3450
      %v3454 = vmul.f32 %v2589, %v3450
      %v3455 = vmul.f32 %v2590, %v3450
      %v3456 = vmul.f32 %v2591, %v3450
      %v3457 = vmul.f32 %v2592, %v3450
      %v3458 = vmul.f32 %v2593, %v3450
      %v3459 = vmul.f32 %v2594, %v3450
      %v3460 = vmul.f32 %v2595, %v3450
      %v3461 = vmul.f32 %v2596, %v3450
      %v3462 = vmul.f32 %v2597, %v3450
      %v3463 = vmul.f32 %v2598, %v3450
      %v3464 = vmul.f32 %v2599, %v3450
      %v3465 = vmul.f32 %v2600, %v3450
      %v3466 = vmul.f32 %v2601, %v3450
      %v3467 = vadd.f32 %v3431, %v3451
      %v3468 = vadd.f32 %v3432, %v3452
      %v3469 = vadd.f32 %v3433, %v3453
      %v3470 = vadd.f32 %v3434, %v3454
      %v3471 = vadd.f32 %v3435, %v3455
      %v3472 = vadd.f32 %v3436, %v3456
      %v3473 = vadd.f32 %v3437, %v3457
      %v3474 = vadd.f32 %v3438, %v3458
      %v3475 = vadd.f32 %v3439, %v3459
      %v3476 = vadd.f32 %v3440, %v3460
      %v3477 = vadd.f32 %v3441, %v3461
      %v3478 = vadd.f32 %v3442, %v3462
      %v3479 = vadd.f32 %v3443, %v3463
      %v3480 = vadd.f32 %v3444, %v3464
      %v3481 = vadd.f32 %v3445, %v3465
      %v3482 = vadd.f32 %v3446, %v3466
      %v3483 = vld [vmem:[%s2217 + $0x4] sm:$0xff]
      %v3484 = vld [vmem:[%s2217 + $0xc] sm:$0xff]
      %v3485 = vld [vmem:[%s2217 + $0x1c] sm:$0xff]
      %v3486 = vld [vmem:[%s2217 + $0x24] sm:$0xff]
      %v3487 = vld [vmem:[%s2217 + $0x34] sm:$0xff]
      %v3488 = vld [vmem:[%s2217 + $0x3c] sm:$0xff]
      %v3489 = vld [vmem:[%s2217 + $0x4c] sm:$0xff]
      %v3490 = vld [vmem:[%s2217 + $0x54] sm:$0xff]
      %v3491 = vld [vmem:[%s2217 + $0x64] sm:$0xff]
      %v3492 = vld [vmem:[%s2217 + $0x6c] sm:$0xff]
      %v3493 = vld [vmem:[%s2217 + $0x7c] sm:$0xff]
      %v3494 = vld [vmem:[%s2217 + $0x84] sm:$0xff]
      %v3495 = vld [vmem:[%s2217 + $0x94] sm:$0xff]
      %v3496 = vld [vmem:[%s2217 + $0x9c] sm:$0xff]
      %v3497 = vld [vmem:[%s2217 + $0xac] sm:$0xff]
      %v3498 = vld [vmem:[%s2217 + $0xb4] sm:$0xff]
      %v3499 = vlaneseq
      %v3500 = vshrl.u32 %v3499, 7
      %v3501 = vsub.s32 6, %v3500
      %v3502 = vrot.slane %v2864, %v3501
      %v3503 = vmul.f32 %v3483, %v3502
      %v3504 = vmul.f32 %v3484, %v3502
      %v3505 = vmul.f32 %v3485, %v3502
      %v3506 = vmul.f32 %v3486, %v3502
      %v3507 = vmul.f32 %v3487, %v3502
      %v3508 = vmul.f32 %v3488, %v3502
      %v3509 = vmul.f32 %v3489, %v3502
      %v3510 = vmul.f32 %v3490, %v3502
      %v3511 = vmul.f32 %v3491, %v3502
      %v3512 = vmul.f32 %v3492, %v3502
      %v3513 = vmul.f32 %v3493, %v3502
      %v3514 = vmul.f32 %v3494, %v3502
      %v3515 = vmul.f32 %v3495, %v3502
      %v3516 = vmul.f32 %v3496, %v3502
      %v3517 = vmul.f32 %v3497, %v3502
      %v3518 = vmul.f32 %v3498, %v3502
      %v3519 = vadd.f32 %v3467, %v3503
      %v3520 = vadd.f32 %v3468, %v3504
      %v3521 = vadd.f32 %v3469, %v3505
      %v3522 = vadd.f32 %v3470, %v3506
      %v3523 = vadd.f32 %v3471, %v3507
      %v3524 = vadd.f32 %v3472, %v3508
      %v3525 = vadd.f32 %v3473, %v3509
      %v3526 = vadd.f32 %v3474, %v3510
      %v3527 = vadd.f32 %v3475, %v3511
      %v3528 = vadd.f32 %v3476, %v3512
      %v3529 = vadd.f32 %v3477, %v3513
      %v3530 = vadd.f32 %v3478, %v3514
      %v3531 = vadd.f32 %v3479, %v3515
      %v3532 = vadd.f32 %v3480, %v3516
      %v3533 = vadd.f32 %v3481, %v3517
      %v3534 = vadd.f32 %v3482, %v3518
      %v3535 = vld [vmem:[%s2638] sm:$0xff]
      %v3536 = vld [vmem:[%s2638 + $0x8] sm:$0xff]
      %v3537 = vld [vmem:[%s2638 + $0x18] sm:$0xff]
      %v3538 = vld [vmem:[%s2638 + $0x20] sm:$0xff]
      %v3539 = vld [vmem:[%s2638 + $0x30] sm:$0xff]
      %v3540 = vld [vmem:[%s2638 + $0x38] sm:$0xff]
      %v3541 = vld [vmem:[%s2638 + $0x48] sm:$0xff]
      %v3542 = vld [vmem:[%s2638 + $0x50] sm:$0xff]
      %v3543 = vld [vmem:[%s2638 + $0x60] sm:$0xff]
      %v3544 = vld [vmem:[%s2638 + $0x68] sm:$0xff]
      %v3545 = vld [vmem:[%s2638 + $0x78] sm:$0xff]
      %v3546 = vld [vmem:[%s2638 + $0x80] sm:$0xff]
      %v3547 = vld [vmem:[%s2638 + $0x90] sm:$0xff]
      %v3548 = vld [vmem:[%s2638 + $0x98] sm:$0xff]
      %v3549 = vld [vmem:[%s2638 + $0xa8] sm:$0xff]
      %v3550 = vld [vmem:[%s2638 + $0xb0] sm:$0xff]
      %v3551 = vlaneseq
      %v3552 = vshrl.u32 %v3551, 7
      %v3553 = vsub.s32 7, %v3552
      %v3554 = vrot.slane %v2864, %v3553
      %v3555 = vmul.f32 %v3535, %v3554
      %v3556 = vmul.f32 %v3536, %v3554
      %v3557 = vmul.f32 %v3537, %v3554
      %v3558 = vmul.f32 %v3538, %v3554
      %v3559 = vmul.f32 %v3539, %v3554
      %v3560 = vmul.f32 %v3540, %v3554
      %v3561 = vmul.f32 %v3541, %v3554
      %v3562 = vmul.f32 %v3542, %v3554
      %v3563 = vmul.f32 %v3543, %v3554
      %v3564 = vmul.f32 %v3544, %v3554
      %v3565 = vmul.f32 %v3545, %v3554
      %v3566 = vmul.f32 %v3546, %v3554
      %v3567 = vmul.f32 %v3547, %v3554
      %v3568 = vmul.f32 %v3548, %v3554
      %v3569 = vmul.f32 %v3549, %v3554
      %v3570 = vmul.f32 %v3550, %v3554
      %v3571 = vadd.f32 %v3519, %v3555
      %v3572 = vadd.f32 %v3520, %v3556
      %v3573 = vadd.f32 %v3521, %v3557
      %v3574 = vadd.f32 %v3522, %v3558
      %v3575 = vadd.f32 %v3523, %v3559
      %v3576 = vadd.f32 %v3524, %v3560
      %v3577 = vadd.f32 %v3525, %v3561
      %v3578 = vadd.f32 %v3526, %v3562
      %v3579 = vadd.f32 %v3527, %v3563
      %v3580 = vadd.f32 %v3528, %v3564
      %v3581 = vadd.f32 %v3529, %v3565
      %v3582 = vadd.f32 %v3530, %v3566
      %v3583 = vadd.f32 %v3531, %v3567
      %v3584 = vadd.f32 %v3532, %v3568
      %v3585 = vadd.f32 %v3533, %v3569
      %v3586 = vadd.f32 %v3534, %v3570
      %v3587 = vlaneseq
      %v3588 = vshrl.u32 %v3587, 7
      %v3589 = vsub.s32 0, %v3588
      %v3590 = vrot.slane %v2865, %v3589
      %v3591 = vmul.f32 %v2639, %v3590
      %v3592 = vmul.f32 %v2640, %v3590
      %v3593 = vmul.f32 %v2641, %v3590
      %v3594 = vmul.f32 %v2642, %v3590
      %v3595 = vmul.f32 %v2643, %v3590
      %v3596 = vmul.f32 %v2644, %v3590
      %v3597 = vmul.f32 %v2645, %v3590
      %v3598 = vmul.f32 %v2646, %v3590
      %v3599 = vmul.f32 %v2647, %v3590
      %v3600 = vmul.f32 %v2648, %v3590
      %v3601 = vmul.f32 %v2649, %v3590
      %v3602 = vmul.f32 %v2650, %v3590
      %v3603 = vmul.f32 %v2651, %v3590
      %v3604 = vmul.f32 %v2652, %v3590
      %v3605 = vmul.f32 %v2653, %v3590
      %v3606 = vmul.f32 %v2654, %v3590
      %v3607 = vadd.f32 %v3571, %v3591
      %v3608 = vadd.f32 %v3572, %v3592
      %v3609 = vadd.f32 %v3573, %v3593
      %v3610 = vadd.f32 %v3574, %v3594
      %v3611 = vadd.f32 %v3575, %v3595
      %v3612 = vadd.f32 %v3576, %v3596
      %v3613 = vadd.f32 %v3577, %v3597
      %v3614 = vadd.f32 %v3578, %v3598
      %v3615 = vadd.f32 %v3579, %v3599
      %v3616 = vadd.f32 %v3580, %v3600
      %v3617 = vadd.f32 %v3581, %v3601
      %v3618 = vadd.f32 %v3582, %v3602
      %v3619 = vadd.f32 %v3583, %v3603
      %v3620 = vadd.f32 %v3584, %v3604
      %v3621 = vadd.f32 %v3585, %v3605
      %v3622 = vadd.f32 %v3586, %v3606
      %v3623 = vlaneseq
      %v3624 = vshrl.u32 %v3623, 7
      %v3625 = vsub.s32 1, %v3624
      %v3626 = vrot.slane %v2865, %v3625
      %v3627 = vmul.f32 %v2691, %v3626
      %v3628 = vmul.f32 %v2692, %v3626
      %v3629 = vmul.f32 %v2693, %v3626
      %v3630 = vmul.f32 %v2694, %v3626
      %v3631 = vmul.f32 %v2695, %v3626
      %v3632 = vmul.f32 %v2696, %v3626
      %v3633 = vmul.f32 %v2697, %v3626
      %v3634 = vmul.f32 %v2698, %v3626
      %v3635 = vmul.f32 %v2699, %v3626
      %v3636 = vmul.f32 %v2700, %v3626
      %v3637 = vmul.f32 %v2701, %v3626
      %v3638 = vmul.f32 %v2702, %v3626
      %v3639 = vmul.f32 %v2703, %v3626
      %v3640 = vmul.f32 %v2704, %v3626
      %v3641 = vmul.f32 %v2705, %v3626
      %v3642 = vmul.f32 %v2706, %v3626
      %v3643 = vadd.f32 %v3607, %v3627
      %v3644 = vadd.f32 %v3608, %v3628
      %v3645 = vadd.f32 %v3609, %v3629
      %v3646 = vadd.f32 %v3610, %v3630
      %v3647 = vadd.f32 %v3611, %v3631
      %v3648 = vadd.f32 %v3612, %v3632
      %v3649 = vadd.f32 %v3613, %v3633
      %v3650 = vadd.f32 %v3614, %v3634
      %v3651 = vadd.f32 %v3615, %v3635
      %v3652 = vadd.f32 %v3616, %v3636
      %v3653 = vadd.f32 %v3617, %v3637
      %v3654 = vadd.f32 %v3618, %v3638
      %v3655 = vadd.f32 %v3619, %v3639
      %v3656 = vadd.f32 %v3620, %v3640
      %v3657 = vadd.f32 %v3621, %v3641
      %v3658 = vadd.f32 %v3622, %v3642
      %v3659 = vlaneseq
      %v3660 = vshrl.u32 %v3659, 7
      %v3661 = vsub.s32 2, %v3660
      %v3662 = vrot.slane %v2865, %v3661
      %v3663 = vmul.f32 %v2743, %v3662
      %v3664 = vmul.f32 %v2744, %v3662
      %v3665 = vmul.f32 %v2745, %v3662
      %v3666 = vmul.f32 %v2746, %v3662
      %v3667 = vmul.f32 %v2747, %v3662
      %v3668 = vmul.f32 %v2748, %v3662
      %v3669 = vmul.f32 %v2749, %v3662
      %v3670 = vmul.f32 %v2750, %v3662
      %v3671 = vmul.f32 %v2751, %v3662
      %v3672 = vmul.f32 %v2752, %v3662
      %v3673 = vmul.f32 %v2753, %v3662
      %v3674 = vmul.f32 %v2754, %v3662
      %v3675 = vmul.f32 %v2755, %v3662
      %v3676 = vmul.f32 %v2756, %v3662
      %v3677 = vmul.f32 %v2757, %v3662
      %v3678 = vmul.f32 %v2758, %v3662
      %v3679 = vadd.f32 %v3643, %v3663
      %v3680 = vadd.f32 %v3644, %v3664
      %v3681 = vadd.f32 %v3645, %v3665
      %v3682 = vadd.f32 %v3646, %v3666
      %v3683 = vadd.f32 %v3647, %v3667
      %v3684 = vadd.f32 %v3648, %v3668
      %v3685 = vadd.f32 %v3649, %v3669
      %v3686 = vadd.f32 %v3650, %v3670
      %v3687 = vadd.f32 %v3651, %v3671
      %v3688 = vadd.f32 %v3652, %v3672
      %v3689 = vadd.f32 %v3653, %v3673
      %v3690 = vadd.f32 %v3654, %v3674
      %v3691 = vadd.f32 %v3655, %v3675
      %v3692 = vadd.f32 %v3656, %v3676
      %v3693 = vadd.f32 %v3657, %v3677
      %v3694 = vadd.f32 %v3658, %v3678
      %v3695 = vld [vmem:[%s2638 + $0x4] sm:$0xff]
      %v3696 = vld [vmem:[%s2638 + $0xc] sm:$0xff]
      %v3697 = vld [vmem:[%s2638 + $0x1c] sm:$0xff]
      %v3698 = vld [vmem:[%s2638 + $0x24] sm:$0xff]
      %v3699 = vld [vmem:[%s2638 + $0x34] sm:$0xff]
      %v3700 = vld [vmem:[%s2638 + $0x3c] sm:$0xff]
      %v3701 = vld [vmem:[%s2638 + $0x4c] sm:$0xff]
      %v3702 = vld [vmem:[%s2638 + $0x54] sm:$0xff]
      %v3703 = vld [vmem:[%s2638 + $0x64] sm:$0xff]
      %v3704 = vld [vmem:[%s2638 + $0x6c] sm:$0xff]
      %v3705 = vld [vmem:[%s2638 + $0x7c] sm:$0xff]
      %v3706 = vld [vmem:[%s2638 + $0x84] sm:$0xff]
      %v3707 = vld [vmem:[%s2638 + $0x94] sm:$0xff]
      %v3708 = vld [vmem:[%s2638 + $0x9c] sm:$0xff]
      %v3709 = vld [vmem:[%s2638 + $0xac] sm:$0xff]
      %v3710 = vld [vmem:[%s2638 + $0xb4] sm:$0xff]
      %v3711 = vlaneseq
      %v3712 = vshrl.u32 %v3711, 7
      %v3713 = vsub.s32 3, %v3712
      %v3714 = vrot.slane %v2865, %v3713
      %v3715 = vmul.f32 %v3695, %v3714
      %v3716 = vmul.f32 %v3696, %v3714
      %v3717 = vmul.f32 %v3697, %v3714
      %v3718 = vmul.f32 %v3698, %v3714
      %v3719 = vmul.f32 %v3699, %v3714
      %v3720 = vmul.f32 %v3700, %v3714
      %v3721 = vmul.f32 %v3701, %v3714
      %v3722 = vmul.f32 %v3702, %v3714
      %v3723 = vmul.f32 %v3703, %v3714
      %v3724 = vmul.f32 %v3704, %v3714
      %v3725 = vmul.f32 %v3705, %v3714
      %v3726 = vmul.f32 %v3706, %v3714
      %v3727 = vmul.f32 %v3707, %v3714
      %v3728 = vmul.f32 %v3708, %v3714
      %v3729 = vmul.f32 %v3709, %v3714
      %v3730 = vmul.f32 %v3710, %v3714
      %v3731 = vadd.f32 %v3679, %v3715
      %v3732 = vadd.f32 %v3680, %v3716
      %v3733 = vadd.f32 %v3681, %v3717
      %v3734 = vadd.f32 %v3682, %v3718
      %v3735 = vadd.f32 %v3683, %v3719
      %v3736 = vadd.f32 %v3684, %v3720
      %v3737 = vadd.f32 %v3685, %v3721
      %v3738 = vadd.f32 %v3686, %v3722
      %v3739 = vadd.f32 %v3687, %v3723
      %v3740 = vadd.f32 %v3688, %v3724
      %v3741 = vadd.f32 %v3689, %v3725
      %v3742 = vadd.f32 %v3690, %v3726
      %v3743 = vadd.f32 %v3691, %v3727
      %v3744 = vadd.f32 %v3692, %v3728
      %v3745 = vadd.f32 %v3693, %v3729
      %v3746 = vadd.f32 %v3694, %v3730
      %s3747 = scalar_lea.vmem [#allocation3], 96
      %v3748 = vld [vmem:[%s3747] sm:$0xff]
      %v3749 = vld [vmem:[%s3747 + $0x8] sm:$0xff]
      %v3750 = vld [vmem:[%s3747 + $0x18] sm:$0xff]
      %v3751 = vld [vmem:[%s3747 + $0x20] sm:$0xff]
      %v3752 = vld [vmem:[%s3747 + $0x30] sm:$0xff]
      %v3753 = vld [vmem:[%s3747 + $0x38] sm:$0xff]
      %v3754 = vld [vmem:[%s3747 + $0x48] sm:$0xff]
      %v3755 = vld [vmem:[%s3747 + $0x50] sm:$0xff]
      %v3756 = vld [vmem:[%s3747 + $0x60] sm:$0xff]
      %v3757 = vld [vmem:[%s3747 + $0x68] sm:$0xff]
      %v3758 = vld [vmem:[%s3747 + $0x78] sm:$0xff]
      %v3759 = vld [vmem:[%s3747 + $0x80] sm:$0xff]
      %v3760 = vld [vmem:[%s3747 + $0x90] sm:$0xff]
      %v3761 = vld [vmem:[%s3747 + $0x98] sm:$0xff]
      %v3762 = vld [vmem:[%s3747 + $0xa8] sm:$0xff]
      %v3763 = vld [vmem:[%s3747 + $0xb0] sm:$0xff]
      %v3764 = vlaneseq
      %v3765 = vshrl.u32 %v3764, 7
      %v3766 = vsub.s32 4, %v3765
      %v3767 = vrot.slane %v2865, %v3766
      %v3768 = vmul.f32 %v3748, %v3767
      %v3769 = vmul.f32 %v3749, %v3767
      %v3770 = vmul.f32 %v3750, %v3767
      %v3771 = vmul.f32 %v3751, %v3767
      %v3772 = vmul.f32 %v3752, %v3767
      %v3773 = vmul.f32 %v3753, %v3767
      %v3774 = vmul.f32 %v3754, %v3767
      %v3775 = vmul.f32 %v3755, %v3767
      %v3776 = vmul.f32 %v3756, %v3767
      %v3777 = vmul.f32 %v3757, %v3767
      %v3778 = vmul.f32 %v3758, %v3767
      %v3779 = vmul.f32 %v3759, %v3767
      %v3780 = vmul.f32 %v3760, %v3767
      %v3781 = vmul.f32 %v3761, %v3767
      %v3782 = vmul.f32 %v3762, %v3767
      %v3783 = vmul.f32 %v3763, %v3767
      %v3784 = vadd.f32 %v3731, %v3768
      %v3785 = vadd.f32 %v3732, %v3769
      %v3786 = vadd.f32 %v3733, %v3770
      %v3787 = vadd.f32 %v3734, %v3771
      %v3788 = vadd.f32 %v3735, %v3772
      %v3789 = vadd.f32 %v3736, %v3773
      %v3790 = vadd.f32 %v3737, %v3774
      %v3791 = vadd.f32 %v3738, %v3775
      %v3792 = vadd.f32 %v3739, %v3776
      %v3793 = vadd.f32 %v3740, %v3777
      %v3794 = vadd.f32 %v3741, %v3778
      %v3795 = vadd.f32 %v3742, %v3779
      %v3796 = vadd.f32 %v3743, %v3780
      %v3797 = vadd.f32 %v3744, %v3781
      %v3798 = vadd.f32 %v3745, %v3782
      %v3799 = vadd.f32 %v3746, %v3783
      %v3800 = vld [vmem:[%s3747 + $0x1] sm:$0xff]
      %v3801 = vld [vmem:[%s3747 + $0x9] sm:$0xff]
      %v3802 = vld [vmem:[%s3747 + $0x19] sm:$0xff]
      %v3803 = vld [vmem:[%s3747 + $0x21] sm:$0xff]
      %v3804 = vld [vmem:[%s3747 + $0x31] sm:$0xff]
      %v3805 = vld [vmem:[%s3747 + $0x39] sm:$0xff]
      %v3806 = vld [vmem:[%s3747 + $0x49] sm:$0xff]
      %v3807 = vld [vmem:[%s3747 + $0x51] sm:$0xff]
      %v3808 = vld [vmem:[%s3747 + $0x61] sm:$0xff]
      %v3809 = vld [vmem:[%s3747 + $0x69] sm:$0xff]
      %v3810 = vld [vmem:[%s3747 + $0x79] sm:$0xff]
      %v3811 = vld [vmem:[%s3747 + $0x81] sm:$0xff]
      %v3812 = vld [vmem:[%s3747 + $0x91] sm:$0xff]
      %v3813 = vld [vmem:[%s3747 + $0x99] sm:$0xff]
      %v3814 = vld [vmem:[%s3747 + $0xa9] sm:$0xff]
      %v3815 = vld [vmem:[%s3747 + $0xb1] sm:$0xff]
      %v3816 = vlaneseq
      %v3817 = vshrl.u32 %v3816, 7
      %v3818 = vsub.s32 5, %v3817
      %v3819 = vrot.slane %v2865, %v3818
      %v3820 = vmul.f32 %v3800, %v3819
      %v3821 = vmul.f32 %v3801, %v3819
      %v3822 = vmul.f32 %v3802, %v3819
      %v3823 = vmul.f32 %v3803, %v3819
      %v3824 = vmul.f32 %v3804, %v3819
      %v3825 = vmul.f32 %v3805, %v3819
      %v3826 = vmul.f32 %v3806, %v3819
      %v3827 = vmul.f32 %v3807, %v3819
      %v3828 = vmul.f32 %v3808, %v3819
      %v3829 = vmul.f32 %v3809, %v3819
      %v3830 = vmul.f32 %v3810, %v3819
      %v3831 = vmul.f32 %v3811, %v3819
      %v3832 = vmul.f32 %v3812, %v3819
      %v3833 = vmul.f32 %v3813, %v3819
      %v3834 = vmul.f32 %v3814, %v3819
      %v3835 = vmul.f32 %v3815, %v3819
      %v3836 = vadd.f32 %v3784, %v3820
      %v3837 = vadd.f32 %v3785, %v3821
      %v3838 = vadd.f32 %v3786, %v3822
      %v3839 = vadd.f32 %v3787, %v3823
      %v3840 = vadd.f32 %v3788, %v3824
      %v3841 = vadd.f32 %v3789, %v3825
      %v3842 = vadd.f32 %v3790, %v3826
      %v3843 = vadd.f32 %v3791, %v3827
      %v3844 = vadd.f32 %v3792, %v3828
      %v3845 = vadd.f32 %v3793, %v3829
      %v3846 = vadd.f32 %v3794, %v3830
      %v3847 = vadd.f32 %v3795, %v3831
      %v3848 = vadd.f32 %v3796, %v3832
      %v3849 = vadd.f32 %v3797, %v3833
      %v3850 = vadd.f32 %v3798, %v3834
      %v3851 = vadd.f32 %v3799, %v3835
      %v3852 = vld [vmem:[%s3747 + $0x2] sm:$0xff]
      %v3853 = vld [vmem:[%s3747 + $0xa] sm:$0xff]
      %v3854 = vld [vmem:[%s3747 + $0x1a] sm:$0xff]
      %v3855 = vld [vmem:[%s3747 + $0x22] sm:$0xff]
      %v3856 = vld [vmem:[%s3747 + $0x32] sm:$0xff]
      %v3857 = vld [vmem:[%s3747 + $0x3a] sm:$0xff]
      %v3858 = vld [vmem:[%s3747 + $0x4a] sm:$0xff]
      %v3859 = vld [vmem:[%s3747 + $0x52] sm:$0xff]
      %v3860 = vld [vmem:[%s3747 + $0x62] sm:$0xff]
      %v3861 = vld [vmem:[%s3747 + $0x6a] sm:$0xff]
      %v3862 = vld [vmem:[%s3747 + $0x7a] sm:$0xff]
      %v3863 = vld [vmem:[%s3747 + $0x82] sm:$0xff]
      %v3864 = vld [vmem:[%s3747 + $0x92] sm:$0xff]
      %v3865 = vld [vmem:[%s3747 + $0x9a] sm:$0xff]
      %v3866 = vld [vmem:[%s3747 + $0xaa] sm:$0xff]
      %v3867 = vld [vmem:[%s3747 + $0xb2] sm:$0xff]
      %v3868 = vlaneseq
      %v3869 = vshrl.u32 %v3868, 7
      %v3870 = vsub.s32 6, %v3869
      %v3871 = vrot.slane %v2865, %v3870
      %v3872 = vmul.f32 %v3852, %v3871
      %v3873 = vmul.f32 %v3853, %v3871
      %v3874 = vmul.f32 %v3854, %v3871
      %v3875 = vmul.f32 %v3855, %v3871
      %v3876 = vmul.f32 %v3856, %v3871
      %v3877 = vmul.f32 %v3857, %v3871
      %v3878 = vmul.f32 %v3858, %v3871
      %v3879 = vmul.f32 %v3859, %v3871
      %v3880 = vmul.f32 %v3860, %v3871
      %v3881 = vmul.f32 %v3861, %v3871
      %v3882 = vmul.f32 %v3862, %v3871
      %v3883 = vmul.f32 %v3863, %v3871
      %v3884 = vmul.f32 %v3864, %v3871
      %v3885 = vmul.f32 %v3865, %v3871
      %v3886 = vmul.f32 %v3866, %v3871
      %v3887 = vmul.f32 %v3867, %v3871
      %v3888 = vadd.f32 %v3836, %v3872
      %v3889 = vadd.f32 %v3837, %v3873
      %v3890 = vadd.f32 %v3838, %v3874
      %v3891 = vadd.f32 %v3839, %v3875
      %v3892 = vadd.f32 %v3840, %v3876
      %v3893 = vadd.f32 %v3841, %v3877
      %v3894 = vadd.f32 %v3842, %v3878
      %v3895 = vadd.f32 %v3843, %v3879
      %v3896 = vadd.f32 %v3844, %v3880
      %v3897 = vadd.f32 %v3845, %v3881
      %v3898 = vadd.f32 %v3846, %v3882
      %v3899 = vadd.f32 %v3847, %v3883
      %v3900 = vadd.f32 %v3848, %v3884
      %v3901 = vadd.f32 %v3849, %v3885
      %v3902 = vadd.f32 %v3850, %v3886
      %v3903 = vadd.f32 %v3851, %v3887
      %v3904 = vld [vmem:[%s3747 + $0x3] sm:$0xff]
      %v3905 = vld [vmem:[%s3747 + $0xb] sm:$0xff]
      %v3906 = vld [vmem:[%s3747 + $0x1b] sm:$0xff]
      %v3907 = vld [vmem:[%s3747 + $0x23] sm:$0xff]
      %v3908 = vld [vmem:[%s3747 + $0x33] sm:$0xff]
      %v3909 = vld [vmem:[%s3747 + $0x3b] sm:$0xff]
      %v3910 = vld [vmem:[%s3747 + $0x4b] sm:$0xff]
      %v3911 = vld [vmem:[%s3747 + $0x53] sm:$0xff]
      %v3912 = vld [vmem:[%s3747 + $0x63] sm:$0xff]
      %v3913 = vld [vmem:[%s3747 + $0x6b] sm:$0xff]
      %v3914 = vld [vmem:[%s3747 + $0x7b] sm:$0xff]
      %v3915 = vld [vmem:[%s3747 + $0x83] sm:$0xff]
      %v3916 = vld [vmem:[%s3747 + $0x93] sm:$0xff]
      %v3917 = vld [vmem:[%s3747 + $0x9b] sm:$0xff]
      %v3918 = vld [vmem:[%s3747 + $0xab] sm:$0xff]
      %v3919 = vld [vmem:[%s3747 + $0xb3] sm:$0xff]
      %v3920 = vlaneseq
      %v3921 = vshrl.u32 %v3920, 7
      %v3922 = vsub.s32 7, %v3921
      %v3923 = vrot.slane %v2865, %v3922
      %v3924 = vmul.f32 %v3904, %v3923
      %v3925 = vmul.f32 %v3905, %v3923
      %v3926 = vmul.f32 %v3906, %v3923
      %v3927 = vmul.f32 %v3907, %v3923
      %v3928 = vmul.f32 %v3908, %v3923
      %v3929 = vmul.f32 %v3909, %v3923
      %v3930 = vmul.f32 %v3910, %v3923
      %v3931 = vmul.f32 %v3911, %v3923
      %v3932 = vmul.f32 %v3912, %v3923
      %v3933 = vmul.f32 %v3913, %v3923
      %v3934 = vmul.f32 %v3914, %v3923
      %v3935 = vmul.f32 %v3915, %v3923
      %v3936 = vmul.f32 %v3916, %v3923
      %v3937 = vmul.f32 %v3917, %v3923
      %v3938 = vmul.f32 %v3918, %v3923
      %v3939 = vmul.f32 %v3919, %v3923
      %v3940 = vadd.f32 %v3888, %v3924
      %v3941 = vadd.f32 %v3889, %v3925
      %v3942 = vadd.f32 %v3890, %v3926
      %v3943 = vadd.f32 %v3891, %v3927
      %v3944 = vadd.f32 %v3892, %v3928
      %v3945 = vadd.f32 %v3893, %v3929
      %v3946 = vadd.f32 %v3894, %v3930
      %v3947 = vadd.f32 %v3895, %v3931
      %v3948 = vadd.f32 %v3896, %v3932
      %v3949 = vadd.f32 %v3897, %v3933
      %v3950 = vadd.f32 %v3898, %v3934
      %v3951 = vadd.f32 %v3899, %v3935
      %v3952 = vadd.f32 %v3900, %v3936
      %v3953 = vadd.f32 %v3901, %v3937
      %v3954 = vadd.f32 %v3902, %v3938
      %v3955 = vadd.f32 %v3903, %v3939
      %v3956 = vld [vmem:[%s3747 + $0x4] sm:$0xff]
      %v3957 = vld [vmem:[%s3747 + $0xc] sm:$0xff]
      %v3958 = vld [vmem:[%s3747 + $0x1c] sm:$0xff]
      %v3959 = vld [vmem:[%s3747 + $0x24] sm:$0xff]
      %v3960 = vld [vmem:[%s3747 + $0x34] sm:$0xff]
      %v3961 = vld [vmem:[%s3747 + $0x3c] sm:$0xff]
      %v3962 = vld [vmem:[%s3747 + $0x4c] sm:$0xff]
      %v3963 = vld [vmem:[%s3747 + $0x54] sm:$0xff]
      %v3964 = vld [vmem:[%s3747 + $0x64] sm:$0xff]
      %v3965 = vld [vmem:[%s3747 + $0x6c] sm:$0xff]
      %v3966 = vld [vmem:[%s3747 + $0x7c] sm:$0xff]
      %v3967 = vld [vmem:[%s3747 + $0x84] sm:$0xff]
      %v3968 = vld [vmem:[%s3747 + $0x94] sm:$0xff]
      %v3969 = vld [vmem:[%s3747 + $0x9c] sm:$0xff]
      %v3970 = vld [vmem:[%s3747 + $0xac] sm:$0xff]
      %v3971 = vld [vmem:[%s3747 + $0xb4] sm:$0xff]
      %v3972 = vlaneseq
      %v3973 = vshrl.u32 %v3972, 7
      %v3974 = vsub.s32 0, %v3973
      %v3975 = vrot.slane %v2866, %v3974
      %v3976 = vmul.f32 %v3956, %v3975
      %v3977 = vmul.f32 %v3957, %v3975
      %v3978 = vmul.f32 %v3958, %v3975
      %v3979 = vmul.f32 %v3959, %v3975
      %v3980 = vmul.f32 %v3960, %v3975
      %v3981 = vmul.f32 %v3961, %v3975
      %v3982 = vmul.f32 %v3962, %v3975
      %v3983 = vmul.f32 %v3963, %v3975
      %v3984 = vmul.f32 %v3964, %v3975
      %v3985 = vmul.f32 %v3965, %v3975
      %v3986 = vmul.f32 %v3966, %v3975
      %v3987 = vmul.f32 %v3967, %v3975
      %v3988 = vmul.f32 %v3968, %v3975
      %v3989 = vmul.f32 %v3969, %v3975
      %v3990 = vmul.f32 %v3970, %v3975
      %v3991 = vmul.f32 %v3971, %v3975
      %v3992 = vadd.f32 %v3940, %v3976
      %v3993 = vadd.f32 %v3941, %v3977
      %v3994 = vadd.f32 %v3942, %v3978
      %v3995 = vadd.f32 %v3943, %v3979
      %v3996 = vadd.f32 %v3944, %v3980
      %v3997 = vadd.f32 %v3945, %v3981
      %v3998 = vadd.f32 %v3946, %v3982
      %v3999 = vadd.f32 %v3947, %v3983
      %v4000 = vadd.f32 %v3948, %v3984
      %v4001 = vadd.f32 %v3949, %v3985
      %v4002 = vadd.f32 %v3950, %v3986
      %v4003 = vadd.f32 %v3951, %v3987
      %v4004 = vadd.f32 %v3952, %v3988
      %v4005 = vadd.f32 %v3953, %v3989
      %v4006 = vadd.f32 %v3954, %v3990
      %v4007 = vadd.f32 %v3955, %v3991
      %v4008 = vlaneseq
      %v4009 = vshrl.u32 %v4008, 7
      %v4010 = vsub.s32 1, %v4009
      %v4011 = vrot.slane %v2866, %v4010
      %v4012 = vadd.f32 %v3992, %v4011
      %v4013 = vadd.f32 %v3993, %v4011
      %v4014 = vadd.f32 %v3994, %v4011
      %v4015 = vadd.f32 %v3995, %v4011
      %v4016 = vadd.f32 %v3996, %v4011
      %v4017 = vadd.f32 %v3997, %v4011
      %v4018 = vadd.f32 %v3998, %v4011
      %v4019 = vadd.f32 %v3999, %v4011
      %v4020 = vadd.f32 %v4000, %v4011
      %v4021 = vadd.f32 %v4001, %v4011
      %v4022 = vadd.f32 %v4002, %v4011
      %v4023 = vadd.f32 %v4003, %v4011
      %v4024 = vadd.f32 %v4004, %v4011
      %v4025 = vadd.f32 %v4005, %v4011
      %v4026 = vadd.f32 %v4006, %v4011
      %v4027 = vadd.f32 %v4007, %v4011
      %v4028 = vmax.f32 %v4012, 0.0
      %v4029 = vmax.f32 %v4013, 0.0
      %v4030 = vmax.f32 %v4014, 0.0
      %v4031 = vmax.f32 %v4015, 0.0
      %v4032 = vmax.f32 %v4016, 0.0
      %v4033 = vmax.f32 %v4017, 0.0
      %v4034 = vmax.f32 %v4018, 0.0
      %v4035 = vmax.f32 %v4019, 0.0
      %v4036 = vmax.f32 %v4020, 0.0
      %v4037 = vmax.f32 %v4021, 0.0
      %v4038 = vmax.f32 %v4022, 0.0
      %v4039 = vmax.f32 %v4023, 0.0
      %v4040 = vmax.f32 %v4024, 0.0
      %v4041 = vmax.f32 %v4025, 0.0
      %v4042 = vmax.f32 %v4026, 0.0
      %v4043 = vmax.f32 %v4027, 0.0
      %v4044 = vmin.f32 %v4028, 6.0
      %v4045 = vmin.f32 %v4029, 6.0
      %v4046 = vmin.f32 %v4030, 6.0
      %v4047 = vmin.f32 %v4031, 6.0
      %v4048 = vmin.f32 %v4032, 6.0
      %v4049 = vmin.f32 %v4033, 6.0
      %v4050 = vmin.f32 %v4034, 6.0
      %v4051 = vmin.f32 %v4035, 6.0
      %v4052 = vmin.f32 %v4036, 6.0
      %v4053 = vmin.f32 %v4037, 6.0
      %v4054 = vmin.f32 %v4038, 6.0
      %v4055 = vmin.f32 %v4039, 6.0
      %v4056 = vmin.f32 %v4040, 6.0
      %v4057 = vmin.f32 %v4041, 6.0
      %v4058 = vmin.f32 %v4042, 6.0
      %v4059 = vmin.f32 %v4043, 6.0
      %v4060 = vadd.f32 %v2847, %v4044
      %v4061 = vadd.f32 %v2848, %v4045
      %v4062 = vadd.f32 %v2849, %v4046
      %v4063 = vadd.f32 %v2850, %v4047
      %v4064 = vadd.f32 %v2851, %v4048
      %v4065 = vadd.f32 %v2852, %v4049
      %v4066 = vadd.f32 %v2853, %v4050
      %v4067 = vadd.f32 %v2854, %v4051
      %v4068 = vadd.f32 %v2855, %v4052
      %v4069 = vadd.f32 %v2856, %v4053
      %v4070 = vadd.f32 %v2857, %v4054
      %v4071 = vadd.f32 %v2858, %v4055
      %v4072 = vadd.f32 %v2859, %v4056
      %v4073 = vadd.f32 %v2860, %v4057
      %v4074 = vadd.f32 %v2861, %v4058
      %v4075 = vadd.f32 %v2862, %v4059
      %4076 = vxpose.xlu0.b32.start [1/16] %v4060, 128
      %4077 = vxpose.xlu0.b32.cont [2/16] %v4061, 128
      %4078 = vxpose.xlu0.b32.cont [3/16] %v4062, 128
      %4079 = vxpose.xlu0.b32.cont [4/16] %v4063, 128
      %4080 = vxpose.xlu0.b32.cont [5/16] %v4064, 128
      %4081 = vxpose.xlu0.b32.cont [6/16] %v4065, 128
      %4082 = vxpose.xlu0.b32.cont [7/16] %v4066, 128
      %4083 = vxpose.xlu0.b32.cont [8/16] %v4067, 128
      %4084 = vxpose.xlu0.b32.cont [9/16] %v4068, 128
      %4085 = vxpose.xlu0.b32.cont [10/16] %v4069, 128
      %4086 = vxpose.xlu0.b32.cont [11/16] %v4070, 128
      %4087 = vxpose.xlu0.b32.cont [12/16] %v4071, 128
      %4088 = vxpose.xlu0.b32.cont [13/16] %v4072, 128
      %4089 = vxpose.xlu0.b32.cont [14/16] %v4073, 128
      %4090 = vxpose.xlu0.b32.cont [15/16] %v4074, 128
      %4091 = vxpose.xlu0.b32.end [16/16] %v4075, 128
      %v4092 = vpop.trf.xlu0
      %v4093 = vpop.trf.xlu0
      %v4094 = vpop.trf.xlu0
      %v4095 = vpop.trf.xlu0
      %v4096 = vpop.trf.xlu0
      %v4097 = vpop.trf.xlu0
      %v4098 = vpop.trf.xlu0
      %v4099 = vpop.trf.xlu0
      %v4100 = vpop.trf.xlu0
      %v4101 = vpop.trf.xlu0
      %v4102 = vpop.trf.xlu0
      %v4103 = vpop.trf.xlu0
      %v4104 = vpop.trf.xlu0
      %v4105 = vpop.trf.xlu0
      %v4106 = vpop.trf.xlu0
      %v4107 = vpop.trf.xlu0
      %v4108 = vld [vmem:[%s12] sm:$0xff]
      %v4109 = vld [vmem:[%s12 + $0x8] sm:$0xff]
      %v4110 = vld [vmem:[%s12 + $0x10] sm:$0xff]
      %v4111 = vld [vmem:[%s12 + $0x18] sm:$0xff]
      %v4112 = vld [vmem:[%s12 + $0x20] sm:$0xff]
      %v4113 = vld [vmem:[%s12 + $0x28] sm:$0xff]
      %v4114 = vld [vmem:[%s12 + $0x30] sm:$0xff]
      %v4115 = vld [vmem:[%s12 + $0x38] sm:$0xff]
      %v4116 = vld [vmem:[%s12 + $0x40] sm:$0xff]
      %v4117 = vld [vmem:[%s12 + $0x48] sm:$0xff]
      %v4118 = vld [vmem:[%s12 + $0x50] sm:$0xff]
      %v4119 = vld [vmem:[%s12 + $0x58] sm:$0xff]
      %v4120 = vld [vmem:[%s12 + $0x60] sm:$0xff]
      %v4121 = vld [vmem:[%s12 + $0x68] sm:$0xff]
      %v4122 = vld [vmem:[%s12 + $0x70] sm:$0xff]
      %v4123 = vld [vmem:[%s12 + $0x78] sm:$0xff]
      %v4124 = vld [vmem:[%s12 + $0x80] sm:$0xff]
      %v4125 = vld [vmem:[%s12 + $0x88] sm:$0xff]
      %v4126 = vld [vmem:[%s12 + $0x90] sm:$0xff]
      %v4127 = vld [vmem:[%s12 + $0x98] sm:$0xff]
      %v4128 = vld [vmem:[%s12 + $0xa0] sm:$0xff]
      %v4129 = vld [vmem:[%s12 + $0xa8] sm:$0xff]
      %v4130 = vld [vmem:[%s12 + $0xb0] sm:$0xff]
      %v4131 = vld [vmem:[%s12 + $0xb8] sm:$0xff]
      %v4132 = vld [vmem:[%s12 + $0xc0] sm:$0xff]
      %v4133 = vld [vmem:[%s12 + $0xc8] sm:$0xff]
      %v4134 = vld [vmem:[%s12 + $0xd0] sm:$0xff]
      %v4135 = vld [vmem:[%s12 + $0xd8] sm:$0xff]
      %v4136 = vld [vmem:[%s12 + $0xe0] sm:$0xff]
      %v4137 = vld [vmem:[%s12 + $0xe8] sm:$0xff]
      %v4138 = vld [vmem:[%s12 + $0xf0] sm:$0xff]
      %v4139 = vld [vmem:[%s12 + $0xf8] sm:$0xff]
      %4140 = vmatprep.subr.mxu0 %v4139
      %4141 = vmatpush1.msra.mxu0 %v4138
      %4142 = vmatprep.subr.mxu0 %v4137
      %4143 = vmatpush1.msra.mxu0 %v4136
      %4144 = vmatprep.subr.mxu0 %v4135
      %4145 = vmatpush1.msra.mxu0 %v4134
      %4146 = vmatprep.subr.mxu0 %v4133
      %4147 = vmatpush1.msra.mxu0 %v4132
      %4148 = vmatprep.subr.mxu0 %v4131
      %4149 = vmatpush1.msra.mxu0 %v4130
      %4150 = vmatprep.subr.mxu0 %v4129
      %4151 = vmatpush1.msra.mxu0 %v4128
      %4152 = vmatprep.subr.mxu0 %v4127
      %4153 = vmatpush1.msra.mxu0 %v4126
      %4154 = vmatprep.subr.mxu0 %v4125
      %4155 = vmatpush1.msra.mxu0 %v4124
      %4156 = vmatprep.subr.mxu0 %v4123
      %4157 = vmatpush1.msra.mxu0 %v4122
      %4158 = vmatprep.subr.mxu0 %v4121
      %4159 = vmatpush1.msra.mxu0 %v4120
      %4160 = vmatprep.subr.mxu0 %v4119
      %4161 = vmatpush1.msra.mxu0 %v4118
      %4162 = vmatprep.subr.mxu0 %v4117
      %4163 = vmatpush1.msra.mxu0 %v4116
      %4164 = vmatprep.subr.mxu0 %v4115
      %4165 = vmatpush1.msra.mxu0 %v4114
      %4166 = vmatprep.subr.mxu0 %v4113
      %4167 = vmatpush1.msra.mxu0 %v4112
      %4168 = vmatprep.subr.mxu0 %v4111
      %4169 = vmatpush1.msra.mxu0 %v4110
      %4170 = vmatprep.subr.mxu0 %v4109
      %4171 = vmatpush1.msra.mxu0 %v4108
      %4172 = vmatprep.subr.mxu0 0.0
      %4173 = vmatpush2.msra.mxu0 0.0
      %4174 = vmatprep.subr.mxu0 0.0
      %4175 = vmatpush2.msra.mxu0 0.0
      %4176 = vmatprep.subr.mxu0 0.0
      %4177 = vmatpush2.msra.mxu0 0.0
      %4178 = vmatprep.subr.mxu0 0.0
      %4179 = vmatpush2.msra.mxu0 0.0
      %4180 = vmatprep.subr.mxu0 0.0
      %4181 = vmatpush2.msra.mxu0 0.0
      %4182 = vmatprep.subr.mxu0 0.0
      %4183 = vmatpush2.msra.mxu0 0.0
      %4184 = vmatprep.subr.mxu0 0.0
      %4185 = vmatpush2.msra.mxu0 0.0
      %4186 = vmatprep.subr.mxu0 0.0
      %4187 = vmatpush2.msra.mxu0 0.0
      %4188 = vmatprep.subr.mxu0 0.0
      %4189 = vmatpush2.msra.mxu0 0.0
      %4190 = vmatprep.subr.mxu0 0.0
      %4191 = vmatpush2.msra.mxu0 0.0
      %4192 = vmatprep.subr.mxu0 0.0
      %4193 = vmatpush2.msra.mxu0 0.0
      %4194 = vmatprep.subr.mxu0 0.0
      %4195 = vmatpush2.msra.mxu0 0.0
      %4196 = vmatprep.subr.mxu0 0.0
      %4197 = vmatpush2.msra.mxu0 0.0
      %4198 = vmatprep.subr.mxu0 0.0
      %4199 = vmatpush2.msra.mxu0 0.0
      %4200 = vmatprep.subr.mxu0 0.0
      %4201 = vmatpush2.msra.mxu0 0.0
      %4202 = vmatprep.subr.mxu0 0.0
      %4203 = vmatpush2.msra.mxu0 0.0
      %4204 = vmatprep.mubr.f32.mxu0 0.0
      %4205 = vmatmul.mubr.f32.gmra.mxu0 %v4092
      %v4206 = vpop.f32.mrf.mxu0
      %v4207 = vadd.f32 0.0, %v4206
      %v4208 = vpop.f32.mrf.mxu0
      %v4209 = vadd.f32 0.0, %v4208
      %4210 = vmatprep.mubr.f32.mxu0 0.0
      %4211 = vmatmul.mubr.f32.gmra.mxu0 %v4093
      %v4212 = vpop.f32.mrf.mxu0
      %v4213 = vadd.f32 0.0, %v4212
      %v4214 = vpop.f32.mrf.mxu0
      %v4215 = vadd.f32 0.0, %v4214
      %4216 = vmatprep.mubr.f32.mxu0 0.0
      %4217 = vmatmul.mubr.f32.gmra.mxu0 %v4094
      %v4218 = vpop.f32.mrf.mxu0
      %v4219 = vadd.f32 0.0, %v4218
      %v4220 = vpop.f32.mrf.mxu0
      %v4221 = vadd.f32 0.0, %v4220
      %4222 = vmatprep.mubr.f32.mxu0 0.0
      %4223 = vmatmul.mubr.f32.gmra.mxu0 %v4095
      %v4224 = vpop.f32.mrf.mxu0
      %v4225 = vadd.f32 0.0, %v4224
      %v4226 = vpop.f32.mrf.mxu0
      %v4227 = vadd.f32 0.0, %v4226
      %4228 = vmatprep.mubr.f32.mxu0 0.0
      %4229 = vmatmul.mubr.f32.gmra.mxu0 %v4096
      %v4230 = vpop.f32.mrf.mxu0
      %v4231 = vadd.f32 0.0, %v4230
      %v4232 = vpop.f32.mrf.mxu0
      %v4233 = vadd.f32 0.0, %v4232
      %4234 = vmatprep.mubr.f32.mxu0 0.0
      %4235 = vmatmul.mubr.f32.gmra.mxu0 %v4097
      %v4236 = vpop.f32.mrf.mxu0
      %v4237 = vadd.f32 0.0, %v4236
      %v4238 = vpop.f32.mrf.mxu0
      %v4239 = vadd.f32 0.0, %v4238
      %4240 = vmatprep.mubr.f32.mxu0 0.0
      %4241 = vmatmul.mubr.f32.gmra.mxu0 %v4098
      %v4242 = vpop.f32.mrf.mxu0
      %v4243 = vadd.f32 0.0, %v4242
      %v4244 = vpop.f32.mrf.mxu0
      %v4245 = vadd.f32 0.0, %v4244
      %4246 = vmatprep.mubr.f32.mxu0 0.0
      %4247 = vmatmul.mubr.f32.gmra.mxu0 %v4099
      %v4248 = vpop.f32.mrf.mxu0
      %v4249 = vadd.f32 0.0, %v4248
      %v4250 = vpop.f32.mrf.mxu0
      %v4251 = vadd.f32 0.0, %v4250
      %4252 = vmatprep.mubr.f32.mxu0 0.0
      %4253 = vmatmul.mubr.f32.gmra.mxu0 %v4100
      %v4254 = vpop.f32.mrf.mxu0
      %v4255 = vadd.f32 0.0, %v4254
      %v4256 = vpop.f32.mrf.mxu0
      %v4257 = vadd.f32 0.0, %v4256
      %4258 = vmatprep.mubr.f32.mxu0 0.0
      %4259 = vmatmul.mubr.f32.gmra.mxu0 %v4101
      %v4260 = vpop.f32.mrf.mxu0
      %v4261 = vadd.f32 0.0, %v4260
      %v4262 = vpop.f32.mrf.mxu0
      %v4263 = vadd.f32 0.0, %v4262
      %4264 = vmatprep.mubr.f32.mxu0 0.0
      %4265 = vmatmul.mubr.f32.gmra.mxu0 %v4102
      %v4266 = vpop.f32.mrf.mxu0
      %v4267 = vadd.f32 0.0, %v4266
      %v4268 = vpop.f32.mrf.mxu0
      %v4269 = vadd.f32 0.0, %v4268
      %4270 = vmatprep.mubr.f32.mxu0 0.0
      %4271 = vmatmul.mubr.f32.gmra.mxu0 %v4103
      %v4272 = vpop.f32.mrf.mxu0
      %v4273 = vadd.f32 0.0, %v4272
      %v4274 = vpop.f32.mrf.mxu0
      %v4275 = vadd.f32 0.0, %v4274
      %4276 = vmatprep.mubr.f32.mxu0 0.0
      %4277 = vmatmul.mubr.f32.gmra.mxu0 %v4104
      %v4278 = vpop.f32.mrf.mxu0
      %v4279 = vadd.f32 0.0, %v4278
      %v4280 = vpop.f32.mrf.mxu0
      %v4281 = vadd.f32 0.0, %v4280
      %4282 = vmatprep.mubr.f32.mxu0 0.0
      %4283 = vmatmul.mubr.f32.gmra.mxu0 %v4105
      %v4284 = vpop.f32.mrf.mxu0
      %v4285 = vadd.f32 0.0, %v4284
      %v4286 = vpop.f32.mrf.mxu0
      %v4287 = vadd.f32 0.0, %v4286
      %4288 = vmatprep.mubr.f32.mxu0 0.0
      %4289 = vmatmul.mubr.f32.gmra.mxu0 %v4106
      %v4290 = vpop.f32.mrf.mxu0
      %v4291 = vadd.f32 0.0, %v4290
      %v4292 = vpop.f32.mrf.mxu0
      %v4293 = vadd.f32 0.0, %v4292
      %4294 = vmatprep.mubr.f32.mxu0 0.0
      %4295 = vmatmul.mubr.f32.gmra.mxu0 %v4107
      %v4296 = vpop.f32.mrf.mxu0
      %v4297 = vadd.f32 0.0, %v4296
      %v4298 = vpop.f32.mrf.mxu0
      %v4299 = vadd.f32 0.0, %v4298
      %4300 = vdwg.mxu0
      %v4301 = vld [vmem:[%s11] sm:$0xff]
      %v4302 = vld [vmem:[%s11 + $0x8] sm:$0xff]
      %v4303 = vld [vmem:[%s11 + $0x10] sm:$0xff]
      %v4304 = vld [vmem:[%s11 + $0x18] sm:$0xff]
      %v4305 = vld [vmem:[%s11 + $0x20] sm:$0xff]
      %v4306 = vld [vmem:[%s11 + $0x28] sm:$0xff]
      %v4307 = vld [vmem:[%s11 + $0x30] sm:$0xff]
      %v4308 = vld [vmem:[%s11 + $0x38] sm:$0xff]
      %v4309 = vld [vmem:[%s11 + $0x40] sm:$0xff]
      %v4310 = vld [vmem:[%s11 + $0x48] sm:$0xff]
      %v4311 = vld [vmem:[%s11 + $0x50] sm:$0xff]
      %v4312 = vld [vmem:[%s11 + $0x58] sm:$0xff]
      %v4313 = vld [vmem:[%s11 + $0x60] sm:$0xff]
      %v4314 = vld [vmem:[%s11 + $0x68] sm:$0xff]
      %v4315 = vld [vmem:[%s11 + $0x70] sm:$0xff]
      %v4316 = vld [vmem:[%s11 + $0x78] sm:$0xff]
      %v4317 = vld [vmem:[%s13] sm:$0x3]
      %v4319 = vlaneseq
      %v4320 = vshrl.u32 %v4319, 7
      %v4321 = vsub.s32 0, %v4320
      %v4322 = vrot.slane %v4317, %v4321
      %v4323 = vlaneseq
      %v4324 = vshrl.u32 %v4323, 7
      %v4325 = vsub.s32 1, %v4324
      %v4326 = vrot.slane %v4317, %v4325
      %4329 = vmatprep.subr.mxu0 %v4299
      %4330 = vmatpush1.msra.mxu0 %v4297
      %4331 = vmatprep.subr.mxu0 %v4293
      %4332 = vmatpush1.msra.mxu0 %v4291
      %4333 = vmatprep.subr.mxu0 %v4287
      %4334 = vmatpush1.msra.mxu0 %v4285
      %4335 = vmatprep.subr.mxu0 %v4281
      %4336 = vmatpush1.msra.mxu0 %v4279
      %4337 = vmatprep.subr.mxu0 %v4275
      %4338 = vmatpush1.msra.mxu0 %v4273
      %4339 = vmatprep.subr.mxu0 %v4269
      %4340 = vmatpush1.msra.mxu0 %v4267
      %4341 = vmatprep.subr.mxu0 %v4263
      %4342 = vmatpush1.msra.mxu0 %v4261
      %4343 = vmatprep.subr.mxu0 %v4257
      %4344 = vmatpush1.msra.mxu0 %v4255
      %4345 = vmatprep.subr.mxu0 %v4251
      %4346 = vmatpush1.msra.mxu0 %v4249
      %4347 = vmatprep.subr.mxu0 %v4245
      %4348 = vmatpush1.msra.mxu0 %v4243
      %4349 = vmatprep.subr.mxu0 %v4239
      %4350 = vmatpush1.msra.mxu0 %v4237
      %4351 = vmatprep.subr.mxu0 %v4233
      %4352 = vmatpush1.msra.mxu0 %v4231
      %4353 = vmatprep.subr.mxu0 %v4227
      %4354 = vmatpush1.msra.mxu0 %v4225
      %4355 = vmatprep.subr.mxu0 %v4221
      %4356 = vmatpush1.msra.mxu0 %v4219
      %4357 = vmatprep.subr.mxu0 %v4215
      %4358 = vmatpush1.msra.mxu0 %v4213
      %4359 = vmatprep.subr.mxu0 %v4209
      %4360 = vmatpush1.msra.mxu0 %v4207
      %4361 = vmatprep.subr.mxu0 0.0
      %4362 = vmatpush2.msra.mxu0 0.0
      %4363 = vmatprep.subr.mxu0 0.0
      %4364 = vmatpush2.msra.mxu0 0.0
      %4365 = vmatprep.subr.mxu0 0.0
      %4366 = vmatpush2.msra.mxu0 0.0
      %4367 = vmatprep.subr.mxu0 0.0
      %4368 = vmatpush2.msra.mxu0 0.0
      %4369 = vmatprep.subr.mxu0 0.0
      %4370 = vmatpush2.msra.mxu0 0.0
      %4371 = vmatprep.subr.mxu0 0.0
      %4372 = vmatpush2.msra.mxu0 0.0
      %4373 = vmatprep.subr.mxu0 0.0
      %4374 = vmatpush2.msra.mxu0 0.0
      %4375 = vmatprep.subr.mxu0 0.0
      %4376 = vmatpush2.msra.mxu0 0.0
      %4377 = vmatprep.subr.mxu0 0.0
      %4378 = vmatpush2.msra.mxu0 0.0
      %4379 = vmatprep.subr.mxu0 0.0
      %4380 = vmatpush2.msra.mxu0 0.0
      %4381 = vmatprep.subr.mxu0 0.0
      %4382 = vmatpush2.msra.mxu0 0.0
      %4383 = vmatprep.subr.mxu0 0.0
      %4384 = vmatpush2.msra.mxu0 0.0
      %4385 = vmatprep.subr.mxu0 0.0
      %4386 = vmatpush2.msra.mxu0 0.0
      %4387 = vmatprep.subr.mxu0 0.0
      %4388 = vmatpush2.msra.mxu0 0.0
      %4389 = vmatprep.subr.mxu0 0.0
      %4390 = vmatpush2.msra.mxu0 0.0
      %4391 = vmatprep.subr.mxu0 0.0
      %4392 = vmatpush2.msra.mxu0 0.0
      %4393 = vmatprep.mubr.f32.mxu0 0.0
      %4394 = vmatmul.mubr.f32.gmra.mxu0 %v4301
      %v4395 = vpop.f32.mrf.mxu0
      %v4396 = vadd.f32 %v4322, %v4395
      %v4397 = vpop.f32.mrf.mxu0
      %v4398 = vadd.f32 %v4326, %v4397
      %4399 = vmatprep.mubr.f32.mxu0 0.0
      %4400 = vmatmul.mubr.f32.gmra.mxu0 %v4302
      %v4401 = vpop.f32.mrf.mxu0
      %v4402 = vadd.f32 %v4322, %v4401
      %v4403 = vpop.f32.mrf.mxu0
      %v4404 = vadd.f32 %v4326, %v4403
      %4405 = vmatprep.mubr.f32.mxu0 0.0
      %4406 = vmatmul.mubr.f32.gmra.mxu0 %v4303
      %v4407 = vpop.f32.mrf.mxu0
      %v4408 = vadd.f32 %v4322, %v4407
      %v4409 = vpop.f32.mrf.mxu0
      %v4410 = vadd.f32 %v4326, %v4409
      %4411 = vmatprep.mubr.f32.mxu0 0.0
      %4412 = vmatmul.mubr.f32.gmra.mxu0 %v4304
      %v4413 = vpop.f32.mrf.mxu0
      %v4414 = vadd.f32 %v4322, %v4413
      %v4415 = vpop.f32.mrf.mxu0
      %v4416 = vadd.f32 %v4326, %v4415
      %4417 = vmatprep.mubr.f32.mxu0 0.0
      %4418 = vmatmul.mubr.f32.gmra.mxu0 %v4305
      %v4419 = vpop.f32.mrf.mxu0
      %v4420 = vadd.f32 %v4322, %v4419
      %v4421 = vpop.f32.mrf.mxu0
      %v4422 = vadd.f32 %v4326, %v4421
      %4423 = vmatprep.mubr.f32.mxu0 0.0
      %4424 = vmatmul.mubr.f32.gmra.mxu0 %v4306
      %v4425 = vpop.f32.mrf.mxu0
      %v4426 = vadd.f32 %v4322, %v4425
      %v4427 = vpop.f32.mrf.mxu0
      %v4428 = vadd.f32 %v4326, %v4427
      %4429 = vmatprep.mubr.f32.mxu0 0.0
      %4430 = vmatmul.mubr.f32.gmra.mxu0 %v4307
      %v4431 = vpop.f32.mrf.mxu0
      %v4432 = vadd.f32 %v4322, %v4431
      %v4433 = vpop.f32.mrf.mxu0
      %v4434 = vadd.f32 %v4326, %v4433
      %4435 = vmatprep.mubr.f32.mxu0 0.0
      %4436 = vmatmul.mubr.f32.gmra.mxu0 %v4308
      %v4437 = vpop.f32.mrf.mxu0
      %v4438 = vadd.f32 %v4322, %v4437
      %v4439 = vpop.f32.mrf.mxu0
      %v4440 = vadd.f32 %v4326, %v4439
      %4441 = vmatprep.mubr.f32.mxu0 0.0
      %4442 = vmatmul.mubr.f32.gmra.mxu0 %v4309
      %v4443 = vpop.f32.mrf.mxu0
      %v4444 = vadd.f32 %v4322, %v4443
      %v4445 = vpop.f32.mrf.mxu0
      %v4446 = vadd.f32 %v4326, %v4445
      %4447 = vmatprep.mubr.f32.mxu0 0.0
      %4448 = vmatmul.mubr.f32.gmra.mxu0 %v4310
      %v4449 = vpop.f32.mrf.mxu0
      %v4450 = vadd.f32 %v4322, %v4449
      %v4451 = vpop.f32.mrf.mxu0
      %v4452 = vadd.f32 %v4326, %v4451
      %4453 = vmatprep.mubr.f32.mxu0 0.0
      %4454 = vmatmul.mubr.f32.gmra.mxu0 %v4311
      %v4455 = vpop.f32.mrf.mxu0
      %v4456 = vadd.f32 %v4322, %v4455
      %v4457 = vpop.f32.mrf.mxu0
      %v4458 = vadd.f32 %v4326, %v4457
      %4459 = vmatprep.mubr.f32.mxu0 0.0
      %4460 = vmatmul.mubr.f32.gmra.mxu0 %v4312
      %v4461 = vpop.f32.mrf.mxu0
      %v4462 = vadd.f32 %v4322, %v4461
      %v4463 = vpop.f32.mrf.mxu0
      %v4464 = vadd.f32 %v4326, %v4463
      %4465 = vmatprep.mubr.f32.mxu0 0.0
      %4466 = vmatmul.mubr.f32.gmra.mxu0 %v4313
      %v4467 = vpop.f32.mrf.mxu0
      %v4468 = vadd.f32 %v4322, %v4467
      %v4469 = vpop.f32.mrf.mxu0
      %v4470 = vadd.f32 %v4326, %v4469
      %4471 = vmatprep.mubr.f32.mxu0 0.0
      %4472 = vmatmul.mubr.f32.gmra.mxu0 %v4314
      %v4473 = vpop.f32.mrf.mxu0
      %v4474 = vadd.f32 %v4322, %v4473
      %v4475 = vpop.f32.mrf.mxu0
      %v4476 = vadd.f32 %v4326, %v4475
      %4477 = vmatprep.mubr.f32.mxu0 0.0
      %4478 = vmatmul.mubr.f32.gmra.mxu0 %v4315
      %v4479 = vpop.f32.mrf.mxu0
      %v4480 = vadd.f32 %v4322, %v4479
      %v4481 = vpop.f32.mrf.mxu0
      %v4482 = vadd.f32 %v4326, %v4481
      %4483 = vmatprep.mubr.f32.mxu0 0.0
      %4484 = vmatmul.mubr.f32.gmra.mxu0 %v4316
      %v4485 = vpop.f32.mrf.mxu0
      %v4486 = vadd.f32 %v4322, %v4485
      %v4487 = vpop.f32.mrf.mxu0
      %v4488 = vadd.f32 %v4326, %v4487
      %4489 = vdwg.mxu0
      %4490 = vst [vmem:[%s467] sm:$0xff] %v4396
      %4491 = vst.msk [vmem:[%s467 + $0x8] sm:$0xff] %vm1333, %v4398
      %4492 = vst [vmem:[%s467 + $0x10] sm:$0xff] %v4402
      %4493 = vst.msk [vmem:[%s467 + $0x18] sm:$0xff] %vm1333, %v4404
      %4494 = vst [vmem:[%s467 + $0x20] sm:$0xff] %v4408
      %4495 = vst.msk [vmem:[%s467 + $0x28] sm:$0xff] %vm1333, %v4410
      %4496 = vst [vmem:[%s467 + $0x30] sm:$0xff] %v4414
      %4497 = vst.msk [vmem:[%s467 + $0x38] sm:$0xff] %vm1333, %v4416
      %4498 = vst [vmem:[%s467 + $0x40] sm:$0xff] %v4420
      %4499 = vst.msk [vmem:[%s467 + $0x48] sm:$0xff] %vm1333, %v4422
      %4500 = vst [vmem:[%s467 + $0x50] sm:$0xff] %v4426
      %4501 = vst.msk [vmem:[%s467 + $0x58] sm:$0xff] %vm1333, %v4428
      %4502 = vst [vmem:[%s467 + $0x60] sm:$0xff] %v4432
      %4503 = vst.msk [vmem:[%s467 + $0x68] sm:$0xff] %vm1333, %v4434
      %4504 = vst [vmem:[%s467 + $0x70] sm:$0xff] %v4438
      %4505 = vst.msk [vmem:[%s467 + $0x78] sm:$0xff] %vm1333, %v4440
      %4506 = vst [vmem:[%s467 + $0x80] sm:$0xff] %v4444
      %4507 = vst.msk [vmem:[%s467 + $0x88] sm:$0xff] %vm1333, %v4446
      %4508 = vst [vmem:[%s467 + $0x90] sm:$0xff] %v4450
      %4509 = vst.msk [vmem:[%s467 + $0x98] sm:$0xff] %vm1333, %v4452
      %4510 = vst [vmem:[%s467 + $0xa0] sm:$0xff] %v4456
      %4511 = vst.msk [vmem:[%s467 + $0xa8] sm:$0xff] %vm1333, %v4458
      %4512 = vst [vmem:[%s467 + $0xb0] sm:$0xff] %v4462
      %4513 = vst.msk [vmem:[%s467 + $0xb8] sm:$0xff] %vm1333, %v4464
      %4514 = vst [vmem:[%s467 + $0xc0] sm:$0xff] %v4468
      %4515 = vst.msk [vmem:[%s467 + $0xc8] sm:$0xff] %vm1333, %v4470
      %4516 = vst [vmem:[%s467 + $0xd0] sm:$0xff] %v4474
      %4517 = vst.msk [vmem:[%s467 + $0xd8] sm:$0xff] %vm1333, %v4476
      %4518 = vst [vmem:[%s467 + $0xe0] sm:$0xff] %v4480
      %4519 = vst.msk [vmem:[%s467 + $0xe8] sm:$0xff] %vm1333, %v4482
      %4520 = vst [vmem:[%s467 + $0xf0] sm:$0xff] %v4486
      %4521 = vst.msk [vmem:[%s467 + $0xf8] sm:$0xff] %vm1333, %v4488
      %p4522 = scmp.lt.s32.totalorder %s25, 1
      %s4523 = scalar_select %p4522, %s25, 1
      %s4524 = smul.addr %s4523, 32
      %s4525 = smul.addr %s4524, 8
      %s4526 = scalar_lea.vmem %s14, %s4525
      // Predicated region
      $region77: #{ms_mlp_forward.1} parent=75 // pred_check
        %p4527 = pneg %p342
      $region78: #{ms_mlp_forward.1} parent=75 // pred_check_branch
        %4529 = sbr.rel (%p4527) target = $region80
      $region79: #{ms_mlp_forward.1} parent=75 // pred_region
        _
      $region80: #{ms_mlp_forward.1} parent=75 // pred_fallthru
        _
    $region76: #{ms_mlp_forward.1} parent=5 // pred_fallthru
      _
    %p4530 = scmp.le.s32.totalorder 2, %s20
    // Predicated region
    $region81: #{ms_mlp_forward.1} parent=5 // pred_check
      %p4531 = pneg %p4530
    $region82: #{ms_mlp_forward.1} parent=5 // pred_check_branch
      %4533 = sbr.rel (%p4531) target = $region84
    $region83: #{ms_mlp_forward.1} parent=5 // pred_region
      %s4534 = ssub.s32 %s20, 2
      // Predicated region
      $region85: #{ms_mlp_forward.1} parent=83 // pred_check
        %p4535 = pneg %p348
      $region86: #{ms_mlp_forward.1} parent=83 // pred_check_branch
        %4537 = sbr.rel (%p4535) target = $region88
      $region87: #{ms_mlp_forward.1} parent=83 // pred_region
        %p4538 = scmp.lt.s32.totalorder %s26, 1
        %s4539 = scalar_select %p4538, %s26, 1
        %s4540 = smul.addr %s4539, 32
        %s4541 = smul.addr %s4540, 8
        %s4542 = scalar_lea.vmem %s14, %s4541
      $region88: #{ms_mlp_forward.1} parent=83 // pred_fallthru
        _
    $region84: #{ms_mlp_forward.1} parent=5 // pred_fallthru
      _
  $region6: #{ms_mlp_forward.1} parent=0 // loop_footer
    %s24 = sadd.s32 1, %s20
  $region7: #{ms_mlp_forward.1} parent=0 // loop_footer_branch
    %19 = sbr.rel target = $region3
  $region8: #{ms_mlp_forward.1} parent=0 // loop_exit
    _

</llo_original>
